<compile_context>
chip_gen: v7x
topology: tpu7x:2x2x1
jax: 0.10.0
libtpu: 0.0.40
codegen_flags: <defaults>
</compile_context>

<pallas_src>
import jax
import jax.numpy as jnp
from jax.experimental import pallas as pl
from jax.experimental.pallas import tpu as pltpu

# ----------------------------------------------------------------------------
# Model configuration.  Channel structure matches the original module
# (mlps [64,64,128] / [128,128,256] / [256,512,1024], classifier
# 1024->512->256->num_classes).  npoint / nsample are scaled down so the demo
# runs at small shapes (original: 2048/64 and 512/128).
# ----------------------------------------------------------------------------
NUM_CLASSES = 3
SA1_CFG = dict(npoint=16, radius=0.2, nsample=8)
SA2_CFG = dict(npoint=8, radius=0.4, nsample=16)
SA1_MLP = (64, 64, 128)
SA2_MLP = (128, 128, 256)
SA3_MLP = (256, 512, 1024)

NC_PAD = 128        # lane-dense classifier output width (sliced to NUM_CLASSES)
XYZ_PAD = 8         # xyz / small channel block zero-padded to the sublane quantum


def _vmem_limit_bytes():
    """Generation-aware scoped-VMEM budget.

    v4/v5e/v6e have 128 MiB physical VMEM per TensorCore -> 100 MiB scoped
    limit (bigger row tiles amortize per-grid-step overhead); v7x-class (and
    unknown) targets get a conservative 48 MiB (64 MiB physical per TC).
    """
    kind = ""
    try:
        kind = jax.devices()[0].device_kind.lower()
    except Exception:
        pass
    if any(tag in kind for tag in ("v4", "v5", "v6")):
        return 100 * 1024 * 1024
    return 48 * 1024 * 1024


VMEM_LIMIT = _vmem_limit_bytes()
# Cap on per-grid-step f32/bf16 intermediates (feeds the tile pickers).
INTERMEDIATE_BUDGET = VMEM_LIMIT // 4


# ----------------------------------------------------------------------------
# Tile pickers: size by intermediate bytes, keep blocks layout-legal, prefer
# >= 2 grid steps on the 'parallel' axis (v7x megacore).
# ----------------------------------------------------------------------------
def _pick_group_tile(m, k, c_max, budget_bytes, sub=16):
    """Groups (rows of K neighbors) per grid step for the MLP+max kernels.

    rows = tM*K is the GEMM row count; per-step intermediates are roughly
    rows * c_max * (4 B f32 + 2 B bf16 cast), so cap rows by the byte budget.
    The bf16 x-block needs (tM*K) % sub == 0 (or tM == M for a full block);
    prefer tM <= M/2 so the 'parallel' axis has >= 2 steps.
    """
    max_rows = max(k, budget_bytes // max(c_max * 6, 1))
    limit = max(1, min(m, max_rows // k))
    cands = [t for t in range(limit, 0, -1) if m % t == 0 and (t * k) % sub == 0]
    if not cands:
        # Layout-legal fallback: one full-M block (block == array dims). May
        # exceed the byte budget for awkward M; correct, just not pipelined.
        return m
    split = [t for t in cands if t <= m // 2]
    return split[0] if split else cands[0]


def _pick_batch_tile(b):
    """Batch tile for SA3: only split B when a sublane-aligned divisor exists."""
    cands = [t for t in range(b // 2, 0, -1) if b % t == 0 and t % 8 == 0]
    return cands[0] if cands else b


def _pick_k_chunk(k, tb, c_max, budget_bytes):
    """K chunk for SA3 so tb*tk rows of c_max-wide f32 stay under the budget."""
    max_rows = max(1, budget_bytes // max(c_max * 6, 1))
    limit = max(1, min(k, max_rows // max(tb, 1)))
    cands = [t for t in range(limit, 0, -1) if k % t == 0 and t % 8 == 0]
    return cands[0] if cands else k


def _const_spec(a):
    """Full-array block, constant across the grid (weights / biases)."""
    nd = a.ndim
    # TODO(synk): single-buffer these grid-invariant operands with
    # pipeline_mode=pl.Buffered(1) once verified on the deployed jax version;
    # reclaims ~2.7 MiB of double-buffered SA3+classifier weights on v7x.
    return pl.BlockSpec(a.shape, lambda *_: (0,) * nd)


# ----------------------------------------------------------------------------
# Pallas kernels
# ----------------------------------------------------------------------------
def _make_mlp3_kernel(k, split):
    """3x (1x1 conv + folded BN + ReLU) then max over the K neighbor axis.

    Inputs are 2-D (rows = tM*K, C) bf16 slabs; every dot accumulates in f32
    (preferred_element_type); only the f32 hidden value is reshaped for the
    K-max, so the bf16 input tile never gets repacked.
    """
    if split:
        def kernel(xs_ref, xf_ref, w1s_ref, w1f_ref, b1_ref,
                   w2_ref, b2_ref, w3_ref, b3_ref, o_ref):
            c3 = w3_ref.shape[1]
            # Dense aligned feature GEMM + tiny 8-wide xyz GEMM (split W1).
            h = (jnp.dot(xf_ref[...], w1f_ref[...],
                         preferred_element_type=jnp.float32)
                 + jnp.dot(xs_ref[...], w1s_ref[...],
                           preferred_element_type=jnp.float32)
                 + b1_ref[...])
            h = jnp.maximum(h, 0.0)
            h = jnp.maximum(
                jnp.dot(h.astype(jnp.bfloat16), w2_ref[...],
                        preferred_element_type=jnp.float32) + b2_ref[...], 0.0)
            h = jnp.maximum(
                jnp.dot(h.astype(jnp.bfloat16), w3_ref[...],
                        preferred_element_type=jnp.float32) + b3_ref[...], 0.0)
            o_ref[...] = jnp.max(h.reshape(-1, k, c3), axis=1).astype(o_ref.dtype)
    else:
        def kernel(xs_ref, w1_ref, b1_ref, w2_ref, b2_ref, w3_ref, b3_ref,
                   o_ref):
            c3 = w3_ref.shape[1]
            h = jnp.maximum(
                jnp.dot(xs_ref[...], w1_ref[...],
                        preferred_element_type=jnp.float32) + b1_ref[...], 0.0)
            h = jnp.maximum(
                jnp.dot(h.astype(jnp.bfloat16), w2_ref[...],
                        preferred_element_type=jnp.float32) + b2_ref[...], 0.0)
            h = jnp.maximum(
                jnp.dot(h.astype(jnp.bfloat16), w3_ref[...],
                        preferred_element_type=jnp.float32) + b3_ref[...], 0.0)
            o_ref[...] = jnp.max(h.reshape(-1, k, c3), axis=1).astype(o_ref.dtype)
    return kernel


def mlp3_max_pallas(xs, xf, layers):
    """Per-group MLP + neighbor max for SA1 / SA2.

    xs: (B, S, K, XYZ_PAD) bf16 small part (xyz_norm [+ tiny raw features]).
    xf: (B, S, K, Cf) bf16 aligned feature part, or None.
    Returns (B, S, Cout3) bf16 pooled features.
    """
    B, S, K, cs = xs.shape
    first, (w2, b2), (w3, b3) = layers
    c3 = w3.shape[1]
    m = B * S
    tm = _pick_group_tile(m, K, c3, INTERMEDIATE_BUDGET)
    rows, trows = m * K, tm * K

    xs2 = xs.reshape(rows, cs)
    kernel = _make_mlp3_kernel(K, split=(xf is not None))

    if xf is None:
        w1, b1 = first
        args = (xs2, w1, b1, w2, b2, w3, b3)
        in_specs = ([pl.BlockSpec((trows, cs), lambda i: (i, 0))]
                    + [_const_spec(a) for a in args[1:]])
    else:
        w1s, w1f, b1 = first
        cf = xf.shape[-1]
        xf2 = xf.reshape(rows, cf)
        args = (xs2, xf2, w1s, w1f, b1, w2, b2, w3, b3)
        in_specs = ([pl.BlockSpec((trows, cs), lambda i: (i, 0)),
                     pl.BlockSpec((trows, cf), lambda i: (i, 0))]
                    + [_const_spec(a) for a in args[2:]])

    out = pl.pallas_call(
        kernel,
        out_shape=jax.ShapeDtypeStruct((m, c3), jnp.bfloat16),
        grid=(m // tm,),
        in_specs=in_specs,
        out_specs=pl.BlockSpec((tm, c3), lambda i: (i, 0)),
        compiler_params=pltpu.CompilerParams(
            dimension_semantics=("parallel",),
            vmem_limit_bytes=VMEM_LIMIT),
    )(*args)
    return out.reshape(B, S, c3)


def sa3_classifier_pallas(xs, xf, sa3_layers, cls_layers):
    """group_all SA3 MLP + running K-max + classifier, fused, K-chunked.

    xs: (B, K, XYZ_PAD) bf16 raw xyz (group_all, new_xyz == 0).
    xf: (B, K, 256) bf16 SA2 features.
    Grid = (B//tB, K//tK) with a 'parallel' batch axis and an 'arbitrary'
    reduction axis; a (tB, 1024) f32 scratch holds the running max and the
    classifier runs on the last K chunk.  Returns (B, NUM_CLASSES) f32.
    """
    (w1s, w1f, b1), (w2, b2), (w3, b3) = sa3_layers
    (cw1, cb1), (cw2, cb2), (cw3, cb3) = cls_layers
    B, K, cs = xs.shape
    cf = xf.shape[-1]
    c3 = w3.shape[1]
    tb = _pick_batch_tile(B)
    tk = _pick_k_chunk(K, tb, c3, INTERMEDIATE_BUDGET)

    def kernel(xs_ref, xf_ref, w1s_ref, w1f_ref, b1_ref, w2_ref, b2_ref,
               w3_ref, b3_ref, cw1_ref, cb1_ref, cw2_ref, cb2_ref,
               cw3_ref, cb3_ref, o_ref, gmax_ref):
        ki = pl.program_id(1)

        @pl.when(ki == 0)
        def _init():
            # ReLU outputs are >= 0, so 0 is a valid identity for the K-max.
            gmax_ref[...] = jnp.zeros_like(gmax_ref)

        xs_blk = xs_ref[...].reshape(tb * tk, cs)
        xf_blk = xf_ref[...].reshape(tb * tk, cf)
        h = (jnp.dot(xf_blk, w1f_ref[...], preferred_element_type=jnp.float32)
             + jnp.dot(xs_blk, w1s_ref[...], preferred_element_type=jnp.float32)
             + b1_ref[...])
        h = jnp.maximum(h, 0.0)
        h = jnp.maximum(
            jnp.dot(h.astype(jnp.bfloat16), w2_ref[...],
                    preferred_element_type=jnp.float32) + b2_ref[...], 0.0)
        h = jnp.maximum(
            jnp.dot(h.astype(jnp.bfloat16), w3_ref[...],
                    preferred_element_type=jnp.float32) + b3_ref[...], 0.0)
        gmax_ref[...] = jnp.maximum(gmax_ref[...],
                                    jnp.max(h.reshape(tb, tk, c3), axis=1))

        @pl.when(ki == pl.num_programs(1) - 1)
        def _classify():
            # Classifier (eval mode: BN folded, dropout = identity).
            g = gmax_ref[...]
            g = jnp.maximum(
                jnp.dot(g.astype(jnp.bfloat16), cw1_ref[...],
                        preferred_element_type=jnp.float32) + cb1_ref[...], 0.0)
            g = jnp.maximum(
                jnp.dot(g.astype(jnp.bfloat16), cw2_ref[...],
                        preferred_element_type=jnp.float32) + cb2_ref[...], 0.0)
            o_ref[...] = (jnp.dot(g.astype(jnp.bfloat16), cw3_ref[...],
                                  preferred_element_type=jnp.float32)
                          + cb3_ref[...]).astype(o_ref.dtype)

    const_args = (w1s, w1f, b1, w2, b2, w3, b3,
                  cw1, cb1, cw2, cb2, cw3, cb3)
    logits = pl.pallas_call(
        kernel,
        out_shape=jax.ShapeDtypeStruct((B, NC_PAD), jnp.float32),
        grid=(B // tb, K // tk),
        in_specs=([pl.BlockSpec((tb, tk, cs), lambda bi, ki: (bi, ki, 0)),
                   pl.BlockSpec((tb, tk, cf), lambda bi, ki: (bi, ki, 0))]
                  + [_const_spec(a) for a in const_args]),
        out_specs=pl.BlockSpec((tb, NC_PAD), lambda bi, ki: (bi, 0)),
        scratch_shapes=[pltpu.VMEM((tb, c3), jnp.float32)],
        compiler_params=pltpu.CompilerParams(
            dimension_semantics=("parallel", "arbitrary"),
            vmem_limit_bytes=VMEM_LIMIT),
    )(xs, xf, *const_args)
    return logits[:, :NUM_CLASSES]


# ----------------------------------------------------------------------------
# Plain-JAX glue: FPS / ball query / gathers (data-dependent indexing)
# ----------------------------------------------------------------------------
def square_distance(src, dst):
    # src: (B, M, 3), dst: (B, N, 3) -> (B, M, N)
    d = -2.0 * jnp.einsum('bmc,bnc->bmn', src, dst)
    d = d + jnp.sum(src ** 2, axis=-1)[:, :, None]
    d = d + jnp.sum(dst ** 2, axis=-1)[:, None, :]
    return d


def index_points(points, idx):
    # points: (B, N, C), idx: (B, ...) int -> (B, ..., C); preserves dtype
    # (bf16 SA features stay bf16 through the gather).
    B = points.shape[0]
    batch_idx = jnp.arange(B).reshape((B,) + (1,) * (idx.ndim - 1))
    return points[batch_idx, idx]


def farthest_point_sample(xyz, npoint):
    # Deterministic FPS (start index 0 instead of torch.randint).
    # TODO(synk): at production scale (npoint=2048) this sequential fori_loop
    # with a per-step argmax dominates wall-clock; move to an on-chip Pallas
    # formulation (xyz + running distance resident in VMEM) before scaling up.
    B, N, _ = xyz.shape

    def body(i, carry):
        centroids, distance, farthest = carry
        centroids = centroids.at[:, i].set(farthest)
        centroid = index_points(xyz, farthest[:, None])            # (B, 1, 3)
        dist = jnp.sum((xyz - centroid) ** 2, axis=-1)             # (B, N)
        distance = jnp.minimum(distance, dist)
        farthest = jnp.argmax(distance, axis=-1).astype(jnp.int32)
        return centroids, distance, farthest

    init = (jnp.zeros((B, npoint), jnp.int32),
            jnp.full((B, N), 1e10, jnp.float32),
            jnp.zeros((B,), jnp.int32))
    centroids, _, _ = jax.lax.fori_loop(0, npoint, body, init)
    return centroids


def query_ball_point(radius, nsample, xyz, new_xyz):
    B, N, _ = xyz.shape
    sqrdists = square_distance(new_xyz, xyz)                        # (B, S, N)
    group_idx = jnp.broadcast_to(jnp.arange(N, dtype=jnp.int32), sqrdists.shape)
    group_idx = jnp.where(sqrdists > radius ** 2, N, group_idx)
    # Smallest `nsample` indices in ascending order == top_k of negated values
    # (partial selection instead of a full O(N log N) sort).
    neg_topk, _ = jax.lax.top_k(-group_idx, nsample)
    group_idx = -neg_topk
    group_first = jnp.broadcast_to(group_idx[:, :, :1], group_idx.shape)
    # Note: if no point is in radius, index N propagates and the gather clamps
    # to N-1 (degenerate input; differs from torch only in that corner case).
    group_idx = jnp.where(group_idx == N, group_first, group_idx)
    return group_idx


def _prep_small(x):
    """Zero-pad last dim to XYZ_PAD and cast to bf16 (one small HBM array)."""
    pad = XYZ_PAD - x.shape[-1]
    if pad:
        x = jnp.pad(x, [(0, 0)] * (x.ndim - 1) + [(0, pad)])
    return x.astype(jnp.bfloat16)


def sample_and_group_split(npoint, radius, nsample, xyz, points):
    """FPS + ball query + gather, returning split bf16 kernel inputs.

    Returns new_xyz (B,S,3) f32, xs (B,S,K,XYZ_PAD) bf16 (xyz_norm [+ tiny
    raw features]), xf (B,S,K,Cf) bf16 aligned feature part or None.
    """
    fps_idx = farthest_point_sample(xyz, npoint)                    # (B, S)
    new_xyz = index_points(xyz, fps_idx)                            # (B, S, 3)
    idx = query_ball_point(radius, nsample, xyz, new_xyz)           # (B, S, K)
    grouped_xyz = index_points(xyz, idx)                            # (B, S, K, 3)
    grouped_xyz_norm = grouped_xyz - new_xyz[:, :, None, :]
    if points is None:
        return new_xyz, _prep_small(grouped_xyz_norm), None
    grouped_points = index_points(points, idx)                      # keeps dtype
    if points.shape[-1] <= XYZ_PAD - 3:
        # SA1: tiny raw features -> fold into the single small padded input
        # (torch concat order: [xyz_norm, features]).
        small = jnp.concatenate(
            [grouped_xyz_norm, grouped_points.astype(grouped_xyz_norm.dtype)],
            axis=-1)
        return new_xyz, _prep_small(small), None
    # SA2: big features stay bf16 and lane-aligned; no concat, no relayout.
    return new_xyz, _prep_small(grouped_xyz_norm), grouped_points


def set_abstraction(xyz, points, cfg, layers):
    new_xyz, xs, xf = sample_and_group_split(cfg['npoint'], cfg['radius'],
                                             cfg['nsample'], xyz, points)
    feat = mlp3_max_pallas(xs, xf, layers)                          # (B, S, Cout)
    return new_xyz, feat


def sa3_and_classify(xyz, points, sa3_layers, cls_layers):
    # group_all: new_xyz is zeros, grouped data is just (xyz, points) over all
    # N2 points (torch concat order [xyz, features] preserved by the W1 split).
    xs = _prep_small(xyz)                                            # (B, N2, 8)
    xf = points                                                      # (B, N2, 256) bf16
    return sa3_classifier_pallas(xs, xf, sa3_layers, cls_layers)


# ----------------------------------------------------------------------------
# Deterministic parameter init (eval-mode BatchNorm folded into weights)
# ----------------------------------------------------------------------------
def _fold_bn(w, b, gamma, beta, mean, var, eps=1e-5):
    scale = gamma / jnp.sqrt(var + eps)
    return w * scale[None, :], (b - mean) * scale + beta


def _rand_conv_bn(key, cin, cout):
    k = jax.random.split(key, 6)
    w = 0.1 * jax.random.normal(k[0], (cin, cout), jnp.float32)
    b = 0.05 * jax.random.normal(k[1], (cout,), jnp.float32)
    gamma = 1.0 + 0.1 * jax.random.normal(k[2], (cout,), jnp.float32)
    beta = 0.05 * jax.random.normal(k[3], (cout,), jnp.float32)
    mean = 0.05 * jax.random.normal(k[4], (cout,), jnp.float32)
    var = 0.5 + jax.random.uniform(k[5], (cout,), jnp.float32)
    return _fold_bn(w, b, gamma, beta, mean, var)


def _pad_rows(w, rows):
    pad = rows - w.shape[0]
    return jnp.pad(w, ((0, pad), (0, 0))) if pad else w


def _pack(w, b):
    return w.astype(jnp.bfloat16), b.reshape(1, -1).astype(jnp.float32)


def _mlp_stack(key, cin_small, cin_feat, mlp):
    """Three conv+BN layers; layer 1 split into (xyz-pad, aligned-feat) parts."""
    keys = jax.random.split(key, len(mlp))
    w1, b1 = _rand_conv_bn(keys[0], cin_small + cin_feat, mlp[0])
    b1 = b1.reshape(1, -1).astype(jnp.float32)
    w1s = _pad_rows(w1[:cin_small], XYZ_PAD).astype(jnp.bfloat16)    # zero rows
    if cin_feat:
        w1f = w1[cin_small:].astype(jnp.bfloat16)
        layers = [(w1s, w1f, b1)]
    else:
        layers = [(w1s, b1)]
    last = mlp[0]
    for kk, cout in zip(keys[1:], mlp[1:]):
        w, b = _rand_conv_bn(kk, last, cout)
        layers.append(_pack(w, b))
        last = cout
    return layers


def _cls_stack(key):
    k = jax.random.split(key, 3)
    w1, b1 = _rand_conv_bn(k[0], SA3_MLP[-1], 512)     # Linear + BN1d (folded)
    w2, b2 = _rand_conv_bn(k[1], 512, 256)             # Linear + BN1d (folded)
    kk = jax.random.split(k[2], 2)
    w3 = 0.1 * jax.random.normal(kk[0], (256, NUM_CLASSES), jnp.float32)
    b3 = 0.05 * jax.random.normal(kk[1], (NUM_CLASSES,), jnp.float32)
    # Lane-dense padded logits: zero output lanes are sliced off outside.
    w3 = jnp.pad(w3, ((0, 0), (0, NC_PAD - NUM_CLASSES)))
    b3 = jnp.pad(b3, ((0, NC_PAD - NUM_CLASSES),))
    return [_pack(w1, b1), _pack(w2, b2), _pack(w3, b3)]


def init_params(key):
    k = jax.random.split(key, 4)
    return {
        'sa1': _mlp_stack(k[0], 3 + 3, 0, SA1_MLP),            # cat(xyz, raw feats)
        'sa2': _mlp_stack(k[1], 3, SA1_MLP[-1], SA2_MLP),       # xyz + 128 feats
        'sa3': _mlp_stack(k[2], 3, SA2_MLP[-1], SA3_MLP),       # xyz + 256 feats
        'cls': _cls_stack(k[3]),
    }


# ----------------------------------------------------------------------------
# Full forward pass (channels-last end-to-end, no NCHW transposes)
# ----------------------------------------------------------------------------
def pointnet2_forward(x, params):
    # x: (B, N, C) with C >= 3; first 3 channels are xyz (torch convention).
    xyz = x[..., :3]
    feats = x[..., 3:] if x.shape[-1] > 3 else None
    l1_xyz, l1_feat = set_abstraction(xyz, feats, SA1_CFG, params['sa1'])
    l2_xyz, l2_feat = set_abstraction(l1_xyz, l1_feat, SA2_CFG, params['sa2'])
    # TODO(synk): feature caching / gradient hooks / amplify_gradient are
    # autograd-time GradCAM bookkeeping with no forward-compute equivalent.
    logits = sa3_and_classify(l2_xyz, l2_feat, params['sa3'], params['cls'])
    return logits


if __name__ == "__main__":
    key = jax.random.PRNGKey(0)
    kx, kp = jax.random.split(key)
    B, N, C = 2, 64, 6
    x = jax.random.uniform(kx, (B, N, C), dtype=jnp.float32)
    params = init_params(kp)
    logits = jax.jit(pointnet2_forward)(x, params)
    jax.block_until_ready(logits)
    assert logits.shape == (B, NUM_CLASSES) and logits.dtype == jnp.float32
    print("KERNEL_OK")
</pallas_src>

<mosaic_0001>
module attributes {stable_mosaic.version = 11 : i64} {
  func.func @kernel(%arg0: i32, %arg1: memref<128x8xbf16, #tpu.memory_space<vmem>>, %arg2: memref<8x64xbf16, #tpu.memory_space<vmem>>, %arg3: memref<1x64xf32, #tpu.memory_space<vmem>>, %arg4: memref<64x64xbf16, #tpu.memory_space<vmem>>, %arg5: memref<1x64xf32, #tpu.memory_space<vmem>>, %arg6: memref<64x128xbf16, #tpu.memory_space<vmem>>, %arg7: memref<1x128xf32, #tpu.memory_space<vmem>>, %arg8: memref<16x128xbf16, #tpu.memory_space<vmem>>) attributes {dimension_semantics = [#tpu.dimension_semantics<parallel>], iteration_bounds = array<i64: 2>, scalar_prefetch = 0 : i64, scratch_operands = 0 : i64, tpu.core_type = #tpu.core_type<tc>, window_params = [{transform_indices = @transform_0, window_bounds = array<i64: 128, 8>}, {pipeline_mode = #tpu.pipeline_mode<synchronous>, transform_indices = @transform_1, window_bounds = array<i64: 8, 64>}, {pipeline_mode = #tpu.pipeline_mode<synchronous>, transform_indices = @transform_2, window_bounds = array<i64: 1, 64>}, {pipeline_mode = #tpu.pipeline_mode<synchronous>, transform_indices = @transform_3, window_bounds = array<i64: 64, 64>}, {pipeline_mode = #tpu.pipeline_mode<synchronous>, transform_indices = @transform_4, window_bounds = array<i64: 1, 64>}, {pipeline_mode = #tpu.pipeline_mode<synchronous>, transform_indices = @transform_5, window_bounds = array<i64: 64, 128>}, {pipeline_mode = #tpu.pipeline_mode<synchronous>, transform_indices = @transform_6, window_bounds = array<i64: 1, 128>}, {transform_indices = @transform_7, window_bounds = array<i64: 16, 128>}]} {
    %c0 = arith.constant 0 : index
    %c0_0 = arith.constant 0 : index
    %0 = vector.load %arg1[%c0, %c0_0] : memref<128x8xbf16, #tpu.memory_space<vmem>>, vector<128x8xbf16>
    %c0_1 = arith.constant 0 : index
    %c0_2 = arith.constant 0 : index
    %1 = vector.load %arg2[%c0_1, %c0_2] : memref<8x64xbf16, #tpu.memory_space<vmem>>, vector<8x64xbf16>
    %cst = arith.constant dense<0.000000e+00> : vector<128x64xf32>
    %2 = tpu.matmul %0, %1, %cst {dimension_numbers = #tpu.dot_dimension_numbers<[1], [0], [0], [1], [0, 0, 1, 1], [], []>} : vector<128x8xbf16>, vector<8x64xbf16>, vector<128x64xf32> -> vector<128x64xf32>
    %c0_3 = arith.constant 0 : index
    %c0_4 = arith.constant 0 : index
    %3 = vector.load %arg3[%c0_3, %c0_4] : memref<1x64xf32, #tpu.memory_space<vmem>>, vector<1x64xf32>
    %4 = vector.broadcast %3 : vector<1x64xf32> to vector<128x64xf32>
    %5 = arith.addf %2, %4 : vector<128x64xf32>
    %cst_5 = arith.constant 0.000000e+00 : f32
    %6 = vector.broadcast %cst_5 : f32 to vector<128x64xf32>
    %7 = arith.maximumf %5, %6 : vector<128x64xf32>
    %8 = arith.truncf %7 : vector<128x64xf32> to vector<128x64xbf16>
    %c0_6 = arith.constant 0 : index
    %c0_7 = arith.constant 0 : index
    %9 = vector.load %arg4[%c0_6, %c0_7] : memref<64x64xbf16, #tpu.memory_space<vmem>>, vector<64x64xbf16>
    %cst_8 = arith.constant dense<0.000000e+00> : vector<128x64xf32>
    %10 = tpu.matmul %8, %9, %cst_8 {dimension_numbers = #tpu.dot_dimension_numbers<[1], [0], [0], [1], [0, 0, 1, 1], [], []>} : vector<128x64xbf16>, vector<64x64xbf16>, vector<128x64xf32> -> vector<128x64xf32>
    %c0_9 = arith.constant 0 : index
    %c0_10 = arith.constant 0 : index
    %11 = vector.load %arg5[%c0_9, %c0_10] : memref<1x64xf32, #tpu.memory_space<vmem>>, vector<1x64xf32>
    %12 = vector.broadcast %11 : vector<1x64xf32> to vector<128x64xf32>
    %13 = arith.addf %10, %12 : vector<128x64xf32>
    %cst_11 = arith.constant 0.000000e+00 : f32
    %14 = vector.broadcast %cst_11 : f32 to vector<128x64xf32>
    %15 = arith.maximumf %13, %14 : vector<128x64xf32>
    %16 = arith.truncf %15 : vector<128x64xf32> to vector<128x64xbf16>
    %c0_12 = arith.constant 0 : index
    %c0_13 = arith.constant 0 : index
    %17 = vector.load %arg6[%c0_12, %c0_13] : memref<64x128xbf16, #tpu.memory_space<vmem>>, vector<64x128xbf16>
    %cst_14 = arith.constant dense<0.000000e+00> : vector<128x128xf32>
    %18 = tpu.matmul %16, %17, %cst_14 {dimension_numbers = #tpu.dot_dimension_numbers<[1], [0], [0], [1], [0, 0, 1, 1], [], []>} : vector<128x64xbf16>, vector<64x128xbf16>, vector<128x128xf32> -> vector<128x128xf32>
    %c0_15 = arith.constant 0 : index
    %c0_16 = arith.constant 0 : index
    %19 = vector.load %arg7[%c0_15, %c0_16] : memref<1x128xf32, #tpu.memory_space<vmem>>, vector<1x128xf32>
    %20 = vector.broadcast %19 : vector<1x128xf32> to vector<128x128xf32>
    %21 = arith.addf %18, %20 : vector<128x128xf32>
    %cst_17 = arith.constant 0.000000e+00 : f32
    %22 = vector.broadcast %cst_17 : f32 to vector<128x128xf32>
    %23 = arith.maximumf %21, %22 : vector<128x128xf32>
    %24 = vector.shape_cast %23 : vector<128x128xf32> to vector<16x8x128xf32>
    %cst_18 = arith.constant dense<0xFF800000> : vector<16x128xf32>
    %25 = vector.multi_reduction <maximumf>, %24, %cst_18 [1] : vector<16x8x128xf32> to vector<16x128xf32>
    %26 = arith.truncf %25 : vector<16x128xf32> to vector<16x128xbf16>
    %c0_19 = arith.constant 0 : index
    %c0_20 = arith.constant 0 : index
    %27 = vector.load %arg8[%c0_19, %c0_20] : memref<16x128xbf16, #tpu.memory_space<vmem>>, vector<16x128xbf16>
    tpu.vector_store %arg8[%c0_19, %c0_20], %26 {strides = array<i32>} : memref<16x128xbf16, #tpu.memory_space<vmem>>, vector<16x128xbf16>,
    return
  }
  func.func @transform_0(%arg0: i32) -> (i32, i32) {
    %c0_i32 = arith.constant 0 : i32
    %c0_i32_0 = arith.constant 0 : i32
    return %arg0, %c0_i32 : i32, i32
  }
  func.func @transform_1(%arg0: i32) -> (i32, i32) {
    %c0_i32 = arith.constant 0 : i32
    %c0_i32_0 = arith.constant 0 : i32
    %c0_i32_1 = arith.constant 0 : i32
    return %c0_i32, %c0_i32_0 : i32, i32
  }
  func.func @transform_2(%arg0: i32) -> (i32, i32) {
    %c0_i32 = arith.constant 0 : i32
    %c0_i32_0 = arith.constant 0 : i32
    %c0_i32_1 = arith.constant 0 : i32
    return %c0_i32, %c0_i32_0 : i32, i32
  }
  func.func @transform_3(%arg0: i32) -> (i32, i32) {
    %c0_i32 = arith.constant 0 : i32
    %c0_i32_0 = arith.constant 0 : i32
    %c0_i32_1 = arith.constant 0 : i32
    return %c0_i32, %c0_i32_0 : i32, i32
  }
  func.func @transform_4(%arg0: i32) -> (i32, i32) {
    %c0_i32 = arith.constant 0 : i32
    %c0_i32_0 = arith.constant 0 : i32
    %c0_i32_1 = arith.constant 0 : i32
    return %c0_i32, %c0_i32_0 : i32, i32
  }
  func.func @transform_5(%arg0: i32) -> (i32, i32) {
    %c0_i32 = arith.constant 0 : i32
    %c0_i32_0 = arith.constant 0 : i32
    %c0_i32_1 = arith.constant 0 : i32
    return %c0_i32, %c0_i32_0 : i32, i32
  }
  func.func @transform_6(%arg0: i32) -> (i32, i32) {
    %c0_i32 = arith.constant 0 : i32
    %c0_i32_0 = arith.constant 0 : i32
    %c0_i32_1 = arith.constant 0 : i32
    return %c0_i32, %c0_i32_0 : i32, i32
  }
  func.func @transform_7(%arg0: i32) -> (i32, i32) {
    %c0_i32 = arith.constant 0 : i32
    %c0_i32_0 = arith.constant 0 : i32
    return %arg0, %c0_i32 : i32, i32
  }
}

module attributes {stable_mosaic.version = 11 : i64} {
  func.func @kernel(%arg0: i32, %arg1: memref<128x8xbf16, #tpu.memory_space<vmem>>, %arg2: memref<128x128xbf16, #tpu.memory_space<vmem>>, %arg3: memref<8x128xbf16, #tpu.memory_space<vmem>>, %arg4: memref<128x128xbf16, #tpu.memory_space<vmem>>, %arg5: memref<1x128xf32, #tpu.memory_space<vmem>>, %arg6: memref<128x128xbf16, #tpu.memory_space<vmem>>, %arg7: memref<1x128xf32, #tpu.memory_space<vmem>>, %arg8: memref<128x256xbf16, #tpu.memory_space<vmem>>, %arg9: memref<1x256xf32, #tpu.memory_space<vmem>>, %arg10: memref<8x256xbf16, #tpu.memory_space<vmem>>) attributes {dimension_semantics = [#tpu.dimension_semantics<parallel>], iteration_bounds = array<i64: 2>, scalar_prefetch = 0 : i64, scratch_operands = 0 : i64, tpu.core_type = #tpu.core_type<tc>, window_params = [{transform_indices = @transform_0, window_bounds = array<i64: 128, 8>}, {transform_indices = @transform_1, window_bounds = array<i64: 128, 128>}, {pipeline_mode = #tpu.pipeline_mode<synchronous>, transform_indices = @transform_2, window_bounds = array<i64: 8, 128>}, {pipeline_mode = #tpu.pipeline_mode<synchronous>, transform_indices = @transform_3, window_bounds = array<i64: 128, 128>}, {pipeline_mode = #tpu.pipeline_mode<synchronous>, transform_indices = @transform_4, window_bounds = array<i64: 1, 128>}, {pipeline_mode = #tpu.pipeline_mode<synchronous>, transform_indices = @transform_5, window_bounds = array<i64: 128, 128>}, {pipeline_mode = #tpu.pipeline_mode<synchronous>, transform_indices = @transform_6, window_bounds = array<i64: 1, 128>}, {pipeline_mode = #tpu.pipeline_mode<synchronous>, transform_indices = @transform_7, window_bounds = array<i64: 128, 256>}, {pipeline_mode = #tpu.pipeline_mode<synchronous>, transform_indices = @transform_8, window_bounds = array<i64: 1, 256>}, {transform_indices = @transform_9, window_bounds = array<i64: 8, 256>}]} {
    %c0 = arith.constant 0 : index
    %c0_0 = arith.constant 0 : index
    %0 = vector.load %arg2[%c0, %c0_0] : memref<128x128xbf16, #tpu.memory_space<vmem>>, vector<128x128xbf16>
    %c0_1 = arith.constant 0 : index
    %c0_2 = arith.constant 0 : index
    %1 = vector.load %arg4[%c0_1, %c0_2] : memref<128x128xbf16, #tpu.memory_space<vmem>>, vector<128x128xbf16>
    %cst = arith.constant dense<0.000000e+00> : vector<128x128xf32>
    %2 = tpu.matmul %0, %1, %cst {dimension_numbers = #tpu.dot_dimension_numbers<[1], [0], [0], [1], [0, 0, 1, 1], [], []>} : vector<128x128xbf16>, vector<128x128xbf16>, vector<128x128xf32> -> vector<128x128xf32>
    %c0_3 = arith.constant 0 : index
    %c0_4 = arith.constant 0 : index
    %3 = vector.load %arg1[%c0_3, %c0_4] : memref<128x8xbf16, #tpu.memory_space<vmem>>, vector<128x8xbf16>
    %c0_5 = arith.constant 0 : index
    %c0_6 = arith.constant 0 : index
    %4 = vector.load %arg3[%c0_5, %c0_6] : memref<8x128xbf16, #tpu.memory_space<vmem>>, vector<8x128xbf16>
    %cst_7 = arith.constant dense<0.000000e+00> : vector<128x128xf32>
    %5 = tpu.matmul %3, %4, %cst_7 {dimension_numbers = #tpu.dot_dimension_numbers<[1], [0], [0], [1], [0, 0, 1, 1], [], []>} : vector<128x8xbf16>, vector<8x128xbf16>, vector<128x128xf32> -> vector<128x128xf32>
    %6 = arith.addf %2, %5 : vector<128x128xf32>
    %c0_8 = arith.constant 0 : index
    %c0_9 = arith.constant 0 : index
    %7 = vector.load %arg5[%c0_8, %c0_9] : memref<1x128xf32, #tpu.memory_space<vmem>>, vector<1x128xf32>
    %8 = vector.broadcast %7 : vector<1x128xf32> to vector<128x128xf32>
    %9 = arith.addf %6, %8 : vector<128x128xf32>
    %cst_10 = arith.constant 0.000000e+00 : f32
    %10 = vector.broadcast %cst_10 : f32 to vector<128x128xf32>
    %11 = arith.maximumf %9, %10 : vector<128x128xf32>
    %12 = arith.truncf %11 : vector<128x128xf32> to vector<128x128xbf16>
    %c0_11 = arith.constant 0 : index
    %c0_12 = arith.constant 0 : index
    %13 = vector.load %arg6[%c0_11, %c0_12] : memref<128x128xbf16, #tpu.memory_space<vmem>>, vector<128x128xbf16>
    %cst_13 = arith.constant dense<0.000000e+00> : vector<128x128xf32>
    %14 = tpu.matmul %12, %13, %cst_13 {dimension_numbers = #tpu.dot_dimension_numbers<[1], [0], [0], [1], [0, 0, 1, 1], [], []>} : vector<128x128xbf16>, vector<128x128xbf16>, vector<128x128xf32> -> vector<128x128xf32>
    %c0_14 = arith.constant 0 : index
    %c0_15 = arith.constant 0 : index
    %15 = vector.load %arg7[%c0_14, %c0_15] : memref<1x128xf32, #tpu.memory_space<vmem>>, vector<1x128xf32>
    %16 = vector.broadcast %15 : vector<1x128xf32> to vector<128x128xf32>
    %17 = arith.addf %14, %16 : vector<128x128xf32>
    %cst_16 = arith.constant 0.000000e+00 : f32
    %18 = vector.broadcast %cst_16 : f32 to vector<128x128xf32>
    %19 = arith.maximumf %17, %18 : vector<128x128xf32>
    %20 = arith.truncf %19 : vector<128x128xf32> to vector<128x128xbf16>
    %c0_17 = arith.constant 0 : index
    %c0_18 = arith.constant 0 : index
    %21 = vector.load %arg8[%c0_17, %c0_18] : memref<128x256xbf16, #tpu.memory_space<vmem>>, vector<128x256xbf16>
    %cst_19 = arith.constant dense<0.000000e+00> : vector<128x256xf32>
    %22 = tpu.matmul %20, %21, %cst_19 {dimension_numbers = #tpu.dot_dimension_numbers<[1], [0], [0], [1], [0, 0, 1, 1], [], []>} : vector<128x128xbf16>, vector<128x256xbf16>, vector<128x256xf32> -> vector<128x256xf32>
    %c0_20 = arith.constant 0 : index
    %c0_21 = arith.constant 0 : index
    %23 = vector.load %arg9[%c0_20, %c0_21] : memref<1x256xf32, #tpu.memory_space<vmem>>, vector<1x256xf32>
    %24 = vector.broadcast %23 : vector<1x256xf32> to vector<128x256xf32>
    %25 = arith.addf %22, %24 : vector<128x256xf32>
    %cst_22 = arith.constant 0.000000e+00 : f32
    %26 = vector.broadcast %cst_22 : f32 to vector<128x256xf32>
    %27 = arith.maximumf %25, %26 : vector<128x256xf32>
    %28 = vector.shape_cast %27 : vector<128x256xf32> to vector<8x16x256xf32>
    %cst_23 = arith.constant dense<0xFF800000> : vector<8x256xf32>
    %29 = vector.multi_reduction <maximumf>, %28, %cst_23 [1] : vector<8x16x256xf32> to vector<8x256xf32>
    %30 = arith.truncf %29 : vector<8x256xf32> to vector<8x256xbf16>
    %c0_24 = arith.constant 0 : index
    %c0_25 = arith.constant 0 : index
    %31 = vector.load %arg10[%c0_24, %c0_25] : memref<8x256xbf16, #tpu.memory_space<vmem>>, vector<8x256xbf16>
    tpu.vector_store %arg10[%c0_24, %c0_25], %30 {strides = array<i32>} : memref<8x256xbf16, #tpu.memory_space<vmem>>, vector<8x256xbf16>,
    return
  }
  func.func @transform_0(%arg0: i32) -> (i32, i32) {
    %c0_i32 = arith.constant 0 : i32
    %c0_i32_0 = arith.constant 0 : i32
    return %arg0, %c0_i32 : i32, i32
  }
  func.func @transform_1(%arg0: i32) -> (i32, i32) {
    %c0_i32 = arith.constant 0 : i32
    %c0_i32_0 = arith.constant 0 : i32
    return %arg0, %c0_i32 : i32, i32
  }
  func.func @transform_2(%arg0: i32) -> (i32, i32) {
    %c0_i32 = arith.constant 0 : i32
    %c0_i32_0 = arith.constant 0 : i32
    %c0_i32_1 = arith.constant 0 : i32
    return %c0_i32, %c0_i32_0 : i32, i32
  }
  func.func @transform_3(%arg0: i32) -> (i32, i32) {
    %c0_i32 = arith.constant 0 : i32
    %c0_i32_0 = arith.constant 0 : i32
    %c0_i32_1 = arith.constant 0 : i32
    return %c0_i32, %c0_i32_0 : i32, i32
  }
  func.func @transform_4(%arg0: i32) -> (i32, i32) {
    %c0_i32 = arith.constant 0 : i32
    %c0_i32_0 = arith.constant 0 : i32
    %c0_i32_1 = arith.constant 0 : i32
    return %c0_i32, %c0_i32_0 : i32, i32
  }
  func.func @transform_5(%arg0: i32) -> (i32, i32) {
    %c0_i32 = arith.constant 0 : i32
    %c0_i32_0 = arith.constant 0 : i32
    %c0_i32_1 = arith.constant 0 : i32
    return %c0_i32, %c0_i32_0 : i32, i32
  }
  func.func @transform_6(%arg0: i32) -> (i32, i32) {
    %c0_i32 = arith.constant 0 : i32
    %c0_i32_0 = arith.constant 0 : i32
    %c0_i32_1 = arith.constant 0 : i32
    return %c0_i32, %c0_i32_0 : i32, i32
  }
  func.func @transform_7(%arg0: i32) -> (i32, i32) {
    %c0_i32 = arith.constant 0 : i32
    %c0_i32_0 = arith.constant 0 : i32
    %c0_i32_1 = arith.constant 0 : i32
    return %c0_i32, %c0_i32_0 : i32, i32
  }
  func.func @transform_8(%arg0: i32) -> (i32, i32) {
    %c0_i32 = arith.constant 0 : i32
    %c0_i32_0 = arith.constant 0 : i32
    %c0_i32_1 = arith.constant 0 : i32
    return %c0_i32, %c0_i32_0 : i32, i32
  }
  func.func @transform_9(%arg0: i32) -> (i32, i32) {
    %c0_i32 = arith.constant 0 : i32
    %c0_i32_0 = arith.constant 0 : i32
    return %arg0, %c0_i32 : i32, i32
  }
}

module attributes {stable_mosaic.version = 11 : i64} {
  func.func @kernel(%arg0: i32, %arg1: i32, %arg2: memref<2x8x8xbf16, #tpu.memory_space<vmem>>, %arg3: memref<2x8x256xbf16, #tpu.memory_space<vmem>>, %arg4: memref<8x256xbf16, #tpu.memory_space<vmem>>, %arg5: memref<256x256xbf16, #tpu.memory_space<vmem>>, %arg6: memref<1x256xf32, #tpu.memory_space<vmem>>, %arg7: memref<256x512xbf16, #tpu.memory_space<vmem>>, %arg8: memref<1x512xf32, #tpu.memory_space<vmem>>, %arg9: memref<512x1024xbf16, #tpu.memory_space<vmem>>, %arg10: memref<1x1024xf32, #tpu.memory_space<vmem>>, %arg11: memref<1024x512xbf16, #tpu.memory_space<vmem>>, %arg12: memref<1x512xf32, #tpu.memory_space<vmem>>, %arg13: memref<512x256xbf16, #tpu.memory_space<vmem>>, %arg14: memref<1x256xf32, #tpu.memory_space<vmem>>, %arg15: memref<256x128xbf16, #tpu.memory_space<vmem>>, %arg16: memref<1x128xf32, #tpu.memory_space<vmem>>, %arg17: memref<2x128xf32, #tpu.memory_space<vmem>>, %arg18: memref<2x1024xf32, #tpu.memory_space<vmem>>) attributes {dimension_semantics = [#tpu.dimension_semantics<parallel>, #tpu.dimension_semantics<arbitrary>], iteration_bounds = array<i64: 1, 1>, scalar_prefetch = 0 : i64, scratch_operands = 1 : i64, tpu.core_type = #tpu.core_type<tc>, window_params = [{transform_indices = @transform_0, window_bounds = array<i64: 2, 8, 8>}, {transform_indices = @transform_1, window_bounds = array<i64: 2, 8, 256>}, {pipeline_mode = #tpu.pipeline_mode<synchronous>, transform_indices = @transform_2, window_bounds = array<i64: 8, 256>}, {pipeline_mode = #tpu.pipeline_mode<synchronous>, transform_indices = @transform_3, window_bounds = array<i64: 256, 256>}, {pipeline_mode = #tpu.pipeline_mode<synchronous>, transform_indices = @transform_4, window_bounds = array<i64: 1, 256>}, {pipeline_mode = #tpu.pipeline_mode<synchronous>, transform_indices = @transform_5, window_bounds = array<i64: 256, 512>}, {pipeline_mode = #tpu.pipeline_mode<synchronous>, transform_indices = @transform_6, window_bounds = array<i64: 1, 512>}, {pipeline_mode = #tpu.pipeline_mode<synchronous>, transform_indices = @transform_7, window_bounds = array<i64: 512, 1024>}, {pipeline_mode = #tpu.pipeline_mode<synchronous>, transform_indices = @transform_8, window_bounds = array<i64: 1, 1024>}, {pipeline_mode = #tpu.pipeline_mode<synchronous>, transform_indices = @transform_9, window_bounds = array<i64: 1024, 512>}, {pipeline_mode = #tpu.pipeline_mode<synchronous>, transform_indices = @transform_10, window_bounds = array<i64: 1, 512>}, {pipeline_mode = #tpu.pipeline_mode<synchronous>, transform_indices = @transform_11, window_bounds = array<i64: 512, 256>}, {pipeline_mode = #tpu.pipeline_mode<synchronous>, transform_indices = @transform_12, window_bounds = array<i64: 1, 256>}, {pipeline_mode = #tpu.pipeline_mode<synchronous>, transform_indices = @transform_13, window_bounds = array<i64: 256, 128>}, {pipeline_mode = #tpu.pipeline_mode<synchronous>, transform_indices = @transform_14, window_bounds = array<i64: 1, 128>}, {transform_indices = @transform_15, window_bounds = array<i64: 2, 128>}]} {
    %c0_i32 = arith.constant 0 : i32
    %0 = arith.cmpi eq, %arg1, %c0_i32 : i32
    %1 = arith.extui %0 : i1 to i32
    %c0_i32_0 = arith.constant 0 : i32
    %2 = arith.cmpi ne, %1, %c0_i32_0 : i32
    scf.if %2 {
      %cst_33 = arith.constant 0.000000e+00 : f32
      %41 = vector.broadcast %cst_33 : f32 to vector<2x1024xf32>
      %c0_34 = arith.constant 0 : index
      %c0_35 = arith.constant 0 : index
      %42 = vector.load %arg18[%c0_34, %c0_35] : memref<2x1024xf32, #tpu.memory_space<vmem>>, vector<2x1024xf32>
      tpu.vector_store %arg18[%c0_34, %c0_35], %41 {strides = array<i32>} : memref<2x1024xf32, #tpu.memory_space<vmem>>, vector<2x1024xf32>,
    } else {
    }
    %c0 = arith.constant 0 : index
    %c0_1 = arith.constant 0 : index
    %c0_2 = arith.constant 0 : index
    %3 = vector.load %arg2[%c0, %c0_1, %c0_2] : memref<2x8x8xbf16, #tpu.memory_space<vmem>>, vector<2x8x8xbf16>
    %4 = vector.shape_cast %3 : vector<2x8x8xbf16> to vector<16x8xbf16>
    %c0_3 = arith.constant 0 : index
    %c0_4 = arith.constant 0 : index
    %c0_5 = arith.constant 0 : index
    %5 = vector.load %arg3[%c0_3, %c0_4, %c0_5] : memref<2x8x256xbf16, #tpu.memory_space<vmem>>, vector<2x8x256xbf16>
    %6 = vector.shape_cast %5 : vector<2x8x256xbf16> to vector<16x256xbf16>
    %c0_6 = arith.constant 0 : index
    %c0_7 = arith.constant 0 : index
    %7 = vector.load %arg5[%c0_6, %c0_7] : memref<256x256xbf16, #tpu.memory_space<vmem>>, vector<256x256xbf16>
    %cst = arith.constant dense<0.000000e+00> : vector<16x256xf32>
    %8 = tpu.matmul %6, %7, %cst {dimension_numbers = #tpu.dot_dimension_numbers<[1], [0], [0], [1], [0, 0, 1, 1], [], []>} : vector<16x256xbf16>, vector<256x256xbf16>, vector<16x256xf32> -> vector<16x256xf32>
    %c0_8 = arith.constant 0 : index
    %c0_9 = arith.constant 0 : index
    %9 = vector.load %arg4[%c0_8, %c0_9] : memref<8x256xbf16, #tpu.memory_space<vmem>>, vector<8x256xbf16>
    %cst_10 = arith.constant dense<0.000000e+00> : vector<16x256xf32>
    %10 = tpu.matmul %4, %9, %cst_10 {dimension_numbers = #tpu.dot_dimension_numbers<[1], [0], [0], [1], [0, 0, 1, 1], [], []>} : vector<16x8xbf16>, vector<8x256xbf16>, vector<16x256xf32> -> vector<16x256xf32>
    %11 = arith.addf %8, %10 : vector<16x256xf32>
    %c0_11 = arith.constant 0 : index
    %c0_12 = arith.constant 0 : index
    %12 = vector.load %arg6[%c0_11, %c0_12] : memref<1x256xf32, #tpu.memory_space<vmem>>, vector<1x256xf32>
    %13 = vector.broadcast %12 : vector<1x256xf32> to vector<16x256xf32>
    %14 = arith.addf %11, %13 : vector<16x256xf32>
    %cst_13 = arith.constant 0.000000e+00 : f32
    %15 = vector.broadcast %cst_13 : f32 to vector<16x256xf32>
    %16 = arith.maximumf %14, %15 : vector<16x256xf32>
    %17 = arith.truncf %16 : vector<16x256xf32> to vector<16x256xbf16>
    %c0_14 = arith.constant 0 : index
    %c0_15 = arith.constant 0 : index
    %18 = vector.load %arg7[%c0_14, %c0_15] : memref<256x512xbf16, #tpu.memory_space<vmem>>, vector<256x512xbf16>
    %cst_16 = arith.constant dense<0.000000e+00> : vector<16x512xf32>
    %19 = tpu.matmul %17, %18, %cst_16 {dimension_numbers = #tpu.dot_dimension_numbers<[1], [0], [0], [1], [0, 0, 1, 1], [], []>} : vector<16x256xbf16>, vector<256x512xbf16>, vector<16x512xf32> -> vector<16x512xf32>
    %c0_17 = arith.constant 0 : index
    %c0_18 = arith.constant 0 : index
    %20 = vector.load %arg8[%c0_17, %c0_18] : memref<1x512xf32, #tpu.memory_space<vmem>>, vector<1x512xf32>
    %21 = vector.broadcast %20 : vector<1x512xf32> to vector<16x512xf32>
    %22 = arith.addf %19, %21 : vector<16x512xf32>
    %cst_19 = arith.constant 0.000000e+00 : f32
    %23 = vector.broadcast %cst_19 : f32 to vector<16x512xf32>
    %24 = arith.maximumf %22, %23 : vector<16x512xf32>
    %25 = arith.truncf %24 : vector<16x512xf32> to vector<16x512xbf16>
    %c0_20 = arith.constant 0 : index
    %c0_21 = arith.constant 0 : index
    %26 = vector.load %arg9[%c0_20, %c0_21] : memref<512x1024xbf16, #tpu.memory_space<vmem>>, vector<512x1024xbf16>
    %cst_22 = arith.constant dense<0.000000e+00> : vector<16x1024xf32>
    %27 = tpu.matmul %25, %26, %cst_22 {dimension_numbers = #tpu.dot_dimension_numbers<[1], [0], [0], [1], [0, 0, 1, 1], [], []>} : vector<16x512xbf16>, vector<512x1024xbf16>, vector<16x1024xf32> -> vector<16x1024xf32>
    %c0_23 = arith.constant 0 : index
    %c0_24 = arith.constant 0 : index
    %28 = vector.load %arg10[%c0_23, %c0_24] : memref<1x1024xf32, #tpu.memory_space<vmem>>, vector<1x1024xf32>
    %29 = vector.broadcast %28 : vector<1x1024xf32> to vector<16x1024xf32>
    %30 = arith.addf %27, %29 : vector<16x1024xf32>
    %cst_25 = arith.constant 0.000000e+00 : f32
    %31 = vector.broadcast %cst_25 : f32 to vector<16x1024xf32>
    %32 = arith.maximumf %30, %31 : vector<16x1024xf32>
    %c0_26 = arith.constant 0 : index
    %c0_27 = arith.constant 0 : index
    %33 = vector.load %arg18[%c0_26, %c0_27] : memref<2x1024xf32, #tpu.memory_space<vmem>>, vector<2x1024xf32>
    %34 = vector.shape_cast %32 : vector<16x1024xf32> to vector<2x8x1024xf32>
    %cst_28 = arith.constant dense<0xFF800000> : vector<2x1024xf32>
    %35 = vector.multi_reduction <maximumf>, %34, %cst_28 [1] : vector<2x8x1024xf32> to vector<2x1024xf32>
    %36 = arith.maximumf %33, %35 : vector<2x1024xf32>
    %c0_29 = arith.constant 0 : index
    %c0_30 = arith.constant 0 : index
    %37 = vector.load %arg18[%c0_29, %c0_30] : memref<2x1024xf32, #tpu.memory_space<vmem>>, vector<2x1024xf32>
    tpu.vector_store %arg18[%c0_29, %c0_30], %36 {strides = array<i32>} : memref<2x1024xf32, #tpu.memory_space<vmem>>, vector<2x1024xf32>,
    %c0_i32_31 = arith.constant 0 : i32
    %38 = arith.cmpi eq, %arg1, %c0_i32_31 : i32
    %39 = arith.extui %38 : i1 to i32
    %c0_i32_32 = arith.constant 0 : i32
    %40 = arith.cmpi ne, %39, %c0_i32_32 : i32
    scf.if %40 {
      %c0_33 = arith.constant 0 : index
      %c0_34 = arith.constant 0 : index
      %41 = vector.load %arg18[%c0_33, %c0_34] : memref<2x1024xf32, #tpu.memory_space<vmem>>, vector<2x1024xf32>
      %42 = arith.truncf %41 : vector<2x1024xf32> to vector<2x1024xbf16>
      %c0_35 = arith.constant 0 : index
      %c0_36 = arith.constant 0 : index
      %43 = vector.load %arg11[%c0_35, %c0_36] : memref<1024x512xbf16, #tpu.memory_space<vmem>>, vector<1024x512xbf16>
      %cst_37 = arith.constant dense<0.000000e+00> : vector<2x512xf32>
      %44 = tpu.matmul %42, %43, %cst_37 {dimension_numbers = #tpu.dot_dimension_numbers<[1], [0], [0], [1], [0, 0, 1, 1], [], []>} : vector<2x1024xbf16>, vector<1024x512xbf16>, vector<2x512xf32> -> vector<2x512xf32>
      %c0_38 = arith.constant 0 : index
      %c0_39 = arith.constant 0 : index
      %45 = vector.load %arg12[%c0_38, %c0_39] : memref<1x512xf32, #tpu.memory_space<vmem>>, vector<1x512xf32>
      %46 = vector.broadcast %45 : vector<1x512xf32> to vector<2x512xf32>
      %47 = arith.addf %44, %46 : vector<2x512xf32>
      %cst_40 = arith.constant 0.000000e+00 : f32
      %48 = vector.broadcast %cst_40 : f32 to vector<2x512xf32>
      %49 = arith.maximumf %47, %48 : vector<2x512xf32>
      %50 = arith.truncf %49 : vector<2x512xf32> to vector<2x512xbf16>
      %c0_41 = arith.constant 0 : index
      %c0_42 = arith.constant 0 : index
      %51 = vector.load %arg13[%c0_41, %c0_42] : memref<512x256xbf16, #tpu.memory_space<vmem>>, vector<512x256xbf16>
      %cst_43 = arith.constant dense<0.000000e+00> : vector<2x256xf32>
      %52 = tpu.matmul %50, %51, %cst_43 {dimension_numbers = #tpu.dot_dimension_numbers<[1], [0], [0], [1], [0, 0, 1, 1], [], []>} : vector<2x512xbf16>, vector<512x256xbf16>, vector<2x256xf32> -> vector<2x256xf32>
      %c0_44 = arith.constant 0 : index
      %c0_45 = arith.constant 0 : index
      %53 = vector.load %arg14[%c0_44, %c0_45] : memref<1x256xf32, #tpu.memory_space<vmem>>, vector<1x256xf32>
      %54 = vector.broadcast %53 : vector<1x256xf32> to vector<2x256xf32>
      %55 = arith.addf %52, %54 : vector<2x256xf32>
      %cst_46 = arith.constant 0.000000e+00 : f32
      %56 = vector.broadcast %cst_46 : f32 to vector<2x256xf32>
      %57 = arith.maximumf %55, %56 : vector<2x256xf32>
      %58 = arith.truncf %57 : vector<2x256xf32> to vector<2x256xbf16>
      %c0_47 = arith.constant 0 : index
      %c0_48 = arith.constant 0 : index
      %59 = vector.load %arg15[%c0_47, %c0_48] : memref<256x128xbf16, #tpu.memory_space<vmem>>, vector<256x128xbf16>
      %cst_49 = arith.constant dense<0.000000e+00> : vector<2x128xf32>
      %60 = tpu.matmul %58, %59, %cst_49 {dimension_numbers = #tpu.dot_dimension_numbers<[1], [0], [0], [1], [0, 0, 1, 1], [], []>} : vector<2x256xbf16>, vector<256x128xbf16>, vector<2x128xf32> -> vector<2x128xf32>
      %c0_50 = arith.constant 0 : index
      %c0_51 = arith.constant 0 : index
      %61 = vector.load %arg16[%c0_50, %c0_51] : memref<1x128xf32, #tpu.memory_space<vmem>>, vector<1x128xf32>
      %62 = vector.broadcast %61 : vector<1x128xf32> to vector<2x128xf32>
      %63 = arith.addf %60, %62 : vector<2x128xf32>
      %c0_52 = arith.constant 0 : index
      %c0_53 = arith.constant 0 : index
      %64 = vector.load %arg17[%c0_52, %c0_53] : memref<2x128xf32, #tpu.memory_space<vmem>>, vector<2x128xf32>
      tpu.vector_store %arg17[%c0_52, %c0_53], %63 {strides = array<i32>} : memref<2x128xf32, #tpu.memory_space<vmem>>, vector<2x128xf32>,
    } else {
    }
    return
  }
  func.func @transform_0(%arg0: i32, %arg1: i32) -> (i32, i32, i32) {
    %c0_i32 = arith.constant 0 : i32
    %c0_i32_0 = arith.constant 0 : i32
    return %arg0, %arg1, %c0_i32 : i32, i32, i32
  }
  func.func @transform_1(%arg0: i32, %arg1: i32) -> (i32, i32, i32) {
    %c0_i32 = arith.constant 0 : i32
    %c0_i32_0 = arith.constant 0 : i32
    return %arg0, %arg1, %c0_i32 : i32, i32, i32
  }
  func.func @transform_2(%arg0: i32, %arg1: i32) -> (i32, i32) {
    %c0_i32 = arith.constant 0 : i32
    %c0_i32_0 = arith.constant 0 : i32
    %c0_i32_1 = arith.constant 0 : i32
    return %c0_i32, %c0_i32_0 : i32, i32
  }
  func.func @transform_3(%arg0: i32, %arg1: i32) -> (i32, i32) {
    %c0_i32 = arith.constant 0 : i32
    %c0_i32_0 = arith.constant 0 : i32
    %c0_i32_1 = arith.constant 0 : i32
    return %c0_i32, %c0_i32_0 : i32, i32
  }
  func.func @transform_4(%arg0: i32, %arg1: i32) -> (i32, i32) {
    %c0_i32 = arith.constant 0 : i32
    %c0_i32_0 = arith.constant 0 : i32
    %c0_i32_1 = arith.constant 0 : i32
    return %c0_i32, %c0_i32_0 : i32, i32
  }
  func.func @transform_5(%arg0: i32, %arg1: i32) -> (i32, i32) {
    %c0_i32 = arith.constant 0 : i32
    %c0_i32_0 = arith.constant 0 : i32
    %c0_i32_1 = arith.constant 0 : i32
    return %c0_i32, %c0_i32_0 : i32, i32
  }
  func.func @transform_6(%arg0: i32, %arg1: i32) -> (i32, i32) {
    %c0_i32 = arith.constant 0 : i32
    %c0_i32_0 = arith.constant 0 : i32
    %c0_i32_1 = arith.constant 0 : i32
    return %c0_i32, %c0_i32_0 : i32, i32
  }
  func.func @transform_7(%arg0: i32, %arg1: i32) -> (i32, i32) {
    %c0_i32 = arith.constant 0 : i32
    %c0_i32_0 = arith.constant 0 : i32
    %c0_i32_1 = arith.constant 0 : i32
    return %c0_i32, %c0_i32_0 : i32, i32
  }
  func.func @transform_8(%arg0: i32, %arg1: i32) -> (i32, i32) {
    %c0_i32 = arith.constant 0 : i32
    %c0_i32_0 = arith.constant 0 : i32
    %c0_i32_1 = arith.constant 0 : i32
    return %c0_i32, %c0_i32_0 : i32, i32
  }
  func.func @transform_9(%arg0: i32, %arg1: i32) -> (i32, i32) {
    %c0_i32 = arith.constant 0 : i32
    %c0_i32_0 = arith.constant 0 : i32
    %c0_i32_1 = arith.constant 0 : i32
    return %c0_i32, %c0_i32_0 : i32, i32
  }
  func.func @transform_10(%arg0: i32, %arg1: i32) -> (i32, i32) {
    %c0_i32 = arith.constant 0 : i32
    %c0_i32_0 = arith.constant 0 : i32
    %c0_i32_1 = arith.constant 0 : i32
    return %c0_i32, %c0_i32_0 : i32, i32
  }
  func.func @transform_11(%arg0: i32, %arg1: i32) -> (i32, i32) {
    %c0_i32 = arith.constant 0 : i32
    %c0_i32_0 = arith.constant 0 : i32
    %c0_i32_1 = arith.constant 0 : i32
    return %c0_i32, %c0_i32_0 : i32, i32
  }
  func.func @transform_12(%arg0: i32, %arg1: i32) -> (i32, i32) {
    %c0_i32 = arith.constant 0 : i32
    %c0_i32_0 = arith.constant 0 : i32
    %c0_i32_1 = arith.constant 0 : i32
    return %c0_i32, %c0_i32_0 : i32, i32
  }
  func.func @transform_13(%arg0: i32, %arg1: i32) -> (i32, i32) {
    %c0_i32 = arith.constant 0 : i32
    %c0_i32_0 = arith.constant 0 : i32
    %c0_i32_1 = arith.constant 0 : i32
    return %c0_i32, %c0_i32_0 : i32, i32
  }
  func.func @transform_14(%arg0: i32, %arg1: i32) -> (i32, i32) {
    %c0_i32 = arith.constant 0 : i32
    %c0_i32_0 = arith.constant 0 : i32
    %c0_i32_1 = arith.constant 0 : i32
    return %c0_i32, %c0_i32_0 : i32, i32
  }
  func.func @transform_15(%arg0: i32, %arg1: i32) -> (i32, i32) {
    %c0_i32 = arith.constant 0 : i32
    %c0_i32_0 = arith.constant 0 : i32
    return %arg0, %c0_i32 : i32, i32
  }
}

</mosaic_0001>

<llo_original>
// kernel: custom-call.16
$region0: #{custom-call.16}
  %s0 = inlined_call_operand.vmem [shape: f32[2,64], index: 0, kind: output, shape index: {}]

// kernel: custom-call.17
$region0: #{custom-call.17}
  %s0 = inlined_call_operand.vmem [shape: f32[2,16], index: 0, kind: output, shape index: {}]

// kernel: pointnet2_forward.3
$region0: #{pointnet2_forward.3}
  #allocation0 [shape = 'u32[]', space=smem, size = 0x4, offset = 0x4, fixed_abs, tag = 'smem constant byte address 0x4 - core index']
  #allocation1 [shape = 'u32[144,128]{1,0:T(1,128)}', space=vmem, size = 0x12000, scoped, tag = 'internal scratch']
  %s0 = inlined_call_operand.vmem [shape: bf16[256,8], index: 0, kind: input, shape index: {}]
  %s1 = inlined_call_operand.vmem [shape: bf16[8,64], index: 1, kind: input, shape index: {}]
  %s2 = inlined_call_operand.vmem [shape: f32[1,64], index: 2, kind: input, shape index: {}]
  %s3 = inlined_call_operand.vmem [shape: bf16[64,64], index: 3, kind: input, shape index: {}]
  %s4 = inlined_call_operand.vmem [shape: f32[1,64], index: 4, kind: input, shape index: {}]
  %s5 = inlined_call_operand.vmem [shape: bf16[64,128], index: 5, kind: input, shape index: {}]
  %s6 = inlined_call_operand.vmem [shape: f32[1,128], index: 6, kind: input, shape index: {}]
  %s7 = inlined_call_operand.vmem [shape: bf16[32,128], index: 7, kind: output, shape index: {}]
  %s8 = sld [smem:[#allocation0]]
  $region61: #{pointnet2_forward.3} parent=0
    _
  %s10 = ssub.s32 1, %s8
  %s11 = scalar_select 0, %s10, %s8
  loop: start=0, step=1, limit=4
  $region2: #{pointnet2_forward.3} parent=0 // loop_pre_header
    _
  $region3: #{pointnet2_forward.3} parent=0 // loop_header
    %s13 = sphi 0, %s17
    %p14 = scmp.ge.s32.totalorder %s13, 4
    %s23 = sphi 0, %s25
    %s26 = sphi 0, %s23
    %s27 = sphi 0, %s26
    %s43 = sphi 0, %s27
    %s47 = sphi 0, %s47
    %s49 = sphi 0, %s47
    %s50 = sphi 0, %s49
    %s64 = sphi 0, %s50
    %s68 = sphi 0, %s68
    %s70 = sphi 0, %s68
    %s71 = sphi 0, %s70
    %s85 = sphi 0, %s71
    %s89 = sphi 0, %s89
    %s91 = sphi 0, %s89
    %s92 = sphi 0, %s91
    %s106 = sphi 0, %s92
    %s110 = sphi 0, %s110
    %s112 = sphi 0, %s110
    %s113 = sphi 0, %s112
    %s127 = sphi 0, %s113
    %s131 = sphi 0, %s131
    %s133 = sphi 0, %s131
    %s134 = sphi 0, %s133
    %s148 = sphi 0, %s134
    %s152 = sphi 0, %s152
    %s154 = sphi 0, %s152
    %s155 = sphi 0, %s154
    %s169 = sphi 0, %s155
    %s175 = sphi 0, %s177
    %s178 = sphi 0, %s175
    %s179 = sphi 0, %s178
    %s195 = sphi 0, %s179
  $region4: #{pointnet2_forward.3} parent=0 // loop_header_branch
    %16 = sbr.rel (%p14) target = $region8
  $region5: #{pointnet2_forward.3} parent=0 // loop_body
    %s18 = ssub.s32 %s13, 1
    %s19 = ssub.s32 %s13, 2
    %s20 = sadd.s32 %s13, 1
    %s21 = ssub.s32 %s13, %s20
    %p22 = scmp.eq.s32.totalorder %s21, 0
    %s24 = sadd.s32 %s23, 1
    %s25 = scalar_select %p22, %s23, %s24
    %p28 = pneg %p22
    %p29 = scmp.eq.s32.totalorder %s13, 1
    %p30 = por %p28, %p29
    %p31 = scmp.ne.s32.totalorder %s23, %s26
    %p32 = scmp.eq.s32.totalorder %s13, 0
    %p33 = por %p31, %p32
    %p34 = scmp.ne.s32.totalorder %s23, %s26
    %p35 = scmp.eq.s32.totalorder %s18, 1
    %p36 = por %p34, %p35
    %p37 = scmp.ne.s32.totalorder %s26, %s27
    %p38 = scmp.eq.s32.totalorder %s18, 0
    %p39 = por %p37, %p38
    %p40 = scmp.ne.s32.totalorder %s26, %s27
    %p41 = scmp.eq.s32.totalorder %s19, 1
    %p42 = por %p40, %p41
    %p44 = scmp.ne.s32.totalorder %s27, %s43
    %p45 = scmp.eq.s32.totalorder %s19, 0
    %p46 = por %p44, %p45
    %s48 = sadd.s32 %s47, 1
    %p51 = scmp.eq.s32.totalorder %s13, 1
    %p52 = scmp.ne.s32.totalorder %s47, %s49
    %p53 = scmp.eq.s32.totalorder %s13, 0
    %p54 = por %p52, %p53
    %p55 = scmp.ne.s32.totalorder %s47, %s49
    %p56 = scmp.eq.s32.totalorder %s18, 1
    %p57 = por %p55, %p56
    %p58 = scmp.ne.s32.totalorder %s49, %s50
    %p59 = scmp.eq.s32.totalorder %s18, 0
    %p60 = por %p58, %p59
    %p61 = scmp.ne.s32.totalorder %s49, %s50
    %p62 = scmp.eq.s32.totalorder %s19, 1
    %p63 = por %p61, %p62
    %p65 = scmp.ne.s32.totalorder %s50, %s64
    %p66 = scmp.eq.s32.totalorder %s19, 0
    %p67 = por %p65, %p66
    %s69 = sadd.s32 %s68, 1
    %p72 = scmp.eq.s32.totalorder %s13, 1
    %p73 = scmp.ne.s32.totalorder %s68, %s70
    %p74 = scmp.eq.s32.totalorder %s13, 0
    %p75 = por %p73, %p74
    %p76 = scmp.ne.s32.totalorder %s68, %s70
    %p77 = scmp.eq.s32.totalorder %s18, 1
    %p78 = por %p76, %p77
    %p79 = scmp.ne.s32.totalorder %s70, %s71
    %p80 = scmp.eq.s32.totalorder %s18, 0
    %p81 = por %p79, %p80
    %p82 = scmp.ne.s32.totalorder %s70, %s71
    %p83 = scmp.eq.s32.totalorder %s19, 1
    %p84 = por %p82, %p83
    %p86 = scmp.ne.s32.totalorder %s71, %s85
    %p87 = scmp.eq.s32.totalorder %s19, 0
    %p88 = por %p86, %p87
    %s90 = sadd.s32 %s89, 1
    %p93 = scmp.eq.s32.totalorder %s13, 1
    %p94 = scmp.ne.s32.totalorder %s89, %s91
    %p95 = scmp.eq.s32.totalorder %s13, 0
    %p96 = por %p94, %p95
    %p97 = scmp.ne.s32.totalorder %s89, %s91
    %p98 = scmp.eq.s32.totalorder %s18, 1
    %p99 = por %p97, %p98
    %p100 = scmp.ne.s32.totalorder %s91, %s92
    %p101 = scmp.eq.s32.totalorder %s18, 0
    %p102 = por %p100, %p101
    %p103 = scmp.ne.s32.totalorder %s91, %s92
    %p104 = scmp.eq.s32.totalorder %s19, 1
    %p105 = por %p103, %p104
    %p107 = scmp.ne.s32.totalorder %s92, %s106
    %p108 = scmp.eq.s32.totalorder %s19, 0
    %p109 = por %p107, %p108
    %s111 = sadd.s32 %s110, 1
    %p114 = scmp.eq.s32.totalorder %s13, 1
    %p115 = scmp.ne.s32.totalorder %s110, %s112
    %p116 = scmp.eq.s32.totalorder %s13, 0
    %p117 = por %p115, %p116
    %p118 = scmp.ne.s32.totalorder %s110, %s112
    %p119 = scmp.eq.s32.totalorder %s18, 1
    %p120 = por %p118, %p119
    %p121 = scmp.ne.s32.totalorder %s112, %s113
    %p122 = scmp.eq.s32.totalorder %s18, 0
    %p123 = por %p121, %p122
    %p124 = scmp.ne.s32.totalorder %s112, %s113
    %p125 = scmp.eq.s32.totalorder %s19, 1
    %p126 = por %p124, %p125
    %p128 = scmp.ne.s32.totalorder %s113, %s127
    %p129 = scmp.eq.s32.totalorder %s19, 0
    %p130 = por %p128, %p129
    %s132 = sadd.s32 %s131, 1
    %p135 = scmp.eq.s32.totalorder %s13, 1
    %p136 = scmp.ne.s32.totalorder %s131, %s133
    %p137 = scmp.eq.s32.totalorder %s13, 0
    %p138 = por %p136, %p137
    %p139 = scmp.ne.s32.totalorder %s131, %s133
    %p140 = scmp.eq.s32.totalorder %s18, 1
    %p141 = por %p139, %p140
    %p142 = scmp.ne.s32.totalorder %s133, %s134
    %p143 = scmp.eq.s32.totalorder %s18, 0
    %p144 = por %p142, %p143
    %p145 = scmp.ne.s32.totalorder %s133, %s134
    %p146 = scmp.eq.s32.totalorder %s19, 1
    %p147 = por %p145, %p146
    %p149 = scmp.ne.s32.totalorder %s134, %s148
    %p150 = scmp.eq.s32.totalorder %s19, 0
    %p151 = por %p149, %p150
    %s153 = sadd.s32 %s152, 1
    %p156 = scmp.eq.s32.totalorder %s13, 1
    %p157 = scmp.ne.s32.totalorder %s152, %s154
    %p158 = scmp.eq.s32.totalorder %s13, 0
    %p159 = por %p157, %p158
    %p160 = scmp.ne.s32.totalorder %s152, %s154
    %p161 = scmp.eq.s32.totalorder %s18, 1
    %p162 = por %p160, %p161
    %p163 = scmp.ne.s32.totalorder %s154, %s155
    %p164 = scmp.eq.s32.totalorder %s18, 0
    %p165 = por %p163, %p164
    %p166 = scmp.ne.s32.totalorder %s154, %s155
    %p167 = scmp.eq.s32.totalorder %s19, 1
    %p168 = por %p166, %p167
    %p170 = scmp.ne.s32.totalorder %s155, %s169
    %p171 = scmp.eq.s32.totalorder %s19, 0
    %p172 = por %p170, %p171
    %s173 = ssub.s32 %s13, %s20
    %p174 = scmp.eq.s32.totalorder %s173, 0
    %s176 = sadd.s32 %s175, 1
    %s177 = scalar_select %p174, %s175, %s176
    %p180 = pneg %p174
    %p181 = scmp.eq.s32.totalorder %s13, 1
    %p182 = por %p180, %p181
    %p183 = scmp.ne.s32.totalorder %s175, %s178
    %p184 = scmp.eq.s32.totalorder %s13, 0
    %p185 = por %p183, %p184
    %p186 = scmp.ne.s32.totalorder %s175, %s178
    %p187 = scmp.eq.s32.totalorder %s18, 1
    %p188 = por %p186, %p187
    %p189 = scmp.ne.s32.totalorder %s178, %s179
    %p190 = scmp.eq.s32.totalorder %s18, 0
    %p191 = por %p189, %p190
    %p192 = scmp.ne.s32.totalorder %s178, %s179
    %p193 = scmp.eq.s32.totalorder %s19, 1
    %p194 = por %p192, %p193
    %p196 = scmp.ne.s32.totalorder %s179, %s195
    %p197 = scmp.eq.s32.totalorder %s19, 0
    %p198 = por %p196, %p197
    %p199 = scmp.le.s32.totalorder 1, %s13
    %p200 = scmp.lt.s32.totalorder %s13, 3
    %p201 = pnand %p199, %p200
    %p202 = pneg %p201
    // Predicated region
    $region9: #{pointnet2_forward.3} parent=5 // pred_check
      _
    $region10: #{pointnet2_forward.3} parent=5 // pred_check_branch
      %204 = sbr.rel (%p201) target = $region12
    $region11: #{pointnet2_forward.3} parent=5 // pred_region
      %s205 = ssub.s32 %s13, 1
      // Predicated region
      $region13: #{pointnet2_forward.3} parent=11 // pred_check
        %p206 = pneg %p60
      $region14: #{pointnet2_forward.3} parent=11 // pred_check_branch
        %208 = sbr.rel (%p206) target = $region16
      $region15: #{pointnet2_forward.3} parent=11 // pred_region
        _
      $region16: #{pointnet2_forward.3} parent=11 // pred_fallthru
        _
      // Predicated region
      $region17: #{pointnet2_forward.3} parent=11 // pred_check
        %p209 = pneg %p81
      $region18: #{pointnet2_forward.3} parent=11 // pred_check_branch
        %211 = sbr.rel (%p209) target = $region20
      $region19: #{pointnet2_forward.3} parent=11 // pred_region
        _
      $region20: #{pointnet2_forward.3} parent=11 // pred_fallthru
        _
      // Predicated region
      $region21: #{pointnet2_forward.3} parent=11 // pred_check
        %p212 = pneg %p102
      $region22: #{pointnet2_forward.3} parent=11 // pred_check_branch
        %214 = sbr.rel (%p212) target = $region24
      $region23: #{pointnet2_forward.3} parent=11 // pred_region
        _
      $region24: #{pointnet2_forward.3} parent=11 // pred_fallthru
        _
      // Predicated region
      $region25: #{pointnet2_forward.3} parent=11 // pred_check
        %p215 = pneg %p123
      $region26: #{pointnet2_forward.3} parent=11 // pred_check_branch
        %217 = sbr.rel (%p215) target = $region28
      $region27: #{pointnet2_forward.3} parent=11 // pred_region
        _
      $region28: #{pointnet2_forward.3} parent=11 // pred_fallthru
        _
      // Predicated region
      $region29: #{pointnet2_forward.3} parent=11 // pred_check
        %p218 = pneg %p144
      $region30: #{pointnet2_forward.3} parent=11 // pred_check_branch
        %220 = sbr.rel (%p218) target = $region32
      $region31: #{pointnet2_forward.3} parent=11 // pred_region
        _
      $region32: #{pointnet2_forward.3} parent=11 // pred_fallthru
        _
      // Predicated region
      $region33: #{pointnet2_forward.3} parent=11 // pred_check
        %p221 = pneg %p165
      $region34: #{pointnet2_forward.3} parent=11 // pred_check_branch
        %223 = sbr.rel (%p221) target = $region36
      $region35: #{pointnet2_forward.3} parent=11 // pred_region
        _
      $region36: #{pointnet2_forward.3} parent=11 // pred_fallthru
        _
    $region12: #{pointnet2_forward.3} parent=5 // pred_fallthru
      _
    %p224 = scmp.lt.s32.totalorder %s13, 2
    // Predicated region
    $region37: #{pointnet2_forward.3} parent=5 // pred_check
      %p225 = pneg %p224
    $region38: #{pointnet2_forward.3} parent=5 // pred_check_branch
      %227 = sbr.rel (%p225) target = $region40
    $region39: #{pointnet2_forward.3} parent=5 // pred_region
      // Predicated region
      $region41: #{pointnet2_forward.3} parent=39 // pred_check
        %p228 = pneg %p33
      $region42: #{pointnet2_forward.3} parent=39 // pred_check_branch
        %230 = sbr.rel (%p228) target = $region44
      $region43: #{pointnet2_forward.3} parent=39 // pred_region
        %s231 = smul.u32 16, %s13
        %p232 = scmp.lt.s32.totalorder %s231, 31
        %s233 = scalar_select %p232, %s231, 31
        %s234 = smul.addr %s233, 4
        %s235 = scalar_lea.vmem %s0, %s234
        %s236 = smul.u32 16, %s13
      $region44: #{pointnet2_forward.3} parent=39 // pred_fallthru
        _
    $region40: #{pointnet2_forward.3} parent=5 // pred_fallthru
      _
    %p237 = scmp.le.s32.totalorder 1, %s13
    %p238 = scmp.lt.s32.totalorder %s13, 3
    %p239 = pnand %p237, %p238
    %p240 = pneg %p239
    // Predicated region
    $region45: #{pointnet2_forward.3} parent=5 // pred_check
      _
    $region46: #{pointnet2_forward.3} parent=5 // pred_check_branch
      %242 = sbr.rel (%p239) target = $region48
    $region47: #{pointnet2_forward.3} parent=5 // pred_region
      %s243 = ssub.s32 %s13, 1
      %s244 = smul.u32 16, %s18
      %p245 = scmp.lt.s32.totalorder %s244, 31
      %s246 = scalar_select %p245, %s244, 31
      %s247 = smul.addr %s246, 4
      %s248 = scalar_lea.vmem %s0, %s247
      %p249 = pneg %p39
      %p250 = pneg %p36
      %p251 = pneg %p60
      %p252 = pneg %p57
      %p253 = pneg %p81
      %p254 = pneg %p78
      %p255 = pneg %p102
      %p256 = pneg %p99
      %p257 = pneg %p123
      %p258 = pneg %p120
      %p259 = pneg %p144
      %p260 = pneg %p141
      %p261 = pneg %p165
      %p262 = pneg %p162
      %p263 = pneg %p191
      %p264 = pneg %p188
      %s265 = smul.u32 2, %s18
      %p266 = scmp.lt.s32.totalorder %s265, 3
      %s267 = scalar_select %p266, %s265, 3
      %s268 = smul.addr %s267, 4
      %s269 = scalar_lea.vmem %s7, %s268
      %s270 = smul.u32 16, %s18
      %p271 = scmp.lt.s32.totalorder %s270, 31
      %s272 = scalar_select %p271, %s270, 31
      %s273 = smul.addr %s272, 4
      %s274 = scalar_lea.vmem %s0, %s273
      %s275 = smul.u32 16, %s18
      %s276 = smul.u32 2, %s18
      %p277 = scmp.lt.s32.totalorder %s276, 3
      %s278 = scalar_select %p277, %s276, 3
      %s279 = smul.addr %s278, 4
      %s280 = scalar_lea.vmem %s7, %s279
      %s281 = smul.u32 2, %s18
      %v283 = vld [vmem:[%s274] sm:$0xf]
      %v284 = vld [vmem:[%s274 + $0x4] sm:$0xf]
      %v285 = vld [vmem:[%s274 + $0x8] sm:$0xf]
      %v286 = vld [vmem:[%s274 + $0xc] sm:$0xf]
      %v287 = vld [vmem:[%s274 + $0x10] sm:$0xf]
      %v288 = vld [vmem:[%s274 + $0x14] sm:$0xf]
      %v289 = vld [vmem:[%s274 + $0x18] sm:$0xf]
      %v290 = vld [vmem:[%s274 + $0x1c] sm:$0xf]
      %v291 = vld [vmem:[%s274 + $0x20] sm:$0xf]
      %v292 = vld [vmem:[%s274 + $0x24] sm:$0xf]
      %v293 = vld [vmem:[%s274 + $0x28] sm:$0xf]
      %v294 = vld [vmem:[%s274 + $0x2c] sm:$0xf]
      %v295 = vld [vmem:[%s274 + $0x30] sm:$0xf]
      %v296 = vld [vmem:[%s274 + $0x34] sm:$0xf]
      %v297 = vld [vmem:[%s274 + $0x38] sm:$0xf]
      %v298 = vld [vmem:[%s274 + $0x3c] sm:$0xf]
      %v299 = vld [vmem:[%s1] sm:$0xf]
      %v300 = vld [vmem:[%s2] sm:$0x1]
      %v302 = vlaneseq
      %v303 = vshrl.u32 %v302, 7
      %v304 = vsub.s32 0, %v303
      %v305 = vrot.slane %v300, %v304
      %v323 = vunpack.c.l.b16 %v283
      %v324 = vunpack.c.l.b16 %v284
      %v325 = vunpack.c.l.b16 %v285
      %v326 = vunpack.c.l.b16 %v286
      %v327 = vunpack.c.l.b16 %v287
      %v328 = vunpack.c.l.b16 %v288
      %v329 = vunpack.c.l.b16 %v289
      %v330 = vunpack.c.l.b16 %v290
      %v331 = vunpack.c.l.b16 %v291
      %v332 = vunpack.c.l.b16 %v292
      %v333 = vunpack.c.l.b16 %v293
      %v334 = vunpack.c.l.b16 %v294
      %v335 = vunpack.c.l.b16 %v295
      %v336 = vunpack.c.l.b16 %v296
      %v337 = vunpack.c.l.b16 %v297
      %v338 = vunpack.c.l.b16 %v298
      %v339 = vpack.c.b16 %v324, %v323
      %v340 = vpack.c.b16 %v326, %v325
      %v341 = vpack.c.b16 %v328, %v327
      %v342 = vpack.c.b16 %v330, %v329
      %v343 = vpack.c.b16 %v332, %v331
      %v344 = vpack.c.b16 %v334, %v333
      %v345 = vpack.c.b16 %v336, %v335
      %v346 = vpack.c.b16 %v338, %v337
      %vm347 = vcmask 64512
      %v349 = vsel %vm347, %v339, 0
      %v352 = vsel %vm347, %v340, 0
      %v355 = vsel %vm347, %v341, 0
      %v358 = vsel %vm347, %v342, 0
      %v361 = vsel %vm347, %v343, 0
      %v364 = vsel %vm347, %v344, 0
      %v367 = vsel %vm347, %v345, 0
      %v370 = vsel %vm347, %v346, 0
      %vm372 = vcmask 1043456
      %v374 = vsel %vm372, %v299, 0
      %376 = vmatprep.subr.bf16.mxu0 0
      %377 = vmatpush1.bf16.msra.mxu0 %v374
      %378 = vmatprep.subr.bf16.mxu0 0
      %379 = vmatpush1.bf16.msra.mxu0 0
      %380 = vmatprep.subr.bf16.mxu0 0
      %381 = vmatpush1.bf16.msra.mxu0 0
      %382 = vmatprep.subr.bf16.mxu0 0
      %383 = vmatpush1.bf16.msra.mxu0 0
      %384 = vmatprep.subr.bf16.mxu0 0
      %385 = vmatpush1.bf16.msra.mxu0 0
      %386 = vmatprep.subr.bf16.mxu0 0
      %387 = vmatpush1.bf16.msra.mxu0 0
      %388 = vmatprep.subr.bf16.mxu0 0
      %389 = vmatpush1.bf16.msra.mxu0 0
      %390 = vmatprep.subr.bf16.mxu0 0
      %391 = vmatpush1.bf16.msra.mxu0 0
      %392 = vmatprep.subr.bf16.mxu0 0
      %393 = vmatpush1.bf16.msra.mxu0 0
      %394 = vmatprep.subr.bf16.mxu0 0
      %395 = vmatpush1.bf16.msra.mxu0 0
      %396 = vmatprep.subr.bf16.mxu0 0
      %397 = vmatpush1.bf16.msra.mxu0 0
      %398 = vmatprep.subr.bf16.mxu0 0
      %399 = vmatpush1.bf16.msra.mxu0 0
      %400 = vmatprep.subr.bf16.mxu0 0
      %401 = vmatpush1.bf16.msra.mxu0 0
      %402 = vmatprep.subr.bf16.mxu0 0
      %403 = vmatpush1.bf16.msra.mxu0 0
      %404 = vmatprep.subr.bf16.mxu0 0
      %405 = vmatpush1.bf16.msra.mxu0 0
      %406 = vmatprep.subr.bf16.mxu0 0
      %407 = vmatpush1.bf16.msra.mxu0 0
      %408 = vmatprep.mubr.bf16.mxu0 0
      %409 = vmatmul.mubr.bf16.gmra.mrb[0].mxu0 %v349
      %v410 = vpop.f32.mrb[0].mxu0
      %v411 = vadd.f32 %v305, %v410
      %v412 = vpop.f32.mrb[0].mxu0
      %v413 = vpop.f32.mrb[0].mxu0
      %v414 = vadd.f32 %v305, %v413
      %v415 = vpop.f32.mrb[0].mxu0
      %416 = vmatprep.mubr.bf16.mxu0 0
      %417 = vmatmul.mubr.bf16.gmra.mrb[0].mxu0 %v352
      %v418 = vpop.f32.mrb[0].mxu0
      %v419 = vadd.f32 %v305, %v418
      %v420 = vpop.f32.mrb[0].mxu0
      %v421 = vpop.f32.mrb[0].mxu0
      %v422 = vadd.f32 %v305, %v421
      %v423 = vpop.f32.mrb[0].mxu0
      %424 = vmatprep.mubr.bf16.mxu0 0
      %425 = vmatmul.mubr.bf16.gmra.mrb[0].mxu0 %v355
      %v426 = vpop.f32.mrb[0].mxu0
      %v427 = vadd.f32 %v305, %v426
      %v428 = vpop.f32.mrb[0].mxu0
      %v429 = vpop.f32.mrb[0].mxu0
      %v430 = vadd.f32 %v305, %v429
      %v431 = vpop.f32.mrb[0].mxu0
      %432 = vmatprep.mubr.bf16.mxu0 0
      %433 = vmatmul.mubr.bf16.gmra.mrb[0].mxu0 %v358
      %v434 = vpop.f32.mrb[0].mxu0
      %v435 = vadd.f32 %v305, %v434
      %v436 = vpop.f32.mrb[0].mxu0
      %v437 = vpop.f32.mrb[0].mxu0
      %v438 = vadd.f32 %v305, %v437
      %v439 = vpop.f32.mrb[0].mxu0
      %440 = vmatprep.mubr.bf16.mxu0 0
      %441 = vmatmul.mubr.bf16.gmra.mrb[0].mxu0 %v361
      %v442 = vpop.f32.mrb[0].mxu0
      %v443 = vadd.f32 %v305, %v442
      %v444 = vpop.f32.mrb[0].mxu0
      %v445 = vpop.f32.mrb[0].mxu0
      %v446 = vadd.f32 %v305, %v445
      %v447 = vpop.f32.mrb[0].mxu0
      %448 = vmatprep.mubr.bf16.mxu0 0
      %449 = vmatmul.mubr.bf16.gmra.mrb[0].mxu0 %v364
      %v450 = vpop.f32.mrb[0].mxu0
      %v451 = vadd.f32 %v305, %v450
      %v452 = vpop.f32.mrb[0].mxu0
      %v453 = vpop.f32.mrb[0].mxu0
      %v454 = vadd.f32 %v305, %v453
      %v455 = vpop.f32.mrb[0].mxu0
      %456 = vmatprep.mubr.bf16.mxu0 0
      %457 = vmatmul.mubr.bf16.gmra.mrb[0].mxu0 %v367
      %v458 = vpop.f32.mrb[0].mxu0
      %v459 = vadd.f32 %v305, %v458
      %v460 = vpop.f32.mrb[0].mxu0
      %v461 = vpop.f32.mrb[0].mxu0
      %v462 = vadd.f32 %v305, %v461
      %v463 = vpop.f32.mrb[0].mxu0
      %464 = vmatprep.mubr.bf16.mxu0 0
      %465 = vmatmul.mubr.bf16.gmra.mrb[0].mxu0 %v370
      %v466 = vpop.f32.mrb[0].mxu0
      %v467 = vadd.f32 %v305, %v466
      %v468 = vpop.f32.mrb[0].mxu0
      %v469 = vpop.f32.mrb[0].mxu0
      %v470 = vadd.f32 %v305, %v469
      %v471 = vpop.f32.mrb[0].mxu0
      %472 = vdwg.mxu0
      %v473 = vmax.f32 %v411, 0.0
      %v474 = vmax.f32 %v414, 0.0
      %v475 = vmax.f32 %v419, 0.0
      %v476 = vmax.f32 %v422, 0.0
      %v477 = vmax.f32 %v427, 0.0
      %v478 = vmax.f32 %v430, 0.0
      %v479 = vmax.f32 %v435, 0.0
      %v480 = vmax.f32 %v438, 0.0
      %v481 = vmax.f32 %v443, 0.0
      %v482 = vmax.f32 %v446, 0.0
      %v483 = vmax.f32 %v451, 0.0
      %v484 = vmax.f32 %v454, 0.0
      %v485 = vmax.f32 %v459, 0.0
      %v486 = vmax.f32 %v462, 0.0
      %v487 = vmax.f32 %v467, 0.0
      %v488 = vmax.f32 %v470, 0.0
      %v489 = vpack.c.bf16 %v474, %v473
      %v490 = vpack.c.bf16 %v476, %v475
      %v491 = vpack.c.bf16 %v478, %v477
      %v492 = vpack.c.bf16 %v480, %v479
      %v493 = vpack.c.bf16 %v482, %v481
      %v494 = vpack.c.bf16 %v484, %v483
      %v495 = vpack.c.bf16 %v486, %v485
      %v496 = vpack.c.bf16 %v488, %v487
      %v497 = vld [vmem:[%s3] sm:$0xf]
      %v498 = vld [vmem:[%s3 + $0x4] sm:$0xf]
      %v499 = vld [vmem:[%s3 + $0x8] sm:$0xf]
      %v500 = vld [vmem:[%s3 + $0xc] sm:$0xf]
      %v501 = vld [vmem:[%s3 + $0x10] sm:$0xf]
      %v502 = vld [vmem:[%s3 + $0x14] sm:$0xf]
      %v503 = vld [vmem:[%s3 + $0x18] sm:$0xf]
      %v504 = vld [vmem:[%s3 + $0x1c] sm:$0xf]
      %v505 = vld [vmem:[%s4] sm:$0x1]
      %v507 = vlaneseq
      %v508 = vshrl.u32 %v507, 7
      %v509 = vsub.s32 0, %v508
      %v510 = vrot.slane %v505, %v509
      %v520 = vunpack.c.l.b16 %v497
      %v521 = vunpack.c.l.b16 %v498
      %v522 = vunpack.c.l.b16 %v499
      %v523 = vunpack.c.l.b16 %v500
      %v524 = vunpack.c.l.b16 %v501
      %v525 = vunpack.c.l.b16 %v502
      %v526 = vunpack.c.l.b16 %v503
      %v527 = vunpack.c.l.b16 %v504
      %v528 = vpack.c.b16 %v521, %v520
      %v529 = vpack.c.b16 %v523, %v522
      %v530 = vpack.c.b16 %v525, %v524
      %v531 = vpack.c.b16 %v527, %v526
      %vm536 = vcmask 523264
      %v538 = vsel %vm536, %v489, 0
      %v541 = vsel %vm536, %v490, 0
      %v544 = vsel %vm536, %v491, 0
      %v547 = vsel %vm536, %v492, 0
      %v550 = vsel %vm536, %v493, 0
      %v553 = vsel %vm536, %v494, 0
      %v556 = vsel %vm536, %v495, 0
      %v559 = vsel %vm536, %v496, 0
      %561 = vmatprep.subr.bf16.mxu0 0
      %562 = vmatpush1.bf16.msra.mxu0 %v528
      %563 = vmatprep.subr.bf16.mxu0 0
      %564 = vmatpush1.bf16.msra.mxu0 %v529
      %565 = vmatprep.subr.bf16.mxu0 0
      %566 = vmatpush1.bf16.msra.mxu0 %v530
      %567 = vmatprep.subr.bf16.mxu0 0
      %568 = vmatpush1.bf16.msra.mxu0 %v531
      %569 = vmatprep.subr.bf16.mxu0 0
      %570 = vmatpush1.bf16.msra.mxu0 0
      %571 = vmatprep.subr.bf16.mxu0 0
      %572 = vmatpush1.bf16.msra.mxu0 0
      %573 = vmatprep.subr.bf16.mxu0 0
      %574 = vmatpush1.bf16.msra.mxu0 0
      %575 = vmatprep.subr.bf16.mxu0 0
      %576 = vmatpush1.bf16.msra.mxu0 0
      %577 = vmatprep.subr.bf16.mxu0 0
      %578 = vmatpush1.bf16.msra.mxu0 0
      %579 = vmatprep.subr.bf16.mxu0 0
      %580 = vmatpush1.bf16.msra.mxu0 0
      %581 = vmatprep.subr.bf16.mxu0 0
      %582 = vmatpush1.bf16.msra.mxu0 0
      %583 = vmatprep.subr.bf16.mxu0 0
      %584 = vmatpush1.bf16.msra.mxu0 0
      %585 = vmatprep.subr.bf16.mxu0 0
      %586 = vmatpush1.bf16.msra.mxu0 0
      %587 = vmatprep.subr.bf16.mxu0 0
      %588 = vmatpush1.bf16.msra.mxu0 0
      %589 = vmatprep.subr.bf16.mxu0 0
      %590 = vmatpush1.bf16.msra.mxu0 0
      %591 = vmatprep.subr.bf16.mxu0 0
      %592 = vmatpush1.bf16.msra.mxu0 0
      %593 = vmatprep.mubr.bf16.mxu0 0
      %594 = vmatmul.mubr.bf16.gmra.mrb[0].mxu0 %v538
      %v595 = vpop.f32.mrb[0].mxu0
      %v596 = vadd.f32 %v510, %v595
      %v597 = vpop.f32.mrb[0].mxu0
      %v598 = vpop.f32.mrb[0].mxu0
      %v599 = vadd.f32 %v510, %v598
      %v600 = vpop.f32.mrb[0].mxu0
      %601 = vmatprep.mubr.bf16.mxu0 0
      %602 = vmatmul.mubr.bf16.gmra.mrb[0].mxu0 %v541
      %v603 = vpop.f32.mrb[0].mxu0
      %v604 = vadd.f32 %v510, %v603
      %v605 = vpop.f32.mrb[0].mxu0
      %v606 = vpop.f32.mrb[0].mxu0
      %v607 = vadd.f32 %v510, %v606
      %v608 = vpop.f32.mrb[0].mxu0
      %609 = vmatprep.mubr.bf16.mxu0 0
      %610 = vmatmul.mubr.bf16.gmra.mrb[0].mxu0 %v544
      %v611 = vpop.f32.mrb[0].mxu0
      %v612 = vadd.f32 %v510, %v611
      %v613 = vpop.f32.mrb[0].mxu0
      %v614 = vpop.f32.mrb[0].mxu0
      %v615 = vadd.f32 %v510, %v614
      %v616 = vpop.f32.mrb[0].mxu0
      %617 = vmatprep.mubr.bf16.mxu0 0
      %618 = vmatmul.mubr.bf16.gmra.mrb[0].mxu0 %v547
      %v619 = vpop.f32.mrb[0].mxu0
      %v620 = vadd.f32 %v510, %v619
      %v621 = vpop.f32.mrb[0].mxu0
      %v622 = vpop.f32.mrb[0].mxu0
      %v623 = vadd.f32 %v510, %v622
      %v624 = vpop.f32.mrb[0].mxu0
      %625 = vmatprep.mubr.bf16.mxu0 0
      %626 = vmatmul.mubr.bf16.gmra.mrb[0].mxu0 %v550
      %v627 = vpop.f32.mrb[0].mxu0
      %v628 = vadd.f32 %v510, %v627
      %v629 = vpop.f32.mrb[0].mxu0
      %v630 = vpop.f32.mrb[0].mxu0
      %v631 = vadd.f32 %v510, %v630
      %v632 = vpop.f32.mrb[0].mxu0
      %633 = vmatprep.mubr.bf16.mxu0 0
      %634 = vmatmul.mubr.bf16.gmra.mrb[0].mxu0 %v553
      %v635 = vpop.f32.mrb[0].mxu0
      %v636 = vadd.f32 %v510, %v635
      %v637 = vpop.f32.mrb[0].mxu0
      %v638 = vpop.f32.mrb[0].mxu0
      %v639 = vadd.f32 %v510, %v638
      %v640 = vpop.f32.mrb[0].mxu0
      %641 = vmatprep.mubr.bf16.mxu0 0
      %642 = vmatmul.mubr.bf16.gmra.mrb[0].mxu0 %v556
      %v643 = vpop.f32.mrb[0].mxu0
      %v644 = vadd.f32 %v510, %v643
      %v645 = vpop.f32.mrb[0].mxu0
      %v646 = vpop.f32.mrb[0].mxu0
      %v647 = vadd.f32 %v510, %v646
      %v648 = vpop.f32.mrb[0].mxu0
      %649 = vmatprep.mubr.bf16.mxu0 0
      %650 = vmatmul.mubr.bf16.gmra.mrb[0].mxu0 %v559
      %v651 = vpop.f32.mrb[0].mxu0
      %v652 = vadd.f32 %v510, %v651
      %v653 = vpop.f32.mrb[0].mxu0
      %v654 = vpop.f32.mrb[0].mxu0
      %v655 = vadd.f32 %v510, %v654
      %v656 = vpop.f32.mrb[0].mxu0
      %657 = vdwg.mxu0
      %v658 = vmax.f32 %v596, 0.0
      %v659 = vmax.f32 %v599, 0.0
      %v660 = vmax.f32 %v604, 0.0
      %v661 = vmax.f32 %v607, 0.0
      %v662 = vmax.f32 %v612, 0.0
      %v663 = vmax.f32 %v615, 0.0
      %v664 = vmax.f32 %v620, 0.0
      %v665 = vmax.f32 %v623, 0.0
      %v666 = vmax.f32 %v628, 0.0
      %v667 = vmax.f32 %v631, 0.0
      %v668 = vmax.f32 %v636, 0.0
      %v669 = vmax.f32 %v639, 0.0
      %v670 = vmax.f32 %v644, 0.0
      %v671 = vmax.f32 %v647, 0.0
      %v672 = vmax.f32 %v652, 0.0
      %v673 = vmax.f32 %v655, 0.0
      %v674 = vpack.c.bf16 %v659, %v658
      %v675 = vpack.c.bf16 %v661, %v660
      %v676 = vpack.c.bf16 %v663, %v662
      %v677 = vpack.c.bf16 %v665, %v664
      %v678 = vpack.c.bf16 %v667, %v666
      %v679 = vpack.c.bf16 %v669, %v668
      %v680 = vpack.c.bf16 %v671, %v670
      %v681 = vpack.c.bf16 %v673, %v672
      %v682 = vld [vmem:[%s5] sm:$0xf]
      %v683 = vld [vmem:[%s5 + $0x4] sm:$0xf]
      %v684 = vld [vmem:[%s5 + $0x8] sm:$0xf]
      %v685 = vld [vmem:[%s5 + $0xc] sm:$0xf]
      %v686 = vld [vmem:[%s5 + $0x10] sm:$0xf]
      %v687 = vld [vmem:[%s5 + $0x14] sm:$0xf]
      %v688 = vld [vmem:[%s5 + $0x18] sm:$0xf]
      %v689 = vld [vmem:[%s5 + $0x1c] sm:$0xf]
      %v690 = vld [vmem:[%s6] sm:$0x1]
      %v692 = vlaneseq
      %v693 = vshrl.u32 %v692, 7
      %v694 = vsub.s32 0, %v693
      %v695 = vrot.slane %v690, %v694
      %v705 = vunpack.c.l.b16 %v682
      %v706 = vunpack.c.l.b16 %v683
      %v707 = vunpack.c.l.b16 %v684
      %v708 = vunpack.c.l.b16 %v685
      %v709 = vunpack.c.l.b16 %v686
      %v710 = vunpack.c.l.b16 %v687
      %v711 = vunpack.c.l.b16 %v688
      %v712 = vunpack.c.l.b16 %v689
      %v713 = vpack.c.b16 %v706, %v705
      %v714 = vpack.c.b16 %v708, %v707
      %v715 = vpack.c.b16 %v710, %v709
      %v716 = vpack.c.b16 %v712, %v711
      %v722 = vsel %vm536, %v674, 0
      %v725 = vsel %vm536, %v675, 0
      %v728 = vsel %vm536, %v676, 0
      %v731 = vsel %vm536, %v677, 0
      %v734 = vsel %vm536, %v678, 0
      %v737 = vsel %vm536, %v679, 0
      %v740 = vsel %vm536, %v680, 0
      %v743 = vsel %vm536, %v681, 0
      %745 = vmatprep.subr.bf16.mxu0 0
      %746 = vmatpush1.bf16.msra.mxu0 %v713
      %747 = vmatprep.subr.bf16.mxu0 0
      %748 = vmatpush1.bf16.msra.mxu0 %v714
      %749 = vmatprep.subr.bf16.mxu0 0
      %750 = vmatpush1.bf16.msra.mxu0 %v715
      %751 = vmatprep.subr.bf16.mxu0 0
      %752 = vmatpush1.bf16.msra.mxu0 %v716
      %753 = vmatprep.subr.bf16.mxu0 0
      %754 = vmatpush1.bf16.msra.mxu0 0
      %755 = vmatprep.subr.bf16.mxu0 0
      %756 = vmatpush1.bf16.msra.mxu0 0
      %757 = vmatprep.subr.bf16.mxu0 0
      %758 = vmatpush1.bf16.msra.mxu0 0
      %759 = vmatprep.subr.bf16.mxu0 0
      %760 = vmatpush1.bf16.msra.mxu0 0
      %761 = vmatprep.subr.bf16.mxu0 0
      %762 = vmatpush1.bf16.msra.mxu0 0
      %763 = vmatprep.subr.bf16.mxu0 0
      %764 = vmatpush1.bf16.msra.mxu0 0
      %765 = vmatprep.subr.bf16.mxu0 0
      %766 = vmatpush1.bf16.msra.mxu0 0
      %767 = vmatprep.subr.bf16.mxu0 0
      %768 = vmatpush1.bf16.msra.mxu0 0
      %769 = vmatprep.subr.bf16.mxu0 0
      %770 = vmatpush1.bf16.msra.mxu0 0
      %771 = vmatprep.subr.bf16.mxu0 0
      %772 = vmatpush1.bf16.msra.mxu0 0
      %773 = vmatprep.subr.bf16.mxu0 0
      %774 = vmatpush1.bf16.msra.mxu0 0
      %775 = vmatprep.subr.bf16.mxu0 0
      %776 = vmatpush1.bf16.msra.mxu0 0
      %777 = vmatprep.mubr.bf16.mxu0 0
      %778 = vmatmul.mubr.bf16.gmra.mrb[0].mxu0 %v722
      %v779 = vpop.f32.mrb[0].mxu0
      %v780 = vadd.f32 %v695, %v779
      %v781 = vpop.f32.mrb[0].mxu0
      %v782 = vpop.f32.mrb[0].mxu0
      %v783 = vadd.f32 %v695, %v782
      %v784 = vpop.f32.mrb[0].mxu0
      %785 = vmatprep.mubr.bf16.mxu0 0
      %786 = vmatmul.mubr.bf16.gmra.mrb[0].mxu0 %v725
      %v787 = vpop.f32.mrb[0].mxu0
      %v788 = vadd.f32 %v695, %v787
      %v789 = vpop.f32.mrb[0].mxu0
      %v790 = vpop.f32.mrb[0].mxu0
      %v791 = vadd.f32 %v695, %v790
      %v792 = vpop.f32.mrb[0].mxu0
      %793 = vmatprep.mubr.bf16.mxu0 0
      %794 = vmatmul.mubr.bf16.gmra.mrb[0].mxu0 %v728
      %v795 = vpop.f32.mrb[0].mxu0
      %v796 = vadd.f32 %v695, %v795
      %v797 = vpop.f32.mrb[0].mxu0
      %v798 = vpop.f32.mrb[0].mxu0
      %v799 = vadd.f32 %v695, %v798
      %v800 = vpop.f32.mrb[0].mxu0
      %801 = vmatprep.mubr.bf16.mxu0 0
      %802 = vmatmul.mubr.bf16.gmra.mrb[0].mxu0 %v731
      %v803 = vpop.f32.mrb[0].mxu0
      %v804 = vadd.f32 %v695, %v803
      %v805 = vpop.f32.mrb[0].mxu0
      %v806 = vpop.f32.mrb[0].mxu0
      %v807 = vadd.f32 %v695, %v806
      %v808 = vpop.f32.mrb[0].mxu0
      %809 = vmatprep.mubr.bf16.mxu0 0
      %810 = vmatmul.mubr.bf16.gmra.mrb[0].mxu0 %v734
      %v811 = vpop.f32.mrb[0].mxu0
      %v812 = vadd.f32 %v695, %v811
      %v813 = vpop.f32.mrb[0].mxu0
      %v814 = vpop.f32.mrb[0].mxu0
      %v815 = vadd.f32 %v695, %v814
      %v816 = vpop.f32.mrb[0].mxu0
      %817 = vmatprep.mubr.bf16.mxu0 0
      %818 = vmatmul.mubr.bf16.gmra.mrb[0].mxu0 %v737
      %v819 = vpop.f32.mrb[0].mxu0
      %v820 = vadd.f32 %v695, %v819
      %v821 = vpop.f32.mrb[0].mxu0
      %v822 = vpop.f32.mrb[0].mxu0
      %v823 = vadd.f32 %v695, %v822
      %v824 = vpop.f32.mrb[0].mxu0
      %825 = vmatprep.mubr.bf16.mxu0 0
      %826 = vmatmul.mubr.bf16.gmra.mrb[0].mxu0 %v740
      %v827 = vpop.f32.mrb[0].mxu0
      %v828 = vadd.f32 %v695, %v827
      %v829 = vpop.f32.mrb[0].mxu0
      %v830 = vpop.f32.mrb[0].mxu0
      %v831 = vadd.f32 %v695, %v830
      %v832 = vpop.f32.mrb[0].mxu0
      %833 = vmatprep.mubr.bf16.mxu0 0
      %834 = vmatmul.mubr.bf16.gmra.mrb[0].mxu0 %v743
      %v835 = vpop.f32.mrb[0].mxu0
      %v836 = vadd.f32 %v695, %v835
      %v837 = vpop.f32.mrb[0].mxu0
      %v838 = vpop.f32.mrb[0].mxu0
      %v839 = vadd.f32 %v695, %v838
      %v840 = vpop.f32.mrb[0].mxu0
      %841 = vdwg.mxu0
      %v842 = vmax.f32 %v780, 0.0
      %v843 = vmax.f32 %v783, 0.0
      %v844 = vmax.f32 %v788, 0.0
      %v845 = vmax.f32 %v791, 0.0
      %v846 = vmax.f32 %v796, 0.0
      %v847 = vmax.f32 %v799, 0.0
      %v848 = vmax.f32 %v804, 0.0
      %v849 = vmax.f32 %v807, 0.0
      %v850 = vmax.f32 %v812, 0.0
      %v851 = vmax.f32 %v815, 0.0
      %v852 = vmax.f32 %v820, 0.0
      %v853 = vmax.f32 %v823, 0.0
      %v854 = vmax.f32 %v828, 0.0
      %v855 = vmax.f32 %v831, 0.0
      %v856 = vmax.f32 %v836, 0.0
      %v857 = vmax.f32 %v839, 0.0
      %v858 = vrot.slane %v842, 4
      %v859 = vmax.f32 %v842, %v858
      %v860 = vrot.slane %v859, 2
      %v861 = vmax.f32 %v859, %v860
      %v862 = vrot.slane %v861, 1
      %v863 = vmax.f32 %v861, %v862
      %v864 = vrot.slane %v843, 4
      %v865 = vmax.f32 %v843, %v864
      %v866 = vrot.slane %v865, 2
      %v867 = vmax.f32 %v865, %v866
      %v868 = vrot.slane %v867, 1
      %v869 = vmax.f32 %v867, %v868
      %v870 = vrot.slane %v844, 4
      %v871 = vmax.f32 %v844, %v870
      %v872 = vrot.slane %v871, 2
      %v873 = vmax.f32 %v871, %v872
      %v874 = vrot.slane %v873, 1
      %v875 = vmax.f32 %v873, %v874
      %v876 = vrot.slane %v845, 4
      %v877 = vmax.f32 %v845, %v876
      %v878 = vrot.slane %v877, 2
      %v879 = vmax.f32 %v877, %v878
      %v880 = vrot.slane %v879, 1
      %v881 = vmax.f32 %v879, %v880
      %v882 = vrot.slane %v846, 4
      %v883 = vmax.f32 %v846, %v882
      %v884 = vrot.slane %v883, 2
      %v885 = vmax.f32 %v883, %v884
      %v886 = vrot.slane %v885, 1
      %v887 = vmax.f32 %v885, %v886
      %v888 = vrot.slane %v847, 4
      %v889 = vmax.f32 %v847, %v888
      %v890 = vrot.slane %v889, 2
      %v891 = vmax.f32 %v889, %v890
      %v892 = vrot.slane %v891, 1
      %v893 = vmax.f32 %v891, %v892
      %v894 = vrot.slane %v848, 4
      %v895 = vmax.f32 %v848, %v894
      %v896 = vrot.slane %v895, 2
      %v897 = vmax.f32 %v895, %v896
      %v898 = vrot.slane %v897, 1
      %v899 = vmax.f32 %v897, %v898
      %v900 = vrot.slane %v849, 4
      %v901 = vmax.f32 %v849, %v900
      %v902 = vrot.slane %v901, 2
      %v903 = vmax.f32 %v901, %v902
      %v904 = vrot.slane %v903, 1
      %v905 = vmax.f32 %v903, %v904
      %v906 = vrot.slane %v850, 4
      %v907 = vmax.f32 %v850, %v906
      %v908 = vrot.slane %v907, 2
      %v909 = vmax.f32 %v907, %v908
      %v910 = vrot.slane %v909, 1
      %v911 = vmax.f32 %v909, %v910
      %v912 = vrot.slane %v851, 4
      %v913 = vmax.f32 %v851, %v912
      %v914 = vrot.slane %v913, 2
      %v915 = vmax.f32 %v913, %v914
      %v916 = vrot.slane %v915, 1
      %v917 = vmax.f32 %v915, %v916
      %v918 = vrot.slane %v852, 4
      %v919 = vmax.f32 %v852, %v918
      %v920 = vrot.slane %v919, 2
      %v921 = vmax.f32 %v919, %v920
      %v922 = vrot.slane %v921, 1
      %v923 = vmax.f32 %v921, %v922
      %v924 = vrot.slane %v853, 4
      %v925 = vmax.f32 %v853, %v924
      %v926 = vrot.slane %v925, 2
      %v927 = vmax.f32 %v925, %v926
      %v928 = vrot.slane %v927, 1
      %v929 = vmax.f32 %v927, %v928
      %v930 = vrot.slane %v854, 4
      %v931 = vmax.f32 %v854, %v930
      %v932 = vrot.slane %v931, 2
      %v933 = vmax.f32 %v931, %v932
      %v934 = vrot.slane %v933, 1
      %v935 = vmax.f32 %v933, %v934
      %v936 = vrot.slane %v855, 4
      %v937 = vmax.f32 %v855, %v936
      %v938 = vrot.slane %v937, 2
      %v939 = vmax.f32 %v937, %v938
      %v940 = vrot.slane %v939, 1
      %v941 = vmax.f32 %v939, %v940
      %v942 = vrot.slane %v856, 4
      %v943 = vmax.f32 %v856, %v942
      %v944 = vrot.slane %v943, 2
      %v945 = vmax.f32 %v943, %v944
      %v946 = vrot.slane %v945, 1
      %v947 = vmax.f32 %v945, %v946
      %v948 = vrot.slane %v857, 4
      %v949 = vmax.f32 %v857, %v948
      %v950 = vrot.slane %v949, 2
      %v951 = vmax.f32 %v949, %v950
      %v952 = vrot.slane %v951, 1
      %v953 = vmax.f32 %v951, %v952
      %v954 = vpack.c.bf16 %v863, %v863
      %v955 = vpack.c.bf16 %v869, %v869
      %v956 = vpack.c.bf16 %v875, %v875
      %v957 = vpack.c.bf16 %v881, %v881
      %v958 = vpack.c.bf16 %v887, %v887
      %v959 = vpack.c.bf16 %v893, %v893
      %v960 = vpack.c.bf16 %v899, %v899
      %v961 = vpack.c.bf16 %v905, %v905
      %v962 = vpack.c.bf16 %v911, %v911
      %v963 = vpack.c.bf16 %v917, %v917
      %v964 = vpack.c.bf16 %v923, %v923
      %v965 = vpack.c.bf16 %v929, %v929
      %v966 = vpack.c.bf16 %v935, %v935
      %v967 = vpack.c.bf16 %v941, %v941
      %v968 = vpack.c.bf16 %v947, %v947
      %v969 = vpack.c.bf16 %v953, %v953
      %v986 = vunpack.c.l.b16 %v954
      %v987 = vunpack.c.l.b16 %v955
      %v988 = vunpack.c.l.b16 %v956
      %v989 = vunpack.c.l.b16 %v957
      %v990 = vunpack.c.l.b16 %v958
      %v991 = vunpack.c.l.b16 %v959
      %v992 = vunpack.c.l.b16 %v960
      %v993 = vunpack.c.l.b16 %v961
      %v994 = vunpack.c.l.b16 %v962
      %v995 = vunpack.c.l.b16 %v963
      %v996 = vunpack.c.l.b16 %v964
      %v997 = vunpack.c.l.b16 %v965
      %v998 = vunpack.c.l.b16 %v966
      %v999 = vunpack.c.l.b16 %v967
      %v1000 = vunpack.c.l.b16 %v968
      %v1001 = vunpack.c.l.b16 %v969
      %v1002 = vpack.c.b16 %v986, %v986
      %v1003 = vpack.c.b16 %v987, %v987
      %v1004 = vpack.c.b16 %v988, %v988
      %v1005 = vpack.c.b16 %v989, %v989
      %v1006 = vpack.c.b16 %v990, %v990
      %v1007 = vpack.c.b16 %v991, %v991
      %v1008 = vpack.c.b16 %v992, %v992
      %v1009 = vpack.c.b16 %v993, %v993
      %v1010 = vpack.c.b16 %v994, %v994
      %v1011 = vpack.c.b16 %v995, %v995
      %v1012 = vpack.c.b16 %v996, %v996
      %v1013 = vpack.c.b16 %v997, %v997
      %v1014 = vpack.c.b16 %v998, %v998
      %v1015 = vpack.c.b16 %v999, %v999
      %v1016 = vpack.c.b16 %v1000, %v1000
      %v1017 = vpack.c.b16 %v1001, %v1001
      %v1018 = vunpack.c.l.b16 %v1002
      %v1019 = vunpack.c.l.b16 %v1003
      %v1020 = vunpack.c.l.b16 %v1004
      %v1021 = vunpack.c.l.b16 %v1005
      %v1022 = vunpack.c.l.b16 %v1006
      %v1023 = vunpack.c.l.b16 %v1007
      %v1024 = vunpack.c.l.b16 %v1008
      %v1025 = vunpack.c.l.b16 %v1009
      %v1026 = vunpack.c.l.b16 %v1010
      %v1027 = vunpack.c.l.b16 %v1011
      %v1028 = vunpack.c.l.b16 %v1012
      %v1029 = vunpack.c.l.b16 %v1013
      %v1030 = vunpack.c.l.b16 %v1014
      %v1031 = vunpack.c.l.b16 %v1015
      %v1032 = vunpack.c.l.b16 %v1016
      %v1033 = vunpack.c.l.b16 %v1017
      %vm1034 = vcmask 1041409
      %v1035 = vsel %vm1034, %v1019, %v1018
      %vm1036 = vcmask 1042434
      %v1037 = vsel %vm1036, %v1020, %v1035
      %vm1038 = vcmask 1043459
      %v1039 = vsel %vm1038, %v1021, %v1037
      %vm1040 = vcmask 1044484
      %v1041 = vsel %vm1040, %v1022, %v1039
      %vm1042 = vcmask 1045509
      %v1043 = vsel %vm1042, %v1023, %v1041
      %vm1044 = vcmask 1046534
      %v1045 = vsel %vm1044, %v1024, %v1043
      %vm1046 = vcmask 1047559
      %v1047 = vsel %vm1046, %v1025, %v1045
      %v1048 = vsel %vm1034, %v1027, %v1026
      %v1049 = vsel %vm1036, %v1028, %v1048
      %v1050 = vsel %vm1038, %v1029, %v1049
      %v1051 = vsel %vm1040, %v1030, %v1050
      %v1052 = vsel %vm1042, %v1031, %v1051
      %v1053 = vsel %vm1044, %v1032, %v1052
      %v1054 = vsel %vm1046, %v1033, %v1053
      %v1055 = vpack.c.b16 %v1047, %v1047
      %v1056 = vpack.c.b16 %v1054, %v1054
      %1059 = vst [vmem:[%s280] sm:$0xf] %v1055
      %1060 = vst [vmem:[%s280 + $0x4] sm:$0xf] %v1056
      %s1061 = smul.u32 2, %s18
      %p1062 = scmp.lt.s32.totalorder %s1061, 3
      %s1063 = scalar_select %p1062, %s1061, 3
      %s1064 = smul.addr %s1063, 4
      %s1065 = scalar_lea.vmem %s7, %s1064
      // Predicated region
      $region49: #{pointnet2_forward.3} parent=47 // pred_check
        %p1066 = pneg %p188
      $region50: #{pointnet2_forward.3} parent=47 // pred_check_branch
        %1068 = sbr.rel (%p1066) target = $region52
      $region51: #{pointnet2_forward.3} parent=47 // pred_region
        %s1069 = smul.u32 2, %s18
      $region52: #{pointnet2_forward.3} parent=47 // pred_fallthru
        _
    $region48: #{pointnet2_forward.3} parent=5 // pred_fallthru
      _
    %p1070 = scmp.le.s32.totalorder 2, %s13
    // Predicated region
    $region53: #{pointnet2_forward.3} parent=5 // pred_check
      %p1071 = pneg %p1070
    $region54: #{pointnet2_forward.3} parent=5 // pred_check_branch
      %1073 = sbr.rel (%p1071) target = $region56
    $region55: #{pointnet2_forward.3} parent=5 // pred_region
      %s1074 = ssub.s32 %s13, 2
      // Predicated region
      $region57: #{pointnet2_forward.3} parent=55 // pred_check
        %p1075 = pneg %p194
      $region58: #{pointnet2_forward.3} parent=55 // pred_check_branch
        %1077 = sbr.rel (%p1075) target = $region60
      $region59: #{pointnet2_forward.3} parent=55 // pred_region
        %s1078 = smul.u32 2, %s19
        %p1079 = scmp.lt.s32.totalorder %s1078, 3
        %s1080 = scalar_select %p1079, %s1078, 3
        %s1081 = smul.addr %s1080, 4
        %s1082 = scalar_lea.vmem %s7, %s1081
      $region60: #{pointnet2_forward.3} parent=55 // pred_fallthru
        _
    $region56: #{pointnet2_forward.3} parent=5 // pred_fallthru
      _
  $region6: #{pointnet2_forward.3} parent=0 // loop_footer
    %s17 = sadd.s32 1, %s13
  $region7: #{pointnet2_forward.3} parent=0 // loop_footer_branch
    %12 = sbr.rel target = $region3
  $region8: #{pointnet2_forward.3} parent=0 // loop_exit
    _

// kernel: neg.7
$region0: #{neg.7}
  #allocation0 [shape = 's32[1]{0}', space=sflag, size = 0x4, scoped, tag = 'scoped memory for neg.7']
  %s0 = inlined_call_operand.vmem [shape: s32[2,8,16], index: 0, kind: input, shape index: {}]
  %s1 = inlined_call_operand.vmem [shape: s32[2,8,16], index: 1, kind: output, shape index: {}]
  %v2 = vld [vmem:[%s0] sm:$0xff]
  %3 = xla_tuple %v2
  %4 = xla_tuple %3
  %v5 = vsub.s32 0, %v2
  %6 = xla_tuple %v5
  %7 = vst [vmem:[%s1] sm:$0xff] %v5
  %s8 = scalar_lea.vmem %s0, 8
  %v9 = vld [vmem:[%s8] sm:$0xff]
  %10 = xla_tuple %v9
  %11 = xla_tuple %10
  %v12 = vsub.s32 0, %v9
  %13 = xla_tuple %v12
  %s14 = scalar_lea.vmem %s1, 8
  %15 = vst [vmem:[%s14] sm:$0xff] %v12

// kernel: pointnet2_forward.4
$region0: #{pointnet2_forward.4}
  #allocation0 [shape = 'u32[]', space=smem, size = 0x4, offset = 0x4, fixed_abs, tag = 'smem constant byte address 0x4 - core index']
  #allocation1 [shape = 'u32[144,128]{1,0:T(1,128)}', space=vmem, size = 0x12000, scoped, tag = 'internal scratch']
  %s0 = inlined_call_operand.vmem [shape: bf16[256,8], index: 0, kind: input, shape index: {}]
  %s1 = inlined_call_operand.vmem [shape: bf16[256,128], index: 1, kind: input, shape index: {}]
  %s2 = inlined_call_operand.vmem [shape: bf16[8,128], index: 2, kind: input, shape index: {}]
  %s3 = inlined_call_operand.vmem [shape: bf16[128,128], index: 3, kind: input, shape index: {}]
  %s4 = inlined_call_operand.vmem [shape: f32[1,128], index: 4, kind: input, shape index: {}]
  %s5 = inlined_call_operand.vmem [shape: bf16[128,128], index: 5, kind: input, shape index: {}]
  %s6 = inlined_call_operand.vmem [shape: f32[1,128], index: 6, kind: input, shape index: {}]
  %s7 = inlined_call_operand.vmem [shape: bf16[128,256], index: 7, kind: input, shape index: {}]
  %s8 = inlined_call_operand.vmem [shape: f32[1,256], index: 8, kind: input, shape index: {}]
  %s9 = inlined_call_operand.vmem [shape: bf16[16,256], index: 9, kind: output, shape index: {}]
  %s10 = sld [smem:[#allocation0]]
  $region69: #{pointnet2_forward.4} parent=0
    _
  %s12 = ssub.s32 1, %s10
  %s13 = scalar_select 0, %s12, %s10
  loop: start=0, step=1, limit=4
  $region2: #{pointnet2_forward.4} parent=0 // loop_pre_header
    _
  $region3: #{pointnet2_forward.4} parent=0 // loop_header
    %s15 = sphi 0, %s19
    %p16 = scmp.ge.s32.totalorder %s15, 4
    %s25 = sphi 0, %s27
    %s28 = sphi 0, %s25
    %s29 = sphi 0, %s28
    %s45 = sphi 0, %s29
    %s51 = sphi 0, %s53
    %s54 = sphi 0, %s51
    %s55 = sphi 0, %s54
    %s71 = sphi 0, %s55
    %s75 = sphi 0, %s75
    %s77 = sphi 0, %s75
    %s78 = sphi 0, %s77
    %s92 = sphi 0, %s78
    %s96 = sphi 0, %s96
    %s98 = sphi 0, %s96
    %s99 = sphi 0, %s98
    %s113 = sphi 0, %s99
    %s117 = sphi 0, %s117
    %s119 = sphi 0, %s117
    %s120 = sphi 0, %s119
    %s134 = sphi 0, %s120
    %s138 = sphi 0, %s138
    %s140 = sphi 0, %s138
    %s141 = sphi 0, %s140
    %s155 = sphi 0, %s141
    %s159 = sphi 0, %s159
    %s161 = sphi 0, %s159
    %s162 = sphi 0, %s161
    %s176 = sphi 0, %s162
    %s180 = sphi 0, %s180
    %s182 = sphi 0, %s180
    %s183 = sphi 0, %s182
    %s197 = sphi 0, %s183
    %s201 = sphi 0, %s201
    %s203 = sphi 0, %s201
    %s204 = sphi 0, %s203
    %s218 = sphi 0, %s204
    %s224 = sphi 0, %s226
    %s227 = sphi 0, %s224
    %s228 = sphi 0, %s227
    %s244 = sphi 0, %s228
  $region4: #{pointnet2_forward.4} parent=0 // loop_header_branch
    %18 = sbr.rel (%p16) target = $region8
  $region5: #{pointnet2_forward.4} parent=0 // loop_body
    %s20 = ssub.s32 %s15, 1
    %s21 = ssub.s32 %s15, 2
    %s22 = sadd.s32 %s15, 1
    %s23 = ssub.s32 %s15, %s22
    %p24 = scmp.eq.s32.totalorder %s23, 0
    %s26 = sadd.s32 %s25, 1
    %s27 = scalar_select %p24, %s25, %s26
    %p30 = pneg %p24
    %p31 = scmp.eq.s32.totalorder %s15, 1
    %p32 = por %p30, %p31
    %p33 = scmp.ne.s32.totalorder %s25, %s28
    %p34 = scmp.eq.s32.totalorder %s15, 0
    %p35 = por %p33, %p34
    %p36 = scmp.ne.s32.totalorder %s25, %s28
    %p37 = scmp.eq.s32.totalorder %s20, 1
    %p38 = por %p36, %p37
    %p39 = scmp.ne.s32.totalorder %s28, %s29
    %p40 = scmp.eq.s32.totalorder %s20, 0
    %p41 = por %p39, %p40
    %p42 = scmp.ne.s32.totalorder %s28, %s29
    %p43 = scmp.eq.s32.totalorder %s21, 1
    %p44 = por %p42, %p43
    %p46 = scmp.ne.s32.totalorder %s29, %s45
    %p47 = scmp.eq.s32.totalorder %s21, 0
    %p48 = por %p46, %p47
    %s49 = ssub.s32 %s15, %s22
    %p50 = scmp.eq.s32.totalorder %s49, 0
    %s52 = sadd.s32 %s51, 1
    %s53 = scalar_select %p50, %s51, %s52
    %p56 = pneg %p50
    %p57 = scmp.eq.s32.totalorder %s15, 1
    %p58 = por %p56, %p57
    %p59 = scmp.ne.s32.totalorder %s51, %s54
    %p60 = scmp.eq.s32.totalorder %s15, 0
    %p61 = por %p59, %p60
    %p62 = scmp.ne.s32.totalorder %s51, %s54
    %p63 = scmp.eq.s32.totalorder %s20, 1
    %p64 = por %p62, %p63
    %p65 = scmp.ne.s32.totalorder %s54, %s55
    %p66 = scmp.eq.s32.totalorder %s20, 0
    %p67 = por %p65, %p66
    %p68 = scmp.ne.s32.totalorder %s54, %s55
    %p69 = scmp.eq.s32.totalorder %s21, 1
    %p70 = por %p68, %p69
    %p72 = scmp.ne.s32.totalorder %s55, %s71
    %p73 = scmp.eq.s32.totalorder %s21, 0
    %p74 = por %p72, %p73
    %s76 = sadd.s32 %s75, 1
    %p79 = scmp.eq.s32.totalorder %s15, 1
    %p80 = scmp.ne.s32.totalorder %s75, %s77
    %p81 = scmp.eq.s32.totalorder %s15, 0
    %p82 = por %p80, %p81
    %p83 = scmp.ne.s32.totalorder %s75, %s77
    %p84 = scmp.eq.s32.totalorder %s20, 1
    %p85 = por %p83, %p84
    %p86 = scmp.ne.s32.totalorder %s77, %s78
    %p87 = scmp.eq.s32.totalorder %s20, 0
    %p88 = por %p86, %p87
    %p89 = scmp.ne.s32.totalorder %s77, %s78
    %p90 = scmp.eq.s32.totalorder %s21, 1
    %p91 = por %p89, %p90
    %p93 = scmp.ne.s32.totalorder %s78, %s92
    %p94 = scmp.eq.s32.totalorder %s21, 0
    %p95 = por %p93, %p94
    %s97 = sadd.s32 %s96, 1
    %p100 = scmp.eq.s32.totalorder %s15, 1
    %p101 = scmp.ne.s32.totalorder %s96, %s98
    %p102 = scmp.eq.s32.totalorder %s15, 0
    %p103 = por %p101, %p102
    %p104 = scmp.ne.s32.totalorder %s96, %s98
    %p105 = scmp.eq.s32.totalorder %s20, 1
    %p106 = por %p104, %p105
    %p107 = scmp.ne.s32.totalorder %s98, %s99
    %p108 = scmp.eq.s32.totalorder %s20, 0
    %p109 = por %p107, %p108
    %p110 = scmp.ne.s32.totalorder %s98, %s99
    %p111 = scmp.eq.s32.totalorder %s21, 1
    %p112 = por %p110, %p111
    %p114 = scmp.ne.s32.totalorder %s99, %s113
    %p115 = scmp.eq.s32.totalorder %s21, 0
    %p116 = por %p114, %p115
    %s118 = sadd.s32 %s117, 1
    %p121 = scmp.eq.s32.totalorder %s15, 1
    %p122 = scmp.ne.s32.totalorder %s117, %s119
    %p123 = scmp.eq.s32.totalorder %s15, 0
    %p124 = por %p122, %p123
    %p125 = scmp.ne.s32.totalorder %s117, %s119
    %p126 = scmp.eq.s32.totalorder %s20, 1
    %p127 = por %p125, %p126
    %p128 = scmp.ne.s32.totalorder %s119, %s120
    %p129 = scmp.eq.s32.totalorder %s20, 0
    %p130 = por %p128, %p129
    %p131 = scmp.ne.s32.totalorder %s119, %s120
    %p132 = scmp.eq.s32.totalorder %s21, 1
    %p133 = por %p131, %p132
    %p135 = scmp.ne.s32.totalorder %s120, %s134
    %p136 = scmp.eq.s32.totalorder %s21, 0
    %p137 = por %p135, %p136
    %s139 = sadd.s32 %s138, 1
    %p142 = scmp.eq.s32.totalorder %s15, 1
    %p143 = scmp.ne.s32.totalorder %s138, %s140
    %p144 = scmp.eq.s32.totalorder %s15, 0
    %p145 = por %p143, %p144
    %p146 = scmp.ne.s32.totalorder %s138, %s140
    %p147 = scmp.eq.s32.totalorder %s20, 1
    %p148 = por %p146, %p147
    %p149 = scmp.ne.s32.totalorder %s140, %s141
    %p150 = scmp.eq.s32.totalorder %s20, 0
    %p151 = por %p149, %p150
    %p152 = scmp.ne.s32.totalorder %s140, %s141
    %p153 = scmp.eq.s32.totalorder %s21, 1
    %p154 = por %p152, %p153
    %p156 = scmp.ne.s32.totalorder %s141, %s155
    %p157 = scmp.eq.s32.totalorder %s21, 0
    %p158 = por %p156, %p157
    %s160 = sadd.s32 %s159, 1
    %p163 = scmp.eq.s32.totalorder %s15, 1
    %p164 = scmp.ne.s32.totalorder %s159, %s161
    %p165 = scmp.eq.s32.totalorder %s15, 0
    %p166 = por %p164, %p165
    %p167 = scmp.ne.s32.totalorder %s159, %s161
    %p168 = scmp.eq.s32.totalorder %s20, 1
    %p169 = por %p167, %p168
    %p170 = scmp.ne.s32.totalorder %s161, %s162
    %p171 = scmp.eq.s32.totalorder %s20, 0
    %p172 = por %p170, %p171
    %p173 = scmp.ne.s32.totalorder %s161, %s162
    %p174 = scmp.eq.s32.totalorder %s21, 1
    %p175 = por %p173, %p174
    %p177 = scmp.ne.s32.totalorder %s162, %s176
    %p178 = scmp.eq.s32.totalorder %s21, 0
    %p179 = por %p177, %p178
    %s181 = sadd.s32 %s180, 1
    %p184 = scmp.eq.s32.totalorder %s15, 1
    %p185 = scmp.ne.s32.totalorder %s180, %s182
    %p186 = scmp.eq.s32.totalorder %s15, 0
    %p187 = por %p185, %p186
    %p188 = scmp.ne.s32.totalorder %s180, %s182
    %p189 = scmp.eq.s32.totalorder %s20, 1
    %p190 = por %p188, %p189
    %p191 = scmp.ne.s32.totalorder %s182, %s183
    %p192 = scmp.eq.s32.totalorder %s20, 0
    %p193 = por %p191, %p192
    %p194 = scmp.ne.s32.totalorder %s182, %s183
    %p195 = scmp.eq.s32.totalorder %s21, 1
    %p196 = por %p194, %p195
    %p198 = scmp.ne.s32.totalorder %s183, %s197
    %p199 = scmp.eq.s32.totalorder %s21, 0
    %p200 = por %p198, %p199
    %s202 = sadd.s32 %s201, 1
    %p205 = scmp.eq.s32.totalorder %s15, 1
    %p206 = scmp.ne.s32.totalorder %s201, %s203
    %p207 = scmp.eq.s32.totalorder %s15, 0
    %p208 = por %p206, %p207
    %p209 = scmp.ne.s32.totalorder %s201, %s203
    %p210 = scmp.eq.s32.totalorder %s20, 1
    %p211 = por %p209, %p210
    %p212 = scmp.ne.s32.totalorder %s203, %s204
    %p213 = scmp.eq.s32.totalorder %s20, 0
    %p214 = por %p212, %p213
    %p215 = scmp.ne.s32.totalorder %s203, %s204
    %p216 = scmp.eq.s32.totalorder %s21, 1
    %p217 = por %p215, %p216
    %p219 = scmp.ne.s32.totalorder %s204, %s218
    %p220 = scmp.eq.s32.totalorder %s21, 0
    %p221 = por %p219, %p220
    %s222 = ssub.s32 %s15, %s22
    %p223 = scmp.eq.s32.totalorder %s222, 0
    %s225 = sadd.s32 %s224, 1
    %s226 = scalar_select %p223, %s224, %s225
    %p229 = pneg %p223
    %p230 = scmp.eq.s32.totalorder %s15, 1
    %p231 = por %p229, %p230
    %p232 = scmp.ne.s32.totalorder %s224, %s227
    %p233 = scmp.eq.s32.totalorder %s15, 0
    %p234 = por %p232, %p233
    %p235 = scmp.ne.s32.totalorder %s224, %s227
    %p236 = scmp.eq.s32.totalorder %s20, 1
    %p237 = por %p235, %p236
    %p238 = scmp.ne.s32.totalorder %s227, %s228
    %p239 = scmp.eq.s32.totalorder %s20, 0
    %p240 = por %p238, %p239
    %p241 = scmp.ne.s32.totalorder %s227, %s228
    %p242 = scmp.eq.s32.totalorder %s21, 1
    %p243 = por %p241, %p242
    %p245 = scmp.ne.s32.totalorder %s228, %s244
    %p246 = scmp.eq.s32.totalorder %s21, 0
    %p247 = por %p245, %p246
    %p248 = scmp.le.s32.totalorder 1, %s15
    %p249 = scmp.lt.s32.totalorder %s15, 3
    %p250 = pnand %p248, %p249
    %p251 = pneg %p250
    // Predicated region
    $region9: #{pointnet2_forward.4} parent=5 // pred_check
      _
    $region10: #{pointnet2_forward.4} parent=5 // pred_check_branch
      %253 = sbr.rel (%p250) target = $region12
    $region11: #{pointnet2_forward.4} parent=5 // pred_region
      %s254 = ssub.s32 %s15, 1
      // Predicated region
      $region13: #{pointnet2_forward.4} parent=11 // pred_check
        %p255 = pneg %p88
      $region14: #{pointnet2_forward.4} parent=11 // pred_check_branch
        %257 = sbr.rel (%p255) target = $region16
      $region15: #{pointnet2_forward.4} parent=11 // pred_region
        _
      $region16: #{pointnet2_forward.4} parent=11 // pred_fallthru
        _
      // Predicated region
      $region17: #{pointnet2_forward.4} parent=11 // pred_check
        %p258 = pneg %p109
      $region18: #{pointnet2_forward.4} parent=11 // pred_check_branch
        %260 = sbr.rel (%p258) target = $region20
      $region19: #{pointnet2_forward.4} parent=11 // pred_region
        _
      $region20: #{pointnet2_forward.4} parent=11 // pred_fallthru
        _
      // Predicated region
      $region21: #{pointnet2_forward.4} parent=11 // pred_check
        %p261 = pneg %p130
      $region22: #{pointnet2_forward.4} parent=11 // pred_check_branch
        %263 = sbr.rel (%p261) target = $region24
      $region23: #{pointnet2_forward.4} parent=11 // pred_region
        _
      $region24: #{pointnet2_forward.4} parent=11 // pred_fallthru
        _
      // Predicated region
      $region25: #{pointnet2_forward.4} parent=11 // pred_check
        %p264 = pneg %p151
      $region26: #{pointnet2_forward.4} parent=11 // pred_check_branch
        %266 = sbr.rel (%p264) target = $region28
      $region27: #{pointnet2_forward.4} parent=11 // pred_region
        _
      $region28: #{pointnet2_forward.4} parent=11 // pred_fallthru
        _
      // Predicated region
      $region29: #{pointnet2_forward.4} parent=11 // pred_check
        %p267 = pneg %p172
      $region30: #{pointnet2_forward.4} parent=11 // pred_check_branch
        %269 = sbr.rel (%p267) target = $region32
      $region31: #{pointnet2_forward.4} parent=11 // pred_region
        _
      $region32: #{pointnet2_forward.4} parent=11 // pred_fallthru
        _
      // Predicated region
      $region33: #{pointnet2_forward.4} parent=11 // pred_check
        %p270 = pneg %p193
      $region34: #{pointnet2_forward.4} parent=11 // pred_check_branch
        %272 = sbr.rel (%p270) target = $region36
      $region35: #{pointnet2_forward.4} parent=11 // pred_region
        _
      $region36: #{pointnet2_forward.4} parent=11 // pred_fallthru
        _
      // Predicated region
      $region37: #{pointnet2_forward.4} parent=11 // pred_check
        %p273 = pneg %p214
      $region38: #{pointnet2_forward.4} parent=11 // pred_check_branch
        %275 = sbr.rel (%p273) target = $region40
      $region39: #{pointnet2_forward.4} parent=11 // pred_region
        _
      $region40: #{pointnet2_forward.4} parent=11 // pred_fallthru
        _
    $region12: #{pointnet2_forward.4} parent=5 // pred_fallthru
      _
    %p276 = scmp.lt.s32.totalorder %s15, 2
    // Predicated region
    $region41: #{pointnet2_forward.4} parent=5 // pred_check
      %p277 = pneg %p276
    $region42: #{pointnet2_forward.4} parent=5 // pred_check_branch
      %279 = sbr.rel (%p277) target = $region44
    $region43: #{pointnet2_forward.4} parent=5 // pred_region
      // Predicated region
      $region45: #{pointnet2_forward.4} parent=43 // pred_check
        %p280 = pneg %p35
      $region46: #{pointnet2_forward.4} parent=43 // pred_check_branch
        %282 = sbr.rel (%p280) target = $region48
      $region47: #{pointnet2_forward.4} parent=43 // pred_region
        %s283 = smul.u32 16, %s15
        %p284 = scmp.lt.s32.totalorder %s283, 31
        %s285 = scalar_select %p284, %s283, 31
        %s286 = smul.addr %s285, 4
        %s287 = scalar_lea.vmem %s0, %s286
        %s288 = smul.u32 16, %s15
      $region48: #{pointnet2_forward.4} parent=43 // pred_fallthru
        _
      // Predicated region
      $region49: #{pointnet2_forward.4} parent=43 // pred_check
        %p289 = pneg %p61
      $region50: #{pointnet2_forward.4} parent=43 // pred_check_branch
        %291 = sbr.rel (%p289) target = $region52
      $region51: #{pointnet2_forward.4} parent=43 // pred_region
        %s292 = smul.u32 16, %s15
        %p293 = scmp.lt.s32.totalorder %s292, 31
        %s294 = scalar_select %p293, %s292, 31
        %s295 = smul.addr %s294, 4
        %s296 = scalar_lea.vmem %s1, %s295
        %s297 = smul.u32 16, %s15
      $region52: #{pointnet2_forward.4} parent=43 // pred_fallthru
        _
    $region44: #{pointnet2_forward.4} parent=5 // pred_fallthru
      _
    %p298 = scmp.le.s32.totalorder 1, %s15
    %p299 = scmp.lt.s32.totalorder %s15, 3
    %p300 = pnand %p298, %p299
    %p301 = pneg %p300
    // Predicated region
    $region53: #{pointnet2_forward.4} parent=5 // pred_check
      _
    $region54: #{pointnet2_forward.4} parent=5 // pred_check_branch
      %303 = sbr.rel (%p300) target = $region56
    $region55: #{pointnet2_forward.4} parent=5 // pred_region
      %s304 = ssub.s32 %s15, 1
      %s305 = smul.u32 16, %s20
      %p306 = scmp.lt.s32.totalorder %s305, 31
      %s307 = scalar_select %p306, %s305, 31
      %s308 = smul.addr %s307, 4
      %s309 = scalar_lea.vmem %s0, %s308
      %p310 = pneg %p41
      %p311 = pneg %p38
      %s312 = smul.u32 16, %s20
      %p313 = scmp.lt.s32.totalorder %s312, 31
      %s314 = scalar_select %p313, %s312, 31
      %s315 = smul.addr %s314, 4
      %s316 = scalar_lea.vmem %s1, %s315
      %p317 = pneg %p67
      %p318 = pneg %p64
      %p319 = pneg %p88
      %p320 = pneg %p85
      %p321 = pneg %p109
      %p322 = pneg %p106
      %p323 = pneg %p130
      %p324 = pneg %p127
      %p325 = pneg %p151
      %p326 = pneg %p148
      %p327 = pneg %p172
      %p328 = pneg %p169
      %p329 = pneg %p193
      %p330 = pneg %p190
      %p331 = pneg %p214
      %p332 = pneg %p211
      %p333 = pneg %p240
      %p334 = pneg %p237
      %p335 = scmp.lt.s32.totalorder %s20, 1
      %s336 = scalar_select %p335, %s20, 1
      %s337 = smul.addr %s336, 2
      %s338 = smul.addr %s337, 4
      %s339 = scalar_lea.vmem %s9, %s338
      %s340 = smul.u32 16, %s20
      %p341 = scmp.lt.s32.totalorder %s340, 31
      %s342 = scalar_select %p341, %s340, 31
      %s343 = smul.addr %s342, 4
      %s344 = scalar_lea.vmem %s0, %s343
      %s345 = smul.u32 16, %s20
      %s346 = smul.u32 16, %s20
      %p347 = scmp.lt.s32.totalorder %s346, 31
      %s348 = scalar_select %p347, %s346, 31
      %s349 = smul.addr %s348, 4
      %s350 = scalar_lea.vmem %s1, %s349
      %s351 = smul.u32 16, %s20
      %p352 = scmp.lt.s32.totalorder %s20, 1
      %s353 = scalar_select %p352, %s20, 1
      %s354 = smul.addr %s353, 2
      %s355 = smul.addr %s354, 4
      %s356 = scalar_lea.vmem %s9, %s355
      %v358 = vld [vmem:[%s350] sm:$0xf]
      %v359 = vld [vmem:[%s350 + $0x4] sm:$0xf]
      %v360 = vld [vmem:[%s350 + $0x8] sm:$0xf]
      %v361 = vld [vmem:[%s350 + $0xc] sm:$0xf]
      %v362 = vld [vmem:[%s350 + $0x10] sm:$0xf]
      %v363 = vld [vmem:[%s350 + $0x14] sm:$0xf]
      %v364 = vld [vmem:[%s350 + $0x18] sm:$0xf]
      %v365 = vld [vmem:[%s350 + $0x1c] sm:$0xf]
      %v366 = vld [vmem:[%s350 + $0x20] sm:$0xf]
      %v367 = vld [vmem:[%s350 + $0x24] sm:$0xf]
      %v368 = vld [vmem:[%s350 + $0x28] sm:$0xf]
      %v369 = vld [vmem:[%s350 + $0x2c] sm:$0xf]
      %v370 = vld [vmem:[%s350 + $0x30] sm:$0xf]
      %v371 = vld [vmem:[%s350 + $0x34] sm:$0xf]
      %v372 = vld [vmem:[%s350 + $0x38] sm:$0xf]
      %v373 = vld [vmem:[%s350 + $0x3c] sm:$0xf]
      %v374 = vld [vmem:[%s3] sm:$0xf]
      %v375 = vld [vmem:[%s3 + $0x4] sm:$0xf]
      %v376 = vld [vmem:[%s3 + $0x8] sm:$0xf]
      %v377 = vld [vmem:[%s3 + $0xc] sm:$0xf]
      %v378 = vld [vmem:[%s3 + $0x10] sm:$0xf]
      %v379 = vld [vmem:[%s3 + $0x14] sm:$0xf]
      %v380 = vld [vmem:[%s3 + $0x18] sm:$0xf]
      %v381 = vld [vmem:[%s3 + $0x1c] sm:$0xf]
      %v382 = vld [vmem:[%s3 + $0x20] sm:$0xf]
      %v383 = vld [vmem:[%s3 + $0x24] sm:$0xf]
      %v384 = vld [vmem:[%s3 + $0x28] sm:$0xf]
      %v385 = vld [vmem:[%s3 + $0x2c] sm:$0xf]
      %v386 = vld [vmem:[%s3 + $0x30] sm:$0xf]
      %v387 = vld [vmem:[%s3 + $0x34] sm:$0xf]
      %v388 = vld [vmem:[%s3 + $0x38] sm:$0xf]
      %v389 = vld [vmem:[%s3 + $0x3c] sm:$0xf]
      %v390 = vld [vmem:[%s344] sm:$0xf]
      %v391 = vld [vmem:[%s344 + $0x4] sm:$0xf]
      %v392 = vld [vmem:[%s344 + $0x8] sm:$0xf]
      %v393 = vld [vmem:[%s344 + $0xc] sm:$0xf]
      %v394 = vld [vmem:[%s344 + $0x10] sm:$0xf]
      %v395 = vld [vmem:[%s344 + $0x14] sm:$0xf]
      %v396 = vld [vmem:[%s344 + $0x18] sm:$0xf]
      %v397 = vld [vmem:[%s344 + $0x1c] sm:$0xf]
      %v398 = vld [vmem:[%s344 + $0x20] sm:$0xf]
      %v399 = vld [vmem:[%s344 + $0x24] sm:$0xf]
      %v400 = vld [vmem:[%s344 + $0x28] sm:$0xf]
      %v401 = vld [vmem:[%s344 + $0x2c] sm:$0xf]
      %v402 = vld [vmem:[%s344 + $0x30] sm:$0xf]
      %v403 = vld [vmem:[%s344 + $0x34] sm:$0xf]
      %v404 = vld [vmem:[%s344 + $0x38] sm:$0xf]
      %v405 = vld [vmem:[%s344 + $0x3c] sm:$0xf]
      %v406 = vld [vmem:[%s2] sm:$0xf]
      %v423 = vunpack.c.l.b16 %v390
      %v424 = vunpack.c.l.b16 %v391
      %v425 = vunpack.c.l.b16 %v392
      %v426 = vunpack.c.l.b16 %v393
      %v427 = vunpack.c.l.b16 %v394
      %v428 = vunpack.c.l.b16 %v395
      %v429 = vunpack.c.l.b16 %v396
      %v430 = vunpack.c.l.b16 %v397
      %v431 = vunpack.c.l.b16 %v398
      %v432 = vunpack.c.l.b16 %v399
      %v433 = vunpack.c.l.b16 %v400
      %v434 = vunpack.c.l.b16 %v401
      %v435 = vunpack.c.l.b16 %v402
      %v436 = vunpack.c.l.b16 %v403
      %v437 = vunpack.c.l.b16 %v404
      %v438 = vunpack.c.l.b16 %v405
      %v439 = vpack.c.b16 %v424, %v423
      %v440 = vpack.c.b16 %v426, %v425
      %v441 = vpack.c.b16 %v428, %v427
      %v442 = vpack.c.b16 %v430, %v429
      %v443 = vpack.c.b16 %v432, %v431
      %v444 = vpack.c.b16 %v434, %v433
      %v445 = vpack.c.b16 %v436, %v435
      %v446 = vpack.c.b16 %v438, %v437
      %vm447 = vcmask 64512
      %v449 = vsel %vm447, %v439, 0
      %v452 = vsel %vm447, %v440, 0
      %v455 = vsel %vm447, %v441, 0
      %v458 = vsel %vm447, %v442, 0
      %v461 = vsel %vm447, %v443, 0
      %v464 = vsel %vm447, %v444, 0
      %v467 = vsel %vm447, %v445, 0
      %v470 = vsel %vm447, %v446, 0
      %vm472 = vcmask 1043456
      %v474 = vsel %vm472, %v406, 0
      %476 = vmatprep.subr.bf16.mxu0 0
      %477 = vmatpush1.bf16.msra.mxu0 %v474
      %478 = vmatprep.subr.bf16.mxu0 0
      %479 = vmatpush1.bf16.msra.mxu0 0
      %480 = vmatprep.subr.bf16.mxu0 0
      %481 = vmatpush1.bf16.msra.mxu0 0
      %482 = vmatprep.subr.bf16.mxu0 0
      %483 = vmatpush1.bf16.msra.mxu0 0
      %484 = vmatprep.subr.bf16.mxu0 0
      %485 = vmatpush1.bf16.msra.mxu0 0
      %486 = vmatprep.subr.bf16.mxu0 0
      %487 = vmatpush1.bf16.msra.mxu0 0
      %488 = vmatprep.subr.bf16.mxu0 0
      %489 = vmatpush1.bf16.msra.mxu0 0
      %490 = vmatprep.subr.bf16.mxu0 0
      %491 = vmatpush1.bf16.msra.mxu0 0
      %492 = vmatprep.subr.bf16.mxu0 0
      %493 = vmatpush1.bf16.msra.mxu0 0
      %494 = vmatprep.subr.bf16.mxu0 0
      %495 = vmatpush1.bf16.msra.mxu0 0
      %496 = vmatprep.subr.bf16.mxu0 0
      %497 = vmatpush1.bf16.msra.mxu0 0
      %498 = vmatprep.subr.bf16.mxu0 0
      %499 = vmatpush1.bf16.msra.mxu0 0
      %500 = vmatprep.subr.bf16.mxu0 0
      %501 = vmatpush1.bf16.msra.mxu0 0
      %502 = vmatprep.subr.bf16.mxu0 0
      %503 = vmatpush1.bf16.msra.mxu0 0
      %504 = vmatprep.subr.bf16.mxu0 0
      %505 = vmatpush1.bf16.msra.mxu0 0
      %506 = vmatprep.subr.bf16.mxu0 0
      %507 = vmatpush1.bf16.msra.mxu0 0
      %508 = vmatprep.mubr.bf16.mxu0 0
      %509 = vmatmul.mubr.bf16.gmra.mrb[0].mxu0 %v449
      %v510 = vpop.f32.mrb[0].mxu0
      %v511 = vadd.f32 0.0, %v510
      %v512 = vpop.f32.mrb[0].mxu0
      %v513 = vpop.f32.mrb[0].mxu0
      %v514 = vadd.f32 0.0, %v513
      %v515 = vpop.f32.mrb[0].mxu0
      %516 = vmatprep.mubr.bf16.mxu0 0
      %517 = vmatmul.mubr.bf16.gmra.mrb[0].mxu0 %v452
      %v518 = vpop.f32.mrb[0].mxu0
      %v519 = vadd.f32 0.0, %v518
      %v520 = vpop.f32.mrb[0].mxu0
      %v521 = vpop.f32.mrb[0].mxu0
      %v522 = vadd.f32 0.0, %v521
      %v523 = vpop.f32.mrb[0].mxu0
      %524 = vmatprep.mubr.bf16.mxu0 0
      %525 = vmatmul.mubr.bf16.gmra.mrb[0].mxu0 %v455
      %v526 = vpop.f32.mrb[0].mxu0
      %v527 = vadd.f32 0.0, %v526
      %v528 = vpop.f32.mrb[0].mxu0
      %v529 = vpop.f32.mrb[0].mxu0
      %v530 = vadd.f32 0.0, %v529
      %v531 = vpop.f32.mrb[0].mxu0
      %532 = vmatprep.mubr.bf16.mxu0 0
      %533 = vmatmul.mubr.bf16.gmra.mrb[0].mxu0 %v458
      %v534 = vpop.f32.mrb[0].mxu0
      %v535 = vadd.f32 0.0, %v534
      %v536 = vpop.f32.mrb[0].mxu0
      %v537 = vpop.f32.mrb[0].mxu0
      %v538 = vadd.f32 0.0, %v537
      %v539 = vpop.f32.mrb[0].mxu0
      %540 = vmatprep.mubr.bf16.mxu0 0
      %541 = vmatmul.mubr.bf16.gmra.mrb[0].mxu0 %v461
      %v542 = vpop.f32.mrb[0].mxu0
      %v543 = vadd.f32 0.0, %v542
      %v544 = vpop.f32.mrb[0].mxu0
      %v545 = vpop.f32.mrb[0].mxu0
      %v546 = vadd.f32 0.0, %v545
      %v547 = vpop.f32.mrb[0].mxu0
      %548 = vmatprep.mubr.bf16.mxu0 0
      %549 = vmatmul.mubr.bf16.gmra.mrb[0].mxu0 %v464
      %v550 = vpop.f32.mrb[0].mxu0
      %v551 = vadd.f32 0.0, %v550
      %v552 = vpop.f32.mrb[0].mxu0
      %v553 = vpop.f32.mrb[0].mxu0
      %v554 = vadd.f32 0.0, %v553
      %v555 = vpop.f32.mrb[0].mxu0
      %556 = vmatprep.mubr.bf16.mxu0 0
      %557 = vmatmul.mubr.bf16.gmra.mrb[0].mxu0 %v467
      %v558 = vpop.f32.mrb[0].mxu0
      %v559 = vadd.f32 0.0, %v558
      %v560 = vpop.f32.mrb[0].mxu0
      %v561 = vpop.f32.mrb[0].mxu0
      %v562 = vadd.f32 0.0, %v561
      %v563 = vpop.f32.mrb[0].mxu0
      %564 = vmatprep.mubr.bf16.mxu0 0
      %565 = vmatmul.mubr.bf16.gmra.mrb[0].mxu0 %v470
      %v566 = vpop.f32.mrb[0].mxu0
      %v567 = vadd.f32 0.0, %v566
      %v568 = vpop.f32.mrb[0].mxu0
      %v569 = vpop.f32.mrb[0].mxu0
      %v570 = vadd.f32 0.0, %v569
      %v571 = vpop.f32.mrb[0].mxu0
      %572 = vdwg.mxu0
      %v589 = vunpack.c.l.b16 %v358
      %v590 = vunpack.c.l.b16 %v359
      %v591 = vunpack.c.l.b16 %v360
      %v592 = vunpack.c.l.b16 %v361
      %v593 = vunpack.c.l.b16 %v362
      %v594 = vunpack.c.l.b16 %v363
      %v595 = vunpack.c.l.b16 %v364
      %v596 = vunpack.c.l.b16 %v365
      %v597 = vunpack.c.l.b16 %v366
      %v598 = vunpack.c.l.b16 %v367
      %v599 = vunpack.c.l.b16 %v368
      %v600 = vunpack.c.l.b16 %v369
      %v601 = vunpack.c.l.b16 %v370
      %v602 = vunpack.c.l.b16 %v371
      %v603 = vunpack.c.l.b16 %v372
      %v604 = vunpack.c.l.b16 %v373
      %v605 = vpack.c.b16 %v590, %v589
      %v606 = vpack.c.b16 %v592, %v591
      %v607 = vpack.c.b16 %v594, %v593
      %v608 = vpack.c.b16 %v596, %v595
      %v609 = vpack.c.b16 %v598, %v597
      %v610 = vpack.c.b16 %v600, %v599
      %v611 = vpack.c.b16 %v602, %v601
      %v612 = vpack.c.b16 %v604, %v603
      %v637 = vunpack.c.l.b16 %v374
      %v638 = vunpack.c.l.b16 %v375
      %v639 = vunpack.c.l.b16 %v376
      %v640 = vunpack.c.l.b16 %v377
      %v641 = vunpack.c.l.b16 %v378
      %v642 = vunpack.c.l.b16 %v379
      %v643 = vunpack.c.l.b16 %v380
      %v644 = vunpack.c.l.b16 %v381
      %v645 = vunpack.c.l.b16 %v382
      %v646 = vunpack.c.l.b16 %v383
      %v647 = vunpack.c.l.b16 %v384
      %v648 = vunpack.c.l.b16 %v385
      %v649 = vunpack.c.l.b16 %v386
      %v650 = vunpack.c.l.b16 %v387
      %v651 = vunpack.c.l.b16 %v388
      %v652 = vunpack.c.l.b16 %v389
      %v653 = vpack.c.b16 %v638, %v637
      %v654 = vpack.c.b16 %v640, %v639
      %v655 = vpack.c.b16 %v642, %v641
      %v656 = vpack.c.b16 %v644, %v643
      %v657 = vpack.c.b16 %v646, %v645
      %v658 = vpack.c.b16 %v648, %v647
      %v659 = vpack.c.b16 %v650, %v649
      %v660 = vpack.c.b16 %v652, %v651
      %669 = vmatprep.subr.bf16.mxu0 0
      %670 = vmatpush1.bf16.msra.mxu0 %v653
      %671 = vmatprep.subr.bf16.mxu0 0
      %672 = vmatpush1.bf16.msra.mxu0 %v654
      %673 = vmatprep.subr.bf16.mxu0 0
      %674 = vmatpush1.bf16.msra.mxu0 %v655
      %675 = vmatprep.subr.bf16.mxu0 0
      %676 = vmatpush1.bf16.msra.mxu0 %v656
      %677 = vmatprep.subr.bf16.mxu0 0
      %678 = vmatpush1.bf16.msra.mxu0 %v657
      %679 = vmatprep.subr.bf16.mxu0 0
      %680 = vmatpush1.bf16.msra.mxu0 %v658
      %681 = vmatprep.subr.bf16.mxu0 0
      %682 = vmatpush1.bf16.msra.mxu0 %v659
      %683 = vmatprep.subr.bf16.mxu0 0
      %684 = vmatpush1.bf16.msra.mxu0 %v660
      %685 = vmatprep.subr.bf16.mxu0 0
      %686 = vmatpush1.bf16.msra.mxu0 0
      %687 = vmatprep.subr.bf16.mxu0 0
      %688 = vmatpush1.bf16.msra.mxu0 0
      %689 = vmatprep.subr.bf16.mxu0 0
      %690 = vmatpush1.bf16.msra.mxu0 0
      %691 = vmatprep.subr.bf16.mxu0 0
      %692 = vmatpush1.bf16.msra.mxu0 0
      %693 = vmatprep.subr.bf16.mxu0 0
      %694 = vmatpush1.bf16.msra.mxu0 0
      %695 = vmatprep.subr.bf16.mxu0 0
      %696 = vmatpush1.bf16.msra.mxu0 0
      %697 = vmatprep.subr.bf16.mxu0 0
      %698 = vmatpush1.bf16.msra.mxu0 0
      %699 = vmatprep.subr.bf16.mxu0 0
      %700 = vmatpush1.bf16.msra.mxu0 0
      %701 = vmatprep.mubr.bf16.mxu0 0
      %702 = vmatmul.mubr.bf16.gmra.mrb[0].mxu0 %v605
      %v703 = vpop.f32.mrb[0].mxu0
      %v704 = vadd.f32 %v511, %v703
      %v705 = vpop.f32.mrb[0].mxu0
      %v706 = vpop.f32.mrb[0].mxu0
      %v707 = vadd.f32 %v514, %v706
      %v708 = vpop.f32.mrb[0].mxu0
      %709 = vmatprep.mubr.bf16.mxu0 0
      %710 = vmatmul.mubr.bf16.gmra.mrb[0].mxu0 %v606
      %v711 = vpop.f32.mrb[0].mxu0
      %v712 = vadd.f32 %v519, %v711
      %v713 = vpop.f32.mrb[0].mxu0
      %v714 = vpop.f32.mrb[0].mxu0
      %v715 = vadd.f32 %v522, %v714
      %v716 = vpop.f32.mrb[0].mxu0
      %717 = vmatprep.mubr.bf16.mxu0 0
      %718 = vmatmul.mubr.bf16.gmra.mrb[0].mxu0 %v607
      %v719 = vpop.f32.mrb[0].mxu0
      %v720 = vadd.f32 %v527, %v719
      %v721 = vpop.f32.mrb[0].mxu0
      %v722 = vpop.f32.mrb[0].mxu0
      %v723 = vadd.f32 %v530, %v722
      %v724 = vpop.f32.mrb[0].mxu0
      %725 = vmatprep.mubr.bf16.mxu0 0
      %726 = vmatmul.mubr.bf16.gmra.mrb[0].mxu0 %v608
      %v727 = vpop.f32.mrb[0].mxu0
      %v728 = vadd.f32 %v535, %v727
      %v729 = vpop.f32.mrb[0].mxu0
      %v730 = vpop.f32.mrb[0].mxu0
      %v731 = vadd.f32 %v538, %v730
      %v732 = vpop.f32.mrb[0].mxu0
      %733 = vmatprep.mubr.bf16.mxu0 0
      %734 = vmatmul.mubr.bf16.gmra.mrb[0].mxu0 %v609
      %v735 = vpop.f32.mrb[0].mxu0
      %v736 = vadd.f32 %v543, %v735
      %v737 = vpop.f32.mrb[0].mxu0
      %v738 = vpop.f32.mrb[0].mxu0
      %v739 = vadd.f32 %v546, %v738
      %v740 = vpop.f32.mrb[0].mxu0
      %741 = vmatprep.mubr.bf16.mxu0 0
      %742 = vmatmul.mubr.bf16.gmra.mrb[0].mxu0 %v610
      %v743 = vpop.f32.mrb[0].mxu0
      %v744 = vadd.f32 %v551, %v743
      %v745 = vpop.f32.mrb[0].mxu0
      %v746 = vpop.f32.mrb[0].mxu0
      %v747 = vadd.f32 %v554, %v746
      %v748 = vpop.f32.mrb[0].mxu0
      %749 = vmatprep.mubr.bf16.mxu0 0
      %750 = vmatmul.mubr.bf16.gmra.mrb[0].mxu0 %v611
      %v751 = vpop.f32.mrb[0].mxu0
      %v752 = vadd.f32 %v559, %v751
      %v753 = vpop.f32.mrb[0].mxu0
      %v754 = vpop.f32.mrb[0].mxu0
      %v755 = vadd.f32 %v562, %v754
      %v756 = vpop.f32.mrb[0].mxu0
      %757 = vmatprep.mubr.bf16.mxu0 0
      %758 = vmatmul.mubr.bf16.gmra.mrb[0].mxu0 %v612
      %v759 = vpop.f32.mrb[0].mxu0
      %v760 = vadd.f32 %v567, %v759
      %v761 = vpop.f32.mrb[0].mxu0
      %v762 = vpop.f32.mrb[0].mxu0
      %v763 = vadd.f32 %v570, %v762
      %v764 = vpop.f32.mrb[0].mxu0
      %765 = vdwg.mxu0
      %v766 = vld [vmem:[%s4] sm:$0x1]
      %v768 = vlaneseq
      %v769 = vshrl.u32 %v768, 7
      %v770 = vsub.s32 0, %v769
      %v771 = vrot.slane %v766, %v770
      %v773 = vadd.f32 %v704, %v771
      %v774 = vadd.f32 %v707, %v771
      %v775 = vadd.f32 %v712, %v771
      %v776 = vadd.f32 %v715, %v771
      %v777 = vadd.f32 %v720, %v771
      %v778 = vadd.f32 %v723, %v771
      %v779 = vadd.f32 %v728, %v771
      %v780 = vadd.f32 %v731, %v771
      %v781 = vadd.f32 %v736, %v771
      %v782 = vadd.f32 %v739, %v771
      %v783 = vadd.f32 %v744, %v771
      %v784 = vadd.f32 %v747, %v771
      %v785 = vadd.f32 %v752, %v771
      %v786 = vadd.f32 %v755, %v771
      %v787 = vadd.f32 %v760, %v771
      %v788 = vadd.f32 %v763, %v771
      %v789 = vmax.f32 %v773, 0.0
      %v790 = vmax.f32 %v774, 0.0
      %v791 = vmax.f32 %v775, 0.0
      %v792 = vmax.f32 %v776, 0.0
      %v793 = vmax.f32 %v777, 0.0
      %v794 = vmax.f32 %v778, 0.0
      %v795 = vmax.f32 %v779, 0.0
      %v796 = vmax.f32 %v780, 0.0
      %v797 = vmax.f32 %v781, 0.0
      %v798 = vmax.f32 %v782, 0.0
      %v799 = vmax.f32 %v783, 0.0
      %v800 = vmax.f32 %v784, 0.0
      %v801 = vmax.f32 %v785, 0.0
      %v802 = vmax.f32 %v786, 0.0
      %v803 = vmax.f32 %v787, 0.0
      %v804 = vmax.f32 %v788, 0.0
      %v805 = vpack.c.bf16 %v790, %v789
      %v806 = vpack.c.bf16 %v792, %v791
      %v807 = vpack.c.bf16 %v794, %v793
      %v808 = vpack.c.bf16 %v796, %v795
      %v809 = vpack.c.bf16 %v798, %v797
      %v810 = vpack.c.bf16 %v800, %v799
      %v811 = vpack.c.bf16 %v802, %v801
      %v812 = vpack.c.bf16 %v804, %v803
      %v813 = vld [vmem:[%s5] sm:$0xf]
      %v814 = vld [vmem:[%s5 + $0x4] sm:$0xf]
      %v815 = vld [vmem:[%s5 + $0x8] sm:$0xf]
      %v816 = vld [vmem:[%s5 + $0xc] sm:$0xf]
      %v817 = vld [vmem:[%s5 + $0x10] sm:$0xf]
      %v818 = vld [vmem:[%s5 + $0x14] sm:$0xf]
      %v819 = vld [vmem:[%s5 + $0x18] sm:$0xf]
      %v820 = vld [vmem:[%s5 + $0x1c] sm:$0xf]
      %v821 = vld [vmem:[%s5 + $0x20] sm:$0xf]
      %v822 = vld [vmem:[%s5 + $0x24] sm:$0xf]
      %v823 = vld [vmem:[%s5 + $0x28] sm:$0xf]
      %v824 = vld [vmem:[%s5 + $0x2c] sm:$0xf]
      %v825 = vld [vmem:[%s5 + $0x30] sm:$0xf]
      %v826 = vld [vmem:[%s5 + $0x34] sm:$0xf]
      %v827 = vld [vmem:[%s5 + $0x38] sm:$0xf]
      %v828 = vld [vmem:[%s5 + $0x3c] sm:$0xf]
      %v829 = vld [vmem:[%s6] sm:$0x1]
      %v831 = vlaneseq
      %v832 = vshrl.u32 %v831, 7
      %v833 = vsub.s32 0, %v832
      %v834 = vrot.slane %v829, %v833
      %v852 = vunpack.c.l.b16 %v813
      %v853 = vunpack.c.l.b16 %v814
      %v854 = vunpack.c.l.b16 %v815
      %v855 = vunpack.c.l.b16 %v816
      %v856 = vunpack.c.l.b16 %v817
      %v857 = vunpack.c.l.b16 %v818
      %v858 = vunpack.c.l.b16 %v819
      %v859 = vunpack.c.l.b16 %v820
      %v860 = vunpack.c.l.b16 %v821
      %v861 = vunpack.c.l.b16 %v822
      %v862 = vunpack.c.l.b16 %v823
      %v863 = vunpack.c.l.b16 %v824
      %v864 = vunpack.c.l.b16 %v825
      %v865 = vunpack.c.l.b16 %v826
      %v866 = vunpack.c.l.b16 %v827
      %v867 = vunpack.c.l.b16 %v828
      %v868 = vpack.c.b16 %v853, %v852
      %v869 = vpack.c.b16 %v855, %v854
      %v870 = vpack.c.b16 %v857, %v856
      %v871 = vpack.c.b16 %v859, %v858
      %v872 = vpack.c.b16 %v861, %v860
      %v873 = vpack.c.b16 %v863, %v862
      %v874 = vpack.c.b16 %v865, %v864
      %v875 = vpack.c.b16 %v867, %v866
      %884 = vmatprep.subr.bf16.mxu0 0
      %885 = vmatpush1.bf16.msra.mxu0 %v868
      %886 = vmatprep.subr.bf16.mxu0 0
      %887 = vmatpush1.bf16.msra.mxu0 %v869
      %888 = vmatprep.subr.bf16.mxu0 0
      %889 = vmatpush1.bf16.msra.mxu0 %v870
      %890 = vmatprep.subr.bf16.mxu0 0
      %891 = vmatpush1.bf16.msra.mxu0 %v871
      %892 = vmatprep.subr.bf16.mxu0 0
      %893 = vmatpush1.bf16.msra.mxu0 %v872
      %894 = vmatprep.subr.bf16.mxu0 0
      %895 = vmatpush1.bf16.msra.mxu0 %v873
      %896 = vmatprep.subr.bf16.mxu0 0
      %897 = vmatpush1.bf16.msra.mxu0 %v874
      %898 = vmatprep.subr.bf16.mxu0 0
      %899 = vmatpush1.bf16.msra.mxu0 %v875
      %900 = vmatprep.subr.bf16.mxu0 0
      %901 = vmatpush1.bf16.msra.mxu0 0
      %902 = vmatprep.subr.bf16.mxu0 0
      %903 = vmatpush1.bf16.msra.mxu0 0
      %904 = vmatprep.subr.bf16.mxu0 0
      %905 = vmatpush1.bf16.msra.mxu0 0
      %906 = vmatprep.subr.bf16.mxu0 0
      %907 = vmatpush1.bf16.msra.mxu0 0
      %908 = vmatprep.subr.bf16.mxu0 0
      %909 = vmatpush1.bf16.msra.mxu0 0
      %910 = vmatprep.subr.bf16.mxu0 0
      %911 = vmatpush1.bf16.msra.mxu0 0
      %912 = vmatprep.subr.bf16.mxu0 0
      %913 = vmatpush1.bf16.msra.mxu0 0
      %914 = vmatprep.subr.bf16.mxu0 0
      %915 = vmatpush1.bf16.msra.mxu0 0
      %916 = vmatprep.mubr.bf16.mxu0 0
      %917 = vmatmul.mubr.bf16.gmra.mrb[0].mxu0 %v805
      %v918 = vpop.f32.mrb[0].mxu0
      %v919 = vadd.f32 %v834, %v918
      %v920 = vpop.f32.mrb[0].mxu0
      %v921 = vpop.f32.mrb[0].mxu0
      %v922 = vadd.f32 %v834, %v921
      %v923 = vpop.f32.mrb[0].mxu0
      %924 = vmatprep.mubr.bf16.mxu0 0
      %925 = vmatmul.mubr.bf16.gmra.mrb[0].mxu0 %v806
      %v926 = vpop.f32.mrb[0].mxu0
      %v927 = vadd.f32 %v834, %v926
      %v928 = vpop.f32.mrb[0].mxu0
      %v929 = vpop.f32.mrb[0].mxu0
      %v930 = vadd.f32 %v834, %v929
      %v931 = vpop.f32.mrb[0].mxu0
      %932 = vmatprep.mubr.bf16.mxu0 0
      %933 = vmatmul.mubr.bf16.gmra.mrb[0].mxu0 %v807
      %v934 = vpop.f32.mrb[0].mxu0
      %v935 = vadd.f32 %v834, %v934
      %v936 = vpop.f32.mrb[0].mxu0
      %v937 = vpop.f32.mrb[0].mxu0
      %v938 = vadd.f32 %v834, %v937
      %v939 = vpop.f32.mrb[0].mxu0
      %940 = vmatprep.mubr.bf16.mxu0 0
      %941 = vmatmul.mubr.bf16.gmra.mrb[0].mxu0 %v808
      %v942 = vpop.f32.mrb[0].mxu0
      %v943 = vadd.f32 %v834, %v942
      %v944 = vpop.f32.mrb[0].mxu0
      %v945 = vpop.f32.mrb[0].mxu0
      %v946 = vadd.f32 %v834, %v945
      %v947 = vpop.f32.mrb[0].mxu0
      %948 = vmatprep.mubr.bf16.mxu0 0
      %949 = vmatmul.mubr.bf16.gmra.mrb[0].mxu0 %v809
      %v950 = vpop.f32.mrb[0].mxu0
      %v951 = vadd.f32 %v834, %v950
      %v952 = vpop.f32.mrb[0].mxu0
      %v953 = vpop.f32.mrb[0].mxu0
      %v954 = vadd.f32 %v834, %v953
      %v955 = vpop.f32.mrb[0].mxu0
      %956 = vmatprep.mubr.bf16.mxu0 0
      %957 = vmatmul.mubr.bf16.gmra.mrb[0].mxu0 %v810
      %v958 = vpop.f32.mrb[0].mxu0
      %v959 = vadd.f32 %v834, %v958
      %v960 = vpop.f32.mrb[0].mxu0
      %v961 = vpop.f32.mrb[0].mxu0
      %v962 = vadd.f32 %v834, %v961
      %v963 = vpop.f32.mrb[0].mxu0
      %964 = vmatprep.mubr.bf16.mxu0 0
      %965 = vmatmul.mubr.bf16.gmra.mrb[0].mxu0 %v811
      %v966 = vpop.f32.mrb[0].mxu0
      %v967 = vadd.f32 %v834, %v966
      %v968 = vpop.f32.mrb[0].mxu0
      %v969 = vpop.f32.mrb[0].mxu0
      %v970 = vadd.f32 %v834, %v969
      %v971 = vpop.f32.mrb[0].mxu0
      %972 = vmatprep.mubr.bf16.mxu0 0
      %973 = vmatmul.mubr.bf16.gmra.mrb[0].mxu0 %v812
      %v974 = vpop.f32.mrb[0].mxu0
      %v975 = vadd.f32 %v834, %v974
      %v976 = vpop.f32.mrb[0].mxu0
      %v977 = vpop.f32.mrb[0].mxu0
      %v978 = vadd.f32 %v834, %v977
      %v979 = vpop.f32.mrb[0].mxu0
      %980 = vdwg.mxu0
      %v981 = vmax.f32 %v919, 0.0
      %v982 = vmax.f32 %v922, 0.0
      %v983 = vmax.f32 %v927, 0.0
      %v984 = vmax.f32 %v930, 0.0
      %v985 = vmax.f32 %v935, 0.0
      %v986 = vmax.f32 %v938, 0.0
      %v987 = vmax.f32 %v943, 0.0
      %v988 = vmax.f32 %v946, 0.0
      %v989 = vmax.f32 %v951, 0.0
      %v990 = vmax.f32 %v954, 0.0
      %v991 = vmax.f32 %v959, 0.0
      %v992 = vmax.f32 %v962, 0.0
      %v993 = vmax.f32 %v967, 0.0
      %v994 = vmax.f32 %v970, 0.0
      %v995 = vmax.f32 %v975, 0.0
      %v996 = vmax.f32 %v978, 0.0
      %v997 = vpack.c.bf16 %v982, %v981
      %v998 = vpack.c.bf16 %v984, %v983
      %v999 = vpack.c.bf16 %v986, %v985
      %v1000 = vpack.c.bf16 %v988, %v987
      %v1001 = vpack.c.bf16 %v990, %v989
      %v1002 = vpack.c.bf16 %v992, %v991
      %v1003 = vpack.c.bf16 %v994, %v993
      %v1004 = vpack.c.bf16 %v996, %v995
      %v1005 = vld [vmem:[%s7] sm:$0xff]
      %v1006 = vld [vmem:[%s7 + $0x8] sm:$0xff]
      %v1007 = vld [vmem:[%s7 + $0x10] sm:$0xff]
      %v1008 = vld [vmem:[%s7 + $0x18] sm:$0xff]
      %v1009 = vld [vmem:[%s7 + $0x20] sm:$0xff]
      %v1010 = vld [vmem:[%s7 + $0x28] sm:$0xff]
      %v1011 = vld [vmem:[%s7 + $0x30] sm:$0xff]
      %v1012 = vld [vmem:[%s7 + $0x38] sm:$0xff]
      %v1013 = vld [vmem:[%s7 + $0x40] sm:$0xff]
      %v1014 = vld [vmem:[%s7 + $0x48] sm:$0xff]
      %v1015 = vld [vmem:[%s7 + $0x50] sm:$0xff]
      %v1016 = vld [vmem:[%s7 + $0x58] sm:$0xff]
      %v1017 = vld [vmem:[%s7 + $0x60] sm:$0xff]
      %v1018 = vld [vmem:[%s7 + $0x68] sm:$0xff]
      %v1019 = vld [vmem:[%s7 + $0x70] sm:$0xff]
      %v1020 = vld [vmem:[%s7 + $0x78] sm:$0xff]
      %v1021 = vld [vmem:[%s8] sm:$0x3]
      %v1023 = vlaneseq
      %v1024 = vshrl.u32 %v1023, 7
      %v1025 = vsub.s32 0, %v1024
      %v1026 = vrot.slane %v1021, %v1025
      %v1027 = vlaneseq
      %v1028 = vshrl.u32 %v1027, 7
      %v1029 = vsub.s32 1, %v1028
      %v1030 = vrot.slane %v1021, %v1029
      %v1049 = vunpack.c.l.b16 %v1005
      %v1050 = vunpack.c.h.b16 %v1005
      %v1051 = vunpack.c.l.b16 %v1006
      %v1052 = vunpack.c.h.b16 %v1006
      %v1053 = vunpack.c.l.b16 %v1007
      %v1054 = vunpack.c.h.b16 %v1007
      %v1055 = vunpack.c.l.b16 %v1008
      %v1056 = vunpack.c.h.b16 %v1008
      %v1057 = vunpack.c.l.b16 %v1009
      %v1058 = vunpack.c.h.b16 %v1009
      %v1059 = vunpack.c.l.b16 %v1010
      %v1060 = vunpack.c.h.b16 %v1010
      %v1061 = vunpack.c.l.b16 %v1011
      %v1062 = vunpack.c.h.b16 %v1011
      %v1063 = vunpack.c.l.b16 %v1012
      %v1064 = vunpack.c.h.b16 %v1012
      %v1065 = vunpack.c.l.b16 %v1013
      %v1066 = vunpack.c.h.b16 %v1013
      %v1067 = vunpack.c.l.b16 %v1014
      %v1068 = vunpack.c.h.b16 %v1014
      %v1069 = vunpack.c.l.b16 %v1015
      %v1070 = vunpack.c.h.b16 %v1015
      %v1071 = vunpack.c.l.b16 %v1016
      %v1072 = vunpack.c.h.b16 %v1016
      %v1073 = vunpack.c.l.b16 %v1017
      %v1074 = vunpack.c.h.b16 %v1017
      %v1075 = vunpack.c.l.b16 %v1018
      %v1076 = vunpack.c.h.b16 %v1018
      %v1077 = vunpack.c.l.b16 %v1019
      %v1078 = vunpack.c.h.b16 %v1019
      %v1079 = vunpack.c.l.b16 %v1020
      %v1080 = vunpack.c.h.b16 %v1020
      %v1081 = vpack.c.b16 %v1051, %v1049
      %v1082 = vpack.c.b16 %v1052, %v1050
      %v1083 = vpack.c.b16 %v1055, %v1053
      %v1084 = vpack.c.b16 %v1056, %v1054
      %v1085 = vpack.c.b16 %v1059, %v1057
      %v1086 = vpack.c.b16 %v1060, %v1058
      %v1087 = vpack.c.b16 %v1063, %v1061
      %v1088 = vpack.c.b16 %v1064, %v1062
      %v1089 = vpack.c.b16 %v1067, %v1065
      %v1090 = vpack.c.b16 %v1068, %v1066
      %v1091 = vpack.c.b16 %v1071, %v1069
      %v1092 = vpack.c.b16 %v1072, %v1070
      %v1093 = vpack.c.b16 %v1075, %v1073
      %v1094 = vpack.c.b16 %v1076, %v1074
      %v1095 = vpack.c.b16 %v1079, %v1077
      %v1096 = vpack.c.b16 %v1080, %v1078
      %1113 = vmatprep.subr.bf16.mxu0 %v1082
      %1114 = vmatpush1.bf16.msra.mxu0 %v1081
      %1115 = vmatprep.subr.bf16.mxu0 %v1084
      %1116 = vmatpush1.bf16.msra.mxu0 %v1083
      %1117 = vmatprep.subr.bf16.mxu0 %v1086
      %1118 = vmatpush1.bf16.msra.mxu0 %v1085
      %1119 = vmatprep.subr.bf16.mxu0 %v1088
      %1120 = vmatpush1.bf16.msra.mxu0 %v1087
      %1121 = vmatprep.subr.bf16.mxu0 %v1090
      %1122 = vmatpush1.bf16.msra.mxu0 %v1089
      %1123 = vmatprep.subr.bf16.mxu0 %v1092
      %1124 = vmatpush1.bf16.msra.mxu0 %v1091
      %1125 = vmatprep.subr.bf16.mxu0 %v1094
      %1126 = vmatpush1.bf16.msra.mxu0 %v1093
      %1127 = vmatprep.subr.bf16.mxu0 %v1096
      %1128 = vmatpush1.bf16.msra.mxu0 %v1095
      %1129 = vmatprep.subr.bf16.mxu0 0
      %1130 = vmatpush1.bf16.msra.mxu0 0
      %1131 = vmatprep.subr.bf16.mxu0 0
      %1132 = vmatpush1.bf16.msra.mxu0 0
      %1133 = vmatprep.subr.bf16.mxu0 0
      %1134 = vmatpush1.bf16.msra.mxu0 0
      %1135 = vmatprep.subr.bf16.mxu0 0
      %1136 = vmatpush1.bf16.msra.mxu0 0
      %1137 = vmatprep.subr.bf16.mxu0 0
      %1138 = vmatpush1.bf16.msra.mxu0 0
      %1139 = vmatprep.subr.bf16.mxu0 0
      %1140 = vmatpush1.bf16.msra.mxu0 0
      %1141 = vmatprep.subr.bf16.mxu0 0
      %1142 = vmatpush1.bf16.msra.mxu0 0
      %1143 = vmatprep.subr.bf16.mxu0 0
      %1144 = vmatpush1.bf16.msra.mxu0 0
      %1145 = vmatprep.mubr.bf16.mxu0 0
      %1146 = vmatmul.mubr.bf16.gmra.mrb[0].mxu0 %v997
      %v1147 = vpop.f32.mrb[0].mxu0
      %v1148 = vadd.f32 %v1026, %v1147
      %v1149 = vpop.f32.mrb[0].mxu0
      %v1150 = vadd.f32 %v1030, %v1149
      %v1151 = vpop.f32.mrb[0].mxu0
      %v1152 = vadd.f32 %v1026, %v1151
      %v1153 = vpop.f32.mrb[0].mxu0
      %v1154 = vadd.f32 %v1030, %v1153
      %1155 = vmatprep.mubr.bf16.mxu0 0
      %1156 = vmatmul.mubr.bf16.gmra.mrb[0].mxu0 %v998
      %v1157 = vpop.f32.mrb[0].mxu0
      %v1158 = vadd.f32 %v1026, %v1157
      %v1159 = vpop.f32.mrb[0].mxu0
      %v1160 = vadd.f32 %v1030, %v1159
      %v1161 = vpop.f32.mrb[0].mxu0
      %v1162 = vadd.f32 %v1026, %v1161
      %v1163 = vpop.f32.mrb[0].mxu0
      %v1164 = vadd.f32 %v1030, %v1163
      %1165 = vmatprep.mubr.bf16.mxu0 0
      %1166 = vmatmul.mubr.bf16.gmra.mrb[0].mxu0 %v999
      %v1167 = vpop.f32.mrb[0].mxu0
      %v1168 = vadd.f32 %v1026, %v1167
      %v1169 = vpop.f32.mrb[0].mxu0
      %v1170 = vadd.f32 %v1030, %v1169
      %v1171 = vpop.f32.mrb[0].mxu0
      %v1172 = vadd.f32 %v1026, %v1171
      %v1173 = vpop.f32.mrb[0].mxu0
      %v1174 = vadd.f32 %v1030, %v1173
      %1175 = vmatprep.mubr.bf16.mxu0 0
      %1176 = vmatmul.mubr.bf16.gmra.mrb[0].mxu0 %v1000
      %v1177 = vpop.f32.mrb[0].mxu0
      %v1178 = vadd.f32 %v1026, %v1177
      %v1179 = vpop.f32.mrb[0].mxu0
      %v1180 = vadd.f32 %v1030, %v1179
      %v1181 = vpop.f32.mrb[0].mxu0
      %v1182 = vadd.f32 %v1026, %v1181
      %v1183 = vpop.f32.mrb[0].mxu0
      %v1184 = vadd.f32 %v1030, %v1183
      %1185 = vmatprep.mubr.bf16.mxu0 0
      %1186 = vmatmul.mubr.bf16.gmra.mrb[0].mxu0 %v1001
      %v1187 = vpop.f32.mrb[0].mxu0
      %v1188 = vadd.f32 %v1026, %v1187
      %v1189 = vpop.f32.mrb[0].mxu0
      %v1190 = vadd.f32 %v1030, %v1189
      %v1191 = vpop.f32.mrb[0].mxu0
      %v1192 = vadd.f32 %v1026, %v1191
      %v1193 = vpop.f32.mrb[0].mxu0
      %v1194 = vadd.f32 %v1030, %v1193
      %1195 = vmatprep.mubr.bf16.mxu0 0
      %1196 = vmatmul.mubr.bf16.gmra.mrb[0].mxu0 %v1002
      %v1197 = vpop.f32.mrb[0].mxu0
      %v1198 = vadd.f32 %v1026, %v1197
      %v1199 = vpop.f32.mrb[0].mxu0
      %v1200 = vadd.f32 %v1030, %v1199
      %v1201 = vpop.f32.mrb[0].mxu0
      %v1202 = vadd.f32 %v1026, %v1201
      %v1203 = vpop.f32.mrb[0].mxu0
      %v1204 = vadd.f32 %v1030, %v1203
      %1205 = vmatprep.mubr.bf16.mxu0 0
      %1206 = vmatmul.mubr.bf16.gmra.mrb[0].mxu0 %v1003
      %v1207 = vpop.f32.mrb[0].mxu0
      %v1208 = vadd.f32 %v1026, %v1207
      %v1209 = vpop.f32.mrb[0].mxu0
      %v1210 = vadd.f32 %v1030, %v1209
      %v1211 = vpop.f32.mrb[0].mxu0
      %v1212 = vadd.f32 %v1026, %v1211
      %v1213 = vpop.f32.mrb[0].mxu0
      %v1214 = vadd.f32 %v1030, %v1213
      %1215 = vmatprep.mubr.bf16.mxu0 0
      %1216 = vmatmul.mubr.bf16.gmra.mrb[0].mxu0 %v1004
      %v1217 = vpop.f32.mrb[0].mxu0
      %v1218 = vadd.f32 %v1026, %v1217
      %v1219 = vpop.f32.mrb[0].mxu0
      %v1220 = vadd.f32 %v1030, %v1219
      %v1221 = vpop.f32.mrb[0].mxu0
      %v1222 = vadd.f32 %v1026, %v1221
      %v1223 = vpop.f32.mrb[0].mxu0
      %v1224 = vadd.f32 %v1030, %v1223
      %1225 = vdwg.mxu0
      %v1226 = vmax.f32 %v1148, 0.0
      %v1227 = vmax.f32 %v1150, 0.0
      %v1228 = vmax.f32 %v1152, 0.0
      %v1229 = vmax.f32 %v1154, 0.0
      %v1230 = vmax.f32 %v1158, 0.0
      %v1231 = vmax.f32 %v1160, 0.0
      %v1232 = vmax.f32 %v1162, 0.0
      %v1233 = vmax.f32 %v1164, 0.0
      %v1234 = vmax.f32 %v1168, 0.0
      %v1235 = vmax.f32 %v1170, 0.0
      %v1236 = vmax.f32 %v1172, 0.0
      %v1237 = vmax.f32 %v1174, 0.0
      %v1238 = vmax.f32 %v1178, 0.0
      %v1239 = vmax.f32 %v1180, 0.0
      %v1240 = vmax.f32 %v1182, 0.0
      %v1241 = vmax.f32 %v1184, 0.0
      %v1242 = vmax.f32 %v1188, 0.0
      %v1243 = vmax.f32 %v1190, 0.0
      %v1244 = vmax.f32 %v1192, 0.0
      %v1245 = vmax.f32 %v1194, 0.0
      %v1246 = vmax.f32 %v1198, 0.0
      %v1247 = vmax.f32 %v1200, 0.0
      %v1248 = vmax.f32 %v1202, 0.0
      %v1249 = vmax.f32 %v1204, 0.0
      %v1250 = vmax.f32 %v1208, 0.0
      %v1251 = vmax.f32 %v1210, 0.0
      %v1252 = vmax.f32 %v1212, 0.0
      %v1253 = vmax.f32 %v1214, 0.0
      %v1254 = vmax.f32 %v1218, 0.0
      %v1255 = vmax.f32 %v1220, 0.0
      %v1256 = vmax.f32 %v1222, 0.0
      %v1257 = vmax.f32 %v1224, 0.0
      %v1258 = vmax.f32 %v1226, %v1228
      %v1259 = vrot.slane %v1258, 4
      %v1260 = vmax.f32 %v1258, %v1259
      %v1261 = vrot.slane %v1260, 2
      %v1262 = vmax.f32 %v1260, %v1261
      %v1263 = vrot.slane %v1262, 1
      %v1264 = vmax.f32 %v1262, %v1263
      %v1265 = vmax.f32 %v1227, %v1229
      %v1266 = vrot.slane %v1265, 4
      %v1267 = vmax.f32 %v1265, %v1266
      %v1268 = vrot.slane %v1267, 2
      %v1269 = vmax.f32 %v1267, %v1268
      %v1270 = vrot.slane %v1269, 1
      %v1271 = vmax.f32 %v1269, %v1270
      %v1272 = vmax.f32 %v1230, %v1232
      %v1273 = vrot.slane %v1272, 4
      %v1274 = vmax.f32 %v1272, %v1273
      %v1275 = vrot.slane %v1274, 2
      %v1276 = vmax.f32 %v1274, %v1275
      %v1277 = vrot.slane %v1276, 1
      %v1278 = vmax.f32 %v1276, %v1277
      %v1279 = vmax.f32 %v1231, %v1233
      %v1280 = vrot.slane %v1279, 4
      %v1281 = vmax.f32 %v1279, %v1280
      %v1282 = vrot.slane %v1281, 2
      %v1283 = vmax.f32 %v1281, %v1282
      %v1284 = vrot.slane %v1283, 1
      %v1285 = vmax.f32 %v1283, %v1284
      %v1286 = vmax.f32 %v1234, %v1236
      %v1287 = vrot.slane %v1286, 4
      %v1288 = vmax.f32 %v1286, %v1287
      %v1289 = vrot.slane %v1288, 2
      %v1290 = vmax.f32 %v1288, %v1289
      %v1291 = vrot.slane %v1290, 1
      %v1292 = vmax.f32 %v1290, %v1291
      %v1293 = vmax.f32 %v1235, %v1237
      %v1294 = vrot.slane %v1293, 4
      %v1295 = vmax.f32 %v1293, %v1294
      %v1296 = vrot.slane %v1295, 2
      %v1297 = vmax.f32 %v1295, %v1296
      %v1298 = vrot.slane %v1297, 1
      %v1299 = vmax.f32 %v1297, %v1298
      %v1300 = vmax.f32 %v1238, %v1240
      %v1301 = vrot.slane %v1300, 4
      %v1302 = vmax.f32 %v1300, %v1301
      %v1303 = vrot.slane %v1302, 2
      %v1304 = vmax.f32 %v1302, %v1303
      %v1305 = vrot.slane %v1304, 1
      %v1306 = vmax.f32 %v1304, %v1305
      %v1307 = vmax.f32 %v1239, %v1241
      %v1308 = vrot.slane %v1307, 4
      %v1309 = vmax.f32 %v1307, %v1308
      %v1310 = vrot.slane %v1309, 2
      %v1311 = vmax.f32 %v1309, %v1310
      %v1312 = vrot.slane %v1311, 1
      %v1313 = vmax.f32 %v1311, %v1312
      %v1314 = vmax.f32 %v1242, %v1244
      %v1315 = vrot.slane %v1314, 4
      %v1316 = vmax.f32 %v1314, %v1315
      %v1317 = vrot.slane %v1316, 2
      %v1318 = vmax.f32 %v1316, %v1317
      %v1319 = vrot.slane %v1318, 1
      %v1320 = vmax.f32 %v1318, %v1319
      %v1321 = vmax.f32 %v1243, %v1245
      %v1322 = vrot.slane %v1321, 4
      %v1323 = vmax.f32 %v1321, %v1322
      %v1324 = vrot.slane %v1323, 2
      %v1325 = vmax.f32 %v1323, %v1324
      %v1326 = vrot.slane %v1325, 1
      %v1327 = vmax.f32 %v1325, %v1326
      %v1328 = vmax.f32 %v1246, %v1248
      %v1329 = vrot.slane %v1328, 4
      %v1330 = vmax.f32 %v1328, %v1329
      %v1331 = vrot.slane %v1330, 2
      %v1332 = vmax.f32 %v1330, %v1331
      %v1333 = vrot.slane %v1332, 1
      %v1334 = vmax.f32 %v1332, %v1333
      %v1335 = vmax.f32 %v1247, %v1249
      %v1336 = vrot.slane %v1335, 4
      %v1337 = vmax.f32 %v1335, %v1336
      %v1338 = vrot.slane %v1337, 2
      %v1339 = vmax.f32 %v1337, %v1338
      %v1340 = vrot.slane %v1339, 1
      %v1341 = vmax.f32 %v1339, %v1340
      %v1342 = vmax.f32 %v1250, %v1252
      %v1343 = vrot.slane %v1342, 4
      %v1344 = vmax.f32 %v1342, %v1343
      %v1345 = vrot.slane %v1344, 2
      %v1346 = vmax.f32 %v1344, %v1345
      %v1347 = vrot.slane %v1346, 1
      %v1348 = vmax.f32 %v1346, %v1347
      %v1349 = vmax.f32 %v1251, %v1253
      %v1350 = vrot.slane %v1349, 4
      %v1351 = vmax.f32 %v1349, %v1350
      %v1352 = vrot.slane %v1351, 2
      %v1353 = vmax.f32 %v1351, %v1352
      %v1354 = vrot.slane %v1353, 1
      %v1355 = vmax.f32 %v1353, %v1354
      %v1356 = vmax.f32 %v1254, %v1256
      %v1357 = vrot.slane %v1356, 4
      %v1358 = vmax.f32 %v1356, %v1357
      %v1359 = vrot.slane %v1358, 2
      %v1360 = vmax.f32 %v1358, %v1359
      %v1361 = vrot.slane %v1360, 1
      %v1362 = vmax.f32 %v1360, %v1361
      %v1363 = vmax.f32 %v1255, %v1257
      %v1364 = vrot.slane %v1363, 4
      %v1365 = vmax.f32 %v1363, %v1364
      %v1366 = vrot.slane %v1365, 2
      %v1367 = vmax.f32 %v1365, %v1366
      %v1368 = vrot.slane %v1367, 1
      %v1369 = vmax.f32 %v1367, %v1368
      %v1370 = vpack.c.bf16 %v1264, %v1264
      %v1371 = vpack.c.bf16 %v1271, %v1271
      %v1372 = vpack.c.bf16 %v1278, %v1278
      %v1373 = vpack.c.bf16 %v1285, %v1285
      %v1374 = vpack.c.bf16 %v1292, %v1292
      %v1375 = vpack.c.bf16 %v1299, %v1299
      %v1376 = vpack.c.bf16 %v1306, %v1306
      %v1377 = vpack.c.bf16 %v1313, %v1313
      %v1378 = vpack.c.bf16 %v1320, %v1320
      %v1379 = vpack.c.bf16 %v1327, %v1327
      %v1380 = vpack.c.bf16 %v1334, %v1334
      %v1381 = vpack.c.bf16 %v1341, %v1341
      %v1382 = vpack.c.bf16 %v1348, %v1348
      %v1383 = vpack.c.bf16 %v1355, %v1355
      %v1384 = vpack.c.bf16 %v1362, %v1362
      %v1385 = vpack.c.bf16 %v1369, %v1369
      %v1402 = vunpack.c.l.b16 %v1370
      %v1403 = vunpack.c.l.b16 %v1371
      %v1404 = vunpack.c.l.b16 %v1372
      %v1405 = vunpack.c.l.b16 %v1373
      %v1406 = vunpack.c.l.b16 %v1374
      %v1407 = vunpack.c.l.b16 %v1375
      %v1408 = vunpack.c.l.b16 %v1376
      %v1409 = vunpack.c.l.b16 %v1377
      %v1410 = vunpack.c.l.b16 %v1378
      %v1411 = vunpack.c.l.b16 %v1379
      %v1412 = vunpack.c.l.b16 %v1380
      %v1413 = vunpack.c.l.b16 %v1381
      %v1414 = vunpack.c.l.b16 %v1382
      %v1415 = vunpack.c.l.b16 %v1383
      %v1416 = vunpack.c.l.b16 %v1384
      %v1417 = vunpack.c.l.b16 %v1385
      %v1418 = vpack.c.b16 %v1403, %v1402
      %v1419 = vpack.c.b16 %v1405, %v1404
      %v1420 = vpack.c.b16 %v1407, %v1406
      %v1421 = vpack.c.b16 %v1409, %v1408
      %v1422 = vpack.c.b16 %v1411, %v1410
      %v1423 = vpack.c.b16 %v1413, %v1412
      %v1424 = vpack.c.b16 %v1415, %v1414
      %v1425 = vpack.c.b16 %v1417, %v1416
      %v1426 = vunpack.c.l.b16 %v1418
      %v1427 = vunpack.c.h.b16 %v1418
      %v1428 = vunpack.c.l.b16 %v1419
      %v1429 = vunpack.c.h.b16 %v1419
      %v1430 = vunpack.c.l.b16 %v1420
      %v1431 = vunpack.c.h.b16 %v1420
      %v1432 = vunpack.c.l.b16 %v1421
      %v1433 = vunpack.c.h.b16 %v1421
      %v1434 = vunpack.c.l.b16 %v1422
      %v1435 = vunpack.c.h.b16 %v1422
      %v1436 = vunpack.c.l.b16 %v1423
      %v1437 = vunpack.c.h.b16 %v1423
      %v1438 = vunpack.c.l.b16 %v1424
      %v1439 = vunpack.c.h.b16 %v1424
      %v1440 = vunpack.c.l.b16 %v1425
      %v1441 = vunpack.c.h.b16 %v1425
      %vm1442 = vcmask 1041409
      %v1443 = vsel %vm1442, %v1428, %v1426
      %vm1444 = vcmask 1042434
      %v1445 = vsel %vm1444, %v1430, %v1443
      %vm1446 = vcmask 1043459
      %v1447 = vsel %vm1446, %v1432, %v1445
      %vm1448 = vcmask 1044484
      %v1449 = vsel %vm1448, %v1434, %v1447
      %vm1450 = vcmask 1045509
      %v1451 = vsel %vm1450, %v1436, %v1449
      %vm1452 = vcmask 1046534
      %v1453 = vsel %vm1452, %v1438, %v1451
      %vm1454 = vcmask 1047559
      %v1455 = vsel %vm1454, %v1440, %v1453
      %v1456 = vsel %vm1442, %v1429, %v1427
      %v1457 = vsel %vm1444, %v1431, %v1456
      %v1458 = vsel %vm1446, %v1433, %v1457
      %v1459 = vsel %vm1448, %v1435, %v1458
      %v1460 = vsel %vm1450, %v1437, %v1459
      %v1461 = vsel %vm1452, %v1439, %v1460
      %v1462 = vsel %vm1454, %v1441, %v1461
      %v1463 = vpack.c.b16 %v1462, %v1455
      %1465 = vst [vmem:[%s356] sm:$0xff] %v1463
      %p1466 = scmp.lt.s32.totalorder %s20, 1
      %s1467 = scalar_select %p1466, %s20, 1
      %s1468 = smul.addr %s1467, 2
      %s1469 = smul.addr %s1468, 4
      %s1470 = scalar_lea.vmem %s9, %s1469
      // Predicated region
      $region57: #{pointnet2_forward.4} parent=55 // pred_check
        %p1471 = pneg %p237
      $region58: #{pointnet2_forward.4} parent=55 // pred_check_branch
        %1473 = sbr.rel (%p1471) target = $region60
      $region59: #{pointnet2_forward.4} parent=55 // pred_region
        _
      $region60: #{pointnet2_forward.4} parent=55 // pred_fallthru
        _
    $region56: #{pointnet2_forward.4} parent=5 // pred_fallthru
      _
    %p1474 = scmp.le.s32.totalorder 2, %s15
    // Predicated region
    $region61: #{pointnet2_forward.4} parent=5 // pred_check
      %p1475 = pneg %p1474
    $region62: #{pointnet2_forward.4} parent=5 // pred_check_branch
      %1477 = sbr.rel (%p1475) target = $region64
    $region63: #{pointnet2_forward.4} parent=5 // pred_region
      %s1478 = ssub.s32 %s15, 2
      // Predicated region
      $region65: #{pointnet2_forward.4} parent=63 // pred_check
        %p1479 = pneg %p243
      $region66: #{pointnet2_forward.4} parent=63 // pred_check_branch
        %1481 = sbr.rel (%p1479) target = $region68
      $region67: #{pointnet2_forward.4} parent=63 // pred_region
        %p1482 = scmp.lt.s32.totalorder %s21, 1
        %s1483 = scalar_select %p1482, %s21, 1
        %s1484 = smul.addr %s1483, 2
        %s1485 = smul.addr %s1484, 4
        %s1486 = scalar_lea.vmem %s9, %s1485
      $region68: #{pointnet2_forward.4} parent=63 // pred_fallthru
        _
    $region64: #{pointnet2_forward.4} parent=5 // pred_fallthru
      _
  $region6: #{pointnet2_forward.4} parent=0 // loop_footer
    %s19 = sadd.s32 1, %s15
  $region7: #{pointnet2_forward.4} parent=0 // loop_footer_branch
    %14 = sbr.rel target = $region3
  $region8: #{pointnet2_forward.4} parent=0 // loop_exit
    _

// kernel: pointnet2_forward.5
$region0: #{pointnet2_forward.5}
  #allocation0 [shape = 'u32[]', space=smem, size = 0x4, offset = 0x4, fixed_abs, tag = 'smem constant byte address 0x4 - core index']
  #allocation1 [shape = 'u32[144,128]{1,0:T(1,128)}', space=vmem, size = 0x12000, scoped, tag = 'internal scratch']
  #allocation2 [shape = 'f32[2,1024]{1,0:T(2,128)}', space=vmem, size = 0x2000, scoped, tag = 'scratch operand']
  %s0 = inlined_call_operand.vmem [shape: bf16[2,8,8], index: 0, kind: input, shape index: {}]
  %s1 = inlined_call_operand.vmem [shape: bf16[2,8,256], index: 1, kind: input, shape index: {}]
  %s2 = inlined_call_operand.vmem [shape: bf16[8,256], index: 2, kind: input, shape index: {}]
  %s3 = inlined_call_operand.vmem [shape: bf16[256,256], index: 3, kind: input, shape index: {}]
  %s4 = inlined_call_operand.vmem [shape: f32[1,256], index: 4, kind: input, shape index: {}]
  %s5 = inlined_call_operand.vmem [shape: bf16[256,512], index: 5, kind: input, shape index: {}]
  %s6 = inlined_call_operand.vmem [shape: f32[1,512], index: 6, kind: input, shape index: {}]
  %s7 = inlined_call_operand.vmem [shape: bf16[512,1024], index: 7, kind: input, shape index: {}]
  %s8 = inlined_call_operand.vmem [shape: f32[1,1024], index: 8, kind: input, shape index: {}]
  %s9 = inlined_call_operand.vmem [shape: bf16[1024,512], index: 9, kind: input, shape index: {}]
  %s10 = inlined_call_operand.vmem [shape: f32[1,512], index: 10, kind: input, shape index: {}]
  %s11 = inlined_call_operand.vmem [shape: bf16[512,256], index: 11, kind: input, shape index: {}]
  %s12 = inlined_call_operand.vmem [shape: f32[1,256], index: 12, kind: input, shape index: {}]
  %s13 = inlined_call_operand.vmem [shape: bf16[256,128], index: 13, kind: input, shape index: {}]
  %s14 = inlined_call_operand.vmem [shape: f32[1,128], index: 14, kind: input, shape index: {}]
  %s15 = inlined_call_operand.hbm [shape: f32[2,128], index: 15, kind: output, shape index: {}]
  %s16 = sld [smem:[#allocation0]]
  $region78: #{pointnet2_forward.5} parent=0
    _
  %s18 = ssub.s32 1, %s16
  %s19 = scalar_select 0, %s18, %s16
  $region1: #{pointnet2_forward.5} parent=0
    #allocation3 [shape = 'u8[1024]{0}', space=vmem, size = 0x400, scoped, tag = 'output window, operand 0, single buffered']
    #allocation4 [shape = 's32[1]{0}', space=sflag, size = 0x4, scoped, tag = 'scoped memory for pointnet2_forward.5']
    %20 = vsyncpa [#allocation4], 0
    // Predicated region
    $region2: #{pointnet2_forward.5} parent=1 // pred_check
      _
    $region3: #{pointnet2_forward.5} parent=1 // pred_check_branch
      %22 = sbr.rel (0) target = $region5
    $region4: #{pointnet2_forward.5} parent=1 // pred_region
      _
    $region5: #{pointnet2_forward.5} parent=1 // pred_fallthru
      _
    // Predicated region
    $region6: #{pointnet2_forward.5} parent=1 // pred_check
      _
    $region7: #{pointnet2_forward.5} parent=1 // pred_check_branch
      %24 = sbr.rel (0) target = $region9
    $region8: #{pointnet2_forward.5} parent=1 // pred_region
      _
    $region9: #{pointnet2_forward.5} parent=1 // pred_fallthru
      _
    // Predicated region
    $region10: #{pointnet2_forward.5} parent=1 // pred_check
      _
    $region11: #{pointnet2_forward.5} parent=1 // pred_check_branch
      %26 = sbr.rel (0) target = $region13
    $region12: #{pointnet2_forward.5} parent=1 // pred_region
      _
    $region13: #{pointnet2_forward.5} parent=1 // pred_fallthru
      _
    // Predicated region
    $region14: #{pointnet2_forward.5} parent=1 // pred_check
      _
    $region15: #{pointnet2_forward.5} parent=1 // pred_check_branch
      %28 = sbr.rel (0) target = $region17
    $region16: #{pointnet2_forward.5} parent=1 // pred_region
      _
    $region17: #{pointnet2_forward.5} parent=1 // pred_fallthru
      _
    // Predicated region
    $region18: #{pointnet2_forward.5} parent=1 // pred_check
      _
    $region19: #{pointnet2_forward.5} parent=1 // pred_check_branch
      %30 = sbr.rel (0) target = $region21
    $region20: #{pointnet2_forward.5} parent=1 // pred_region
      _
    $region21: #{pointnet2_forward.5} parent=1 // pred_fallthru
      _
    // Predicated region
    $region22: #{pointnet2_forward.5} parent=1 // pred_check
      _
    $region23: #{pointnet2_forward.5} parent=1 // pred_check_branch
      %32 = sbr.rel (0) target = $region25
    $region24: #{pointnet2_forward.5} parent=1 // pred_region
      _
    $region25: #{pointnet2_forward.5} parent=1 // pred_fallthru
      _
    // Predicated region
    $region26: #{pointnet2_forward.5} parent=1 // pred_check
      _
    $region27: #{pointnet2_forward.5} parent=1 // pred_check_branch
      %34 = sbr.rel (0) target = $region29
    $region28: #{pointnet2_forward.5} parent=1 // pred_region
      _
    $region29: #{pointnet2_forward.5} parent=1 // pred_fallthru
      _
    // Predicated region
    $region30: #{pointnet2_forward.5} parent=1 // pred_check
      _
    $region31: #{pointnet2_forward.5} parent=1 // pred_check_branch
      %36 = sbr.rel (0) target = $region33
    $region32: #{pointnet2_forward.5} parent=1 // pred_region
      _
    $region33: #{pointnet2_forward.5} parent=1 // pred_fallthru
      _
    // Predicated region
    $region34: #{pointnet2_forward.5} parent=1 // pred_check
      _
    $region35: #{pointnet2_forward.5} parent=1 // pred_check_branch
      %38 = sbr.rel (0) target = $region37
    $region36: #{pointnet2_forward.5} parent=1 // pred_region
      _
    $region37: #{pointnet2_forward.5} parent=1 // pred_fallthru
      _
    // Predicated region
    $region38: #{pointnet2_forward.5} parent=1 // pred_check
      _
    $region39: #{pointnet2_forward.5} parent=1 // pred_check_branch
      %40 = sbr.rel (0) target = $region41
    $region40: #{pointnet2_forward.5} parent=1 // pred_region
      _
    $region41: #{pointnet2_forward.5} parent=1 // pred_fallthru
      _
    // Predicated region
    $region42: #{pointnet2_forward.5} parent=1 // pred_check
      _
    $region43: #{pointnet2_forward.5} parent=1 // pred_check_branch
      %42 = sbr.rel (0) target = $region45
    $region44: #{pointnet2_forward.5} parent=1 // pred_region
      _
    $region45: #{pointnet2_forward.5} parent=1 // pred_fallthru
      _
    // Predicated region
    $region46: #{pointnet2_forward.5} parent=1 // pred_check
      _
    $region47: #{pointnet2_forward.5} parent=1 // pred_check_branch
      %44 = sbr.rel (0) target = $region49
    $region48: #{pointnet2_forward.5} parent=1 // pred_region
      _
    $region49: #{pointnet2_forward.5} parent=1 // pred_fallthru
      _
    // Predicated region
    $region50: #{pointnet2_forward.5} parent=1 // pred_check
      _
    $region51: #{pointnet2_forward.5} parent=1 // pred_check_branch
      %46 = sbr.rel (0) target = $region53
    $region52: #{pointnet2_forward.5} parent=1 // pred_region
      _
    $region53: #{pointnet2_forward.5} parent=1 // pred_fallthru
      _
    // Predicated region
    $region54: #{pointnet2_forward.5} parent=1 // pred_check
      _
    $region55: #{pointnet2_forward.5} parent=1 // pred_check_branch
      %48 = sbr.rel (0) target = $region57
    $region56: #{pointnet2_forward.5} parent=1 // pred_region
      _
    $region57: #{pointnet2_forward.5} parent=1 // pred_fallthru
      _
    // Predicated region
    $region58: #{pointnet2_forward.5} parent=1 // pred_check
      _
    $region59: #{pointnet2_forward.5} parent=1 // pred_check_branch
      %50 = sbr.rel (0) target = $region61
    $region60: #{pointnet2_forward.5} parent=1 // pred_region
      _
    $region61: #{pointnet2_forward.5} parent=1 // pred_fallthru
      _
    %p52 = scmp.eq.s32.totalorder 0, 0
    // Predicated region
    $region62: #{pointnet2_forward.5} parent=1 // pred_check
      %p53 = pneg %p52
    $region63: #{pointnet2_forward.5} parent=1 // pred_check_branch
      %55 = sbr.rel (%p53) target = $region65
    $region64: #{pointnet2_forward.5} parent=1 // pred_region
      %56 = vst [vmem:[#allocation2] sm:$0xff] 0.0
      %57 = vst [vmem:[#allocation2 + $0x8] sm:$0xff] 0.0
    $region65: #{pointnet2_forward.5} parent=1 // pred_fallthru
      _
    %v58 = vld [vmem:[%s0] sm:$0xf]
    %v59 = vld [vmem:[%s0 + $0x4] sm:$0xf]
    %v60 = vld [vmem:[%s1] sm:$0xff]
    %v61 = vld [vmem:[%s1 + $0x8] sm:$0xff]
    %v62 = vld [vmem:[%s3] sm:$0xff]
    %v63 = vld [vmem:[%s3 + $0x8] sm:$0xff]
    %v64 = vld [vmem:[%s3 + $0x10] sm:$0xff]
    %v65 = vld [vmem:[%s3 + $0x18] sm:$0xff]
    %v66 = vld [vmem:[%s3 + $0x20] sm:$0xff]
    %v67 = vld [vmem:[%s3 + $0x28] sm:$0xff]
    %v68 = vld [vmem:[%s3 + $0x30] sm:$0xff]
    %v69 = vld [vmem:[%s3 + $0x38] sm:$0xff]
    %v70 = vld [vmem:[%s3 + $0x40] sm:$0xff]
    %v71 = vld [vmem:[%s3 + $0x48] sm:$0xff]
    %v72 = vld [vmem:[%s3 + $0x50] sm:$0xff]
    %v73 = vld [vmem:[%s3 + $0x58] sm:$0xff]
    %v74 = vld [vmem:[%s3 + $0x60] sm:$0xff]
    %v75 = vld [vmem:[%s3 + $0x68] sm:$0xff]
    %v76 = vld [vmem:[%s3 + $0x70] sm:$0xff]
    %v77 = vld [vmem:[%s3 + $0x78] sm:$0xff]
    %v78 = vld [vmem:[%s3 + $0x80] sm:$0xff]
    %v79 = vld [vmem:[%s3 + $0x88] sm:$0xff]
    %v80 = vld [vmem:[%s3 + $0x90] sm:$0xff]
    %v81 = vld [vmem:[%s3 + $0x98] sm:$0xff]
    %v82 = vld [vmem:[%s3 + $0xa0] sm:$0xff]
    %v83 = vld [vmem:[%s3 + $0xa8] sm:$0xff]
    %v84 = vld [vmem:[%s3 + $0xb0] sm:$0xff]
    %v85 = vld [vmem:[%s3 + $0xb8] sm:$0xff]
    %v86 = vld [vmem:[%s3 + $0xc0] sm:$0xff]
    %v87 = vld [vmem:[%s3 + $0xc8] sm:$0xff]
    %v88 = vld [vmem:[%s3 + $0xd0] sm:$0xff]
    %v89 = vld [vmem:[%s3 + $0xd8] sm:$0xff]
    %v90 = vld [vmem:[%s3 + $0xe0] sm:$0xff]
    %v91 = vld [vmem:[%s3 + $0xe8] sm:$0xff]
    %v92 = vld [vmem:[%s3 + $0xf0] sm:$0xff]
    %v93 = vld [vmem:[%s3 + $0xf8] sm:$0xff]
    %v94 = vld [vmem:[%s2] sm:$0xff]
    %v97 = vunpack.c.l.b16 %v58
    %v98 = vunpack.c.l.b16 %v59
    %v99 = vpack.c.b16 %v98, %v97
    %v101 = vunpack.c.l.b16 %v94
    %v102 = vunpack.c.h.b16 %v94
    %v103 = vpack.c.b16 %v101, %v101
    %v104 = vpack.c.b16 %v102, %v102
    %vm105 = vcmask 64512
    %v107 = vsel %vm105, %v99, 0
    %vm109 = vcmask 1043456
    %v111 = vsel %vm109, %v103, 0
    %v114 = vsel %vm109, %v104, 0
    %116 = vmatprep.subr.bf16.mxu0 %v114
    %117 = vmatpush1.bf16.msra.mxu0 %v111
    %118 = vmatprep.subr.bf16.mxu0 0
    %119 = vmatpush1.bf16.msra.mxu0 0
    %120 = vmatprep.subr.bf16.mxu0 0
    %121 = vmatpush1.bf16.msra.mxu0 0
    %122 = vmatprep.subr.bf16.mxu0 0
    %123 = vmatpush1.bf16.msra.mxu0 0
    %124 = vmatprep.subr.bf16.mxu0 0
    %125 = vmatpush1.bf16.msra.mxu0 0
    %126 = vmatprep.subr.bf16.mxu0 0
    %127 = vmatpush1.bf16.msra.mxu0 0
    %128 = vmatprep.subr.bf16.mxu0 0
    %129 = vmatpush1.bf16.msra.mxu0 0
    %130 = vmatprep.subr.bf16.mxu0 0
    %131 = vmatpush1.bf16.msra.mxu0 0
    %132 = vmatprep.subr.bf16.mxu0 0
    %133 = vmatpush1.bf16.msra.mxu0 0
    %134 = vmatprep.subr.bf16.mxu0 0
    %135 = vmatpush1.bf16.msra.mxu0 0
    %136 = vmatprep.subr.bf16.mxu0 0
    %137 = vmatpush1.bf16.msra.mxu0 0
    %138 = vmatprep.subr.bf16.mxu0 0
    %139 = vmatpush1.bf16.msra.mxu0 0
    %140 = vmatprep.subr.bf16.mxu0 0
    %141 = vmatpush1.bf16.msra.mxu0 0
    %142 = vmatprep.subr.bf16.mxu0 0
    %143 = vmatpush1.bf16.msra.mxu0 0
    %144 = vmatprep.subr.bf16.mxu0 0
    %145 = vmatpush1.bf16.msra.mxu0 0
    %146 = vmatprep.subr.bf16.mxu0 0
    %147 = vmatpush1.bf16.msra.mxu0 0
    %148 = vmatprep.mubr.bf16.mxu0 0
    %149 = vmatmul.mubr.bf16.gmra.mrb[0].mxu0 %v107
    %v150 = vpop.f32.mrb[0].mxu0
    %v151 = vadd.f32 0.0, %v150
    %v152 = vpop.f32.mrb[0].mxu0
    %v153 = vadd.f32 0.0, %v152
    %v154 = vpop.f32.mrb[0].mxu0
    %v155 = vadd.f32 0.0, %v154
    %v156 = vpop.f32.mrb[0].mxu0
    %v157 = vadd.f32 0.0, %v156
    %158 = vdwg.mxu0
    %v161 = vunpack.c.l.b16 %v60
    %v162 = vunpack.c.h.b16 %v60
    %v163 = vunpack.c.l.b16 %v61
    %v164 = vunpack.c.h.b16 %v61
    %v165 = vpack.c.b16 %v163, %v161
    %v166 = vpack.c.b16 %v164, %v162
    %v201 = vunpack.c.l.b16 %v62
    %v202 = vunpack.c.h.b16 %v62
    %v203 = vunpack.c.l.b16 %v63
    %v204 = vunpack.c.h.b16 %v63
    %v205 = vunpack.c.l.b16 %v64
    %v206 = vunpack.c.h.b16 %v64
    %v207 = vunpack.c.l.b16 %v65
    %v208 = vunpack.c.h.b16 %v65
    %v209 = vunpack.c.l.b16 %v66
    %v210 = vunpack.c.h.b16 %v66
    %v211 = vunpack.c.l.b16 %v67
    %v212 = vunpack.c.h.b16 %v67
    %v213 = vunpack.c.l.b16 %v68
    %v214 = vunpack.c.h.b16 %v68
    %v215 = vunpack.c.l.b16 %v69
    %v216 = vunpack.c.h.b16 %v69
    %v217 = vunpack.c.l.b16 %v70
    %v218 = vunpack.c.h.b16 %v70
    %v219 = vunpack.c.l.b16 %v71
    %v220 = vunpack.c.h.b16 %v71
    %v221 = vunpack.c.l.b16 %v72
    %v222 = vunpack.c.h.b16 %v72
    %v223 = vunpack.c.l.b16 %v73
    %v224 = vunpack.c.h.b16 %v73
    %v225 = vunpack.c.l.b16 %v74
    %v226 = vunpack.c.h.b16 %v74
    %v227 = vunpack.c.l.b16 %v75
    %v228 = vunpack.c.h.b16 %v75
    %v229 = vunpack.c.l.b16 %v76
    %v230 = vunpack.c.h.b16 %v76
    %v231 = vunpack.c.l.b16 %v77
    %v232 = vunpack.c.h.b16 %v77
    %v233 = vunpack.c.l.b16 %v78
    %v234 = vunpack.c.h.b16 %v78
    %v235 = vunpack.c.l.b16 %v79
    %v236 = vunpack.c.h.b16 %v79
    %v237 = vunpack.c.l.b16 %v80
    %v238 = vunpack.c.h.b16 %v80
    %v239 = vunpack.c.l.b16 %v81
    %v240 = vunpack.c.h.b16 %v81
    %v241 = vunpack.c.l.b16 %v82
    %v242 = vunpack.c.h.b16 %v82
    %v243 = vunpack.c.l.b16 %v83
    %v244 = vunpack.c.h.b16 %v83
    %v245 = vunpack.c.l.b16 %v84
    %v246 = vunpack.c.h.b16 %v84
    %v247 = vunpack.c.l.b16 %v85
    %v248 = vunpack.c.h.b16 %v85
    %v249 = vunpack.c.l.b16 %v86
    %v250 = vunpack.c.h.b16 %v86
    %v251 = vunpack.c.l.b16 %v87
    %v252 = vunpack.c.h.b16 %v87
    %v253 = vunpack.c.l.b16 %v88
    %v254 = vunpack.c.h.b16 %v88
    %v255 = vunpack.c.l.b16 %v89
    %v256 = vunpack.c.h.b16 %v89
    %v257 = vunpack.c.l.b16 %v90
    %v258 = vunpack.c.h.b16 %v90
    %v259 = vunpack.c.l.b16 %v91
    %v260 = vunpack.c.h.b16 %v91
    %v261 = vunpack.c.l.b16 %v92
    %v262 = vunpack.c.h.b16 %v92
    %v263 = vunpack.c.l.b16 %v93
    %v264 = vunpack.c.h.b16 %v93
    %v265 = vpack.c.b16 %v203, %v201
    %v266 = vpack.c.b16 %v204, %v202
    %v267 = vpack.c.b16 %v207, %v205
    %v268 = vpack.c.b16 %v208, %v206
    %v269 = vpack.c.b16 %v211, %v209
    %v270 = vpack.c.b16 %v212, %v210
    %v271 = vpack.c.b16 %v215, %v213
    %v272 = vpack.c.b16 %v216, %v214
    %v273 = vpack.c.b16 %v219, %v217
    %v274 = vpack.c.b16 %v220, %v218
    %v275 = vpack.c.b16 %v223, %v221
    %v276 = vpack.c.b16 %v224, %v222
    %v277 = vpack.c.b16 %v227, %v225
    %v278 = vpack.c.b16 %v228, %v226
    %v279 = vpack.c.b16 %v231, %v229
    %v280 = vpack.c.b16 %v232, %v230
    %v281 = vpack.c.b16 %v235, %v233
    %v282 = vpack.c.b16 %v236, %v234
    %v283 = vpack.c.b16 %v239, %v237
    %v284 = vpack.c.b16 %v240, %v238
    %v285 = vpack.c.b16 %v243, %v241
    %v286 = vpack.c.b16 %v244, %v242
    %v287 = vpack.c.b16 %v247, %v245
    %v288 = vpack.c.b16 %v248, %v246
    %v289 = vpack.c.b16 %v251, %v249
    %v290 = vpack.c.b16 %v252, %v250
    %v291 = vpack.c.b16 %v255, %v253
    %v292 = vpack.c.b16 %v256, %v254
    %v293 = vpack.c.b16 %v259, %v257
    %v294 = vpack.c.b16 %v260, %v258
    %v295 = vpack.c.b16 %v263, %v261
    %v296 = vpack.c.b16 %v264, %v262
    %329 = vmatprep.subr.bf16.mxu0 %v266
    %330 = vmatpush1.bf16.msra.mxu0 %v265
    %331 = vmatprep.subr.bf16.mxu0 %v268
    %332 = vmatpush1.bf16.msra.mxu0 %v267
    %333 = vmatprep.subr.bf16.mxu0 %v270
    %334 = vmatpush1.bf16.msra.mxu0 %v269
    %335 = vmatprep.subr.bf16.mxu0 %v272
    %336 = vmatpush1.bf16.msra.mxu0 %v271
    %337 = vmatprep.subr.bf16.mxu0 %v274
    %338 = vmatpush1.bf16.msra.mxu0 %v273
    %339 = vmatprep.subr.bf16.mxu0 %v276
    %340 = vmatpush1.bf16.msra.mxu0 %v275
    %341 = vmatprep.subr.bf16.mxu0 %v278
    %342 = vmatpush1.bf16.msra.mxu0 %v277
    %343 = vmatprep.subr.bf16.mxu0 %v280
    %344 = vmatpush1.bf16.msra.mxu0 %v279
    %345 = vmatprep.subr.bf16.mxu0 %v282
    %346 = vmatpush1.bf16.msra.mxu0 %v281
    %347 = vmatprep.subr.bf16.mxu0 %v284
    %348 = vmatpush1.bf16.msra.mxu0 %v283
    %349 = vmatprep.subr.bf16.mxu0 %v286
    %350 = vmatpush1.bf16.msra.mxu0 %v285
    %351 = vmatprep.subr.bf16.mxu0 %v288
    %352 = vmatpush1.bf16.msra.mxu0 %v287
    %353 = vmatprep.subr.bf16.mxu0 %v290
    %354 = vmatpush1.bf16.msra.mxu0 %v289
    %355 = vmatprep.subr.bf16.mxu0 %v292
    %356 = vmatpush1.bf16.msra.mxu0 %v291
    %357 = vmatprep.subr.bf16.mxu0 %v294
    %358 = vmatpush1.bf16.msra.mxu0 %v293
    %359 = vmatprep.subr.bf16.mxu0 %v296
    %360 = vmatpush1.bf16.msra.mxu0 %v295
    %361 = vmatprep.mubr.bf16.mxu0 %v166
    %362 = vmatmul.mubr.bf16.gmra.mrb[0].mxu0 %v165
    %v363 = vpop.f32.mrb[0].mxu0
    %v364 = vadd.f32 %v151, %v363
    %v365 = vpop.f32.mrb[0].mxu0
    %v366 = vadd.f32 %v153, %v365
    %v367 = vpop.f32.mrb[0].mxu0
    %v368 = vadd.f32 %v155, %v367
    %v369 = vpop.f32.mrb[0].mxu0
    %v370 = vadd.f32 %v157, %v369
    %371 = vdwg.mxu0
    %v372 = vld [vmem:[%s4] sm:$0x3]
    %v374 = vlaneseq
    %v375 = vshrl.u32 %v374, 7
    %v376 = vsub.s32 0, %v375
    %v377 = vrot.slane %v372, %v376
    %v378 = vlaneseq
    %v379 = vshrl.u32 %v378, 7
    %v380 = vsub.s32 1, %v379
    %v381 = vrot.slane %v372, %v380
    %v384 = vadd.f32 %v364, %v377
    %v385 = vadd.f32 %v366, %v381
    %v386 = vadd.f32 %v368, %v377
    %v387 = vadd.f32 %v370, %v381
    %v388 = vmax.f32 %v384, 0.0
    %v389 = vmax.f32 %v385, 0.0
    %v390 = vmax.f32 %v386, 0.0
    %v391 = vmax.f32 %v387, 0.0
    %v392 = vpack.c.bf16 %v390, %v388
    %v393 = vpack.c.bf16 %v391, %v389
    %v394 = vld [vmem:[%s5] sm:$0xff]
    %v395 = vld [vmem:[%s5 + $0x8] sm:$0xff]
    %v396 = vld [vmem:[%s5 + $0x10] sm:$0xff]
    %v397 = vld [vmem:[%s5 + $0x18] sm:$0xff]
    %v398 = vld [vmem:[%s5 + $0x20] sm:$0xff]
    %v399 = vld [vmem:[%s5 + $0x28] sm:$0xff]
    %v400 = vld [vmem:[%s5 + $0x30] sm:$0xff]
    %v401 = vld [vmem:[%s5 + $0x38] sm:$0xff]
    %v402 = vld [vmem:[%s5 + $0x40] sm:$0xff]
    %v403 = vld [vmem:[%s5 + $0x48] sm:$0xff]
    %v404 = vld [vmem:[%s5 + $0x50] sm:$0xff]
    %v405 = vld [vmem:[%s5 + $0x58] sm:$0xff]
    %v406 = vld [vmem:[%s5 + $0x60] sm:$0xff]
    %v407 = vld [vmem:[%s5 + $0x68] sm:$0xff]
    %v408 = vld [vmem:[%s5 + $0x70] sm:$0xff]
    %v409 = vld [vmem:[%s5 + $0x78] sm:$0xff]
    %v410 = vld [vmem:[%s5 + $0x80] sm:$0xff]
    %v411 = vld [vmem:[%s5 + $0x88] sm:$0xff]
    %v412 = vld [vmem:[%s5 + $0x90] sm:$0xff]
    %v413 = vld [vmem:[%s5 + $0x98] sm:$0xff]
    %v414 = vld [vmem:[%s5 + $0xa0] sm:$0xff]
    %v415 = vld [vmem:[%s5 + $0xa8] sm:$0xff]
    %v416 = vld [vmem:[%s5 + $0xb0] sm:$0xff]
    %v417 = vld [vmem:[%s5 + $0xb8] sm:$0xff]
    %v418 = vld [vmem:[%s5 + $0xc0] sm:$0xff]
    %v419 = vld [vmem:[%s5 + $0xc8] sm:$0xff]
    %v420 = vld [vmem:[%s5 + $0xd0] sm:$0xff]
    %v421 = vld [vmem:[%s5 + $0xd8] sm:$0xff]
    %v422 = vld [vmem:[%s5 + $0xe0] sm:$0xff]
    %v423 = vld [vmem:[%s5 + $0xe8] sm:$0xff]
    %v424 = vld [vmem:[%s5 + $0xf0] sm:$0xff]
    %v425 = vld [vmem:[%s5 + $0xf8] sm:$0xff]
    %v426 = vld [vmem:[%s5 + $0x100] sm:$0xff]
    %v427 = vld [vmem:[%s5 + $0x108] sm:$0xff]
    %v428 = vld [vmem:[%s5 + $0x110] sm:$0xff]
    %v429 = vld [vmem:[%s5 + $0x118] sm:$0xff]
    %v430 = vld [vmem:[%s5 + $0x120] sm:$0xff]
    %v431 = vld [vmem:[%s5 + $0x128] sm:$0xff]
    %v432 = vld [vmem:[%s5 + $0x130] sm:$0xff]
    %v433 = vld [vmem:[%s5 + $0x138] sm:$0xff]
    %v434 = vld [vmem:[%s5 + $0x140] sm:$0xff]
    %v435 = vld [vmem:[%s5 + $0x148] sm:$0xff]
    %v436 = vld [vmem:[%s5 + $0x150] sm:$0xff]
    %v437 = vld [vmem:[%s5 + $0x158] sm:$0xff]
    %v438 = vld [vmem:[%s5 + $0x160] sm:$0xff]
    %v439 = vld [vmem:[%s5 + $0x168] sm:$0xff]
    %v440 = vld [vmem:[%s5 + $0x170] sm:$0xff]
    %v441 = vld [vmem:[%s5 + $0x178] sm:$0xff]
    %v442 = vld [vmem:[%s5 + $0x180] sm:$0xff]
    %v443 = vld [vmem:[%s5 + $0x188] sm:$0xff]
    %v444 = vld [vmem:[%s5 + $0x190] sm:$0xff]
    %v445 = vld [vmem:[%s5 + $0x198] sm:$0xff]
    %v446 = vld [vmem:[%s5 + $0x1a0] sm:$0xff]
    %v447 = vld [vmem:[%s5 + $0x1a8] sm:$0xff]
    %v448 = vld [vmem:[%s5 + $0x1b0] sm:$0xff]
    %v449 = vld [vmem:[%s5 + $0x1b8] sm:$0xff]
    %v450 = vld [vmem:[%s5 + $0x1c0] sm:$0xff]
    %v451 = vld [vmem:[%s5 + $0x1c8] sm:$0xff]
    %v452 = vld [vmem:[%s5 + $0x1d0] sm:$0xff]
    %v453 = vld [vmem:[%s5 + $0x1d8] sm:$0xff]
    %v454 = vld [vmem:[%s5 + $0x1e0] sm:$0xff]
    %v455 = vld [vmem:[%s5 + $0x1e8] sm:$0xff]
    %v456 = vld [vmem:[%s5 + $0x1f0] sm:$0xff]
    %v457 = vld [vmem:[%s5 + $0x1f8] sm:$0xff]
    %v458 = vld [vmem:[%s6] sm:$0xf]
    %v460 = vlaneseq
    %v461 = vshrl.u32 %v460, 7
    %v462 = vsub.s32 0, %v461
    %v463 = vrot.slane %v458, %v462
    %v464 = vlaneseq
    %v465 = vshrl.u32 %v464, 7
    %v466 = vsub.s32 1, %v465
    %v467 = vrot.slane %v458, %v466
    %v468 = vlaneseq
    %v469 = vshrl.u32 %v468, 7
    %v470 = vsub.s32 2, %v469
    %v471 = vrot.slane %v458, %v470
    %v472 = vlaneseq
    %v473 = vshrl.u32 %v472, 7
    %v474 = vsub.s32 3, %v473
    %v475 = vrot.slane %v458, %v474
    %v544 = vunpack.c.l.b16 %v394
    %v545 = vunpack.c.h.b16 %v394
    %v546 = vunpack.c.l.b16 %v395
    %v547 = vunpack.c.h.b16 %v395
    %v548 = vunpack.c.l.b16 %v396
    %v549 = vunpack.c.h.b16 %v396
    %v550 = vunpack.c.l.b16 %v397
    %v551 = vunpack.c.h.b16 %v397
    %v552 = vunpack.c.l.b16 %v398
    %v553 = vunpack.c.h.b16 %v398
    %v554 = vunpack.c.l.b16 %v399
    %v555 = vunpack.c.h.b16 %v399
    %v556 = vunpack.c.l.b16 %v400
    %v557 = vunpack.c.h.b16 %v400
    %v558 = vunpack.c.l.b16 %v401
    %v559 = vunpack.c.h.b16 %v401
    %v560 = vunpack.c.l.b16 %v402
    %v561 = vunpack.c.h.b16 %v402
    %v562 = vunpack.c.l.b16 %v403
    %v563 = vunpack.c.h.b16 %v403
    %v564 = vunpack.c.l.b16 %v404
    %v565 = vunpack.c.h.b16 %v404
    %v566 = vunpack.c.l.b16 %v405
    %v567 = vunpack.c.h.b16 %v405
    %v568 = vunpack.c.l.b16 %v406
    %v569 = vunpack.c.h.b16 %v406
    %v570 = vunpack.c.l.b16 %v407
    %v571 = vunpack.c.h.b16 %v407
    %v572 = vunpack.c.l.b16 %v408
    %v573 = vunpack.c.h.b16 %v408
    %v574 = vunpack.c.l.b16 %v409
    %v575 = vunpack.c.h.b16 %v409
    %v576 = vunpack.c.l.b16 %v410
    %v577 = vunpack.c.h.b16 %v410
    %v578 = vunpack.c.l.b16 %v411
    %v579 = vunpack.c.h.b16 %v411
    %v580 = vunpack.c.l.b16 %v412
    %v581 = vunpack.c.h.b16 %v412
    %v582 = vunpack.c.l.b16 %v413
    %v583 = vunpack.c.h.b16 %v413
    %v584 = vunpack.c.l.b16 %v414
    %v585 = vunpack.c.h.b16 %v414
    %v586 = vunpack.c.l.b16 %v415
    %v587 = vunpack.c.h.b16 %v415
    %v588 = vunpack.c.l.b16 %v416
    %v589 = vunpack.c.h.b16 %v416
    %v590 = vunpack.c.l.b16 %v417
    %v591 = vunpack.c.h.b16 %v417
    %v592 = vunpack.c.l.b16 %v418
    %v593 = vunpack.c.h.b16 %v418
    %v594 = vunpack.c.l.b16 %v419
    %v595 = vunpack.c.h.b16 %v419
    %v596 = vunpack.c.l.b16 %v420
    %v597 = vunpack.c.h.b16 %v420
    %v598 = vunpack.c.l.b16 %v421
    %v599 = vunpack.c.h.b16 %v421
    %v600 = vunpack.c.l.b16 %v422
    %v601 = vunpack.c.h.b16 %v422
    %v602 = vunpack.c.l.b16 %v423
    %v603 = vunpack.c.h.b16 %v423
    %v604 = vunpack.c.l.b16 %v424
    %v605 = vunpack.c.h.b16 %v424
    %v606 = vunpack.c.l.b16 %v425
    %v607 = vunpack.c.h.b16 %v425
    %v608 = vunpack.c.l.b16 %v426
    %v609 = vunpack.c.h.b16 %v426
    %v610 = vunpack.c.l.b16 %v427
    %v611 = vunpack.c.h.b16 %v427
    %v612 = vunpack.c.l.b16 %v428
    %v613 = vunpack.c.h.b16 %v428
    %v614 = vunpack.c.l.b16 %v429
    %v615 = vunpack.c.h.b16 %v429
    %v616 = vunpack.c.l.b16 %v430
    %v617 = vunpack.c.h.b16 %v430
    %v618 = vunpack.c.l.b16 %v431
    %v619 = vunpack.c.h.b16 %v431
    %v620 = vunpack.c.l.b16 %v432
    %v621 = vunpack.c.h.b16 %v432
    %v622 = vunpack.c.l.b16 %v433
    %v623 = vunpack.c.h.b16 %v433
    %v624 = vunpack.c.l.b16 %v434
    %v625 = vunpack.c.h.b16 %v434
    %v626 = vunpack.c.l.b16 %v435
    %v627 = vunpack.c.h.b16 %v435
    %v628 = vunpack.c.l.b16 %v436
    %v629 = vunpack.c.h.b16 %v436
    %v630 = vunpack.c.l.b16 %v437
    %v631 = vunpack.c.h.b16 %v437
    %v632 = vunpack.c.l.b16 %v438
    %v633 = vunpack.c.h.b16 %v438
    %v634 = vunpack.c.l.b16 %v439
    %v635 = vunpack.c.h.b16 %v439
    %v636 = vunpack.c.l.b16 %v440
    %v637 = vunpack.c.h.b16 %v440
    %v638 = vunpack.c.l.b16 %v441
    %v639 = vunpack.c.h.b16 %v441
    %v640 = vunpack.c.l.b16 %v442
    %v641 = vunpack.c.h.b16 %v442
    %v642 = vunpack.c.l.b16 %v443
    %v643 = vunpack.c.h.b16 %v443
    %v644 = vunpack.c.l.b16 %v444
    %v645 = vunpack.c.h.b16 %v444
    %v646 = vunpack.c.l.b16 %v445
    %v647 = vunpack.c.h.b16 %v445
    %v648 = vunpack.c.l.b16 %v446
    %v649 = vunpack.c.h.b16 %v446
    %v650 = vunpack.c.l.b16 %v447
    %v651 = vunpack.c.h.b16 %v447
    %v652 = vunpack.c.l.b16 %v448
    %v653 = vunpack.c.h.b16 %v448
    %v654 = vunpack.c.l.b16 %v449
    %v655 = vunpack.c.h.b16 %v449
    %v656 = vunpack.c.l.b16 %v450
    %v657 = vunpack.c.h.b16 %v450
    %v658 = vunpack.c.l.b16 %v451
    %v659 = vunpack.c.h.b16 %v451
    %v660 = vunpack.c.l.b16 %v452
    %v661 = vunpack.c.h.b16 %v452
    %v662 = vunpack.c.l.b16 %v453
    %v663 = vunpack.c.h.b16 %v453
    %v664 = vunpack.c.l.b16 %v454
    %v665 = vunpack.c.h.b16 %v454
    %v666 = vunpack.c.l.b16 %v455
    %v667 = vunpack.c.h.b16 %v455
    %v668 = vunpack.c.l.b16 %v456
    %v669 = vunpack.c.h.b16 %v456
    %v670 = vunpack.c.l.b16 %v457
    %v671 = vunpack.c.h.b16 %v457
    %v672 = vpack.c.b16 %v548, %v544
    %v673 = vpack.c.b16 %v549, %v545
    %v674 = vpack.c.b16 %v550, %v546
    %v675 = vpack.c.b16 %v551, %v547
    %v676 = vpack.c.b16 %v556, %v552
    %v677 = vpack.c.b16 %v557, %v553
    %v678 = vpack.c.b16 %v558, %v554
    %v679 = vpack.c.b16 %v559, %v555
    %v680 = vpack.c.b16 %v564, %v560
    %v681 = vpack.c.b16 %v565, %v561
    %v682 = vpack.c.b16 %v566, %v562
    %v683 = vpack.c.b16 %v567, %v563
    %v684 = vpack.c.b16 %v572, %v568
    %v685 = vpack.c.b16 %v573, %v569
    %v686 = vpack.c.b16 %v574, %v570
    %v687 = vpack.c.b16 %v575, %v571
    %v688 = vpack.c.b16 %v580, %v576
    %v689 = vpack.c.b16 %v581, %v577
    %v690 = vpack.c.b16 %v582, %v578
    %v691 = vpack.c.b16 %v583, %v579
    %v692 = vpack.c.b16 %v588, %v584
    %v693 = vpack.c.b16 %v589, %v585
    %v694 = vpack.c.b16 %v590, %v586
    %v695 = vpack.c.b16 %v591, %v587
    %v696 = vpack.c.b16 %v596, %v592
    %v697 = vpack.c.b16 %v597, %v593
    %v698 = vpack.c.b16 %v598, %v594
    %v699 = vpack.c.b16 %v599, %v595
    %v700 = vpack.c.b16 %v604, %v600
    %v701 = vpack.c.b16 %v605, %v601
    %v702 = vpack.c.b16 %v606, %v602
    %v703 = vpack.c.b16 %v607, %v603
    %v704 = vpack.c.b16 %v612, %v608
    %v705 = vpack.c.b16 %v613, %v609
    %v706 = vpack.c.b16 %v614, %v610
    %v707 = vpack.c.b16 %v615, %v611
    %v708 = vpack.c.b16 %v620, %v616
    %v709 = vpack.c.b16 %v621, %v617
    %v710 = vpack.c.b16 %v622, %v618
    %v711 = vpack.c.b16 %v623, %v619
    %v712 = vpack.c.b16 %v628, %v624
    %v713 = vpack.c.b16 %v629, %v625
    %v714 = vpack.c.b16 %v630, %v626
    %v715 = vpack.c.b16 %v631, %v627
    %v716 = vpack.c.b16 %v636, %v632
    %v717 = vpack.c.b16 %v637, %v633
    %v718 = vpack.c.b16 %v638, %v634
    %v719 = vpack.c.b16 %v639, %v635
    %v720 = vpack.c.b16 %v644, %v640
    %v721 = vpack.c.b16 %v645, %v641
    %v722 = vpack.c.b16 %v646, %v642
    %v723 = vpack.c.b16 %v647, %v643
    %v724 = vpack.c.b16 %v652, %v648
    %v725 = vpack.c.b16 %v653, %v649
    %v726 = vpack.c.b16 %v654, %v650
    %v727 = vpack.c.b16 %v655, %v651
    %v728 = vpack.c.b16 %v660, %v656
    %v729 = vpack.c.b16 %v661, %v657
    %v730 = vpack.c.b16 %v662, %v658
    %v731 = vpack.c.b16 %v663, %v659
    %v732 = vpack.c.b16 %v668, %v664
    %v733 = vpack.c.b16 %v669, %v665
    %v734 = vpack.c.b16 %v670, %v666
    %v735 = vpack.c.b16 %v671, %v667
    %800 = vmatprep.subr.bf16.mxu0 %v673
    %801 = vmatpush1.bf16.msra.mxu0 %v672
    %802 = vmatprep.subr.bf16.mxu0 %v677
    %803 = vmatpush1.bf16.msra.mxu0 %v676
    %804 = vmatprep.subr.bf16.mxu0 %v681
    %805 = vmatpush1.bf16.msra.mxu0 %v680
    %806 = vmatprep.subr.bf16.mxu0 %v685
    %807 = vmatpush1.bf16.msra.mxu0 %v684
    %808 = vmatprep.subr.bf16.mxu0 %v689
    %809 = vmatpush1.bf16.msra.mxu0 %v688
    %810 = vmatprep.subr.bf16.mxu0 %v693
    %811 = vmatpush1.bf16.msra.mxu0 %v692
    %812 = vmatprep.subr.bf16.mxu0 %v697
    %813 = vmatpush1.bf16.msra.mxu0 %v696
    %814 = vmatprep.subr.bf16.mxu0 %v701
    %815 = vmatpush1.bf16.msra.mxu0 %v700
    %816 = vmatprep.subr.bf16.mxu0 %v705
    %817 = vmatpush1.bf16.msra.mxu0 %v704
    %818 = vmatprep.subr.bf16.mxu0 %v709
    %819 = vmatpush1.bf16.msra.mxu0 %v708
    %820 = vmatprep.subr.bf16.mxu0 %v713
    %821 = vmatpush1.bf16.msra.mxu0 %v712
    %822 = vmatprep.subr.bf16.mxu0 %v717
    %823 = vmatpush1.bf16.msra.mxu0 %v716
    %824 = vmatprep.subr.bf16.mxu0 %v721
    %825 = vmatpush1.bf16.msra.mxu0 %v720
    %826 = vmatprep.subr.bf16.mxu0 %v725
    %827 = vmatpush1.bf16.msra.mxu0 %v724
    %828 = vmatprep.subr.bf16.mxu0 %v729
    %829 = vmatpush1.bf16.msra.mxu0 %v728
    %830 = vmatprep.subr.bf16.mxu0 %v733
    %831 = vmatpush1.bf16.msra.mxu0 %v732
    %832 = vmatprep.mubr.bf16.mxu0 %v393
    %833 = vmatmul.mubr.bf16.gmra.mrb[0].mxu0 %v392
    %v834 = vpop.f32.mrb[0].mxu0
    %v835 = vadd.f32 %v463, %v834
    %v836 = vpop.f32.mrb[0].mxu0
    %v837 = vadd.f32 %v467, %v836
    %v838 = vpop.f32.mrb[0].mxu0
    %v839 = vadd.f32 %v463, %v838
    %v840 = vpop.f32.mrb[0].mxu0
    %v841 = vadd.f32 %v467, %v840
    %842 = vdwg.mxu0
    %843 = vmatprep.subr.bf16.mxu0 %v675
    %844 = vmatpush1.bf16.msra.mxu0 %v674
    %845 = vmatprep.subr.bf16.mxu0 %v679
    %846 = vmatpush1.bf16.msra.mxu0 %v678
    %847 = vmatprep.subr.bf16.mxu0 %v683
    %848 = vmatpush1.bf16.msra.mxu0 %v682
    %849 = vmatprep.subr.bf16.mxu0 %v687
    %850 = vmatpush1.bf16.msra.mxu0 %v686
    %851 = vmatprep.subr.bf16.mxu0 %v691
    %852 = vmatpush1.bf16.msra.mxu0 %v690
    %853 = vmatprep.subr.bf16.mxu0 %v695
    %854 = vmatpush1.bf16.msra.mxu0 %v694
    %855 = vmatprep.subr.bf16.mxu0 %v699
    %856 = vmatpush1.bf16.msra.mxu0 %v698
    %857 = vmatprep.subr.bf16.mxu0 %v703
    %858 = vmatpush1.bf16.msra.mxu0 %v702
    %859 = vmatprep.subr.bf16.mxu0 %v707
    %860 = vmatpush1.bf16.msra.mxu0 %v706
    %861 = vmatprep.subr.bf16.mxu0 %v711
    %862 = vmatpush1.bf16.msra.mxu0 %v710
    %863 = vmatprep.subr.bf16.mxu0 %v715
    %864 = vmatpush1.bf16.msra.mxu0 %v714
    %865 = vmatprep.subr.bf16.mxu0 %v719
    %866 = vmatpush1.bf16.msra.mxu0 %v718
    %867 = vmatprep.subr.bf16.mxu0 %v723
    %868 = vmatpush1.bf16.msra.mxu0 %v722
    %869 = vmatprep.subr.bf16.mxu0 %v727
    %870 = vmatpush1.bf16.msra.mxu0 %v726
    %871 = vmatprep.subr.bf16.mxu0 %v731
    %872 = vmatpush1.bf16.msra.mxu0 %v730
    %873 = vmatprep.subr.bf16.mxu0 %v735
    %874 = vmatpush1.bf16.msra.mxu0 %v734
    %875 = vmatprep.mubr.bf16.mxu0 %v393
    %876 = vmatmul.mubr.bf16.gmra.mrb[0].mxu0 %v392
    %v877 = vpop.f32.mrb[0].mxu0
    %v878 = vadd.f32 %v471, %v877
    %v879 = vpop.f32.mrb[0].mxu0
    %v880 = vadd.f32 %v475, %v879
    %v881 = vpop.f32.mrb[0].mxu0
    %v882 = vadd.f32 %v471, %v881
    %v883 = vpop.f32.mrb[0].mxu0
    %v884 = vadd.f32 %v475, %v883
    %885 = vdwg.mxu0
    %v886 = vmax.f32 %v835, 0.0
    %v887 = vmax.f32 %v837, 0.0
    %v888 = vmax.f32 %v878, 0.0
    %v889 = vmax.f32 %v880, 0.0
    %v890 = vmax.f32 %v839, 0.0
    %v891 = vmax.f32 %v841, 0.0
    %v892 = vmax.f32 %v882, 0.0
    %v893 = vmax.f32 %v884, 0.0
    %v894 = vpack.c.bf16 %v890, %v886
    %v895 = vpack.c.bf16 %v891, %v887
    %v896 = vpack.c.bf16 %v892, %v888
    %v897 = vpack.c.bf16 %v893, %v889
    %v898 = vld [vmem:[%s7] sm:$0xff]
    %v899 = vld [vmem:[%s7 + $0x8] sm:$0xff]
    %v900 = vld [vmem:[%s7 + $0x10] sm:$0xff]
    %v901 = vld [vmem:[%s7 + $0x18] sm:$0xff]
    %v902 = vld [vmem:[%s7 + $0x20] sm:$0xff]
    %v903 = vld [vmem:[%s7 + $0x28] sm:$0xff]
    %v904 = vld [vmem:[%s7 + $0x30] sm:$0xff]
    %v905 = vld [vmem:[%s7 + $0x38] sm:$0xff]
    %v906 = vld [vmem:[%s7 + $0x40] sm:$0xff]
    %v907 = vld [vmem:[%s7 + $0x48] sm:$0xff]
    %v908 = vld [vmem:[%s7 + $0x50] sm:$0xff]
    %v909 = vld [vmem:[%s7 + $0x58] sm:$0xff]
    %v910 = vld [vmem:[%s7 + $0x60] sm:$0xff]
    %v911 = vld [vmem:[%s7 + $0x68] sm:$0xff]
    %v912 = vld [vmem:[%s7 + $0x70] sm:$0xff]
    %v913 = vld [vmem:[%s7 + $0x78] sm:$0xff]
    %v914 = vld [vmem:[%s7 + $0x80] sm:$0xff]
    %v915 = vld [vmem:[%s7 + $0x88] sm:$0xff]
    %v916 = vld [vmem:[%s7 + $0x90] sm:$0xff]
    %v917 = vld [vmem:[%s7 + $0x98] sm:$0xff]
    %v918 = vld [vmem:[%s7 + $0xa0] sm:$0xff]
    %v919 = vld [vmem:[%s7 + $0xa8] sm:$0xff]
    %v920 = vld [vmem:[%s7 + $0xb0] sm:$0xff]
    %v921 = vld [vmem:[%s7 + $0xb8] sm:$0xff]
    %v922 = vld [vmem:[%s7 + $0xc0] sm:$0xff]
    %v923 = vld [vmem:[%s7 + $0xc8] sm:$0xff]
    %v924 = vld [vmem:[%s7 + $0xd0] sm:$0xff]
    %v925 = vld [vmem:[%s7 + $0xd8] sm:$0xff]
    %v926 = vld [vmem:[%s7 + $0xe0] sm:$0xff]
    %v927 = vld [vmem:[%s7 + $0xe8] sm:$0xff]
    %v928 = vld [vmem:[%s7 + $0xf0] sm:$0xff]
    %v929 = vld [vmem:[%s7 + $0xf8] sm:$0xff]
    %v930 = vld [vmem:[%s7 + $0x100] sm:$0xff]
    %v931 = vld [vmem:[%s7 + $0x108] sm:$0xff]
    %v932 = vld [vmem:[%s7 + $0x110] sm:$0xff]
    %v933 = vld [vmem:[%s7 + $0x118] sm:$0xff]
    %v934 = vld [vmem:[%s7 + $0x120] sm:$0xff]
    %v935 = vld [vmem:[%s7 + $0x128] sm:$0xff]
    %v936 = vld [vmem:[%s7 + $0x130] sm:$0xff]
    %v937 = vld [vmem:[%s7 + $0x138] sm:$0xff]
    %v938 = vld [vmem:[%s7 + $0x140] sm:$0xff]
    %v939 = vld [vmem:[%s7 + $0x148] sm:$0xff]
    %v940 = vld [vmem:[%s7 + $0x150] sm:$0xff]
    %v941 = vld [vmem:[%s7 + $0x158] sm:$0xff]
    %v942 = vld [vmem:[%s7 + $0x160] sm:$0xff]
    %v943 = vld [vmem:[%s7 + $0x168] sm:$0xff]
    %v944 = vld [vmem:[%s7 + $0x170] sm:$0xff]
    %v945 = vld [vmem:[%s7 + $0x178] sm:$0xff]
    %v946 = vld [vmem:[%s7 + $0x180] sm:$0xff]
    %v947 = vld [vmem:[%s7 + $0x188] sm:$0xff]
    %v948 = vld [vmem:[%s7 + $0x190] sm:$0xff]
    %v949 = vld [vmem:[%s7 + $0x198] sm:$0xff]
    %v950 = vld [vmem:[%s7 + $0x1a0] sm:$0xff]
    %v951 = vld [vmem:[%s7 + $0x1a8] sm:$0xff]
    %v952 = vld [vmem:[%s7 + $0x1b0] sm:$0xff]
    %v953 = vld [vmem:[%s7 + $0x1b8] sm:$0xff]
    %v954 = vld [vmem:[%s7 + $0x1c0] sm:$0xff]
    %v955 = vld [vmem:[%s7 + $0x1c8] sm:$0xff]
    %v956 = vld [vmem:[%s7 + $0x1d0] sm:$0xff]
    %v957 = vld [vmem:[%s7 + $0x1d8] sm:$0xff]
    %v958 = vld [vmem:[%s7 + $0x1e0] sm:$0xff]
    %v959 = vld [vmem:[%s7 + $0x1e8] sm:$0xff]
    %v960 = vld [vmem:[%s7 + $0x1f0] sm:$0xff]
    %v961 = vld [vmem:[%s7 + $0x1f8] sm:$0xff]
    %v962 = vld [vmem:[%s7 + $0x200] sm:$0xff]
    %v963 = vld [vmem:[%s7 + $0x208] sm:$0xff]
    %v964 = vld [vmem:[%s7 + $0x210] sm:$0xff]
    %v965 = vld [vmem:[%s7 + $0x218] sm:$0xff]
    %v966 = vld [vmem:[%s7 + $0x220] sm:$0xff]
    %v967 = vld [vmem:[%s7 + $0x228] sm:$0xff]
    %v968 = vld [vmem:[%s7 + $0x230] sm:$0xff]
    %v969 = vld [vmem:[%s7 + $0x238] sm:$0xff]
    %v970 = vld [vmem:[%s7 + $0x240] sm:$0xff]
    %v971 = vld [vmem:[%s7 + $0x248] sm:$0xff]
    %v972 = vld [vmem:[%s7 + $0x250] sm:$0xff]
    %v973 = vld [vmem:[%s7 + $0x258] sm:$0xff]
    %v974 = vld [vmem:[%s7 + $0x260] sm:$0xff]
    %v975 = vld [vmem:[%s7 + $0x268] sm:$0xff]
    %v976 = vld [vmem:[%s7 + $0x270] sm:$0xff]
    %v977 = vld [vmem:[%s7 + $0x278] sm:$0xff]
    %v978 = vld [vmem:[%s7 + $0x280] sm:$0xff]
    %v979 = vld [vmem:[%s7 + $0x288] sm:$0xff]
    %v980 = vld [vmem:[%s7 + $0x290] sm:$0xff]
    %v981 = vld [vmem:[%s7 + $0x298] sm:$0xff]
    %v982 = vld [vmem:[%s7 + $0x2a0] sm:$0xff]
    %v983 = vld [vmem:[%s7 + $0x2a8] sm:$0xff]
    %v984 = vld [vmem:[%s7 + $0x2b0] sm:$0xff]
    %v985 = vld [vmem:[%s7 + $0x2b8] sm:$0xff]
    %v986 = vld [vmem:[%s7 + $0x2c0] sm:$0xff]
    %v987 = vld [vmem:[%s7 + $0x2c8] sm:$0xff]
    %v988 = vld [vmem:[%s7 + $0x2d0] sm:$0xff]
    %v989 = vld [vmem:[%s7 + $0x2d8] sm:$0xff]
    %v990 = vld [vmem:[%s7 + $0x2e0] sm:$0xff]
    %v991 = vld [vmem:[%s7 + $0x2e8] sm:$0xff]
    %v992 = vld [vmem:[%s7 + $0x2f0] sm:$0xff]
    %v993 = vld [vmem:[%s7 + $0x2f8] sm:$0xff]
    %v994 = vld [vmem:[%s7 + $0x300] sm:$0xff]
    %v995 = vld [vmem:[%s7 + $0x308] sm:$0xff]
    %v996 = vld [vmem:[%s7 + $0x310] sm:$0xff]
    %v997 = vld [vmem:[%s7 + $0x318] sm:$0xff]
    %v998 = vld [vmem:[%s7 + $0x320] sm:$0xff]
    %v999 = vld [vmem:[%s7 + $0x328] sm:$0xff]
    %v1000 = vld [vmem:[%s7 + $0x330] sm:$0xff]
    %v1001 = vld [vmem:[%s7 + $0x338] sm:$0xff]
    %v1002 = vld [vmem:[%s7 + $0x340] sm:$0xff]
    %v1003 = vld [vmem:[%s7 + $0x348] sm:$0xff]
    %v1004 = vld [vmem:[%s7 + $0x350] sm:$0xff]
    %v1005 = vld [vmem:[%s7 + $0x358] sm:$0xff]
    %v1006 = vld [vmem:[%s7 + $0x360] sm:$0xff]
    %v1007 = vld [vmem:[%s7 + $0x368] sm:$0xff]
    %v1008 = vld [vmem:[%s7 + $0x370] sm:$0xff]
    %v1009 = vld [vmem:[%s7 + $0x378] sm:$0xff]
    %v1010 = vld [vmem:[%s7 + $0x380] sm:$0xff]
    %v1011 = vld [vmem:[%s7 + $0x388] sm:$0xff]
    %v1012 = vld [vmem:[%s7 + $0x390] sm:$0xff]
    %v1013 = vld [vmem:[%s7 + $0x398] sm:$0xff]
    %v1014 = vld [vmem:[%s7 + $0x3a0] sm:$0xff]
    %v1015 = vld [vmem:[%s7 + $0x3a8] sm:$0xff]
    %v1016 = vld [vmem:[%s7 + $0x3b0] sm:$0xff]
    %v1017 = vld [vmem:[%s7 + $0x3b8] sm:$0xff]
    %v1018 = vld [vmem:[%s7 + $0x3c0] sm:$0xff]
    %v1019 = vld [vmem:[%s7 + $0x3c8] sm:$0xff]
    %v1020 = vld [vmem:[%s7 + $0x3d0] sm:$0xff]
    %v1021 = vld [vmem:[%s7 + $0x3d8] sm:$0xff]
    %v1022 = vld [vmem:[%s7 + $0x3e0] sm:$0xff]
    %v1023 = vld [vmem:[%s7 + $0x3e8] sm:$0xff]
    %v1024 = vld [vmem:[%s7 + $0x3f0] sm:$0xff]
    %v1025 = vld [vmem:[%s7 + $0x3f8] sm:$0xff]
    %v1026 = vld [vmem:[%s7 + $0x400] sm:$0xff]
    %v1027 = vld [vmem:[%s7 + $0x408] sm:$0xff]
    %v1028 = vld [vmem:[%s7 + $0x410] sm:$0xff]
    %v1029 = vld [vmem:[%s7 + $0x418] sm:$0xff]
    %v1030 = vld [vmem:[%s7 + $0x420] sm:$0xff]
    %v1031 = vld [vmem:[%s7 + $0x428] sm:$0xff]
    %v1032 = vld [vmem:[%s7 + $0x430] sm:$0xff]
    %v1033 = vld [vmem:[%s7 + $0x438] sm:$0xff]
    %v1034 = vld [vmem:[%s7 + $0x440] sm:$0xff]
    %v1035 = vld [vmem:[%s7 + $0x448] sm:$0xff]
    %v1036 = vld [vmem:[%s7 + $0x450] sm:$0xff]
    %v1037 = vld [vmem:[%s7 + $0x458] sm:$0xff]
    %v1038 = vld [vmem:[%s7 + $0x460] sm:$0xff]
    %v1039 = vld [vmem:[%s7 + $0x468] sm:$0xff]
    %v1040 = vld [vmem:[%s7 + $0x470] sm:$0xff]
    %v1041 = vld [vmem:[%s7 + $0x478] sm:$0xff]
    %v1042 = vld [vmem:[%s7 + $0x480] sm:$0xff]
    %v1043 = vld [vmem:[%s7 + $0x488] sm:$0xff]
    %v1044 = vld [vmem:[%s7 + $0x490] sm:$0xff]
    %v1045 = vld [vmem:[%s7 + $0x498] sm:$0xff]
    %v1046 = vld [vmem:[%s7 + $0x4a0] sm:$0xff]
    %v1047 = vld [vmem:[%s7 + $0x4a8] sm:$0xff]
    %v1048 = vld [vmem:[%s7 + $0x4b0] sm:$0xff]
    %v1049 = vld [vmem:[%s7 + $0x4b8] sm:$0xff]
    %v1050 = vld [vmem:[%s7 + $0x4c0] sm:$0xff]
    %v1051 = vld [vmem:[%s7 + $0x4c8] sm:$0xff]
    %v1052 = vld [vmem:[%s7 + $0x4d0] sm:$0xff]
    %v1053 = vld [vmem:[%s7 + $0x4d8] sm:$0xff]
    %v1054 = vld [vmem:[%s7 + $0x4e0] sm:$0xff]
    %v1055 = vld [vmem:[%s7 + $0x4e8] sm:$0xff]
    %v1056 = vld [vmem:[%s7 + $0x4f0] sm:$0xff]
    %v1057 = vld [vmem:[%s7 + $0x4f8] sm:$0xff]
    %v1058 = vld [vmem:[%s7 + $0x500] sm:$0xff]
    %v1059 = vld [vmem:[%s7 + $0x508] sm:$0xff]
    %v1060 = vld [vmem:[%s7 + $0x510] sm:$0xff]
    %v1061 = vld [vmem:[%s7 + $0x518] sm:$0xff]
    %v1062 = vld [vmem:[%s7 + $0x520] sm:$0xff]
    %v1063 = vld [vmem:[%s7 + $0x528] sm:$0xff]
    %v1064 = vld [vmem:[%s7 + $0x530] sm:$0xff]
    %v1065 = vld [vmem:[%s7 + $0x538] sm:$0xff]
    %v1066 = vld [vmem:[%s7 + $0x540] sm:$0xff]
    %v1067 = vld [vmem:[%s7 + $0x548] sm:$0xff]
    %v1068 = vld [vmem:[%s7 + $0x550] sm:$0xff]
    %v1069 = vld [vmem:[%s7 + $0x558] sm:$0xff]
    %v1070 = vld [vmem:[%s7 + $0x560] sm:$0xff]
    %v1071 = vld [vmem:[%s7 + $0x568] sm:$0xff]
    %v1072 = vld [vmem:[%s7 + $0x570] sm:$0xff]
    %v1073 = vld [vmem:[%s7 + $0x578] sm:$0xff]
    %v1074 = vld [vmem:[%s7 + $0x580] sm:$0xff]
    %v1075 = vld [vmem:[%s7 + $0x588] sm:$0xff]
    %v1076 = vld [vmem:[%s7 + $0x590] sm:$0xff]
    %v1077 = vld [vmem:[%s7 + $0x598] sm:$0xff]
    %v1078 = vld [vmem:[%s7 + $0x5a0] sm:$0xff]
    %v1079 = vld [vmem:[%s7 + $0x5a8] sm:$0xff]
    %v1080 = vld [vmem:[%s7 + $0x5b0] sm:$0xff]
    %v1081 = vld [vmem:[%s7 + $0x5b8] sm:$0xff]
    %v1082 = vld [vmem:[%s7 + $0x5c0] sm:$0xff]
    %v1083 = vld [vmem:[%s7 + $0x5c8] sm:$0xff]
    %v1084 = vld [vmem:[%s7 + $0x5d0] sm:$0xff]
    %v1085 = vld [vmem:[%s7 + $0x5d8] sm:$0xff]
    %v1086 = vld [vmem:[%s7 + $0x5e0] sm:$0xff]
    %v1087 = vld [vmem:[%s7 + $0x5e8] sm:$0xff]
    %v1088 = vld [vmem:[%s7 + $0x5f0] sm:$0xff]
    %v1089 = vld [vmem:[%s7 + $0x5f8] sm:$0xff]
    %v1090 = vld [vmem:[%s7 + $0x600] sm:$0xff]
    %v1091 = vld [vmem:[%s7 + $0x608] sm:$0xff]
    %v1092 = vld [vmem:[%s7 + $0x610] sm:$0xff]
    %v1093 = vld [vmem:[%s7 + $0x618] sm:$0xff]
    %v1094 = vld [vmem:[%s7 + $0x620] sm:$0xff]
    %v1095 = vld [vmem:[%s7 + $0x628] sm:$0xff]
    %v1096 = vld [vmem:[%s7 + $0x630] sm:$0xff]
    %v1097 = vld [vmem:[%s7 + $0x638] sm:$0xff]
    %v1098 = vld [vmem:[%s7 + $0x640] sm:$0xff]
    %v1099 = vld [vmem:[%s7 + $0x648] sm:$0xff]
    %v1100 = vld [vmem:[%s7 + $0x650] sm:$0xff]
    %v1101 = vld [vmem:[%s7 + $0x658] sm:$0xff]
    %v1102 = vld [vmem:[%s7 + $0x660] sm:$0xff]
    %v1103 = vld [vmem:[%s7 + $0x668] sm:$0xff]
    %v1104 = vld [vmem:[%s7 + $0x670] sm:$0xff]
    %v1105 = vld [vmem:[%s7 + $0x678] sm:$0xff]
    %v1106 = vld [vmem:[%s7 + $0x680] sm:$0xff]
    %v1107 = vld [vmem:[%s7 + $0x688] sm:$0xff]
    %v1108 = vld [vmem:[%s7 + $0x690] sm:$0xff]
    %v1109 = vld [vmem:[%s7 + $0x698] sm:$0xff]
    %v1110 = vld [vmem:[%s7 + $0x6a0] sm:$0xff]
    %v1111 = vld [vmem:[%s7 + $0x6a8] sm:$0xff]
    %v1112 = vld [vmem:[%s7 + $0x6b0] sm:$0xff]
    %v1113 = vld [vmem:[%s7 + $0x6b8] sm:$0xff]
    %v1114 = vld [vmem:[%s7 + $0x6c0] sm:$0xff]
    %v1115 = vld [vmem:[%s7 + $0x6c8] sm:$0xff]
    %v1116 = vld [vmem:[%s7 + $0x6d0] sm:$0xff]
    %v1117 = vld [vmem:[%s7 + $0x6d8] sm:$0xff]
    %v1118 = vld [vmem:[%s7 + $0x6e0] sm:$0xff]
    %v1119 = vld [vmem:[%s7 + $0x6e8] sm:$0xff]
    %v1120 = vld [vmem:[%s7 + $0x6f0] sm:$0xff]
    %v1121 = vld [vmem:[%s7 + $0x6f8] sm:$0xff]
    %v1122 = vld [vmem:[%s7 + $0x700] sm:$0xff]
    %v1123 = vld [vmem:[%s7 + $0x708] sm:$0xff]
    %v1124 = vld [vmem:[%s7 + $0x710] sm:$0xff]
    %v1125 = vld [vmem:[%s7 + $0x718] sm:$0xff]
    %v1126 = vld [vmem:[%s7 + $0x720] sm:$0xff]
    %v1127 = vld [vmem:[%s7 + $0x728] sm:$0xff]
    %v1128 = vld [vmem:[%s7 + $0x730] sm:$0xff]
    %v1129 = vld [vmem:[%s7 + $0x738] sm:$0xff]
    %v1130 = vld [vmem:[%s7 + $0x740] sm:$0xff]
    %v1131 = vld [vmem:[%s7 + $0x748] sm:$0xff]
    %v1132 = vld [vmem:[%s7 + $0x750] sm:$0xff]
    %v1133 = vld [vmem:[%s7 + $0x758] sm:$0xff]
    %v1134 = vld [vmem:[%s7 + $0x760] sm:$0xff]
    %v1135 = vld [vmem:[%s7 + $0x768] sm:$0xff]
    %v1136 = vld [vmem:[%s7 + $0x770] sm:$0xff]
    %v1137 = vld [vmem:[%s7 + $0x778] sm:$0xff]
    %v1138 = vld [vmem:[%s7 + $0x780] sm:$0xff]
    %v1139 = vld [vmem:[%s7 + $0x788] sm:$0xff]
    %v1140 = vld [vmem:[%s7 + $0x790] sm:$0xff]
    %v1141 = vld [vmem:[%s7 + $0x798] sm:$0xff]
    %v1142 = vld [vmem:[%s7 + $0x7a0] sm:$0xff]
    %v1143 = vld [vmem:[%s7 + $0x7a8] sm:$0xff]
    %v1144 = vld [vmem:[%s7 + $0x7b0] sm:$0xff]
    %v1145 = vld [vmem:[%s7 + $0x7b8] sm:$0xff]
    %v1146 = vld [vmem:[%s7 + $0x7c0] sm:$0xff]
    %v1147 = vld [vmem:[%s7 + $0x7c8] sm:$0xff]
    %v1148 = vld [vmem:[%s7 + $0x7d0] sm:$0xff]
    %v1149 = vld [vmem:[%s7 + $0x7d8] sm:$0xff]
    %v1150 = vld [vmem:[%s7 + $0x7e0] sm:$0xff]
    %v1151 = vld [vmem:[%s7 + $0x7e8] sm:$0xff]
    %v1152 = vld [vmem:[%s7 + $0x7f0] sm:$0xff]
    %v1153 = vld [vmem:[%s7 + $0x7f8] sm:$0xff]
    %v1154 = vld [vmem:[%s8] sm:$0xff]
    %v1156 = vlaneseq
    %v1157 = vshrl.u32 %v1156, 7
    %v1158 = vsub.s32 0, %v1157
    %v1159 = vrot.slane %v1154, %v1158
    %v1160 = vlaneseq
    %v1161 = vshrl.u32 %v1160, 7
    %v1162 = vsub.s32 1, %v1161
    %v1163 = vrot.slane %v1154, %v1162
    %v1164 = vlaneseq
    %v1165 = vshrl.u32 %v1164, 7
    %v1166 = vsub.s32 2, %v1165
    %v1167 = vrot.slane %v1154, %v1166
    %v1168 = vlaneseq
    %v1169 = vshrl.u32 %v1168, 7
    %v1170 = vsub.s32 3, %v1169
    %v1171 = vrot.slane %v1154, %v1170
    %v1172 = vlaneseq
    %v1173 = vshrl.u32 %v1172, 7
    %v1174 = vsub.s32 4, %v1173
    %v1175 = vrot.slane %v1154, %v1174
    %v1176 = vlaneseq
    %v1177 = vshrl.u32 %v1176, 7
    %v1178 = vsub.s32 5, %v1177
    %v1179 = vrot.slane %v1154, %v1178
    %v1180 = vlaneseq
    %v1181 = vshrl.u32 %v1180, 7
    %v1182 = vsub.s32 6, %v1181
    %v1183 = vrot.slane %v1154, %v1182
    %v1184 = vlaneseq
    %v1185 = vshrl.u32 %v1184, 7
    %v1186 = vsub.s32 7, %v1185
    %v1187 = vrot.slane %v1154, %v1186
    %v1452 = vunpack.c.l.b16 %v898
    %v1453 = vunpack.c.h.b16 %v898
    %v1454 = vunpack.c.l.b16 %v899
    %v1455 = vunpack.c.h.b16 %v899
    %v1456 = vunpack.c.l.b16 %v900
    %v1457 = vunpack.c.h.b16 %v900
    %v1458 = vunpack.c.l.b16 %v901
    %v1459 = vunpack.c.h.b16 %v901
    %v1460 = vunpack.c.l.b16 %v902
    %v1461 = vunpack.c.h.b16 %v902
    %v1462 = vunpack.c.l.b16 %v903
    %v1463 = vunpack.c.h.b16 %v903
    %v1464 = vunpack.c.l.b16 %v904
    %v1465 = vunpack.c.h.b16 %v904
    %v1466 = vunpack.c.l.b16 %v905
    %v1467 = vunpack.c.h.b16 %v905
    %v1468 = vunpack.c.l.b16 %v906
    %v1469 = vunpack.c.h.b16 %v906
    %v1470 = vunpack.c.l.b16 %v907
    %v1471 = vunpack.c.h.b16 %v907
    %v1472 = vunpack.c.l.b16 %v908
    %v1473 = vunpack.c.h.b16 %v908
    %v1474 = vunpack.c.l.b16 %v909
    %v1475 = vunpack.c.h.b16 %v909
    %v1476 = vunpack.c.l.b16 %v910
    %v1477 = vunpack.c.h.b16 %v910
    %v1478 = vunpack.c.l.b16 %v911
    %v1479 = vunpack.c.h.b16 %v911
    %v1480 = vunpack.c.l.b16 %v912
    %v1481 = vunpack.c.h.b16 %v912
    %v1482 = vunpack.c.l.b16 %v913
    %v1483 = vunpack.c.h.b16 %v913
    %v1484 = vunpack.c.l.b16 %v914
    %v1485 = vunpack.c.h.b16 %v914
    %v1486 = vunpack.c.l.b16 %v915
    %v1487 = vunpack.c.h.b16 %v915
    %v1488 = vunpack.c.l.b16 %v916
    %v1489 = vunpack.c.h.b16 %v916
    %v1490 = vunpack.c.l.b16 %v917
    %v1491 = vunpack.c.h.b16 %v917
    %v1492 = vunpack.c.l.b16 %v918
    %v1493 = vunpack.c.h.b16 %v918
    %v1494 = vunpack.c.l.b16 %v919
    %v1495 = vunpack.c.h.b16 %v919
    %v1496 = vunpack.c.l.b16 %v920
    %v1497 = vunpack.c.h.b16 %v920
    %v1498 = vunpack.c.l.b16 %v921
    %v1499 = vunpack.c.h.b16 %v921
    %v1500 = vunpack.c.l.b16 %v922
    %v1501 = vunpack.c.h.b16 %v922
    %v1502 = vunpack.c.l.b16 %v923
    %v1503 = vunpack.c.h.b16 %v923
    %v1504 = vunpack.c.l.b16 %v924
    %v1505 = vunpack.c.h.b16 %v924
    %v1506 = vunpack.c.l.b16 %v925
    %v1507 = vunpack.c.h.b16 %v925
    %v1508 = vunpack.c.l.b16 %v926
    %v1509 = vunpack.c.h.b16 %v926
    %v1510 = vunpack.c.l.b16 %v927
    %v1511 = vunpack.c.h.b16 %v927
    %v1512 = vunpack.c.l.b16 %v928
    %v1513 = vunpack.c.h.b16 %v928
    %v1514 = vunpack.c.l.b16 %v929
    %v1515 = vunpack.c.h.b16 %v929
    %v1516 = vunpack.c.l.b16 %v930
    %v1517 = vunpack.c.h.b16 %v930
    %v1518 = vunpack.c.l.b16 %v931
    %v1519 = vunpack.c.h.b16 %v931
    %v1520 = vunpack.c.l.b16 %v932
    %v1521 = vunpack.c.h.b16 %v932
    %v1522 = vunpack.c.l.b16 %v933
    %v1523 = vunpack.c.h.b16 %v933
    %v1524 = vunpack.c.l.b16 %v934
    %v1525 = vunpack.c.h.b16 %v934
    %v1526 = vunpack.c.l.b16 %v935
    %v1527 = vunpack.c.h.b16 %v935
    %v1528 = vunpack.c.l.b16 %v936
    %v1529 = vunpack.c.h.b16 %v936
    %v1530 = vunpack.c.l.b16 %v937
    %v1531 = vunpack.c.h.b16 %v937
    %v1532 = vunpack.c.l.b16 %v938
    %v1533 = vunpack.c.h.b16 %v938
    %v1534 = vunpack.c.l.b16 %v939
    %v1535 = vunpack.c.h.b16 %v939
    %v1536 = vunpack.c.l.b16 %v940
    %v1537 = vunpack.c.h.b16 %v940
    %v1538 = vunpack.c.l.b16 %v941
    %v1539 = vunpack.c.h.b16 %v941
    %v1540 = vunpack.c.l.b16 %v942
    %v1541 = vunpack.c.h.b16 %v942
    %v1542 = vunpack.c.l.b16 %v943
    %v1543 = vunpack.c.h.b16 %v943
    %v1544 = vunpack.c.l.b16 %v944
    %v1545 = vunpack.c.h.b16 %v944
    %v1546 = vunpack.c.l.b16 %v945
    %v1547 = vunpack.c.h.b16 %v945
    %v1548 = vunpack.c.l.b16 %v946
    %v1549 = vunpack.c.h.b16 %v946
    %v1550 = vunpack.c.l.b16 %v947
    %v1551 = vunpack.c.h.b16 %v947
    %v1552 = vunpack.c.l.b16 %v948
    %v1553 = vunpack.c.h.b16 %v948
    %v1554 = vunpack.c.l.b16 %v949
    %v1555 = vunpack.c.h.b16 %v949
    %v1556 = vunpack.c.l.b16 %v950
    %v1557 = vunpack.c.h.b16 %v950
    %v1558 = vunpack.c.l.b16 %v951
    %v1559 = vunpack.c.h.b16 %v951
    %v1560 = vunpack.c.l.b16 %v952
    %v1561 = vunpack.c.h.b16 %v952
    %v1562 = vunpack.c.l.b16 %v953
    %v1563 = vunpack.c.h.b16 %v953
    %v1564 = vunpack.c.l.b16 %v954
    %v1565 = vunpack.c.h.b16 %v954
    %v1566 = vunpack.c.l.b16 %v955
    %v1567 = vunpack.c.h.b16 %v955
    %v1568 = vunpack.c.l.b16 %v956
    %v1569 = vunpack.c.h.b16 %v956
    %v1570 = vunpack.c.l.b16 %v957
    %v1571 = vunpack.c.h.b16 %v957
    %v1572 = vunpack.c.l.b16 %v958
    %v1573 = vunpack.c.h.b16 %v958
    %v1574 = vunpack.c.l.b16 %v959
    %v1575 = vunpack.c.h.b16 %v959
    %v1576 = vunpack.c.l.b16 %v960
    %v1577 = vunpack.c.h.b16 %v960
    %v1578 = vunpack.c.l.b16 %v961
    %v1579 = vunpack.c.h.b16 %v961
    %v1580 = vunpack.c.l.b16 %v962
    %v1581 = vunpack.c.h.b16 %v962
    %v1582 = vunpack.c.l.b16 %v963
    %v1583 = vunpack.c.h.b16 %v963
    %v1584 = vunpack.c.l.b16 %v964
    %v1585 = vunpack.c.h.b16 %v964
    %v1586 = vunpack.c.l.b16 %v965
    %v1587 = vunpack.c.h.b16 %v965
    %v1588 = vunpack.c.l.b16 %v966
    %v1589 = vunpack.c.h.b16 %v966
    %v1590 = vunpack.c.l.b16 %v967
    %v1591 = vunpack.c.h.b16 %v967
    %v1592 = vunpack.c.l.b16 %v968
    %v1593 = vunpack.c.h.b16 %v968
    %v1594 = vunpack.c.l.b16 %v969
    %v1595 = vunpack.c.h.b16 %v969
    %v1596 = vunpack.c.l.b16 %v970
    %v1597 = vunpack.c.h.b16 %v970
    %v1598 = vunpack.c.l.b16 %v971
    %v1599 = vunpack.c.h.b16 %v971
    %v1600 = vunpack.c.l.b16 %v972
    %v1601 = vunpack.c.h.b16 %v972
    %v1602 = vunpack.c.l.b16 %v973
    %v1603 = vunpack.c.h.b16 %v973
    %v1604 = vunpack.c.l.b16 %v974
    %v1605 = vunpack.c.h.b16 %v974
    %v1606 = vunpack.c.l.b16 %v975
    %v1607 = vunpack.c.h.b16 %v975
    %v1608 = vunpack.c.l.b16 %v976
    %v1609 = vunpack.c.h.b16 %v976
    %v1610 = vunpack.c.l.b16 %v977
    %v1611 = vunpack.c.h.b16 %v977
    %v1612 = vunpack.c.l.b16 %v978
    %v1613 = vunpack.c.h.b16 %v978
    %v1614 = vunpack.c.l.b16 %v979
    %v1615 = vunpack.c.h.b16 %v979
    %v1616 = vunpack.c.l.b16 %v980
    %v1617 = vunpack.c.h.b16 %v980
    %v1618 = vunpack.c.l.b16 %v981
    %v1619 = vunpack.c.h.b16 %v981
    %v1620 = vunpack.c.l.b16 %v982
    %v1621 = vunpack.c.h.b16 %v982
    %v1622 = vunpack.c.l.b16 %v983
    %v1623 = vunpack.c.h.b16 %v983
    %v1624 = vunpack.c.l.b16 %v984
    %v1625 = vunpack.c.h.b16 %v984
    %v1626 = vunpack.c.l.b16 %v985
    %v1627 = vunpack.c.h.b16 %v985
    %v1628 = vunpack.c.l.b16 %v986
    %v1629 = vunpack.c.h.b16 %v986
    %v1630 = vunpack.c.l.b16 %v987
    %v1631 = vunpack.c.h.b16 %v987
    %v1632 = vunpack.c.l.b16 %v988
    %v1633 = vunpack.c.h.b16 %v988
    %v1634 = vunpack.c.l.b16 %v989
    %v1635 = vunpack.c.h.b16 %v989
    %v1636 = vunpack.c.l.b16 %v990
    %v1637 = vunpack.c.h.b16 %v990
    %v1638 = vunpack.c.l.b16 %v991
    %v1639 = vunpack.c.h.b16 %v991
    %v1640 = vunpack.c.l.b16 %v992
    %v1641 = vunpack.c.h.b16 %v992
    %v1642 = vunpack.c.l.b16 %v993
    %v1643 = vunpack.c.h.b16 %v993
    %v1644 = vunpack.c.l.b16 %v994
    %v1645 = vunpack.c.h.b16 %v994
    %v1646 = vunpack.c.l.b16 %v995
    %v1647 = vunpack.c.h.b16 %v995
    %v1648 = vunpack.c.l.b16 %v996
    %v1649 = vunpack.c.h.b16 %v996
    %v1650 = vunpack.c.l.b16 %v997
    %v1651 = vunpack.c.h.b16 %v997
    %v1652 = vunpack.c.l.b16 %v998
    %v1653 = vunpack.c.h.b16 %v998
    %v1654 = vunpack.c.l.b16 %v999
    %v1655 = vunpack.c.h.b16 %v999
    %v1656 = vunpack.c.l.b16 %v1000
    %v1657 = vunpack.c.h.b16 %v1000
    %v1658 = vunpack.c.l.b16 %v1001
    %v1659 = vunpack.c.h.b16 %v1001
    %v1660 = vunpack.c.l.b16 %v1002
    %v1661 = vunpack.c.h.b16 %v1002
    %v1662 = vunpack.c.l.b16 %v1003
    %v1663 = vunpack.c.h.b16 %v1003
    %v1664 = vunpack.c.l.b16 %v1004
    %v1665 = vunpack.c.h.b16 %v1004
    %v1666 = vunpack.c.l.b16 %v1005
    %v1667 = vunpack.c.h.b16 %v1005
    %v1668 = vunpack.c.l.b16 %v1006
    %v1669 = vunpack.c.h.b16 %v1006
    %v1670 = vunpack.c.l.b16 %v1007
    %v1671 = vunpack.c.h.b16 %v1007
    %v1672 = vunpack.c.l.b16 %v1008
    %v1673 = vunpack.c.h.b16 %v1008
    %v1674 = vunpack.c.l.b16 %v1009
    %v1675 = vunpack.c.h.b16 %v1009
    %v1676 = vunpack.c.l.b16 %v1010
    %v1677 = vunpack.c.h.b16 %v1010
    %v1678 = vunpack.c.l.b16 %v1011
    %v1679 = vunpack.c.h.b16 %v1011
    %v1680 = vunpack.c.l.b16 %v1012
    %v1681 = vunpack.c.h.b16 %v1012
    %v1682 = vunpack.c.l.b16 %v1013
    %v1683 = vunpack.c.h.b16 %v1013
    %v1684 = vunpack.c.l.b16 %v1014
    %v1685 = vunpack.c.h.b16 %v1014
    %v1686 = vunpack.c.l.b16 %v1015
    %v1687 = vunpack.c.h.b16 %v1015
    %v1688 = vunpack.c.l.b16 %v1016
    %v1689 = vunpack.c.h.b16 %v1016
    %v1690 = vunpack.c.l.b16 %v1017
    %v1691 = vunpack.c.h.b16 %v1017
    %v1692 = vunpack.c.l.b16 %v1018
    %v1693 = vunpack.c.h.b16 %v1018
    %v1694 = vunpack.c.l.b16 %v1019
    %v1695 = vunpack.c.h.b16 %v1019
    %v1696 = vunpack.c.l.b16 %v1020
    %v1697 = vunpack.c.h.b16 %v1020
    %v1698 = vunpack.c.l.b16 %v1021
    %v1699 = vunpack.c.h.b16 %v1021
    %v1700 = vunpack.c.l.b16 %v1022
    %v1701 = vunpack.c.h.b16 %v1022
    %v1702 = vunpack.c.l.b16 %v1023
    %v1703 = vunpack.c.h.b16 %v1023
    %v1704 = vunpack.c.l.b16 %v1024
    %v1705 = vunpack.c.h.b16 %v1024
    %v1706 = vunpack.c.l.b16 %v1025
    %v1707 = vunpack.c.h.b16 %v1025
    %v1708 = vunpack.c.l.b16 %v1026
    %v1709 = vunpack.c.h.b16 %v1026
    %v1710 = vunpack.c.l.b16 %v1027
    %v1711 = vunpack.c.h.b16 %v1027
    %v1712 = vunpack.c.l.b16 %v1028
    %v1713 = vunpack.c.h.b16 %v1028
    %v1714 = vunpack.c.l.b16 %v1029
    %v1715 = vunpack.c.h.b16 %v1029
    %v1716 = vunpack.c.l.b16 %v1030
    %v1717 = vunpack.c.h.b16 %v1030
    %v1718 = vunpack.c.l.b16 %v1031
    %v1719 = vunpack.c.h.b16 %v1031
    %v1720 = vunpack.c.l.b16 %v1032
    %v1721 = vunpack.c.h.b16 %v1032
    %v1722 = vunpack.c.l.b16 %v1033
    %v1723 = vunpack.c.h.b16 %v1033
    %v1724 = vunpack.c.l.b16 %v1034
    %v1725 = vunpack.c.h.b16 %v1034
    %v1726 = vunpack.c.l.b16 %v1035
    %v1727 = vunpack.c.h.b16 %v1035
    %v1728 = vunpack.c.l.b16 %v1036
    %v1729 = vunpack.c.h.b16 %v1036
    %v1730 = vunpack.c.l.b16 %v1037
    %v1731 = vunpack.c.h.b16 %v1037
    %v1732 = vunpack.c.l.b16 %v1038
    %v1733 = vunpack.c.h.b16 %v1038
    %v1734 = vunpack.c.l.b16 %v1039
    %v1735 = vunpack.c.h.b16 %v1039
    %v1736 = vunpack.c.l.b16 %v1040
    %v1737 = vunpack.c.h.b16 %v1040
    %v1738 = vunpack.c.l.b16 %v1041
    %v1739 = vunpack.c.h.b16 %v1041
    %v1740 = vunpack.c.l.b16 %v1042
    %v1741 = vunpack.c.h.b16 %v1042
    %v1742 = vunpack.c.l.b16 %v1043
    %v1743 = vunpack.c.h.b16 %v1043
    %v1744 = vunpack.c.l.b16 %v1044
    %v1745 = vunpack.c.h.b16 %v1044
    %v1746 = vunpack.c.l.b16 %v1045
    %v1747 = vunpack.c.h.b16 %v1045
    %v1748 = vunpack.c.l.b16 %v1046
    %v1749 = vunpack.c.h.b16 %v1046
    %v1750 = vunpack.c.l.b16 %v1047
    %v1751 = vunpack.c.h.b16 %v1047
    %v1752 = vunpack.c.l.b16 %v1048
    %v1753 = vunpack.c.h.b16 %v1048
    %v1754 = vunpack.c.l.b16 %v1049
    %v1755 = vunpack.c.h.b16 %v1049
    %v1756 = vunpack.c.l.b16 %v1050
    %v1757 = vunpack.c.h.b16 %v1050
    %v1758 = vunpack.c.l.b16 %v1051
    %v1759 = vunpack.c.h.b16 %v1051
    %v1760 = vunpack.c.l.b16 %v1052
    %v1761 = vunpack.c.h.b16 %v1052
    %v1762 = vunpack.c.l.b16 %v1053
    %v1763 = vunpack.c.h.b16 %v1053
    %v1764 = vunpack.c.l.b16 %v1054
    %v1765 = vunpack.c.h.b16 %v1054
    %v1766 = vunpack.c.l.b16 %v1055
    %v1767 = vunpack.c.h.b16 %v1055
    %v1768 = vunpack.c.l.b16 %v1056
    %v1769 = vunpack.c.h.b16 %v1056
    %v1770 = vunpack.c.l.b16 %v1057
    %v1771 = vunpack.c.h.b16 %v1057
    %v1772 = vunpack.c.l.b16 %v1058
    %v1773 = vunpack.c.h.b16 %v1058
    %v1774 = vunpack.c.l.b16 %v1059
    %v1775 = vunpack.c.h.b16 %v1059
    %v1776 = vunpack.c.l.b16 %v1060
    %v1777 = vunpack.c.h.b16 %v1060
    %v1778 = vunpack.c.l.b16 %v1061
    %v1779 = vunpack.c.h.b16 %v1061
    %v1780 = vunpack.c.l.b16 %v1062
    %v1781 = vunpack.c.h.b16 %v1062
    %v1782 = vunpack.c.l.b16 %v1063
    %v1783 = vunpack.c.h.b16 %v1063
    %v1784 = vunpack.c.l.b16 %v1064
    %v1785 = vunpack.c.h.b16 %v1064
    %v1786 = vunpack.c.l.b16 %v1065
    %v1787 = vunpack.c.h.b16 %v1065
    %v1788 = vunpack.c.l.b16 %v1066
    %v1789 = vunpack.c.h.b16 %v1066
    %v1790 = vunpack.c.l.b16 %v1067
    %v1791 = vunpack.c.h.b16 %v1067
    %v1792 = vunpack.c.l.b16 %v1068
    %v1793 = vunpack.c.h.b16 %v1068
    %v1794 = vunpack.c.l.b16 %v1069
    %v1795 = vunpack.c.h.b16 %v1069
    %v1796 = vunpack.c.l.b16 %v1070
    %v1797 = vunpack.c.h.b16 %v1070
    %v1798 = vunpack.c.l.b16 %v1071
    %v1799 = vunpack.c.h.b16 %v1071
    %v1800 = vunpack.c.l.b16 %v1072
    %v1801 = vunpack.c.h.b16 %v1072
    %v1802 = vunpack.c.l.b16 %v1073
    %v1803 = vunpack.c.h.b16 %v1073
    %v1804 = vunpack.c.l.b16 %v1074
    %v1805 = vunpack.c.h.b16 %v1074
    %v1806 = vunpack.c.l.b16 %v1075
    %v1807 = vunpack.c.h.b16 %v1075
    %v1808 = vunpack.c.l.b16 %v1076
    %v1809 = vunpack.c.h.b16 %v1076
    %v1810 = vunpack.c.l.b16 %v1077
    %v1811 = vunpack.c.h.b16 %v1077
    %v1812 = vunpack.c.l.b16 %v1078
    %v1813 = vunpack.c.h.b16 %v1078
    %v1814 = vunpack.c.l.b16 %v1079
    %v1815 = vunpack.c.h.b16 %v1079
    %v1816 = vunpack.c.l.b16 %v1080
    %v1817 = vunpack.c.h.b16 %v1080
    %v1818 = vunpack.c.l.b16 %v1081
    %v1819 = vunpack.c.h.b16 %v1081
    %v1820 = vunpack.c.l.b16 %v1082
    %v1821 = vunpack.c.h.b16 %v1082
    %v1822 = vunpack.c.l.b16 %v1083
    %v1823 = vunpack.c.h.b16 %v1083
    %v1824 = vunpack.c.l.b16 %v1084
    %v1825 = vunpack.c.h.b16 %v1084
    %v1826 = vunpack.c.l.b16 %v1085
    %v1827 = vunpack.c.h.b16 %v1085
    %v1828 = vunpack.c.l.b16 %v1086
    %v1829 = vunpack.c.h.b16 %v1086
    %v1830 = vunpack.c.l.b16 %v1087
    %v1831 = vunpack.c.h.b16 %v1087
    %v1832 = vunpack.c.l.b16 %v1088
    %v1833 = vunpack.c.h.b16 %v1088
    %v1834 = vunpack.c.l.b16 %v1089
    %v1835 = vunpack.c.h.b16 %v1089
    %v1836 = vunpack.c.l.b16 %v1090
    %v1837 = vunpack.c.h.b16 %v1090
    %v1838 = vunpack.c.l.b16 %v1091
    %v1839 = vunpack.c.h.b16 %v1091
    %v1840 = vunpack.c.l.b16 %v1092
    %v1841 = vunpack.c.h.b16 %v1092
    %v1842 = vunpack.c.l.b16 %v1093
    %v1843 = vunpack.c.h.b16 %v1093
    %v1844 = vunpack.c.l.b16 %v1094
    %v1845 = vunpack.c.h.b16 %v1094
    %v1846 = vunpack.c.l.b16 %v1095
    %v1847 = vunpack.c.h.b16 %v1095
    %v1848 = vunpack.c.l.b16 %v1096
    %v1849 = vunpack.c.h.b16 %v1096
    %v1850 = vunpack.c.l.b16 %v1097
    %v1851 = vunpack.c.h.b16 %v1097
    %v1852 = vunpack.c.l.b16 %v1098
    %v1853 = vunpack.c.h.b16 %v1098
    %v1854 = vunpack.c.l.b16 %v1099
    %v1855 = vunpack.c.h.b16 %v1099
    %v1856 = vunpack.c.l.b16 %v1100
    %v1857 = vunpack.c.h.b16 %v1100
    %v1858 = vunpack.c.l.b16 %v1101
    %v1859 = vunpack.c.h.b16 %v1101
    %v1860 = vunpack.c.l.b16 %v1102
    %v1861 = vunpack.c.h.b16 %v1102
    %v1862 = vunpack.c.l.b16 %v1103
    %v1863 = vunpack.c.h.b16 %v1103
    %v1864 = vunpack.c.l.b16 %v1104
    %v1865 = vunpack.c.h.b16 %v1104
    %v1866 = vunpack.c.l.b16 %v1105
    %v1867 = vunpack.c.h.b16 %v1105
    %v1868 = vunpack.c.l.b16 %v1106
    %v1869 = vunpack.c.h.b16 %v1106
    %v1870 = vunpack.c.l.b16 %v1107
    %v1871 = vunpack.c.h.b16 %v1107
    %v1872 = vunpack.c.l.b16 %v1108
    %v1873 = vunpack.c.h.b16 %v1108
    %v1874 = vunpack.c.l.b16 %v1109
    %v1875 = vunpack.c.h.b16 %v1109
    %v1876 = vunpack.c.l.b16 %v1110
    %v1877 = vunpack.c.h.b16 %v1110
    %v1878 = vunpack.c.l.b16 %v1111
    %v1879 = vunpack.c.h.b16 %v1111
    %v1880 = vunpack.c.l.b16 %v1112
    %v1881 = vunpack.c.h.b16 %v1112
    %v1882 = vunpack.c.l.b16 %v1113
    %v1883 = vunpack.c.h.b16 %v1113
    %v1884 = vunpack.c.l.b16 %v1114
    %v1885 = vunpack.c.h.b16 %v1114
    %v1886 = vunpack.c.l.b16 %v1115
    %v1887 = vunpack.c.h.b16 %v1115
    %v1888 = vunpack.c.l.b16 %v1116
    %v1889 = vunpack.c.h.b16 %v1116
    %v1890 = vunpack.c.l.b16 %v1117
    %v1891 = vunpack.c.h.b16 %v1117
    %v1892 = vunpack.c.l.b16 %v1118
    %v1893 = vunpack.c.h.b16 %v1118
    %v1894 = vunpack.c.l.b16 %v1119
    %v1895 = vunpack.c.h.b16 %v1119
    %v1896 = vunpack.c.l.b16 %v1120
    %v1897 = vunpack.c.h.b16 %v1120
    %v1898 = vunpack.c.l.b16 %v1121
    %v1899 = vunpack.c.h.b16 %v1121
    %v1900 = vunpack.c.l.b16 %v1122
    %v1901 = vunpack.c.h.b16 %v1122
    %v1902 = vunpack.c.l.b16 %v1123
    %v1903 = vunpack.c.h.b16 %v1123
    %v1904 = vunpack.c.l.b16 %v1124
    %v1905 = vunpack.c.h.b16 %v1124
    %v1906 = vunpack.c.l.b16 %v1125
    %v1907 = vunpack.c.h.b16 %v1125
    %v1908 = vunpack.c.l.b16 %v1126
    %v1909 = vunpack.c.h.b16 %v1126
    %v1910 = vunpack.c.l.b16 %v1127
    %v1911 = vunpack.c.h.b16 %v1127
    %v1912 = vunpack.c.l.b16 %v1128
    %v1913 = vunpack.c.h.b16 %v1128
    %v1914 = vunpack.c.l.b16 %v1129
    %v1915 = vunpack.c.h.b16 %v1129
    %v1916 = vunpack.c.l.b16 %v1130
    %v1917 = vunpack.c.h.b16 %v1130
    %v1918 = vunpack.c.l.b16 %v1131
    %v1919 = vunpack.c.h.b16 %v1131
    %v1920 = vunpack.c.l.b16 %v1132
    %v1921 = vunpack.c.h.b16 %v1132
    %v1922 = vunpack.c.l.b16 %v1133
    %v1923 = vunpack.c.h.b16 %v1133
    %v1924 = vunpack.c.l.b16 %v1134
    %v1925 = vunpack.c.h.b16 %v1134
    %v1926 = vunpack.c.l.b16 %v1135
    %v1927 = vunpack.c.h.b16 %v1135
    %v1928 = vunpack.c.l.b16 %v1136
    %v1929 = vunpack.c.h.b16 %v1136
    %v1930 = vunpack.c.l.b16 %v1137
    %v1931 = vunpack.c.h.b16 %v1137
    %v1932 = vunpack.c.l.b16 %v1138
    %v1933 = vunpack.c.h.b16 %v1138
    %v1934 = vunpack.c.l.b16 %v1139
    %v1935 = vunpack.c.h.b16 %v1139
    %v1936 = vunpack.c.l.b16 %v1140
    %v1937 = vunpack.c.h.b16 %v1140
    %v1938 = vunpack.c.l.b16 %v1141
    %v1939 = vunpack.c.h.b16 %v1141
    %v1940 = vunpack.c.l.b16 %v1142
    %v1941 = vunpack.c.h.b16 %v1142
    %v1942 = vunpack.c.l.b16 %v1143
    %v1943 = vunpack.c.h.b16 %v1143
    %v1944 = vunpack.c.l.b16 %v1144
    %v1945 = vunpack.c.h.b16 %v1144
    %v1946 = vunpack.c.l.b16 %v1145
    %v1947 = vunpack.c.h.b16 %v1145
    %v1948 = vunpack.c.l.b16 %v1146
    %v1949 = vunpack.c.h.b16 %v1146
    %v1950 = vunpack.c.l.b16 %v1147
    %v1951 = vunpack.c.h.b16 %v1147
    %v1952 = vunpack.c.l.b16 %v1148
    %v1953 = vunpack.c.h.b16 %v1148
    %v1954 = vunpack.c.l.b16 %v1149
    %v1955 = vunpack.c.h.b16 %v1149
    %v1956 = vunpack.c.l.b16 %v1150
    %v1957 = vunpack.c.h.b16 %v1150
    %v1958 = vunpack.c.l.b16 %v1151
    %v1959 = vunpack.c.h.b16 %v1151
    %v1960 = vunpack.c.l.b16 %v1152
    %v1961 = vunpack.c.h.b16 %v1152
    %v1962 = vunpack.c.l.b16 %v1153
    %v1963 = vunpack.c.h.b16 %v1153
    %v1964 = vpack.c.b16 %v1460, %v1452
    %v1965 = vpack.c.b16 %v1461, %v1453
    %v1966 = vpack.c.b16 %v1462, %v1454
    %v1967 = vpack.c.b16 %v1463, %v1455
    %v1968 = vpack.c.b16 %v1464, %v1456
    %v1969 = vpack.c.b16 %v1465, %v1457
    %v1970 = vpack.c.b16 %v1466, %v1458
    %v1971 = vpack.c.b16 %v1467, %v1459
    %v1972 = vpack.c.b16 %v1476, %v1468
    %v1973 = vpack.c.b16 %v1477, %v1469
    %v1974 = vpack.c.b16 %v1478, %v1470
    %v1975 = vpack.c.b16 %v1479, %v1471
    %v1976 = vpack.c.b16 %v1480, %v1472
    %v1977 = vpack.c.b16 %v1481, %v1473
    %v1978 = vpack.c.b16 %v1482, %v1474
    %v1979 = vpack.c.b16 %v1483, %v1475
    %v1980 = vpack.c.b16 %v1492, %v1484
    %v1981 = vpack.c.b16 %v1493, %v1485
    %v1982 = vpack.c.b16 %v1494, %v1486
    %v1983 = vpack.c.b16 %v1495, %v1487
    %v1984 = vpack.c.b16 %v1496, %v1488
    %v1985 = vpack.c.b16 %v1497, %v1489
    %v1986 = vpack.c.b16 %v1498, %v1490
    %v1987 = vpack.c.b16 %v1499, %v1491
    %v1988 = vpack.c.b16 %v1508, %v1500
    %v1989 = vpack.c.b16 %v1509, %v1501
    %v1990 = vpack.c.b16 %v1510, %v1502
    %v1991 = vpack.c.b16 %v1511, %v1503
    %v1992 = vpack.c.b16 %v1512, %v1504
    %v1993 = vpack.c.b16 %v1513, %v1505
    %v1994 = vpack.c.b16 %v1514, %v1506
    %v1995 = vpack.c.b16 %v1515, %v1507
    %v1996 = vpack.c.b16 %v1524, %v1516
    %v1997 = vpack.c.b16 %v1525, %v1517
    %v1998 = vpack.c.b16 %v1526, %v1518
    %v1999 = vpack.c.b16 %v1527, %v1519
    %v2000 = vpack.c.b16 %v1528, %v1520
    %v2001 = vpack.c.b16 %v1529, %v1521
    %v2002 = vpack.c.b16 %v1530, %v1522
    %v2003 = vpack.c.b16 %v1531, %v1523
    %v2004 = vpack.c.b16 %v1540, %v1532
    %v2005 = vpack.c.b16 %v1541, %v1533
    %v2006 = vpack.c.b16 %v1542, %v1534
    %v2007 = vpack.c.b16 %v1543, %v1535
    %v2008 = vpack.c.b16 %v1544, %v1536
    %v2009 = vpack.c.b16 %v1545, %v1537
    %v2010 = vpack.c.b16 %v1546, %v1538
    %v2011 = vpack.c.b16 %v1547, %v1539
    %v2012 = vpack.c.b16 %v1556, %v1548
    %v2013 = vpack.c.b16 %v1557, %v1549
    %v2014 = vpack.c.b16 %v1558, %v1550
    %v2015 = vpack.c.b16 %v1559, %v1551
    %v2016 = vpack.c.b16 %v1560, %v1552
    %v2017 = vpack.c.b16 %v1561, %v1553
    %v2018 = vpack.c.b16 %v1562, %v1554
    %v2019 = vpack.c.b16 %v1563, %v1555
    %v2020 = vpack.c.b16 %v1572, %v1564
    %v2021 = vpack.c.b16 %v1573, %v1565
    %v2022 = vpack.c.b16 %v1574, %v1566
    %v2023 = vpack.c.b16 %v1575, %v1567
    %v2024 = vpack.c.b16 %v1576, %v1568
    %v2025 = vpack.c.b16 %v1577, %v1569
    %v2026 = vpack.c.b16 %v1578, %v1570
    %v2027 = vpack.c.b16 %v1579, %v1571
    %v2028 = vpack.c.b16 %v1588, %v1580
    %v2029 = vpack.c.b16 %v1589, %v1581
    %v2030 = vpack.c.b16 %v1590, %v1582
    %v2031 = vpack.c.b16 %v1591, %v1583
    %v2032 = vpack.c.b16 %v1592, %v1584
    %v2033 = vpack.c.b16 %v1593, %v1585
    %v2034 = vpack.c.b16 %v1594, %v1586
    %v2035 = vpack.c.b16 %v1595, %v1587
    %v2036 = vpack.c.b16 %v1604, %v1596
    %v2037 = vpack.c.b16 %v1605, %v1597
    %v2038 = vpack.c.b16 %v1606, %v1598
    %v2039 = vpack.c.b16 %v1607, %v1599
    %v2040 = vpack.c.b16 %v1608, %v1600
    %v2041 = vpack.c.b16 %v1609, %v1601
    %v2042 = vpack.c.b16 %v1610, %v1602
    %v2043 = vpack.c.b16 %v1611, %v1603
    %v2044 = vpack.c.b16 %v1620, %v1612
    %v2045 = vpack.c.b16 %v1621, %v1613
    %v2046 = vpack.c.b16 %v1622, %v1614
    %v2047 = vpack.c.b16 %v1623, %v1615
    %v2048 = vpack.c.b16 %v1624, %v1616
    %v2049 = vpack.c.b16 %v1625, %v1617
    %v2050 = vpack.c.b16 %v1626, %v1618
    %v2051 = vpack.c.b16 %v1627, %v1619
    %v2052 = vpack.c.b16 %v1636, %v1628
    %v2053 = vpack.c.b16 %v1637, %v1629
    %v2054 = vpack.c.b16 %v1638, %v1630
    %v2055 = vpack.c.b16 %v1639, %v1631
    %v2056 = vpack.c.b16 %v1640, %v1632
    %v2057 = vpack.c.b16 %v1641, %v1633
    %v2058 = vpack.c.b16 %v1642, %v1634
    %v2059 = vpack.c.b16 %v1643, %v1635
    %v2060 = vpack.c.b16 %v1652, %v1644
    %v2061 = vpack.c.b16 %v1653, %v1645
    %v2062 = vpack.c.b16 %v1654, %v1646
    %v2063 = vpack.c.b16 %v1655, %v1647
    %v2064 = vpack.c.b16 %v1656, %v1648
    %v2065 = vpack.c.b16 %v1657, %v1649
    %v2066 = vpack.c.b16 %v1658, %v1650
    %v2067 = vpack.c.b16 %v1659, %v1651
    %v2068 = vpack.c.b16 %v1668, %v1660
    %v2069 = vpack.c.b16 %v1669, %v1661
    %v2070 = vpack.c.b16 %v1670, %v1662
    %v2071 = vpack.c.b16 %v1671, %v1663
    %v2072 = vpack.c.b16 %v1672, %v1664
    %v2073 = vpack.c.b16 %v1673, %v1665
    %v2074 = vpack.c.b16 %v1674, %v1666
    %v2075 = vpack.c.b16 %v1675, %v1667
    %v2076 = vpack.c.b16 %v1684, %v1676
    %v2077 = vpack.c.b16 %v1685, %v1677
    %v2078 = vpack.c.b16 %v1686, %v1678
    %v2079 = vpack.c.b16 %v1687, %v1679
    %v2080 = vpack.c.b16 %v1688, %v1680
    %v2081 = vpack.c.b16 %v1689, %v1681
    %v2082 = vpack.c.b16 %v1690, %v1682
    %v2083 = vpack.c.b16 %v1691, %v1683
    %v2084 = vpack.c.b16 %v1700, %v1692
    %v2085 = vpack.c.b16 %v1701, %v1693
    %v2086 = vpack.c.b16 %v1702, %v1694
    %v2087 = vpack.c.b16 %v1703, %v1695
    %v2088 = vpack.c.b16 %v1704, %v1696
    %v2089 = vpack.c.b16 %v1705, %v1697
    %v2090 = vpack.c.b16 %v1706, %v1698
    %v2091 = vpack.c.b16 %v1707, %v1699
    %v2092 = vpack.c.b16 %v1716, %v1708
    %v2093 = vpack.c.b16 %v1717, %v1709
    %v2094 = vpack.c.b16 %v1718, %v1710
    %v2095 = vpack.c.b16 %v1719, %v1711
    %v2096 = vpack.c.b16 %v1720, %v1712
    %v2097 = vpack.c.b16 %v1721, %v1713
    %v2098 = vpack.c.b16 %v1722, %v1714
    %v2099 = vpack.c.b16 %v1723, %v1715
    %v2100 = vpack.c.b16 %v1732, %v1724
    %v2101 = vpack.c.b16 %v1733, %v1725
    %v2102 = vpack.c.b16 %v1734, %v1726
    %v2103 = vpack.c.b16 %v1735, %v1727
    %v2104 = vpack.c.b16 %v1736, %v1728
    %v2105 = vpack.c.b16 %v1737, %v1729
    %v2106 = vpack.c.b16 %v1738, %v1730
    %v2107 = vpack.c.b16 %v1739, %v1731
    %v2108 = vpack.c.b16 %v1748, %v1740
    %v2109 = vpack.c.b16 %v1749, %v1741
    %v2110 = vpack.c.b16 %v1750, %v1742
    %v2111 = vpack.c.b16 %v1751, %v1743
    %v2112 = vpack.c.b16 %v1752, %v1744
    %v2113 = vpack.c.b16 %v1753, %v1745
    %v2114 = vpack.c.b16 %v1754, %v1746
    %v2115 = vpack.c.b16 %v1755, %v1747
    %v2116 = vpack.c.b16 %v1764, %v1756
    %v2117 = vpack.c.b16 %v1765, %v1757
    %v2118 = vpack.c.b16 %v1766, %v1758
    %v2119 = vpack.c.b16 %v1767, %v1759
    %v2120 = vpack.c.b16 %v1768, %v1760
    %v2121 = vpack.c.b16 %v1769, %v1761
    %v2122 = vpack.c.b16 %v1770, %v1762
    %v2123 = vpack.c.b16 %v1771, %v1763
    %v2124 = vpack.c.b16 %v1780, %v1772
    %v2125 = vpack.c.b16 %v1781, %v1773
    %v2126 = vpack.c.b16 %v1782, %v1774
    %v2127 = vpack.c.b16 %v1783, %v1775
    %v2128 = vpack.c.b16 %v1784, %v1776
    %v2129 = vpack.c.b16 %v1785, %v1777
    %v2130 = vpack.c.b16 %v1786, %v1778
    %v2131 = vpack.c.b16 %v1787, %v1779
    %v2132 = vpack.c.b16 %v1796, %v1788
    %v2133 = vpack.c.b16 %v1797, %v1789
    %v2134 = vpack.c.b16 %v1798, %v1790
    %v2135 = vpack.c.b16 %v1799, %v1791
    %v2136 = vpack.c.b16 %v1800, %v1792
    %v2137 = vpack.c.b16 %v1801, %v1793
    %v2138 = vpack.c.b16 %v1802, %v1794
    %v2139 = vpack.c.b16 %v1803, %v1795
    %v2140 = vpack.c.b16 %v1812, %v1804
    %v2141 = vpack.c.b16 %v1813, %v1805
    %v2142 = vpack.c.b16 %v1814, %v1806
    %v2143 = vpack.c.b16 %v1815, %v1807
    %v2144 = vpack.c.b16 %v1816, %v1808
    %v2145 = vpack.c.b16 %v1817, %v1809
    %v2146 = vpack.c.b16 %v1818, %v1810
    %v2147 = vpack.c.b16 %v1819, %v1811
    %v2148 = vpack.c.b16 %v1828, %v1820
    %v2149 = vpack.c.b16 %v1829, %v1821
    %v2150 = vpack.c.b16 %v1830, %v1822
    %v2151 = vpack.c.b16 %v1831, %v1823
    %v2152 = vpack.c.b16 %v1832, %v1824
    %v2153 = vpack.c.b16 %v1833, %v1825
    %v2154 = vpack.c.b16 %v1834, %v1826
    %v2155 = vpack.c.b16 %v1835, %v1827
    %v2156 = vpack.c.b16 %v1844, %v1836
    %v2157 = vpack.c.b16 %v1845, %v1837
    %v2158 = vpack.c.b16 %v1846, %v1838
    %v2159 = vpack.c.b16 %v1847, %v1839
    %v2160 = vpack.c.b16 %v1848, %v1840
    %v2161 = vpack.c.b16 %v1849, %v1841
    %v2162 = vpack.c.b16 %v1850, %v1842
    %v2163 = vpack.c.b16 %v1851, %v1843
    %v2164 = vpack.c.b16 %v1860, %v1852
    %v2165 = vpack.c.b16 %v1861, %v1853
    %v2166 = vpack.c.b16 %v1862, %v1854
    %v2167 = vpack.c.b16 %v1863, %v1855
    %v2168 = vpack.c.b16 %v1864, %v1856
    %v2169 = vpack.c.b16 %v1865, %v1857
    %v2170 = vpack.c.b16 %v1866, %v1858
    %v2171 = vpack.c.b16 %v1867, %v1859
    %v2172 = vpack.c.b16 %v1876, %v1868
    %v2173 = vpack.c.b16 %v1877, %v1869
    %v2174 = vpack.c.b16 %v1878, %v1870
    %v2175 = vpack.c.b16 %v1879, %v1871
    %v2176 = vpack.c.b16 %v1880, %v1872
    %v2177 = vpack.c.b16 %v1881, %v1873
    %v2178 = vpack.c.b16 %v1882, %v1874
    %v2179 = vpack.c.b16 %v1883, %v1875
    %v2180 = vpack.c.b16 %v1892, %v1884
    %v2181 = vpack.c.b16 %v1893, %v1885
    %v2182 = vpack.c.b16 %v1894, %v1886
    %v2183 = vpack.c.b16 %v1895, %v1887
    %v2184 = vpack.c.b16 %v1896, %v1888
    %v2185 = vpack.c.b16 %v1897, %v1889
    %v2186 = vpack.c.b16 %v1898, %v1890
    %v2187 = vpack.c.b16 %v1899, %v1891
    %v2188 = vpack.c.b16 %v1908, %v1900
    %v2189 = vpack.c.b16 %v1909, %v1901
    %v2190 = vpack.c.b16 %v1910, %v1902
    %v2191 = vpack.c.b16 %v1911, %v1903
    %v2192 = vpack.c.b16 %v1912, %v1904
    %v2193 = vpack.c.b16 %v1913, %v1905
    %v2194 = vpack.c.b16 %v1914, %v1906
    %v2195 = vpack.c.b16 %v1915, %v1907
    %v2196 = vpack.c.b16 %v1924, %v1916
    %v2197 = vpack.c.b16 %v1925, %v1917
    %v2198 = vpack.c.b16 %v1926, %v1918
    %v2199 = vpack.c.b16 %v1927, %v1919
    %v2200 = vpack.c.b16 %v1928, %v1920
    %v2201 = vpack.c.b16 %v1929, %v1921
    %v2202 = vpack.c.b16 %v1930, %v1922
    %v2203 = vpack.c.b16 %v1931, %v1923
    %v2204 = vpack.c.b16 %v1940, %v1932
    %v2205 = vpack.c.b16 %v1941, %v1933
    %v2206 = vpack.c.b16 %v1942, %v1934
    %v2207 = vpack.c.b16 %v1943, %v1935
    %v2208 = vpack.c.b16 %v1944, %v1936
    %v2209 = vpack.c.b16 %v1945, %v1937
    %v2210 = vpack.c.b16 %v1946, %v1938
    %v2211 = vpack.c.b16 %v1947, %v1939
    %v2212 = vpack.c.b16 %v1956, %v1948
    %v2213 = vpack.c.b16 %v1957, %v1949
    %v2214 = vpack.c.b16 %v1958, %v1950
    %v2215 = vpack.c.b16 %v1959, %v1951
    %v2216 = vpack.c.b16 %v1960, %v1952
    %v2217 = vpack.c.b16 %v1961, %v1953
    %v2218 = vpack.c.b16 %v1962, %v1954
    %v2219 = vpack.c.b16 %v1963, %v1955
    %2476 = vmatprep.subr.bf16.mxu0 %v1965
    %2477 = vmatpush1.bf16.msra.mxu0 %v1964
    %2478 = vmatprep.subr.bf16.mxu0 %v1973
    %2479 = vmatpush1.bf16.msra.mxu0 %v1972
    %2480 = vmatprep.subr.bf16.mxu0 %v1981
    %2481 = vmatpush1.bf16.msra.mxu0 %v1980
    %2482 = vmatprep.subr.bf16.mxu0 %v1989
    %2483 = vmatpush1.bf16.msra.mxu0 %v1988
    %2484 = vmatprep.subr.bf16.mxu0 %v1997
    %2485 = vmatpush1.bf16.msra.mxu0 %v1996
    %2486 = vmatprep.subr.bf16.mxu0 %v2005
    %2487 = vmatpush1.bf16.msra.mxu0 %v2004
    %2488 = vmatprep.subr.bf16.mxu0 %v2013
    %2489 = vmatpush1.bf16.msra.mxu0 %v2012
    %2490 = vmatprep.subr.bf16.mxu0 %v2021
    %2491 = vmatpush1.bf16.msra.mxu0 %v2020
    %2492 = vmatprep.subr.bf16.mxu0 %v2029
    %2493 = vmatpush1.bf16.msra.mxu0 %v2028
    %2494 = vmatprep.subr.bf16.mxu0 %v2037
    %2495 = vmatpush1.bf16.msra.mxu0 %v2036
    %2496 = vmatprep.subr.bf16.mxu0 %v2045
    %2497 = vmatpush1.bf16.msra.mxu0 %v2044
    %2498 = vmatprep.subr.bf16.mxu0 %v2053
    %2499 = vmatpush1.bf16.msra.mxu0 %v2052
    %2500 = vmatprep.subr.bf16.mxu0 %v2061
    %2501 = vmatpush1.bf16.msra.mxu0 %v2060
    %2502 = vmatprep.subr.bf16.mxu0 %v2069
    %2503 = vmatpush1.bf16.msra.mxu0 %v2068
    %2504 = vmatprep.subr.bf16.mxu0 %v2077
    %2505 = vmatpush1.bf16.msra.mxu0 %v2076
    %2506 = vmatprep.subr.bf16.mxu0 %v2085
    %2507 = vmatpush1.bf16.msra.mxu0 %v2084
    %2508 = vmatprep.mubr.bf16.mxu0 %v895
    %2509 = vmatmul.mubr.bf16.gmra.mrb[0].mxu0 %v894
    %v2510 = vpop.f32.mrb[0].mxu0
    %v2511 = vadd.f32 %v1159, %v2510
    %v2512 = vpop.f32.mrb[0].mxu0
    %v2513 = vadd.f32 %v1163, %v2512
    %v2514 = vpop.f32.mrb[0].mxu0
    %v2515 = vadd.f32 %v1159, %v2514
    %v2516 = vpop.f32.mrb[0].mxu0
    %v2517 = vadd.f32 %v1163, %v2516
    %2518 = vdwg.mxu0
    %2519 = vmatprep.subr.bf16.mxu0 %v2093
    %2520 = vmatpush1.bf16.msra.mxu0 %v2092
    %2521 = vmatprep.subr.bf16.mxu0 %v2101
    %2522 = vmatpush1.bf16.msra.mxu0 %v2100
    %2523 = vmatprep.subr.bf16.mxu0 %v2109
    %2524 = vmatpush1.bf16.msra.mxu0 %v2108
    %2525 = vmatprep.subr.bf16.mxu0 %v2117
    %2526 = vmatpush1.bf16.msra.mxu0 %v2116
    %2527 = vmatprep.subr.bf16.mxu0 %v2125
    %2528 = vmatpush1.bf16.msra.mxu0 %v2124
    %2529 = vmatprep.subr.bf16.mxu0 %v2133
    %2530 = vmatpush1.bf16.msra.mxu0 %v2132
    %2531 = vmatprep.subr.bf16.mxu0 %v2141
    %2532 = vmatpush1.bf16.msra.mxu0 %v2140
    %2533 = vmatprep.subr.bf16.mxu0 %v2149
    %2534 = vmatpush1.bf16.msra.mxu0 %v2148
    %2535 = vmatprep.subr.bf16.mxu0 %v2157
    %2536 = vmatpush1.bf16.msra.mxu0 %v2156
    %2537 = vmatprep.subr.bf16.mxu0 %v2165
    %2538 = vmatpush1.bf16.msra.mxu0 %v2164
    %2539 = vmatprep.subr.bf16.mxu0 %v2173
    %2540 = vmatpush1.bf16.msra.mxu0 %v2172
    %2541 = vmatprep.subr.bf16.mxu0 %v2181
    %2542 = vmatpush1.bf16.msra.mxu0 %v2180
    %2543 = vmatprep.subr.bf16.mxu0 %v2189
    %2544 = vmatpush1.bf16.msra.mxu0 %v2188
    %2545 = vmatprep.subr.bf16.mxu0 %v2197
    %2546 = vmatpush1.bf16.msra.mxu0 %v2196
    %2547 = vmatprep.subr.bf16.mxu0 %v2205
    %2548 = vmatpush1.bf16.msra.mxu0 %v2204
    %2549 = vmatprep.subr.bf16.mxu0 %v2213
    %2550 = vmatpush1.bf16.msra.mxu0 %v2212
    %2551 = vmatprep.mubr.bf16.mxu0 %v897
    %2552 = vmatmul.mubr.bf16.gmra.mrb[0].mxu0 %v896
    %v2553 = vpop.f32.mrb[0].mxu0
    %v2554 = vadd.f32 %v2511, %v2553
    %v2555 = vpop.f32.mrb[0].mxu0
    %v2556 = vadd.f32 %v2513, %v2555
    %v2557 = vpop.f32.mrb[0].mxu0
    %v2558 = vadd.f32 %v2515, %v2557
    %v2559 = vpop.f32.mrb[0].mxu0
    %v2560 = vadd.f32 %v2517, %v2559
    %2561 = vdwg.mxu0
    %2562 = vmatprep.subr.bf16.mxu0 %v1967
    %2563 = vmatpush1.bf16.msra.mxu0 %v1966
    %2564 = vmatprep.subr.bf16.mxu0 %v1975
    %2565 = vmatpush1.bf16.msra.mxu0 %v1974
    %2566 = vmatprep.subr.bf16.mxu0 %v1983
    %2567 = vmatpush1.bf16.msra.mxu0 %v1982
    %2568 = vmatprep.subr.bf16.mxu0 %v1991
    %2569 = vmatpush1.bf16.msra.mxu0 %v1990
    %2570 = vmatprep.subr.bf16.mxu0 %v1999
    %2571 = vmatpush1.bf16.msra.mxu0 %v1998
    %2572 = vmatprep.subr.bf16.mxu0 %v2007
    %2573 = vmatpush1.bf16.msra.mxu0 %v2006
    %2574 = vmatprep.subr.bf16.mxu0 %v2015
    %2575 = vmatpush1.bf16.msra.mxu0 %v2014
    %2576 = vmatprep.subr.bf16.mxu0 %v2023
    %2577 = vmatpush1.bf16.msra.mxu0 %v2022
    %2578 = vmatprep.subr.bf16.mxu0 %v2031
    %2579 = vmatpush1.bf16.msra.mxu0 %v2030
    %2580 = vmatprep.subr.bf16.mxu0 %v2039
    %2581 = vmatpush1.bf16.msra.mxu0 %v2038
    %2582 = vmatprep.subr.bf16.mxu0 %v2047
    %2583 = vmatpush1.bf16.msra.mxu0 %v2046
    %2584 = vmatprep.subr.bf16.mxu0 %v2055
    %2585 = vmatpush1.bf16.msra.mxu0 %v2054
    %2586 = vmatprep.subr.bf16.mxu0 %v2063
    %2587 = vmatpush1.bf16.msra.mxu0 %v2062
    %2588 = vmatprep.subr.bf16.mxu0 %v2071
    %2589 = vmatpush1.bf16.msra.mxu0 %v2070
    %2590 = vmatprep.subr.bf16.mxu0 %v2079
    %2591 = vmatpush1.bf16.msra.mxu0 %v2078
    %2592 = vmatprep.subr.bf16.mxu0 %v2087
    %2593 = vmatpush1.bf16.msra.mxu0 %v2086
    %2594 = vmatprep.mubr.bf16.mxu0 %v895
    %2595 = vmatmul.mubr.bf16.gmra.mrb[0].mxu0 %v894
    %v2596 = vpop.f32.mrb[0].mxu0
    %v2597 = vadd.f32 %v1167, %v2596
    %v2598 = vpop.f32.mrb[0].mxu0
    %v2599 = vadd.f32 %v1171, %v2598
    %v2600 = vpop.f32.mrb[0].mxu0
    %v2601 = vadd.f32 %v1167, %v2600
    %v2602 = vpop.f32.mrb[0].mxu0
    %v2603 = vadd.f32 %v1171, %v2602
    %2604 = vdwg.mxu0
    %2605 = vmatprep.subr.bf16.mxu0 %v2095
    %2606 = vmatpush1.bf16.msra.mxu0 %v2094
    %2607 = vmatprep.subr.bf16.mxu0 %v2103
    %2608 = vmatpush1.bf16.msra.mxu0 %v2102
    %2609 = vmatprep.subr.bf16.mxu0 %v2111
    %2610 = vmatpush1.bf16.msra.mxu0 %v2110
    %2611 = vmatprep.subr.bf16.mxu0 %v2119
    %2612 = vmatpush1.bf16.msra.mxu0 %v2118
    %2613 = vmatprep.subr.bf16.mxu0 %v2127
    %2614 = vmatpush1.bf16.msra.mxu0 %v2126
    %2615 = vmatprep.subr.bf16.mxu0 %v2135
    %2616 = vmatpush1.bf16.msra.mxu0 %v2134
    %2617 = vmatprep.subr.bf16.mxu0 %v2143
    %2618 = vmatpush1.bf16.msra.mxu0 %v2142
    %2619 = vmatprep.subr.bf16.mxu0 %v2151
    %2620 = vmatpush1.bf16.msra.mxu0 %v2150
    %2621 = vmatprep.subr.bf16.mxu0 %v2159
    %2622 = vmatpush1.bf16.msra.mxu0 %v2158
    %2623 = vmatprep.subr.bf16.mxu0 %v2167
    %2624 = vmatpush1.bf16.msra.mxu0 %v2166
    %2625 = vmatprep.subr.bf16.mxu0 %v2175
    %2626 = vmatpush1.bf16.msra.mxu0 %v2174
    %2627 = vmatprep.subr.bf16.mxu0 %v2183
    %2628 = vmatpush1.bf16.msra.mxu0 %v2182
    %2629 = vmatprep.subr.bf16.mxu0 %v2191
    %2630 = vmatpush1.bf16.msra.mxu0 %v2190
    %2631 = vmatprep.subr.bf16.mxu0 %v2199
    %2632 = vmatpush1.bf16.msra.mxu0 %v2198
    %2633 = vmatprep.subr.bf16.mxu0 %v2207
    %2634 = vmatpush1.bf16.msra.mxu0 %v2206
    %2635 = vmatprep.subr.bf16.mxu0 %v2215
    %2636 = vmatpush1.bf16.msra.mxu0 %v2214
    %2637 = vmatprep.mubr.bf16.mxu0 %v897
    %2638 = vmatmul.mubr.bf16.gmra.mrb[0].mxu0 %v896
    %v2639 = vpop.f32.mrb[0].mxu0
    %v2640 = vadd.f32 %v2597, %v2639
    %v2641 = vpop.f32.mrb[0].mxu0
    %v2642 = vadd.f32 %v2599, %v2641
    %v2643 = vpop.f32.mrb[0].mxu0
    %v2644 = vadd.f32 %v2601, %v2643
    %v2645 = vpop.f32.mrb[0].mxu0
    %v2646 = vadd.f32 %v2603, %v2645
    %2647 = vdwg.mxu0
    %2648 = vmatprep.subr.bf16.mxu0 %v1969
    %2649 = vmatpush1.bf16.msra.mxu0 %v1968
    %2650 = vmatprep.subr.bf16.mxu0 %v1977
    %2651 = vmatpush1.bf16.msra.mxu0 %v1976
    %2652 = vmatprep.subr.bf16.mxu0 %v1985
    %2653 = vmatpush1.bf16.msra.mxu0 %v1984
    %2654 = vmatprep.subr.bf16.mxu0 %v1993
    %2655 = vmatpush1.bf16.msra.mxu0 %v1992
    %2656 = vmatprep.subr.bf16.mxu0 %v2001
    %2657 = vmatpush1.bf16.msra.mxu0 %v2000
    %2658 = vmatprep.subr.bf16.mxu0 %v2009
    %2659 = vmatpush1.bf16.msra.mxu0 %v2008
    %2660 = vmatprep.subr.bf16.mxu0 %v2017
    %2661 = vmatpush1.bf16.msra.mxu0 %v2016
    %2662 = vmatprep.subr.bf16.mxu0 %v2025
    %2663 = vmatpush1.bf16.msra.mxu0 %v2024
    %2664 = vmatprep.subr.bf16.mxu0 %v2033
    %2665 = vmatpush1.bf16.msra.mxu0 %v2032
    %2666 = vmatprep.subr.bf16.mxu0 %v2041
    %2667 = vmatpush1.bf16.msra.mxu0 %v2040
    %2668 = vmatprep.subr.bf16.mxu0 %v2049
    %2669 = vmatpush1.bf16.msra.mxu0 %v2048
    %2670 = vmatprep.subr.bf16.mxu0 %v2057
    %2671 = vmatpush1.bf16.msra.mxu0 %v2056
    %2672 = vmatprep.subr.bf16.mxu0 %v2065
    %2673 = vmatpush1.bf16.msra.mxu0 %v2064
    %2674 = vmatprep.subr.bf16.mxu0 %v2073
    %2675 = vmatpush1.bf16.msra.mxu0 %v2072
    %2676 = vmatprep.subr.bf16.mxu0 %v2081
    %2677 = vmatpush1.bf16.msra.mxu0 %v2080
    %2678 = vmatprep.subr.bf16.mxu0 %v2089
    %2679 = vmatpush1.bf16.msra.mxu0 %v2088
    %2680 = vmatprep.mubr.bf16.mxu0 %v895
    %2681 = vmatmul.mubr.bf16.gmra.mrb[0].mxu0 %v894
    %v2682 = vpop.f32.mrb[0].mxu0
    %v2683 = vadd.f32 %v1175, %v2682
    %v2684 = vpop.f32.mrb[0].mxu0
    %v2685 = vadd.f32 %v1179, %v2684
    %v2686 = vpop.f32.mrb[0].mxu0
    %v2687 = vadd.f32 %v1175, %v2686
    %v2688 = vpop.f32.mrb[0].mxu0
    %v2689 = vadd.f32 %v1179, %v2688
    %2690 = vdwg.mxu0
    %2691 = vmatprep.subr.bf16.mxu0 %v2097
    %2692 = vmatpush1.bf16.msra.mxu0 %v2096
    %2693 = vmatprep.subr.bf16.mxu0 %v2105
    %2694 = vmatpush1.bf16.msra.mxu0 %v2104
    %2695 = vmatprep.subr.bf16.mxu0 %v2113
    %2696 = vmatpush1.bf16.msra.mxu0 %v2112
    %2697 = vmatprep.subr.bf16.mxu0 %v2121
    %2698 = vmatpush1.bf16.msra.mxu0 %v2120
    %2699 = vmatprep.subr.bf16.mxu0 %v2129
    %2700 = vmatpush1.bf16.msra.mxu0 %v2128
    %2701 = vmatprep.subr.bf16.mxu0 %v2137
    %2702 = vmatpush1.bf16.msra.mxu0 %v2136
    %2703 = vmatprep.subr.bf16.mxu0 %v2145
    %2704 = vmatpush1.bf16.msra.mxu0 %v2144
    %2705 = vmatprep.subr.bf16.mxu0 %v2153
    %2706 = vmatpush1.bf16.msra.mxu0 %v2152
    %2707 = vmatprep.subr.bf16.mxu0 %v2161
    %2708 = vmatpush1.bf16.msra.mxu0 %v2160
    %2709 = vmatprep.subr.bf16.mxu0 %v2169
    %2710 = vmatpush1.bf16.msra.mxu0 %v2168
    %2711 = vmatprep.subr.bf16.mxu0 %v2177
    %2712 = vmatpush1.bf16.msra.mxu0 %v2176
    %2713 = vmatprep.subr.bf16.mxu0 %v2185
    %2714 = vmatpush1.bf16.msra.mxu0 %v2184
    %2715 = vmatprep.subr.bf16.mxu0 %v2193
    %2716 = vmatpush1.bf16.msra.mxu0 %v2192
    %2717 = vmatprep.subr.bf16.mxu0 %v2201
    %2718 = vmatpush1.bf16.msra.mxu0 %v2200
    %2719 = vmatprep.subr.bf16.mxu0 %v2209
    %2720 = vmatpush1.bf16.msra.mxu0 %v2208
    %2721 = vmatprep.subr.bf16.mxu0 %v2217
    %2722 = vmatpush1.bf16.msra.mxu0 %v2216
    %2723 = vmatprep.mubr.bf16.mxu0 %v897
    %2724 = vmatmul.mubr.bf16.gmra.mrb[0].mxu0 %v896
    %v2725 = vpop.f32.mrb[0].mxu0
    %v2726 = vadd.f32 %v2683, %v2725
    %v2727 = vpop.f32.mrb[0].mxu0
    %v2728 = vadd.f32 %v2685, %v2727
    %v2729 = vpop.f32.mrb[0].mxu0
    %v2730 = vadd.f32 %v2687, %v2729
    %v2731 = vpop.f32.mrb[0].mxu0
    %v2732 = vadd.f32 %v2689, %v2731
    %2733 = vdwg.mxu0
    %2734 = vmatprep.subr.bf16.mxu0 %v1971
    %2735 = vmatpush1.bf16.msra.mxu0 %v1970
    %2736 = vmatprep.subr.bf16.mxu0 %v1979
    %2737 = vmatpush1.bf16.msra.mxu0 %v1978
    %2738 = vmatprep.subr.bf16.mxu0 %v1987
    %2739 = vmatpush1.bf16.msra.mxu0 %v1986
    %2740 = vmatprep.subr.bf16.mxu0 %v1995
    %2741 = vmatpush1.bf16.msra.mxu0 %v1994
    %2742 = vmatprep.subr.bf16.mxu0 %v2003
    %2743 = vmatpush1.bf16.msra.mxu0 %v2002
    %2744 = vmatprep.subr.bf16.mxu0 %v2011
    %2745 = vmatpush1.bf16.msra.mxu0 %v2010
    %2746 = vmatprep.subr.bf16.mxu0 %v2019
    %2747 = vmatpush1.bf16.msra.mxu0 %v2018
    %2748 = vmatprep.subr.bf16.mxu0 %v2027
    %2749 = vmatpush1.bf16.msra.mxu0 %v2026
    %2750 = vmatprep.subr.bf16.mxu0 %v2035
    %2751 = vmatpush1.bf16.msra.mxu0 %v2034
    %2752 = vmatprep.subr.bf16.mxu0 %v2043
    %2753 = vmatpush1.bf16.msra.mxu0 %v2042
    %2754 = vmatprep.subr.bf16.mxu0 %v2051
    %2755 = vmatpush1.bf16.msra.mxu0 %v2050
    %2756 = vmatprep.subr.bf16.mxu0 %v2059
    %2757 = vmatpush1.bf16.msra.mxu0 %v2058
    %2758 = vmatprep.subr.bf16.mxu0 %v2067
    %2759 = vmatpush1.bf16.msra.mxu0 %v2066
    %2760 = vmatprep.subr.bf16.mxu0 %v2075
    %2761 = vmatpush1.bf16.msra.mxu0 %v2074
    %2762 = vmatprep.subr.bf16.mxu0 %v2083
    %2763 = vmatpush1.bf16.msra.mxu0 %v2082
    %2764 = vmatprep.subr.bf16.mxu0 %v2091
    %2765 = vmatpush1.bf16.msra.mxu0 %v2090
    %2766 = vmatprep.mubr.bf16.mxu0 %v895
    %2767 = vmatmul.mubr.bf16.gmra.mrb[0].mxu0 %v894
    %v2768 = vpop.f32.mrb[0].mxu0
    %v2769 = vadd.f32 %v1183, %v2768
    %v2770 = vpop.f32.mrb[0].mxu0
    %v2771 = vadd.f32 %v1187, %v2770
    %v2772 = vpop.f32.mrb[0].mxu0
    %v2773 = vadd.f32 %v1183, %v2772
    %v2774 = vpop.f32.mrb[0].mxu0
    %v2775 = vadd.f32 %v1187, %v2774
    %2776 = vdwg.mxu0
    %2777 = vmatprep.subr.bf16.mxu0 %v2099
    %2778 = vmatpush1.bf16.msra.mxu0 %v2098
    %2779 = vmatprep.subr.bf16.mxu0 %v2107
    %2780 = vmatpush1.bf16.msra.mxu0 %v2106
    %2781 = vmatprep.subr.bf16.mxu0 %v2115
    %2782 = vmatpush1.bf16.msra.mxu0 %v2114
    %2783 = vmatprep.subr.bf16.mxu0 %v2123
    %2784 = vmatpush1.bf16.msra.mxu0 %v2122
    %2785 = vmatprep.subr.bf16.mxu0 %v2131
    %2786 = vmatpush1.bf16.msra.mxu0 %v2130
    %2787 = vmatprep.subr.bf16.mxu0 %v2139
    %2788 = vmatpush1.bf16.msra.mxu0 %v2138
    %2789 = vmatprep.subr.bf16.mxu0 %v2147
    %2790 = vmatpush1.bf16.msra.mxu0 %v2146
    %2791 = vmatprep.subr.bf16.mxu0 %v2155
    %2792 = vmatpush1.bf16.msra.mxu0 %v2154
    %2793 = vmatprep.subr.bf16.mxu0 %v2163
    %2794 = vmatpush1.bf16.msra.mxu0 %v2162
    %2795 = vmatprep.subr.bf16.mxu0 %v2171
    %2796 = vmatpush1.bf16.msra.mxu0 %v2170
    %2797 = vmatprep.subr.bf16.mxu0 %v2179
    %2798 = vmatpush1.bf16.msra.mxu0 %v2178
    %2799 = vmatprep.subr.bf16.mxu0 %v2187
    %2800 = vmatpush1.bf16.msra.mxu0 %v2186
    %2801 = vmatprep.subr.bf16.mxu0 %v2195
    %2802 = vmatpush1.bf16.msra.mxu0 %v2194
    %2803 = vmatprep.subr.bf16.mxu0 %v2203
    %2804 = vmatpush1.bf16.msra.mxu0 %v2202
    %2805 = vmatprep.subr.bf16.mxu0 %v2211
    %2806 = vmatpush1.bf16.msra.mxu0 %v2210
    %2807 = vmatprep.subr.bf16.mxu0 %v2219
    %2808 = vmatpush1.bf16.msra.mxu0 %v2218
    %2809 = vmatprep.mubr.bf16.mxu0 %v897
    %2810 = vmatmul.mubr.bf16.gmra.mrb[0].mxu0 %v896
    %v2811 = vpop.f32.mrb[0].mxu0
    %v2812 = vadd.f32 %v2769, %v2811
    %v2813 = vpop.f32.mrb[0].mxu0
    %v2814 = vadd.f32 %v2771, %v2813
    %v2815 = vpop.f32.mrb[0].mxu0
    %v2816 = vadd.f32 %v2773, %v2815
    %v2817 = vpop.f32.mrb[0].mxu0
    %v2818 = vadd.f32 %v2775, %v2817
    %2819 = vdwg.mxu0
    %v2820 = vmax.f32 %v2554, 0.0
    %v2821 = vmax.f32 %v2556, 0.0
    %v2822 = vmax.f32 %v2640, 0.0
    %v2823 = vmax.f32 %v2642, 0.0
    %v2824 = vmax.f32 %v2726, 0.0
    %v2825 = vmax.f32 %v2728, 0.0
    %v2826 = vmax.f32 %v2812, 0.0
    %v2827 = vmax.f32 %v2814, 0.0
    %v2828 = vmax.f32 %v2558, 0.0
    %v2829 = vmax.f32 %v2560, 0.0
    %v2830 = vmax.f32 %v2644, 0.0
    %v2831 = vmax.f32 %v2646, 0.0
    %v2832 = vmax.f32 %v2730, 0.0
    %v2833 = vmax.f32 %v2732, 0.0
    %v2834 = vmax.f32 %v2816, 0.0
    %v2835 = vmax.f32 %v2818, 0.0
    %v2836 = vld [vmem:[#allocation2] sm:$0xff]
    %v2837 = vld [vmem:[#allocation2 + $0x8] sm:$0xff]
    %v2838 = vrot.slane %v2820, 4
    %v2839 = vmax.f32 %v2820, %v2838
    %v2840 = vrot.slane %v2839, 2
    %v2841 = vmax.f32 %v2839, %v2840
    %v2842 = vrot.slane %v2841, 1
    %v2843 = vmax.f32 %v2841, %v2842
    %v2844 = vrot.slane %v2821, 4
    %v2845 = vmax.f32 %v2821, %v2844
    %v2846 = vrot.slane %v2845, 2
    %v2847 = vmax.f32 %v2845, %v2846
    %v2848 = vrot.slane %v2847, 1
    %v2849 = vmax.f32 %v2847, %v2848
    %v2850 = vrot.slane %v2822, 4
    %v2851 = vmax.f32 %v2822, %v2850
    %v2852 = vrot.slane %v2851, 2
    %v2853 = vmax.f32 %v2851, %v2852
    %v2854 = vrot.slane %v2853, 1
    %v2855 = vmax.f32 %v2853, %v2854
    %v2856 = vrot.slane %v2823, 4
    %v2857 = vmax.f32 %v2823, %v2856
    %v2858 = vrot.slane %v2857, 2
    %v2859 = vmax.f32 %v2857, %v2858
    %v2860 = vrot.slane %v2859, 1
    %v2861 = vmax.f32 %v2859, %v2860
    %v2862 = vrot.slane %v2824, 4
    %v2863 = vmax.f32 %v2824, %v2862
    %v2864 = vrot.slane %v2863, 2
    %v2865 = vmax.f32 %v2863, %v2864
    %v2866 = vrot.slane %v2865, 1
    %v2867 = vmax.f32 %v2865, %v2866
    %v2868 = vrot.slane %v2825, 4
    %v2869 = vmax.f32 %v2825, %v2868
    %v2870 = vrot.slane %v2869, 2
    %v2871 = vmax.f32 %v2869, %v2870
    %v2872 = vrot.slane %v2871, 1
    %v2873 = vmax.f32 %v2871, %v2872
    %v2874 = vrot.slane %v2826, 4
    %v2875 = vmax.f32 %v2826, %v2874
    %v2876 = vrot.slane %v2875, 2
    %v2877 = vmax.f32 %v2875, %v2876
    %v2878 = vrot.slane %v2877, 1
    %v2879 = vmax.f32 %v2877, %v2878
    %v2880 = vrot.slane %v2827, 4
    %v2881 = vmax.f32 %v2827, %v2880
    %v2882 = vrot.slane %v2881, 2
    %v2883 = vmax.f32 %v2881, %v2882
    %v2884 = vrot.slane %v2883, 1
    %v2885 = vmax.f32 %v2883, %v2884
    %v2886 = vrot.slane %v2828, 4
    %v2887 = vmax.f32 %v2828, %v2886
    %v2888 = vrot.slane %v2887, 2
    %v2889 = vmax.f32 %v2887, %v2888
    %v2890 = vrot.slane %v2889, 1
    %v2891 = vmax.f32 %v2889, %v2890
    %v2892 = vrot.slane %v2829, 4
    %v2893 = vmax.f32 %v2829, %v2892
    %v2894 = vrot.slane %v2893, 2
    %v2895 = vmax.f32 %v2893, %v2894
    %v2896 = vrot.slane %v2895, 1
    %v2897 = vmax.f32 %v2895, %v2896
    %v2898 = vrot.slane %v2830, 4
    %v2899 = vmax.f32 %v2830, %v2898
    %v2900 = vrot.slane %v2899, 2
    %v2901 = vmax.f32 %v2899, %v2900
    %v2902 = vrot.slane %v2901, 1
    %v2903 = vmax.f32 %v2901, %v2902
    %v2904 = vrot.slane %v2831, 4
    %v2905 = vmax.f32 %v2831, %v2904
    %v2906 = vrot.slane %v2905, 2
    %v2907 = vmax.f32 %v2905, %v2906
    %v2908 = vrot.slane %v2907, 1
    %v2909 = vmax.f32 %v2907, %v2908
    %v2910 = vrot.slane %v2832, 4
    %v2911 = vmax.f32 %v2832, %v2910
    %v2912 = vrot.slane %v2911, 2
    %v2913 = vmax.f32 %v2911, %v2912
    %v2914 = vrot.slane %v2913, 1
    %v2915 = vmax.f32 %v2913, %v2914
    %v2916 = vrot.slane %v2833, 4
    %v2917 = vmax.f32 %v2833, %v2916
    %v2918 = vrot.slane %v2917, 2
    %v2919 = vmax.f32 %v2917, %v2918
    %v2920 = vrot.slane %v2919, 1
    %v2921 = vmax.f32 %v2919, %v2920
    %v2922 = vrot.slane %v2834, 4
    %v2923 = vmax.f32 %v2834, %v2922
    %v2924 = vrot.slane %v2923, 2
    %v2925 = vmax.f32 %v2923, %v2924
    %v2926 = vrot.slane %v2925, 1
    %v2927 = vmax.f32 %v2925, %v2926
    %v2928 = vrot.slane %v2835, 4
    %v2929 = vmax.f32 %v2835, %v2928
    %v2930 = vrot.slane %v2929, 2
    %v2931 = vmax.f32 %v2929, %v2930
    %v2932 = vrot.slane %v2931, 1
    %v2933 = vmax.f32 %v2931, %v2932
    %v2950 = vcombine.low %v2843, %v2849
    %v2951 = vcombine.low %v2855, %v2861
    %v2953 = vunpack.c.l.s4 1983009808
    %v2954 = vunpack.c.0.s8 %v2953
    %v2955 = vlaneseq
    %v2956 = vshrl.u32 %v2955, 7
    %v2957 = vsub.s32 %v2954, %v2956
    %v2958 = vrot.slane %v2950, %v2957
    %v2960 = vunpack.c.l.s4 1983009808
    %v2961 = vunpack.c.0.s8 %v2960
    %v2962 = vlaneseq
    %v2963 = vshrl.u32 %v2962, 7
    %v2964 = vsub.s32 %v2961, %v2963
    %v2965 = vrot.slane %v2951, %v2964
    %v2966 = vcombine.low %v2958, %v2965
    %v2967 = vcombine.low %v2867, %v2873
    %v2968 = vcombine.low %v2879, %v2885
    %v2970 = vunpack.c.l.s4 1983009808
    %v2971 = vunpack.c.0.s8 %v2970
    %v2972 = vlaneseq
    %v2973 = vshrl.u32 %v2972, 7
    %v2974 = vsub.s32 %v2971, %v2973
    %v2975 = vrot.slane %v2967, %v2974
    %v2977 = vunpack.c.l.s4 1983009808
    %v2978 = vunpack.c.0.s8 %v2977
    %v2979 = vlaneseq
    %v2980 = vshrl.u32 %v2979, 7
    %v2981 = vsub.s32 %v2978, %v2980
    %v2982 = vrot.slane %v2968, %v2981
    %v2983 = vcombine.low %v2975, %v2982
    %v2984 = vcombine.low %v2891, %v2897
    %v2985 = vcombine.low %v2903, %v2909
    %v2987 = vunpack.c.l.s4 1983009808
    %v2988 = vunpack.c.0.s8 %v2987
    %v2989 = vlaneseq
    %v2990 = vshrl.u32 %v2989, 7
    %v2991 = vsub.s32 %v2988, %v2990
    %v2992 = vrot.slane %v2984, %v2991
    %v2994 = vunpack.c.l.s4 1983009808
    %v2995 = vunpack.c.0.s8 %v2994
    %v2996 = vlaneseq
    %v2997 = vshrl.u32 %v2996, 7
    %v2998 = vsub.s32 %v2995, %v2997
    %v2999 = vrot.slane %v2985, %v2998
    %v3000 = vcombine.low %v2992, %v2999
    %v3001 = vcombine.low %v2915, %v2921
    %v3002 = vcombine.low %v2927, %v2933
    %v3004 = vunpack.c.l.s4 1983009808
    %v3005 = vunpack.c.0.s8 %v3004
    %v3006 = vlaneseq
    %v3007 = vshrl.u32 %v3006, 7
    %v3008 = vsub.s32 %v3005, %v3007
    %v3009 = vrot.slane %v3001, %v3008
    %v3011 = vunpack.c.l.s4 1983009808
    %v3012 = vunpack.c.0.s8 %v3011
    %v3013 = vlaneseq
    %v3014 = vshrl.u32 %v3013, 7
    %v3015 = vsub.s32 %v3012, %v3014
    %v3016 = vrot.slane %v3002, %v3015
    %v3017 = vcombine.low %v3009, %v3016
    %vm3018 = vcmask 1044484
    %v3019 = vsel %vm3018, %v2966, %v2966
    %vm3020 = vcmask 1046534
    %v3021 = vsel %vm3020, %v2966, %v3019
    %v3022 = vrot.slane %v3000, 7
    %vm3023 = vcmask 1041409
    %v3024 = vsel %vm3023, %v3022, %v3021
    %vm3025 = vcmask 1043459
    %v3026 = vsel %vm3025, %v3022, %v3024
    %vm3027 = vcmask 1045509
    %v3028 = vsel %vm3027, %v3022, %v3026
    %vm3029 = vcmask 1047559
    %v3030 = vsel %vm3029, %v3022, %v3028
    %v3031 = vsel %vm3018, %v2983, %v2983
    %v3032 = vsel %vm3020, %v2983, %v3031
    %v3033 = vrot.slane %v3017, 7
    %v3034 = vsel %vm3023, %v3033, %v3032
    %v3035 = vsel %vm3025, %v3033, %v3034
    %v3036 = vsel %vm3027, %v3033, %v3035
    %v3037 = vsel %vm3029, %v3033, %v3036
    %v3040 = vmax.f32 %v2836, %v3030
    %v3041 = vmax.f32 %v2837, %v3037
    %3042 = vst [vmem:[#allocation2] sm:$0xff] %v3040
    %3043 = vst [vmem:[#allocation2 + $0x8] sm:$0xff] %v3041
    // Predicated region
    $region66: #{pointnet2_forward.5} parent=1 // pred_check
      %p3044 = pneg %p52
    $region67: #{pointnet2_forward.5} parent=1 // pred_check_branch
      %3046 = sbr.rel (%p3044) target = $region69
    $region68: #{pointnet2_forward.5} parent=1 // pred_region
      %v3047 = vld [vmem:[#allocation2] sm:$0xff]
      %v3048 = vld [vmem:[#allocation2 + $0x8] sm:$0xff]
      %v3051 = vcombine.high %v3047, %v3047
      %v3053 = vunpack.c.l.s4 1983009808
      %v3054 = vunpack.c.0.s8 %v3053
      %v3055 = vlaneseq
      %v3056 = vshrl.u32 %v3055, 7
      %v3057 = vsub.s32 %v3054, %v3056
      %v3058 = vrot.slane %v3047, %v3057
      %v3060 = vunpack.c.l.s4 1983009808
      %v3061 = vunpack.c.0.s8 %v3060
      %v3062 = vlaneseq
      %v3063 = vshrl.u32 %v3062, 7
      %v3064 = vsub.s32 %v3061, %v3063
      %v3065 = vrot.slane %v3051, %v3064
      %v3066 = vcombine.high %v3058, %v3058
      %v3067 = vcombine.high %v3065, %v3065
      %v3068 = vcombine.high %v3048, %v3048
      %v3070 = vunpack.c.l.s4 1983009808
      %v3071 = vunpack.c.0.s8 %v3070
      %v3072 = vlaneseq
      %v3073 = vshrl.u32 %v3072, 7
      %v3074 = vsub.s32 %v3071, %v3073
      %v3075 = vrot.slane %v3048, %v3074
      %v3077 = vunpack.c.l.s4 1983009808
      %v3078 = vunpack.c.0.s8 %v3077
      %v3079 = vlaneseq
      %v3080 = vshrl.u32 %v3079, 7
      %v3081 = vsub.s32 %v3078, %v3080
      %v3082 = vrot.slane %v3068, %v3081
      %v3083 = vcombine.high %v3075, %v3075
      %v3084 = vcombine.high %v3082, %v3082
      %v3093 = vpack.c.bf16 %v3058, %v3058
      %v3094 = vpack.c.bf16 %v3066, %v3066
      %v3095 = vpack.c.bf16 %v3065, %v3065
      %v3096 = vpack.c.bf16 %v3067, %v3067
      %v3097 = vpack.c.bf16 %v3075, %v3075
      %v3098 = vpack.c.bf16 %v3083, %v3083
      %v3099 = vpack.c.bf16 %v3082, %v3082
      %v3100 = vpack.c.bf16 %v3084, %v3084
      %v3101 = vld [vmem:[%s9] sm:$0xff]
      %v3102 = vld [vmem:[%s9 + $0x8] sm:$0xff]
      %v3103 = vld [vmem:[%s9 + $0x10] sm:$0xff]
      %v3104 = vld [vmem:[%s9 + $0x18] sm:$0xff]
      %v3105 = vld [vmem:[%s9 + $0x20] sm:$0xff]
      %v3106 = vld [vmem:[%s9 + $0x28] sm:$0xff]
      %v3107 = vld [vmem:[%s9 + $0x30] sm:$0xff]
      %v3108 = vld [vmem:[%s9 + $0x38] sm:$0xff]
      %v3109 = vld [vmem:[%s9 + $0x40] sm:$0xff]
      %v3110 = vld [vmem:[%s9 + $0x48] sm:$0xff]
      %v3111 = vld [vmem:[%s9 + $0x50] sm:$0xff]
      %v3112 = vld [vmem:[%s9 + $0x58] sm:$0xff]
      %v3113 = vld [vmem:[%s9 + $0x60] sm:$0xff]
      %v3114 = vld [vmem:[%s9 + $0x68] sm:$0xff]
      %v3115 = vld [vmem:[%s9 + $0x70] sm:$0xff]
      %v3116 = vld [vmem:[%s9 + $0x78] sm:$0xff]
      %v3117 = vld [vmem:[%s9 + $0x80] sm:$0xff]
      %v3118 = vld [vmem:[%s9 + $0x88] sm:$0xff]
      %v3119 = vld [vmem:[%s9 + $0x90] sm:$0xff]
      %v3120 = vld [vmem:[%s9 + $0x98] sm:$0xff]
      %v3121 = vld [vmem:[%s9 + $0xa0] sm:$0xff]
      %v3122 = vld [vmem:[%s9 + $0xa8] sm:$0xff]
      %v3123 = vld [vmem:[%s9 + $0xb0] sm:$0xff]
      %v3124 = vld [vmem:[%s9 + $0xb8] sm:$0xff]
      %v3125 = vld [vmem:[%s9 + $0xc0] sm:$0xff]
      %v3126 = vld [vmem:[%s9 + $0xc8] sm:$0xff]
      %v3127 = vld [vmem:[%s9 + $0xd0] sm:$0xff]
      %v3128 = vld [vmem:[%s9 + $0xd8] sm:$0xff]
      %v3129 = vld [vmem:[%s9 + $0xe0] sm:$0xff]
      %v3130 = vld [vmem:[%s9 + $0xe8] sm:$0xff]
      %v3131 = vld [vmem:[%s9 + $0xf0] sm:$0xff]
      %v3132 = vld [vmem:[%s9 + $0xf8] sm:$0xff]
      %v3133 = vld [vmem:[%s9 + $0x100] sm:$0xff]
      %v3134 = vld [vmem:[%s9 + $0x108] sm:$0xff]
      %v3135 = vld [vmem:[%s9 + $0x110] sm:$0xff]
      %v3136 = vld [vmem:[%s9 + $0x118] sm:$0xff]
      %v3137 = vld [vmem:[%s9 + $0x120] sm:$0xff]
      %v3138 = vld [vmem:[%s9 + $0x128] sm:$0xff]
      %v3139 = vld [vmem:[%s9 + $0x130] sm:$0xff]
      %v3140 = vld [vmem:[%s9 + $0x138] sm:$0xff]
      %v3141 = vld [vmem:[%s9 + $0x140] sm:$0xff]
      %v3142 = vld [vmem:[%s9 + $0x148] sm:$0xff]
      %v3143 = vld [vmem:[%s9 + $0x150] sm:$0xff]
      %v3144 = vld [vmem:[%s9 + $0x158] sm:$0xff]
      %v3145 = vld [vmem:[%s9 + $0x160] sm:$0xff]
      %v3146 = vld [vmem:[%s9 + $0x168] sm:$0xff]
      %v3147 = vld [vmem:[%s9 + $0x170] sm:$0xff]
      %v3148 = vld [vmem:[%s9 + $0x178] sm:$0xff]
      %v3149 = vld [vmem:[%s9 + $0x180] sm:$0xff]
      %v3150 = vld [vmem:[%s9 + $0x188] sm:$0xff]
      %v3151 = vld [vmem:[%s9 + $0x190] sm:$0xff]
      %v3152 = vld [vmem:[%s9 + $0x198] sm:$0xff]
      %v3153 = vld [vmem:[%s9 + $0x1a0] sm:$0xff]
      %v3154 = vld [vmem:[%s9 + $0x1a8] sm:$0xff]
      %v3155 = vld [vmem:[%s9 + $0x1b0] sm:$0xff]
      %v3156 = vld [vmem:[%s9 + $0x1b8] sm:$0xff]
      %v3157 = vld [vmem:[%s9 + $0x1c0] sm:$0xff]
      %v3158 = vld [vmem:[%s9 + $0x1c8] sm:$0xff]
      %v3159 = vld [vmem:[%s9 + $0x1d0] sm:$0xff]
      %v3160 = vld [vmem:[%s9 + $0x1d8] sm:$0xff]
      %v3161 = vld [vmem:[%s9 + $0x1e0] sm:$0xff]
      %v3162 = vld [vmem:[%s9 + $0x1e8] sm:$0xff]
      %v3163 = vld [vmem:[%s9 + $0x1f0] sm:$0xff]
      %v3164 = vld [vmem:[%s9 + $0x1f8] sm:$0xff]
      %v3165 = vld [vmem:[%s9 + $0x200] sm:$0xff]
      %v3166 = vld [vmem:[%s9 + $0x208] sm:$0xff]
      %v3167 = vld [vmem:[%s9 + $0x210] sm:$0xff]
      %v3168 = vld [vmem:[%s9 + $0x218] sm:$0xff]
      %v3169 = vld [vmem:[%s9 + $0x220] sm:$0xff]
      %v3170 = vld [vmem:[%s9 + $0x228] sm:$0xff]
      %v3171 = vld [vmem:[%s9 + $0x230] sm:$0xff]
      %v3172 = vld [vmem:[%s9 + $0x238] sm:$0xff]
      %v3173 = vld [vmem:[%s9 + $0x240] sm:$0xff]
      %v3174 = vld [vmem:[%s9 + $0x248] sm:$0xff]
      %v3175 = vld [vmem:[%s9 + $0x250] sm:$0xff]
      %v3176 = vld [vmem:[%s9 + $0x258] sm:$0xff]
      %v3177 = vld [vmem:[%s9 + $0x260] sm:$0xff]
      %v3178 = vld [vmem:[%s9 + $0x268] sm:$0xff]
      %v3179 = vld [vmem:[%s9 + $0x270] sm:$0xff]
      %v3180 = vld [vmem:[%s9 + $0x278] sm:$0xff]
      %v3181 = vld [vmem:[%s9 + $0x280] sm:$0xff]
      %v3182 = vld [vmem:[%s9 + $0x288] sm:$0xff]
      %v3183 = vld [vmem:[%s9 + $0x290] sm:$0xff]
      %v3184 = vld [vmem:[%s9 + $0x298] sm:$0xff]
      %v3185 = vld [vmem:[%s9 + $0x2a0] sm:$0xff]
      %v3186 = vld [vmem:[%s9 + $0x2a8] sm:$0xff]
      %v3187 = vld [vmem:[%s9 + $0x2b0] sm:$0xff]
      %v3188 = vld [vmem:[%s9 + $0x2b8] sm:$0xff]
      %v3189 = vld [vmem:[%s9 + $0x2c0] sm:$0xff]
      %v3190 = vld [vmem:[%s9 + $0x2c8] sm:$0xff]
      %v3191 = vld [vmem:[%s9 + $0x2d0] sm:$0xff]
      %v3192 = vld [vmem:[%s9 + $0x2d8] sm:$0xff]
      %v3193 = vld [vmem:[%s9 + $0x2e0] sm:$0xff]
      %v3194 = vld [vmem:[%s9 + $0x2e8] sm:$0xff]
      %v3195 = vld [vmem:[%s9 + $0x2f0] sm:$0xff]
      %v3196 = vld [vmem:[%s9 + $0x2f8] sm:$0xff]
      %v3197 = vld [vmem:[%s9 + $0x300] sm:$0xff]
      %v3198 = vld [vmem:[%s9 + $0x308] sm:$0xff]
      %v3199 = vld [vmem:[%s9 + $0x310] sm:$0xff]
      %v3200 = vld [vmem:[%s9 + $0x318] sm:$0xff]
      %v3201 = vld [vmem:[%s9 + $0x320] sm:$0xff]
      %v3202 = vld [vmem:[%s9 + $0x328] sm:$0xff]
      %v3203 = vld [vmem:[%s9 + $0x330] sm:$0xff]
      %v3204 = vld [vmem:[%s9 + $0x338] sm:$0xff]
      %v3205 = vld [vmem:[%s9 + $0x340] sm:$0xff]
      %v3206 = vld [vmem:[%s9 + $0x348] sm:$0xff]
      %v3207 = vld [vmem:[%s9 + $0x350] sm:$0xff]
      %v3208 = vld [vmem:[%s9 + $0x358] sm:$0xff]
      %v3209 = vld [vmem:[%s9 + $0x360] sm:$0xff]
      %v3210 = vld [vmem:[%s9 + $0x368] sm:$0xff]
      %v3211 = vld [vmem:[%s9 + $0x370] sm:$0xff]
      %v3212 = vld [vmem:[%s9 + $0x378] sm:$0xff]
      %v3213 = vld [vmem:[%s9 + $0x380] sm:$0xff]
      %v3214 = vld [vmem:[%s9 + $0x388] sm:$0xff]
      %v3215 = vld [vmem:[%s9 + $0x390] sm:$0xff]
      %v3216 = vld [vmem:[%s9 + $0x398] sm:$0xff]
      %v3217 = vld [vmem:[%s9 + $0x3a0] sm:$0xff]
      %v3218 = vld [vmem:[%s9 + $0x3a8] sm:$0xff]
      %v3219 = vld [vmem:[%s9 + $0x3b0] sm:$0xff]
      %v3220 = vld [vmem:[%s9 + $0x3b8] sm:$0xff]
      %v3221 = vld [vmem:[%s9 + $0x3c0] sm:$0xff]
      %v3222 = vld [vmem:[%s9 + $0x3c8] sm:$0xff]
      %v3223 = vld [vmem:[%s9 + $0x3d0] sm:$0xff]
      %v3224 = vld [vmem:[%s9 + $0x3d8] sm:$0xff]
      %v3225 = vld [vmem:[%s9 + $0x3e0] sm:$0xff]
      %v3226 = vld [vmem:[%s9 + $0x3e8] sm:$0xff]
      %v3227 = vld [vmem:[%s9 + $0x3f0] sm:$0xff]
      %v3228 = vld [vmem:[%s9 + $0x3f8] sm:$0xff]
      %v3229 = vld [vmem:[%s9 + $0x400] sm:$0xff]
      %v3230 = vld [vmem:[%s9 + $0x408] sm:$0xff]
      %v3231 = vld [vmem:[%s9 + $0x410] sm:$0xff]
      %v3232 = vld [vmem:[%s9 + $0x418] sm:$0xff]
      %v3233 = vld [vmem:[%s9 + $0x420] sm:$0xff]
      %v3234 = vld [vmem:[%s9 + $0x428] sm:$0xff]
      %v3235 = vld [vmem:[%s9 + $0x430] sm:$0xff]
      %v3236 = vld [vmem:[%s9 + $0x438] sm:$0xff]
      %v3237 = vld [vmem:[%s9 + $0x440] sm:$0xff]
      %v3238 = vld [vmem:[%s9 + $0x448] sm:$0xff]
      %v3239 = vld [vmem:[%s9 + $0x450] sm:$0xff]
      %v3240 = vld [vmem:[%s9 + $0x458] sm:$0xff]
      %v3241 = vld [vmem:[%s9 + $0x460] sm:$0xff]
      %v3242 = vld [vmem:[%s9 + $0x468] sm:$0xff]
      %v3243 = vld [vmem:[%s9 + $0x470] sm:$0xff]
      %v3244 = vld [vmem:[%s9 + $0x478] sm:$0xff]
      %v3245 = vld [vmem:[%s9 + $0x480] sm:$0xff]
      %v3246 = vld [vmem:[%s9 + $0x488] sm:$0xff]
      %v3247 = vld [vmem:[%s9 + $0x490] sm:$0xff]
      %v3248 = vld [vmem:[%s9 + $0x498] sm:$0xff]
      %v3249 = vld [vmem:[%s9 + $0x4a0] sm:$0xff]
      %v3250 = vld [vmem:[%s9 + $0x4a8] sm:$0xff]
      %v3251 = vld [vmem:[%s9 + $0x4b0] sm:$0xff]
      %v3252 = vld [vmem:[%s9 + $0x4b8] sm:$0xff]
      %v3253 = vld [vmem:[%s9 + $0x4c0] sm:$0xff]
      %v3254 = vld [vmem:[%s9 + $0x4c8] sm:$0xff]
      %v3255 = vld [vmem:[%s9 + $0x4d0] sm:$0xff]
      %v3256 = vld [vmem:[%s9 + $0x4d8] sm:$0xff]
      %v3257 = vld [vmem:[%s9 + $0x4e0] sm:$0xff]
      %v3258 = vld [vmem:[%s9 + $0x4e8] sm:$0xff]
      %v3259 = vld [vmem:[%s9 + $0x4f0] sm:$0xff]
      %v3260 = vld [vmem:[%s9 + $0x4f8] sm:$0xff]
      %v3261 = vld [vmem:[%s9 + $0x500] sm:$0xff]
      %v3262 = vld [vmem:[%s9 + $0x508] sm:$0xff]
      %v3263 = vld [vmem:[%s9 + $0x510] sm:$0xff]
      %v3264 = vld [vmem:[%s9 + $0x518] sm:$0xff]
      %v3265 = vld [vmem:[%s9 + $0x520] sm:$0xff]
      %v3266 = vld [vmem:[%s9 + $0x528] sm:$0xff]
      %v3267 = vld [vmem:[%s9 + $0x530] sm:$0xff]
      %v3268 = vld [vmem:[%s9 + $0x538] sm:$0xff]
      %v3269 = vld [vmem:[%s9 + $0x540] sm:$0xff]
      %v3270 = vld [vmem:[%s9 + $0x548] sm:$0xff]
      %v3271 = vld [vmem:[%s9 + $0x550] sm:$0xff]
      %v3272 = vld [vmem:[%s9 + $0x558] sm:$0xff]
      %v3273 = vld [vmem:[%s9 + $0x560] sm:$0xff]
      %v3274 = vld [vmem:[%s9 + $0x568] sm:$0xff]
      %v3275 = vld [vmem:[%s9 + $0x570] sm:$0xff]
      %v3276 = vld [vmem:[%s9 + $0x578] sm:$0xff]
      %v3277 = vld [vmem:[%s9 + $0x580] sm:$0xff]
      %v3278 = vld [vmem:[%s9 + $0x588] sm:$0xff]
      %v3279 = vld [vmem:[%s9 + $0x590] sm:$0xff]
      %v3280 = vld [vmem:[%s9 + $0x598] sm:$0xff]
      %v3281 = vld [vmem:[%s9 + $0x5a0] sm:$0xff]
      %v3282 = vld [vmem:[%s9 + $0x5a8] sm:$0xff]
      %v3283 = vld [vmem:[%s9 + $0x5b0] sm:$0xff]
      %v3284 = vld [vmem:[%s9 + $0x5b8] sm:$0xff]
      %v3285 = vld [vmem:[%s9 + $0x5c0] sm:$0xff]
      %v3286 = vld [vmem:[%s9 + $0x5c8] sm:$0xff]
      %v3287 = vld [vmem:[%s9 + $0x5d0] sm:$0xff]
      %v3288 = vld [vmem:[%s9 + $0x5d8] sm:$0xff]
      %v3289 = vld [vmem:[%s9 + $0x5e0] sm:$0xff]
      %v3290 = vld [vmem:[%s9 + $0x5e8] sm:$0xff]
      %v3291 = vld [vmem:[%s9 + $0x5f0] sm:$0xff]
      %v3292 = vld [vmem:[%s9 + $0x5f8] sm:$0xff]
      %v3293 = vld [vmem:[%s9 + $0x600] sm:$0xff]
      %v3294 = vld [vmem:[%s9 + $0x608] sm:$0xff]
      %v3295 = vld [vmem:[%s9 + $0x610] sm:$0xff]
      %v3296 = vld [vmem:[%s9 + $0x618] sm:$0xff]
      %v3297 = vld [vmem:[%s9 + $0x620] sm:$0xff]
      %v3298 = vld [vmem:[%s9 + $0x628] sm:$0xff]
      %v3299 = vld [vmem:[%s9 + $0x630] sm:$0xff]
      %v3300 = vld [vmem:[%s9 + $0x638] sm:$0xff]
      %v3301 = vld [vmem:[%s9 + $0x640] sm:$0xff]
      %v3302 = vld [vmem:[%s9 + $0x648] sm:$0xff]
      %v3303 = vld [vmem:[%s9 + $0x650] sm:$0xff]
      %v3304 = vld [vmem:[%s9 + $0x658] sm:$0xff]
      %v3305 = vld [vmem:[%s9 + $0x660] sm:$0xff]
      %v3306 = vld [vmem:[%s9 + $0x668] sm:$0xff]
      %v3307 = vld [vmem:[%s9 + $0x670] sm:$0xff]
      %v3308 = vld [vmem:[%s9 + $0x678] sm:$0xff]
      %v3309 = vld [vmem:[%s9 + $0x680] sm:$0xff]
      %v3310 = vld [vmem:[%s9 + $0x688] sm:$0xff]
      %v3311 = vld [vmem:[%s9 + $0x690] sm:$0xff]
      %v3312 = vld [vmem:[%s9 + $0x698] sm:$0xff]
      %v3313 = vld [vmem:[%s9 + $0x6a0] sm:$0xff]
      %v3314 = vld [vmem:[%s9 + $0x6a8] sm:$0xff]
      %v3315 = vld [vmem:[%s9 + $0x6b0] sm:$0xff]
      %v3316 = vld [vmem:[%s9 + $0x6b8] sm:$0xff]
      %v3317 = vld [vmem:[%s9 + $0x6c0] sm:$0xff]
      %v3318 = vld [vmem:[%s9 + $0x6c8] sm:$0xff]
      %v3319 = vld [vmem:[%s9 + $0x6d0] sm:$0xff]
      %v3320 = vld [vmem:[%s9 + $0x6d8] sm:$0xff]
      %v3321 = vld [vmem:[%s9 + $0x6e0] sm:$0xff]
      %v3322 = vld [vmem:[%s9 + $0x6e8] sm:$0xff]
      %v3323 = vld [vmem:[%s9 + $0x6f0] sm:$0xff]
      %v3324 = vld [vmem:[%s9 + $0x6f8] sm:$0xff]
      %v3325 = vld [vmem:[%s9 + $0x700] sm:$0xff]
      %v3326 = vld [vmem:[%s9 + $0x708] sm:$0xff]
      %v3327 = vld [vmem:[%s9 + $0x710] sm:$0xff]
      %v3328 = vld [vmem:[%s9 + $0x718] sm:$0xff]
      %v3329 = vld [vmem:[%s9 + $0x720] sm:$0xff]
      %v3330 = vld [vmem:[%s9 + $0x728] sm:$0xff]
      %v3331 = vld [vmem:[%s9 + $0x730] sm:$0xff]
      %v3332 = vld [vmem:[%s9 + $0x738] sm:$0xff]
      %v3333 = vld [vmem:[%s9 + $0x740] sm:$0xff]
      %v3334 = vld [vmem:[%s9 + $0x748] sm:$0xff]
      %v3335 = vld [vmem:[%s9 + $0x750] sm:$0xff]
      %v3336 = vld [vmem:[%s9 + $0x758] sm:$0xff]
      %v3337 = vld [vmem:[%s9 + $0x760] sm:$0xff]
      %v3338 = vld [vmem:[%s9 + $0x768] sm:$0xff]
      %v3339 = vld [vmem:[%s9 + $0x770] sm:$0xff]
      %v3340 = vld [vmem:[%s9 + $0x778] sm:$0xff]
      %v3341 = vld [vmem:[%s9 + $0x780] sm:$0xff]
      %v3342 = vld [vmem:[%s9 + $0x788] sm:$0xff]
      %v3343 = vld [vmem:[%s9 + $0x790] sm:$0xff]
      %v3344 = vld [vmem:[%s9 + $0x798] sm:$0xff]
      %v3345 = vld [vmem:[%s9 + $0x7a0] sm:$0xff]
      %v3346 = vld [vmem:[%s9 + $0x7a8] sm:$0xff]
      %v3347 = vld [vmem:[%s9 + $0x7b0] sm:$0xff]
      %v3348 = vld [vmem:[%s9 + $0x7b8] sm:$0xff]
      %v3349 = vld [vmem:[%s9 + $0x7c0] sm:$0xff]
      %v3350 = vld [vmem:[%s9 + $0x7c8] sm:$0xff]
      %v3351 = vld [vmem:[%s9 + $0x7d0] sm:$0xff]
      %v3352 = vld [vmem:[%s9 + $0x7d8] sm:$0xff]
      %v3353 = vld [vmem:[%s9 + $0x7e0] sm:$0xff]
      %v3354 = vld [vmem:[%s9 + $0x7e8] sm:$0xff]
      %v3355 = vld [vmem:[%s9 + $0x7f0] sm:$0xff]
      %v3356 = vld [vmem:[%s9 + $0x7f8] sm:$0xff]
      %v3357 = vld [vmem:[%s10] sm:$0xf]
      %v3359 = vlaneseq
      %v3360 = vshrl.u32 %v3359, 7
      %v3361 = vsub.s32 0, %v3360
      %v3362 = vrot.slane %v3357, %v3361
      %v3363 = vlaneseq
      %v3364 = vshrl.u32 %v3363, 7
      %v3365 = vsub.s32 1, %v3364
      %v3366 = vrot.slane %v3357, %v3365
      %v3367 = vlaneseq
      %v3368 = vshrl.u32 %v3367, 7
      %v3369 = vsub.s32 2, %v3368
      %v3370 = vrot.slane %v3357, %v3369
      %v3371 = vlaneseq
      %v3372 = vshrl.u32 %v3371, 7
      %v3373 = vsub.s32 3, %v3372
      %v3374 = vrot.slane %v3357, %v3373
      %v3635 = vunpack.c.l.b16 %v3101
      %v3636 = vunpack.c.h.b16 %v3101
      %v3637 = vunpack.c.l.b16 %v3102
      %v3638 = vunpack.c.h.b16 %v3102
      %v3639 = vunpack.c.l.b16 %v3103
      %v3640 = vunpack.c.h.b16 %v3103
      %v3641 = vunpack.c.l.b16 %v3104
      %v3642 = vunpack.c.h.b16 %v3104
      %v3643 = vunpack.c.l.b16 %v3105
      %v3644 = vunpack.c.h.b16 %v3105
      %v3645 = vunpack.c.l.b16 %v3106
      %v3646 = vunpack.c.h.b16 %v3106
      %v3647 = vunpack.c.l.b16 %v3107
      %v3648 = vunpack.c.h.b16 %v3107
      %v3649 = vunpack.c.l.b16 %v3108
      %v3650 = vunpack.c.h.b16 %v3108
      %v3651 = vunpack.c.l.b16 %v3109
      %v3652 = vunpack.c.h.b16 %v3109
      %v3653 = vunpack.c.l.b16 %v3110
      %v3654 = vunpack.c.h.b16 %v3110
      %v3655 = vunpack.c.l.b16 %v3111
      %v3656 = vunpack.c.h.b16 %v3111
      %v3657 = vunpack.c.l.b16 %v3112
      %v3658 = vunpack.c.h.b16 %v3112
      %v3659 = vunpack.c.l.b16 %v3113
      %v3660 = vunpack.c.h.b16 %v3113
      %v3661 = vunpack.c.l.b16 %v3114
      %v3662 = vunpack.c.h.b16 %v3114
      %v3663 = vunpack.c.l.b16 %v3115
      %v3664 = vunpack.c.h.b16 %v3115
      %v3665 = vunpack.c.l.b16 %v3116
      %v3666 = vunpack.c.h.b16 %v3116
      %v3667 = vunpack.c.l.b16 %v3117
      %v3668 = vunpack.c.h.b16 %v3117
      %v3669 = vunpack.c.l.b16 %v3118
      %v3670 = vunpack.c.h.b16 %v3118
      %v3671 = vunpack.c.l.b16 %v3119
      %v3672 = vunpack.c.h.b16 %v3119
      %v3673 = vunpack.c.l.b16 %v3120
      %v3674 = vunpack.c.h.b16 %v3120
      %v3675 = vunpack.c.l.b16 %v3121
      %v3676 = vunpack.c.h.b16 %v3121
      %v3677 = vunpack.c.l.b16 %v3122
      %v3678 = vunpack.c.h.b16 %v3122
      %v3679 = vunpack.c.l.b16 %v3123
      %v3680 = vunpack.c.h.b16 %v3123
      %v3681 = vunpack.c.l.b16 %v3124
      %v3682 = vunpack.c.h.b16 %v3124
      %v3683 = vunpack.c.l.b16 %v3125
      %v3684 = vunpack.c.h.b16 %v3125
      %v3685 = vunpack.c.l.b16 %v3126
      %v3686 = vunpack.c.h.b16 %v3126
      %v3687 = vunpack.c.l.b16 %v3127
      %v3688 = vunpack.c.h.b16 %v3127
      %v3689 = vunpack.c.l.b16 %v3128
      %v3690 = vunpack.c.h.b16 %v3128
      %v3691 = vunpack.c.l.b16 %v3129
      %v3692 = vunpack.c.h.b16 %v3129
      %v3693 = vunpack.c.l.b16 %v3130
      %v3694 = vunpack.c.h.b16 %v3130
      %v3695 = vunpack.c.l.b16 %v3131
      %v3696 = vunpack.c.h.b16 %v3131
      %v3697 = vunpack.c.l.b16 %v3132
      %v3698 = vunpack.c.h.b16 %v3132
      %v3699 = vunpack.c.l.b16 %v3133
      %v3700 = vunpack.c.h.b16 %v3133
      %v3701 = vunpack.c.l.b16 %v3134
      %v3702 = vunpack.c.h.b16 %v3134
      %v3703 = vunpack.c.l.b16 %v3135
      %v3704 = vunpack.c.h.b16 %v3135
      %v3705 = vunpack.c.l.b16 %v3136
      %v3706 = vunpack.c.h.b16 %v3136
      %v3707 = vunpack.c.l.b16 %v3137
      %v3708 = vunpack.c.h.b16 %v3137
      %v3709 = vunpack.c.l.b16 %v3138
      %v3710 = vunpack.c.h.b16 %v3138
      %v3711 = vunpack.c.l.b16 %v3139
      %v3712 = vunpack.c.h.b16 %v3139
      %v3713 = vunpack.c.l.b16 %v3140
      %v3714 = vunpack.c.h.b16 %v3140
      %v3715 = vunpack.c.l.b16 %v3141
      %v3716 = vunpack.c.h.b16 %v3141
      %v3717 = vunpack.c.l.b16 %v3142
      %v3718 = vunpack.c.h.b16 %v3142
      %v3719 = vunpack.c.l.b16 %v3143
      %v3720 = vunpack.c.h.b16 %v3143
      %v3721 = vunpack.c.l.b16 %v3144
      %v3722 = vunpack.c.h.b16 %v3144
      %v3723 = vunpack.c.l.b16 %v3145
      %v3724 = vunpack.c.h.b16 %v3145
      %v3725 = vunpack.c.l.b16 %v3146
      %v3726 = vunpack.c.h.b16 %v3146
      %v3727 = vunpack.c.l.b16 %v3147
      %v3728 = vunpack.c.h.b16 %v3147
      %v3729 = vunpack.c.l.b16 %v3148
      %v3730 = vunpack.c.h.b16 %v3148
      %v3731 = vunpack.c.l.b16 %v3149
      %v3732 = vunpack.c.h.b16 %v3149
      %v3733 = vunpack.c.l.b16 %v3150
      %v3734 = vunpack.c.h.b16 %v3150
      %v3735 = vunpack.c.l.b16 %v3151
      %v3736 = vunpack.c.h.b16 %v3151
      %v3737 = vunpack.c.l.b16 %v3152
      %v3738 = vunpack.c.h.b16 %v3152
      %v3739 = vunpack.c.l.b16 %v3153
      %v3740 = vunpack.c.h.b16 %v3153
      %v3741 = vunpack.c.l.b16 %v3154
      %v3742 = vunpack.c.h.b16 %v3154
      %v3743 = vunpack.c.l.b16 %v3155
      %v3744 = vunpack.c.h.b16 %v3155
      %v3745 = vunpack.c.l.b16 %v3156
      %v3746 = vunpack.c.h.b16 %v3156
      %v3747 = vunpack.c.l.b16 %v3157
      %v3748 = vunpack.c.h.b16 %v3157
      %v3749 = vunpack.c.l.b16 %v3158
      %v3750 = vunpack.c.h.b16 %v3158
      %v3751 = vunpack.c.l.b16 %v3159
      %v3752 = vunpack.c.h.b16 %v3159
      %v3753 = vunpack.c.l.b16 %v3160
      %v3754 = vunpack.c.h.b16 %v3160
      %v3755 = vunpack.c.l.b16 %v3161
      %v3756 = vunpack.c.h.b16 %v3161
      %v3757 = vunpack.c.l.b16 %v3162
      %v3758 = vunpack.c.h.b16 %v3162
      %v3759 = vunpack.c.l.b16 %v3163
      %v3760 = vunpack.c.h.b16 %v3163
      %v3761 = vunpack.c.l.b16 %v3164
      %v3762 = vunpack.c.h.b16 %v3164
      %v3763 = vunpack.c.l.b16 %v3165
      %v3764 = vunpack.c.h.b16 %v3165
      %v3765 = vunpack.c.l.b16 %v3166
      %v3766 = vunpack.c.h.b16 %v3166
      %v3767 = vunpack.c.l.b16 %v3167
      %v3768 = vunpack.c.h.b16 %v3167
      %v3769 = vunpack.c.l.b16 %v3168
      %v3770 = vunpack.c.h.b16 %v3168
      %v3771 = vunpack.c.l.b16 %v3169
      %v3772 = vunpack.c.h.b16 %v3169
      %v3773 = vunpack.c.l.b16 %v3170
      %v3774 = vunpack.c.h.b16 %v3170
      %v3775 = vunpack.c.l.b16 %v3171
      %v3776 = vunpack.c.h.b16 %v3171
      %v3777 = vunpack.c.l.b16 %v3172
      %v3778 = vunpack.c.h.b16 %v3172
      %v3779 = vunpack.c.l.b16 %v3173
      %v3780 = vunpack.c.h.b16 %v3173
      %v3781 = vunpack.c.l.b16 %v3174
      %v3782 = vunpack.c.h.b16 %v3174
      %v3783 = vunpack.c.l.b16 %v3175
      %v3784 = vunpack.c.h.b16 %v3175
      %v3785 = vunpack.c.l.b16 %v3176
      %v3786 = vunpack.c.h.b16 %v3176
      %v3787 = vunpack.c.l.b16 %v3177
      %v3788 = vunpack.c.h.b16 %v3177
      %v3789 = vunpack.c.l.b16 %v3178
      %v3790 = vunpack.c.h.b16 %v3178
      %v3791 = vunpack.c.l.b16 %v3179
      %v3792 = vunpack.c.h.b16 %v3179
      %v3793 = vunpack.c.l.b16 %v3180
      %v3794 = vunpack.c.h.b16 %v3180
      %v3795 = vunpack.c.l.b16 %v3181
      %v3796 = vunpack.c.h.b16 %v3181
      %v3797 = vunpack.c.l.b16 %v3182
      %v3798 = vunpack.c.h.b16 %v3182
      %v3799 = vunpack.c.l.b16 %v3183
      %v3800 = vunpack.c.h.b16 %v3183
      %v3801 = vunpack.c.l.b16 %v3184
      %v3802 = vunpack.c.h.b16 %v3184
      %v3803 = vunpack.c.l.b16 %v3185
      %v3804 = vunpack.c.h.b16 %v3185
      %v3805 = vunpack.c.l.b16 %v3186
      %v3806 = vunpack.c.h.b16 %v3186
      %v3807 = vunpack.c.l.b16 %v3187
      %v3808 = vunpack.c.h.b16 %v3187
      %v3809 = vunpack.c.l.b16 %v3188
      %v3810 = vunpack.c.h.b16 %v3188
      %v3811 = vunpack.c.l.b16 %v3189
      %v3812 = vunpack.c.h.b16 %v3189
      %v3813 = vunpack.c.l.b16 %v3190
      %v3814 = vunpack.c.h.b16 %v3190
      %v3815 = vunpack.c.l.b16 %v3191
      %v3816 = vunpack.c.h.b16 %v3191
      %v3817 = vunpack.c.l.b16 %v3192
      %v3818 = vunpack.c.h.b16 %v3192
      %v3819 = vunpack.c.l.b16 %v3193
      %v3820 = vunpack.c.h.b16 %v3193
      %v3821 = vunpack.c.l.b16 %v3194
      %v3822 = vunpack.c.h.b16 %v3194
      %v3823 = vunpack.c.l.b16 %v3195
      %v3824 = vunpack.c.h.b16 %v3195
      %v3825 = vunpack.c.l.b16 %v3196
      %v3826 = vunpack.c.h.b16 %v3196
      %v3827 = vunpack.c.l.b16 %v3197
      %v3828 = vunpack.c.h.b16 %v3197
      %v3829 = vunpack.c.l.b16 %v3198
      %v3830 = vunpack.c.h.b16 %v3198
      %v3831 = vunpack.c.l.b16 %v3199
      %v3832 = vunpack.c.h.b16 %v3199
      %v3833 = vunpack.c.l.b16 %v3200
      %v3834 = vunpack.c.h.b16 %v3200
      %v3835 = vunpack.c.l.b16 %v3201
      %v3836 = vunpack.c.h.b16 %v3201
      %v3837 = vunpack.c.l.b16 %v3202
      %v3838 = vunpack.c.h.b16 %v3202
      %v3839 = vunpack.c.l.b16 %v3203
      %v3840 = vunpack.c.h.b16 %v3203
      %v3841 = vunpack.c.l.b16 %v3204
      %v3842 = vunpack.c.h.b16 %v3204
      %v3843 = vunpack.c.l.b16 %v3205
      %v3844 = vunpack.c.h.b16 %v3205
      %v3845 = vunpack.c.l.b16 %v3206
      %v3846 = vunpack.c.h.b16 %v3206
      %v3847 = vunpack.c.l.b16 %v3207
      %v3848 = vunpack.c.h.b16 %v3207
      %v3849 = vunpack.c.l.b16 %v3208
      %v3850 = vunpack.c.h.b16 %v3208
      %v3851 = vunpack.c.l.b16 %v3209
      %v3852 = vunpack.c.h.b16 %v3209
      %v3853 = vunpack.c.l.b16 %v3210
      %v3854 = vunpack.c.h.b16 %v3210
      %v3855 = vunpack.c.l.b16 %v3211
      %v3856 = vunpack.c.h.b16 %v3211
      %v3857 = vunpack.c.l.b16 %v3212
      %v3858 = vunpack.c.h.b16 %v3212
      %v3859 = vunpack.c.l.b16 %v3213
      %v3860 = vunpack.c.h.b16 %v3213
      %v3861 = vunpack.c.l.b16 %v3214
      %v3862 = vunpack.c.h.b16 %v3214
      %v3863 = vunpack.c.l.b16 %v3215
      %v3864 = vunpack.c.h.b16 %v3215
      %v3865 = vunpack.c.l.b16 %v3216
      %v3866 = vunpack.c.h.b16 %v3216
      %v3867 = vunpack.c.l.b16 %v3217
      %v3868 = vunpack.c.h.b16 %v3217
      %v3869 = vunpack.c.l.b16 %v3218
      %v3870 = vunpack.c.h.b16 %v3218
      %v3871 = vunpack.c.l.b16 %v3219
      %v3872 = vunpack.c.h.b16 %v3219
      %v3873 = vunpack.c.l.b16 %v3220
      %v3874 = vunpack.c.h.b16 %v3220
      %v3875 = vunpack.c.l.b16 %v3221
      %v3876 = vunpack.c.h.b16 %v3221
      %v3877 = vunpack.c.l.b16 %v3222
      %v3878 = vunpack.c.h.b16 %v3222
      %v3879 = vunpack.c.l.b16 %v3223
      %v3880 = vunpack.c.h.b16 %v3223
      %v3881 = vunpack.c.l.b16 %v3224
      %v3882 = vunpack.c.h.b16 %v3224
      %v3883 = vunpack.c.l.b16 %v3225
      %v3884 = vunpack.c.h.b16 %v3225
      %v3885 = vunpack.c.l.b16 %v3226
      %v3886 = vunpack.c.h.b16 %v3226
      %v3887 = vunpack.c.l.b16 %v3227
      %v3888 = vunpack.c.h.b16 %v3227
      %v3889 = vunpack.c.l.b16 %v3228
      %v3890 = vunpack.c.h.b16 %v3228
      %v3891 = vunpack.c.l.b16 %v3229
      %v3892 = vunpack.c.h.b16 %v3229
      %v3893 = vunpack.c.l.b16 %v3230
      %v3894 = vunpack.c.h.b16 %v3230
      %v3895 = vunpack.c.l.b16 %v3231
      %v3896 = vunpack.c.h.b16 %v3231
      %v3897 = vunpack.c.l.b16 %v3232
      %v3898 = vunpack.c.h.b16 %v3232
      %v3899 = vunpack.c.l.b16 %v3233
      %v3900 = vunpack.c.h.b16 %v3233
      %v3901 = vunpack.c.l.b16 %v3234
      %v3902 = vunpack.c.h.b16 %v3234
      %v3903 = vunpack.c.l.b16 %v3235
      %v3904 = vunpack.c.h.b16 %v3235
      %v3905 = vunpack.c.l.b16 %v3236
      %v3906 = vunpack.c.h.b16 %v3236
      %v3907 = vunpack.c.l.b16 %v3237
      %v3908 = vunpack.c.h.b16 %v3237
      %v3909 = vunpack.c.l.b16 %v3238
      %v3910 = vunpack.c.h.b16 %v3238
      %v3911 = vunpack.c.l.b16 %v3239
      %v3912 = vunpack.c.h.b16 %v3239
      %v3913 = vunpack.c.l.b16 %v3240
      %v3914 = vunpack.c.h.b16 %v3240
      %v3915 = vunpack.c.l.b16 %v3241
      %v3916 = vunpack.c.h.b16 %v3241
      %v3917 = vunpack.c.l.b16 %v3242
      %v3918 = vunpack.c.h.b16 %v3242
      %v3919 = vunpack.c.l.b16 %v3243
      %v3920 = vunpack.c.h.b16 %v3243
      %v3921 = vunpack.c.l.b16 %v3244
      %v3922 = vunpack.c.h.b16 %v3244
      %v3923 = vunpack.c.l.b16 %v3245
      %v3924 = vunpack.c.h.b16 %v3245
      %v3925 = vunpack.c.l.b16 %v3246
      %v3926 = vunpack.c.h.b16 %v3246
      %v3927 = vunpack.c.l.b16 %v3247
      %v3928 = vunpack.c.h.b16 %v3247
      %v3929 = vunpack.c.l.b16 %v3248
      %v3930 = vunpack.c.h.b16 %v3248
      %v3931 = vunpack.c.l.b16 %v3249
      %v3932 = vunpack.c.h.b16 %v3249
      %v3933 = vunpack.c.l.b16 %v3250
      %v3934 = vunpack.c.h.b16 %v3250
      %v3935 = vunpack.c.l.b16 %v3251
      %v3936 = vunpack.c.h.b16 %v3251
      %v3937 = vunpack.c.l.b16 %v3252
      %v3938 = vunpack.c.h.b16 %v3252
      %v3939 = vunpack.c.l.b16 %v3253
      %v3940 = vunpack.c.h.b16 %v3253
      %v3941 = vunpack.c.l.b16 %v3254
      %v3942 = vunpack.c.h.b16 %v3254
      %v3943 = vunpack.c.l.b16 %v3255
      %v3944 = vunpack.c.h.b16 %v3255
      %v3945 = vunpack.c.l.b16 %v3256
      %v3946 = vunpack.c.h.b16 %v3256
      %v3947 = vunpack.c.l.b16 %v3257
      %v3948 = vunpack.c.h.b16 %v3257
      %v3949 = vunpack.c.l.b16 %v3258
      %v3950 = vunpack.c.h.b16 %v3258
      %v3951 = vunpack.c.l.b16 %v3259
      %v3952 = vunpack.c.h.b16 %v3259
      %v3953 = vunpack.c.l.b16 %v3260
      %v3954 = vunpack.c.h.b16 %v3260
      %v3955 = vunpack.c.l.b16 %v3261
      %v3956 = vunpack.c.h.b16 %v3261
      %v3957 = vunpack.c.l.b16 %v3262
      %v3958 = vunpack.c.h.b16 %v3262
      %v3959 = vunpack.c.l.b16 %v3263
      %v3960 = vunpack.c.h.b16 %v3263
      %v3961 = vunpack.c.l.b16 %v3264
      %v3962 = vunpack.c.h.b16 %v3264
      %v3963 = vunpack.c.l.b16 %v3265
      %v3964 = vunpack.c.h.b16 %v3265
      %v3965 = vunpack.c.l.b16 %v3266
      %v3966 = vunpack.c.h.b16 %v3266
      %v3967 = vunpack.c.l.b16 %v3267
      %v3968 = vunpack.c.h.b16 %v3267
      %v3969 = vunpack.c.l.b16 %v3268
      %v3970 = vunpack.c.h.b16 %v3268
      %v3971 = vunpack.c.l.b16 %v3269
      %v3972 = vunpack.c.h.b16 %v3269
      %v3973 = vunpack.c.l.b16 %v3270
      %v3974 = vunpack.c.h.b16 %v3270
      %v3975 = vunpack.c.l.b16 %v3271
      %v3976 = vunpack.c.h.b16 %v3271
      %v3977 = vunpack.c.l.b16 %v3272
      %v3978 = vunpack.c.h.b16 %v3272
      %v3979 = vunpack.c.l.b16 %v3273
      %v3980 = vunpack.c.h.b16 %v3273
      %v3981 = vunpack.c.l.b16 %v3274
      %v3982 = vunpack.c.h.b16 %v3274
      %v3983 = vunpack.c.l.b16 %v3275
      %v3984 = vunpack.c.h.b16 %v3275
      %v3985 = vunpack.c.l.b16 %v3276
      %v3986 = vunpack.c.h.b16 %v3276
      %v3987 = vunpack.c.l.b16 %v3277
      %v3988 = vunpack.c.h.b16 %v3277
      %v3989 = vunpack.c.l.b16 %v3278
      %v3990 = vunpack.c.h.b16 %v3278
      %v3991 = vunpack.c.l.b16 %v3279
      %v3992 = vunpack.c.h.b16 %v3279
      %v3993 = vunpack.c.l.b16 %v3280
      %v3994 = vunpack.c.h.b16 %v3280
      %v3995 = vunpack.c.l.b16 %v3281
      %v3996 = vunpack.c.h.b16 %v3281
      %v3997 = vunpack.c.l.b16 %v3282
      %v3998 = vunpack.c.h.b16 %v3282
      %v3999 = vunpack.c.l.b16 %v3283
      %v4000 = vunpack.c.h.b16 %v3283
      %v4001 = vunpack.c.l.b16 %v3284
      %v4002 = vunpack.c.h.b16 %v3284
      %v4003 = vunpack.c.l.b16 %v3285
      %v4004 = vunpack.c.h.b16 %v3285
      %v4005 = vunpack.c.l.b16 %v3286
      %v4006 = vunpack.c.h.b16 %v3286
      %v4007 = vunpack.c.l.b16 %v3287
      %v4008 = vunpack.c.h.b16 %v3287
      %v4009 = vunpack.c.l.b16 %v3288
      %v4010 = vunpack.c.h.b16 %v3288
      %v4011 = vunpack.c.l.b16 %v3289
      %v4012 = vunpack.c.h.b16 %v3289
      %v4013 = vunpack.c.l.b16 %v3290
      %v4014 = vunpack.c.h.b16 %v3290
      %v4015 = vunpack.c.l.b16 %v3291
      %v4016 = vunpack.c.h.b16 %v3291
      %v4017 = vunpack.c.l.b16 %v3292
      %v4018 = vunpack.c.h.b16 %v3292
      %v4019 = vunpack.c.l.b16 %v3293
      %v4020 = vunpack.c.h.b16 %v3293
      %v4021 = vunpack.c.l.b16 %v3294
      %v4022 = vunpack.c.h.b16 %v3294
      %v4023 = vunpack.c.l.b16 %v3295
      %v4024 = vunpack.c.h.b16 %v3295
      %v4025 = vunpack.c.l.b16 %v3296
      %v4026 = vunpack.c.h.b16 %v3296
      %v4027 = vunpack.c.l.b16 %v3297
      %v4028 = vunpack.c.h.b16 %v3297
      %v4029 = vunpack.c.l.b16 %v3298
      %v4030 = vunpack.c.h.b16 %v3298
      %v4031 = vunpack.c.l.b16 %v3299
      %v4032 = vunpack.c.h.b16 %v3299
      %v4033 = vunpack.c.l.b16 %v3300
      %v4034 = vunpack.c.h.b16 %v3300
      %v4035 = vunpack.c.l.b16 %v3301
      %v4036 = vunpack.c.h.b16 %v3301
      %v4037 = vunpack.c.l.b16 %v3302
      %v4038 = vunpack.c.h.b16 %v3302
      %v4039 = vunpack.c.l.b16 %v3303
      %v4040 = vunpack.c.h.b16 %v3303
      %v4041 = vunpack.c.l.b16 %v3304
      %v4042 = vunpack.c.h.b16 %v3304
      %v4043 = vunpack.c.l.b16 %v3305
      %v4044 = vunpack.c.h.b16 %v3305
      %v4045 = vunpack.c.l.b16 %v3306
      %v4046 = vunpack.c.h.b16 %v3306
      %v4047 = vunpack.c.l.b16 %v3307
      %v4048 = vunpack.c.h.b16 %v3307
      %v4049 = vunpack.c.l.b16 %v3308
      %v4050 = vunpack.c.h.b16 %v3308
      %v4051 = vunpack.c.l.b16 %v3309
      %v4052 = vunpack.c.h.b16 %v3309
      %v4053 = vunpack.c.l.b16 %v3310
      %v4054 = vunpack.c.h.b16 %v3310
      %v4055 = vunpack.c.l.b16 %v3311
      %v4056 = vunpack.c.h.b16 %v3311
      %v4057 = vunpack.c.l.b16 %v3312
      %v4058 = vunpack.c.h.b16 %v3312
      %v4059 = vunpack.c.l.b16 %v3313
      %v4060 = vunpack.c.h.b16 %v3313
      %v4061 = vunpack.c.l.b16 %v3314
      %v4062 = vunpack.c.h.b16 %v3314
      %v4063 = vunpack.c.l.b16 %v3315
      %v4064 = vunpack.c.h.b16 %v3315
      %v4065 = vunpack.c.l.b16 %v3316
      %v4066 = vunpack.c.h.b16 %v3316
      %v4067 = vunpack.c.l.b16 %v3317
      %v4068 = vunpack.c.h.b16 %v3317
      %v4069 = vunpack.c.l.b16 %v3318
      %v4070 = vunpack.c.h.b16 %v3318
      %v4071 = vunpack.c.l.b16 %v3319
      %v4072 = vunpack.c.h.b16 %v3319
      %v4073 = vunpack.c.l.b16 %v3320
      %v4074 = vunpack.c.h.b16 %v3320
      %v4075 = vunpack.c.l.b16 %v3321
      %v4076 = vunpack.c.h.b16 %v3321
      %v4077 = vunpack.c.l.b16 %v3322
      %v4078 = vunpack.c.h.b16 %v3322
      %v4079 = vunpack.c.l.b16 %v3323
      %v4080 = vunpack.c.h.b16 %v3323
      %v4081 = vunpack.c.l.b16 %v3324
      %v4082 = vunpack.c.h.b16 %v3324
      %v4083 = vunpack.c.l.b16 %v3325
      %v4084 = vunpack.c.h.b16 %v3325
      %v4085 = vunpack.c.l.b16 %v3326
      %v4086 = vunpack.c.h.b16 %v3326
      %v4087 = vunpack.c.l.b16 %v3327
      %v4088 = vunpack.c.h.b16 %v3327
      %v4089 = vunpack.c.l.b16 %v3328
      %v4090 = vunpack.c.h.b16 %v3328
      %v4091 = vunpack.c.l.b16 %v3329
      %v4092 = vunpack.c.h.b16 %v3329
      %v4093 = vunpack.c.l.b16 %v3330
      %v4094 = vunpack.c.h.b16 %v3330
      %v4095 = vunpack.c.l.b16 %v3331
      %v4096 = vunpack.c.h.b16 %v3331
      %v4097 = vunpack.c.l.b16 %v3332
      %v4098 = vunpack.c.h.b16 %v3332
      %v4099 = vunpack.c.l.b16 %v3333
      %v4100 = vunpack.c.h.b16 %v3333
      %v4101 = vunpack.c.l.b16 %v3334
      %v4102 = vunpack.c.h.b16 %v3334
      %v4103 = vunpack.c.l.b16 %v3335
      %v4104 = vunpack.c.h.b16 %v3335
      %v4105 = vunpack.c.l.b16 %v3336
      %v4106 = vunpack.c.h.b16 %v3336
      %v4107 = vunpack.c.l.b16 %v3337
      %v4108 = vunpack.c.h.b16 %v3337
      %v4109 = vunpack.c.l.b16 %v3338
      %v4110 = vunpack.c.h.b16 %v3338
      %v4111 = vunpack.c.l.b16 %v3339
      %v4112 = vunpack.c.h.b16 %v3339
      %v4113 = vunpack.c.l.b16 %v3340
      %v4114 = vunpack.c.h.b16 %v3340
      %v4115 = vunpack.c.l.b16 %v3341
      %v4116 = vunpack.c.h.b16 %v3341
      %v4117 = vunpack.c.l.b16 %v3342
      %v4118 = vunpack.c.h.b16 %v3342
      %v4119 = vunpack.c.l.b16 %v3343
      %v4120 = vunpack.c.h.b16 %v3343
      %v4121 = vunpack.c.l.b16 %v3344
      %v4122 = vunpack.c.h.b16 %v3344
      %v4123 = vunpack.c.l.b16 %v3345
      %v4124 = vunpack.c.h.b16 %v3345
      %v4125 = vunpack.c.l.b16 %v3346
      %v4126 = vunpack.c.h.b16 %v3346
      %v4127 = vunpack.c.l.b16 %v3347
      %v4128 = vunpack.c.h.b16 %v3347
      %v4129 = vunpack.c.l.b16 %v3348
      %v4130 = vunpack.c.h.b16 %v3348
      %v4131 = vunpack.c.l.b16 %v3349
      %v4132 = vunpack.c.h.b16 %v3349
      %v4133 = vunpack.c.l.b16 %v3350
      %v4134 = vunpack.c.h.b16 %v3350
      %v4135 = vunpack.c.l.b16 %v3351
      %v4136 = vunpack.c.h.b16 %v3351
      %v4137 = vunpack.c.l.b16 %v3352
      %v4138 = vunpack.c.h.b16 %v3352
      %v4139 = vunpack.c.l.b16 %v3353
      %v4140 = vunpack.c.h.b16 %v3353
      %v4141 = vunpack.c.l.b16 %v3354
      %v4142 = vunpack.c.h.b16 %v3354
      %v4143 = vunpack.c.l.b16 %v3355
      %v4144 = vunpack.c.h.b16 %v3355
      %v4145 = vunpack.c.l.b16 %v3356
      %v4146 = vunpack.c.h.b16 %v3356
      %v4147 = vpack.c.b16 %v3639, %v3635
      %v4148 = vpack.c.b16 %v3640, %v3636
      %v4149 = vpack.c.b16 %v3641, %v3637
      %v4150 = vpack.c.b16 %v3642, %v3638
      %v4151 = vpack.c.b16 %v3647, %v3643
      %v4152 = vpack.c.b16 %v3648, %v3644
      %v4153 = vpack.c.b16 %v3649, %v3645
      %v4154 = vpack.c.b16 %v3650, %v3646
      %v4155 = vpack.c.b16 %v3655, %v3651
      %v4156 = vpack.c.b16 %v3656, %v3652
      %v4157 = vpack.c.b16 %v3657, %v3653
      %v4158 = vpack.c.b16 %v3658, %v3654
      %v4159 = vpack.c.b16 %v3663, %v3659
      %v4160 = vpack.c.b16 %v3664, %v3660
      %v4161 = vpack.c.b16 %v3665, %v3661
      %v4162 = vpack.c.b16 %v3666, %v3662
      %v4163 = vpack.c.b16 %v3671, %v3667
      %v4164 = vpack.c.b16 %v3672, %v3668
      %v4165 = vpack.c.b16 %v3673, %v3669
      %v4166 = vpack.c.b16 %v3674, %v3670
      %v4167 = vpack.c.b16 %v3679, %v3675
      %v4168 = vpack.c.b16 %v3680, %v3676
      %v4169 = vpack.c.b16 %v3681, %v3677
      %v4170 = vpack.c.b16 %v3682, %v3678
      %v4171 = vpack.c.b16 %v3687, %v3683
      %v4172 = vpack.c.b16 %v3688, %v3684
      %v4173 = vpack.c.b16 %v3689, %v3685
      %v4174 = vpack.c.b16 %v3690, %v3686
      %v4175 = vpack.c.b16 %v3695, %v3691
      %v4176 = vpack.c.b16 %v3696, %v3692
      %v4177 = vpack.c.b16 %v3697, %v3693
      %v4178 = vpack.c.b16 %v3698, %v3694
      %v4179 = vpack.c.b16 %v3703, %v3699
      %v4180 = vpack.c.b16 %v3704, %v3700
      %v4181 = vpack.c.b16 %v3705, %v3701
      %v4182 = vpack.c.b16 %v3706, %v3702
      %v4183 = vpack.c.b16 %v3711, %v3707
      %v4184 = vpack.c.b16 %v3712, %v3708
      %v4185 = vpack.c.b16 %v3713, %v3709
      %v4186 = vpack.c.b16 %v3714, %v3710
      %v4187 = vpack.c.b16 %v3719, %v3715
      %v4188 = vpack.c.b16 %v3720, %v3716
      %v4189 = vpack.c.b16 %v3721, %v3717
      %v4190 = vpack.c.b16 %v3722, %v3718
      %v4191 = vpack.c.b16 %v3727, %v3723
      %v4192 = vpack.c.b16 %v3728, %v3724
      %v4193 = vpack.c.b16 %v3729, %v3725
      %v4194 = vpack.c.b16 %v3730, %v3726
      %v4195 = vpack.c.b16 %v3735, %v3731
      %v4196 = vpack.c.b16 %v3736, %v3732
      %v4197 = vpack.c.b16 %v3737, %v3733
      %v4198 = vpack.c.b16 %v3738, %v3734
      %v4199 = vpack.c.b16 %v3743, %v3739
      %v4200 = vpack.c.b16 %v3744, %v3740
      %v4201 = vpack.c.b16 %v3745, %v3741
      %v4202 = vpack.c.b16 %v3746, %v3742
      %v4203 = vpack.c.b16 %v3751, %v3747
      %v4204 = vpack.c.b16 %v3752, %v3748
      %v4205 = vpack.c.b16 %v3753, %v3749
      %v4206 = vpack.c.b16 %v3754, %v3750
      %v4207 = vpack.c.b16 %v3759, %v3755
      %v4208 = vpack.c.b16 %v3760, %v3756
      %v4209 = vpack.c.b16 %v3761, %v3757
      %v4210 = vpack.c.b16 %v3762, %v3758
      %v4211 = vpack.c.b16 %v3767, %v3763
      %v4212 = vpack.c.b16 %v3768, %v3764
      %v4213 = vpack.c.b16 %v3769, %v3765
      %v4214 = vpack.c.b16 %v3770, %v3766
      %v4215 = vpack.c.b16 %v3775, %v3771
      %v4216 = vpack.c.b16 %v3776, %v3772
      %v4217 = vpack.c.b16 %v3777, %v3773
      %v4218 = vpack.c.b16 %v3778, %v3774
      %v4219 = vpack.c.b16 %v3783, %v3779
      %v4220 = vpack.c.b16 %v3784, %v3780
      %v4221 = vpack.c.b16 %v3785, %v3781
      %v4222 = vpack.c.b16 %v3786, %v3782
      %v4223 = vpack.c.b16 %v3791, %v3787
      %v4224 = vpack.c.b16 %v3792, %v3788
      %v4225 = vpack.c.b16 %v3793, %v3789
      %v4226 = vpack.c.b16 %v3794, %v3790
      %v4227 = vpack.c.b16 %v3799, %v3795
      %v4228 = vpack.c.b16 %v3800, %v3796
      %v4229 = vpack.c.b16 %v3801, %v3797
      %v4230 = vpack.c.b16 %v3802, %v3798
      %v4231 = vpack.c.b16 %v3807, %v3803
      %v4232 = vpack.c.b16 %v3808, %v3804
      %v4233 = vpack.c.b16 %v3809, %v3805
      %v4234 = vpack.c.b16 %v3810, %v3806
      %v4235 = vpack.c.b16 %v3815, %v3811
      %v4236 = vpack.c.b16 %v3816, %v3812
      %v4237 = vpack.c.b16 %v3817, %v3813
      %v4238 = vpack.c.b16 %v3818, %v3814
      %v4239 = vpack.c.b16 %v3823, %v3819
      %v4240 = vpack.c.b16 %v3824, %v3820
      %v4241 = vpack.c.b16 %v3825, %v3821
      %v4242 = vpack.c.b16 %v3826, %v3822
      %v4243 = vpack.c.b16 %v3831, %v3827
      %v4244 = vpack.c.b16 %v3832, %v3828
      %v4245 = vpack.c.b16 %v3833, %v3829
      %v4246 = vpack.c.b16 %v3834, %v3830
      %v4247 = vpack.c.b16 %v3839, %v3835
      %v4248 = vpack.c.b16 %v3840, %v3836
      %v4249 = vpack.c.b16 %v3841, %v3837
      %v4250 = vpack.c.b16 %v3842, %v3838
      %v4251 = vpack.c.b16 %v3847, %v3843
      %v4252 = vpack.c.b16 %v3848, %v3844
      %v4253 = vpack.c.b16 %v3849, %v3845
      %v4254 = vpack.c.b16 %v3850, %v3846
      %v4255 = vpack.c.b16 %v3855, %v3851
      %v4256 = vpack.c.b16 %v3856, %v3852
      %v4257 = vpack.c.b16 %v3857, %v3853
      %v4258 = vpack.c.b16 %v3858, %v3854
      %v4259 = vpack.c.b16 %v3863, %v3859
      %v4260 = vpack.c.b16 %v3864, %v3860
      %v4261 = vpack.c.b16 %v3865, %v3861
      %v4262 = vpack.c.b16 %v3866, %v3862
      %v4263 = vpack.c.b16 %v3871, %v3867
      %v4264 = vpack.c.b16 %v3872, %v3868
      %v4265 = vpack.c.b16 %v3873, %v3869
      %v4266 = vpack.c.b16 %v3874, %v3870
      %v4267 = vpack.c.b16 %v3879, %v3875
      %v4268 = vpack.c.b16 %v3880, %v3876
      %v4269 = vpack.c.b16 %v3881, %v3877
      %v4270 = vpack.c.b16 %v3882, %v3878
      %v4271 = vpack.c.b16 %v3887, %v3883
      %v4272 = vpack.c.b16 %v3888, %v3884
      %v4273 = vpack.c.b16 %v3889, %v3885
      %v4274 = vpack.c.b16 %v3890, %v3886
      %v4275 = vpack.c.b16 %v3895, %v3891
      %v4276 = vpack.c.b16 %v3896, %v3892
      %v4277 = vpack.c.b16 %v3897, %v3893
      %v4278 = vpack.c.b16 %v3898, %v3894
      %v4279 = vpack.c.b16 %v3903, %v3899
      %v4280 = vpack.c.b16 %v3904, %v3900
      %v4281 = vpack.c.b16 %v3905, %v3901
      %v4282 = vpack.c.b16 %v3906, %v3902
      %v4283 = vpack.c.b16 %v3911, %v3907
      %v4284 = vpack.c.b16 %v3912, %v3908
      %v4285 = vpack.c.b16 %v3913, %v3909
      %v4286 = vpack.c.b16 %v3914, %v3910
      %v4287 = vpack.c.b16 %v3919, %v3915
      %v4288 = vpack.c.b16 %v3920, %v3916
      %v4289 = vpack.c.b16 %v3921, %v3917
      %v4290 = vpack.c.b16 %v3922, %v3918
      %v4291 = vpack.c.b16 %v3927, %v3923
      %v4292 = vpack.c.b16 %v3928, %v3924
      %v4293 = vpack.c.b16 %v3929, %v3925
      %v4294 = vpack.c.b16 %v3930, %v3926
      %v4295 = vpack.c.b16 %v3935, %v3931
      %v4296 = vpack.c.b16 %v3936, %v3932
      %v4297 = vpack.c.b16 %v3937, %v3933
      %v4298 = vpack.c.b16 %v3938, %v3934
      %v4299 = vpack.c.b16 %v3943, %v3939
      %v4300 = vpack.c.b16 %v3944, %v3940
      %v4301 = vpack.c.b16 %v3945, %v3941
      %v4302 = vpack.c.b16 %v3946, %v3942
      %v4303 = vpack.c.b16 %v3951, %v3947
      %v4304 = vpack.c.b16 %v3952, %v3948
      %v4305 = vpack.c.b16 %v3953, %v3949
      %v4306 = vpack.c.b16 %v3954, %v3950
      %v4307 = vpack.c.b16 %v3959, %v3955
      %v4308 = vpack.c.b16 %v3960, %v3956
      %v4309 = vpack.c.b16 %v3961, %v3957
      %v4310 = vpack.c.b16 %v3962, %v3958
      %v4311 = vpack.c.b16 %v3967, %v3963
      %v4312 = vpack.c.b16 %v3968, %v3964
      %v4313 = vpack.c.b16 %v3969, %v3965
      %v4314 = vpack.c.b16 %v3970, %v3966
      %v4315 = vpack.c.b16 %v3975, %v3971
      %v4316 = vpack.c.b16 %v3976, %v3972
      %v4317 = vpack.c.b16 %v3977, %v3973
      %v4318 = vpack.c.b16 %v3978, %v3974
      %v4319 = vpack.c.b16 %v3983, %v3979
      %v4320 = vpack.c.b16 %v3984, %v3980
      %v4321 = vpack.c.b16 %v3985, %v3981
      %v4322 = vpack.c.b16 %v3986, %v3982
      %v4323 = vpack.c.b16 %v3991, %v3987
      %v4324 = vpack.c.b16 %v3992, %v3988
      %v4325 = vpack.c.b16 %v3993, %v3989
      %v4326 = vpack.c.b16 %v3994, %v3990
      %v4327 = vpack.c.b16 %v3999, %v3995
      %v4328 = vpack.c.b16 %v4000, %v3996
      %v4329 = vpack.c.b16 %v4001, %v3997
      %v4330 = vpack.c.b16 %v4002, %v3998
      %v4331 = vpack.c.b16 %v4007, %v4003
      %v4332 = vpack.c.b16 %v4008, %v4004
      %v4333 = vpack.c.b16 %v4009, %v4005
      %v4334 = vpack.c.b16 %v4010, %v4006
      %v4335 = vpack.c.b16 %v4015, %v4011
      %v4336 = vpack.c.b16 %v4016, %v4012
      %v4337 = vpack.c.b16 %v4017, %v4013
      %v4338 = vpack.c.b16 %v4018, %v4014
      %v4339 = vpack.c.b16 %v4023, %v4019
      %v4340 = vpack.c.b16 %v4024, %v4020
      %v4341 = vpack.c.b16 %v4025, %v4021
      %v4342 = vpack.c.b16 %v4026, %v4022
      %v4343 = vpack.c.b16 %v4031, %v4027
      %v4344 = vpack.c.b16 %v4032, %v4028
      %v4345 = vpack.c.b16 %v4033, %v4029
      %v4346 = vpack.c.b16 %v4034, %v4030
      %v4347 = vpack.c.b16 %v4039, %v4035
      %v4348 = vpack.c.b16 %v4040, %v4036
      %v4349 = vpack.c.b16 %v4041, %v4037
      %v4350 = vpack.c.b16 %v4042, %v4038
      %v4351 = vpack.c.b16 %v4047, %v4043
      %v4352 = vpack.c.b16 %v4048, %v4044
      %v4353 = vpack.c.b16 %v4049, %v4045
      %v4354 = vpack.c.b16 %v4050, %v4046
      %v4355 = vpack.c.b16 %v4055, %v4051
      %v4356 = vpack.c.b16 %v4056, %v4052
      %v4357 = vpack.c.b16 %v4057, %v4053
      %v4358 = vpack.c.b16 %v4058, %v4054
      %v4359 = vpack.c.b16 %v4063, %v4059
      %v4360 = vpack.c.b16 %v4064, %v4060
      %v4361 = vpack.c.b16 %v4065, %v4061
      %v4362 = vpack.c.b16 %v4066, %v4062
      %v4363 = vpack.c.b16 %v4071, %v4067
      %v4364 = vpack.c.b16 %v4072, %v4068
      %v4365 = vpack.c.b16 %v4073, %v4069
      %v4366 = vpack.c.b16 %v4074, %v4070
      %v4367 = vpack.c.b16 %v4079, %v4075
      %v4368 = vpack.c.b16 %v4080, %v4076
      %v4369 = vpack.c.b16 %v4081, %v4077
      %v4370 = vpack.c.b16 %v4082, %v4078
      %v4371 = vpack.c.b16 %v4087, %v4083
      %v4372 = vpack.c.b16 %v4088, %v4084
      %v4373 = vpack.c.b16 %v4089, %v4085
      %v4374 = vpack.c.b16 %v4090, %v4086
      %v4375 = vpack.c.b16 %v4095, %v4091
      %v4376 = vpack.c.b16 %v4096, %v4092
      %v4377 = vpack.c.b16 %v4097, %v4093
      %v4378 = vpack.c.b16 %v4098, %v4094
      %v4379 = vpack.c.b16 %v4103, %v4099
      %v4380 = vpack.c.b16 %v4104, %v4100
      %v4381 = vpack.c.b16 %v4105, %v4101
      %v4382 = vpack.c.b16 %v4106, %v4102
      %v4383 = vpack.c.b16 %v4111, %v4107
      %v4384 = vpack.c.b16 %v4112, %v4108
      %v4385 = vpack.c.b16 %v4113, %v4109
      %v4386 = vpack.c.b16 %v4114, %v4110
      %v4387 = vpack.c.b16 %v4119, %v4115
      %v4388 = vpack.c.b16 %v4120, %v4116
      %v4389 = vpack.c.b16 %v4121, %v4117
      %v4390 = vpack.c.b16 %v4122, %v4118
      %v4391 = vpack.c.b16 %v4127, %v4123
      %v4392 = vpack.c.b16 %v4128, %v4124
      %v4393 = vpack.c.b16 %v4129, %v4125
      %v4394 = vpack.c.b16 %v4130, %v4126
      %v4395 = vpack.c.b16 %v4135, %v4131
      %v4396 = vpack.c.b16 %v4136, %v4132
      %v4397 = vpack.c.b16 %v4137, %v4133
      %v4398 = vpack.c.b16 %v4138, %v4134
      %v4399 = vpack.c.b16 %v4143, %v4139
      %v4400 = vpack.c.b16 %v4144, %v4140
      %v4401 = vpack.c.b16 %v4145, %v4141
      %v4402 = vpack.c.b16 %v4146, %v4142
      %4659 = vmatprep.subr.bf16.mxu0 %v4148
      %4660 = vmatpush1.bf16.msra.mxu0 %v4147
      %4661 = vmatprep.subr.bf16.mxu0 %v4152
      %4662 = vmatpush1.bf16.msra.mxu0 %v4151
      %4663 = vmatprep.subr.bf16.mxu0 %v4156
      %4664 = vmatpush1.bf16.msra.mxu0 %v4155
      %4665 = vmatprep.subr.bf16.mxu0 %v4160
      %4666 = vmatpush1.bf16.msra.mxu0 %v4159
      %4667 = vmatprep.subr.bf16.mxu0 %v4164
      %4668 = vmatpush1.bf16.msra.mxu0 %v4163
      %4669 = vmatprep.subr.bf16.mxu0 %v4168
      %4670 = vmatpush1.bf16.msra.mxu0 %v4167
      %4671 = vmatprep.subr.bf16.mxu0 %v4172
      %4672 = vmatpush1.bf16.msra.mxu0 %v4171
      %4673 = vmatprep.subr.bf16.mxu0 %v4176
      %4674 = vmatpush1.bf16.msra.mxu0 %v4175
      %4675 = vmatprep.subr.bf16.mxu0 %v4180
      %4676 = vmatpush1.bf16.msra.mxu0 %v4179
      %4677 = vmatprep.subr.bf16.mxu0 %v4184
      %4678 = vmatpush1.bf16.msra.mxu0 %v4183
      %4679 = vmatprep.subr.bf16.mxu0 %v4188
      %4680 = vmatpush1.bf16.msra.mxu0 %v4187
      %4681 = vmatprep.subr.bf16.mxu0 %v4192
      %4682 = vmatpush1.bf16.msra.mxu0 %v4191
      %4683 = vmatprep.subr.bf16.mxu0 %v4196
      %4684 = vmatpush1.bf16.msra.mxu0 %v4195
      %4685 = vmatprep.subr.bf16.mxu0 %v4200
      %4686 = vmatpush1.bf16.msra.mxu0 %v4199
      %4687 = vmatprep.subr.bf16.mxu0 %v4204
      %4688 = vmatpush1.bf16.msra.mxu0 %v4203
      %4689 = vmatprep.subr.bf16.mxu0 %v4208
      %4690 = vmatpush1.bf16.msra.mxu0 %v4207
      %4691 = vmatprep.mubr.bf16.mxu0 %v3094
      %4692 = vmatmul.mubr.bf16.gmra.mrb[0].mxu0 %v3093
      %v4693 = vpop.f32.mrb[0].mxu0
      %v4694 = vadd.f32 %v3362, %v4693
      %v4695 = vpop.f32.mrb[0].mxu0
      %v4696 = vadd.f32 %v3366, %v4695
      %v4697 = vpop.f32.mrb[0].mxu0
      %v4698 = vpop.f32.mrb[0].mxu0
      %4699 = vdwg.mxu0
      %4700 = vmatprep.subr.bf16.mxu0 %v4212
      %4701 = vmatpush1.bf16.msra.mxu0 %v4211
      %4702 = vmatprep.subr.bf16.mxu0 %v4216
      %4703 = vmatpush1.bf16.msra.mxu0 %v4215
      %4704 = vmatprep.subr.bf16.mxu0 %v4220
      %4705 = vmatpush1.bf16.msra.mxu0 %v4219
      %4706 = vmatprep.subr.bf16.mxu0 %v4224
      %4707 = vmatpush1.bf16.msra.mxu0 %v4223
      %4708 = vmatprep.subr.bf16.mxu0 %v4228
      %4709 = vmatpush1.bf16.msra.mxu0 %v4227
      %4710 = vmatprep.subr.bf16.mxu0 %v4232
      %4711 = vmatpush1.bf16.msra.mxu0 %v4231
      %4712 = vmatprep.subr.bf16.mxu0 %v4236
      %4713 = vmatpush1.bf16.msra.mxu0 %v4235
      %4714 = vmatprep.subr.bf16.mxu0 %v4240
      %4715 = vmatpush1.bf16.msra.mxu0 %v4239
      %4716 = vmatprep.subr.bf16.mxu0 %v4244
      %4717 = vmatpush1.bf16.msra.mxu0 %v4243
      %4718 = vmatprep.subr.bf16.mxu0 %v4248
      %4719 = vmatpush1.bf16.msra.mxu0 %v4247
      %4720 = vmatprep.subr.bf16.mxu0 %v4252
      %4721 = vmatpush1.bf16.msra.mxu0 %v4251
      %4722 = vmatprep.subr.bf16.mxu0 %v4256
      %4723 = vmatpush1.bf16.msra.mxu0 %v4255
      %4724 = vmatprep.subr.bf16.mxu0 %v4260
      %4725 = vmatpush1.bf16.msra.mxu0 %v4259
      %4726 = vmatprep.subr.bf16.mxu0 %v4264
      %4727 = vmatpush1.bf16.msra.mxu0 %v4263
      %4728 = vmatprep.subr.bf16.mxu0 %v4268
      %4729 = vmatpush1.bf16.msra.mxu0 %v4267
      %4730 = vmatprep.subr.bf16.mxu0 %v4272
      %4731 = vmatpush1.bf16.msra.mxu0 %v4271
      %4732 = vmatprep.mubr.bf16.mxu0 %v3096
      %4733 = vmatmul.mubr.bf16.gmra.mrb[0].mxu0 %v3095
      %v4734 = vpop.f32.mrb[0].mxu0
      %v4735 = vadd.f32 %v4694, %v4734
      %v4736 = vpop.f32.mrb[0].mxu0
      %v4737 = vadd.f32 %v4696, %v4736
      %v4738 = vpop.f32.mrb[0].mxu0
      %v4739 = vpop.f32.mrb[0].mxu0
      %4740 = vdwg.mxu0
      %4741 = vmatprep.subr.bf16.mxu0 %v4276
      %4742 = vmatpush1.bf16.msra.mxu0 %v4275
      %4743 = vmatprep.subr.bf16.mxu0 %v4280
      %4744 = vmatpush1.bf16.msra.mxu0 %v4279
      %4745 = vmatprep.subr.bf16.mxu0 %v4284
      %4746 = vmatpush1.bf16.msra.mxu0 %v4283
      %4747 = vmatprep.subr.bf16.mxu0 %v4288
      %4748 = vmatpush1.bf16.msra.mxu0 %v4287
      %4749 = vmatprep.subr.bf16.mxu0 %v4292
      %4750 = vmatpush1.bf16.msra.mxu0 %v4291
      %4751 = vmatprep.subr.bf16.mxu0 %v4296
      %4752 = vmatpush1.bf16.msra.mxu0 %v4295
      %4753 = vmatprep.subr.bf16.mxu0 %v4300
      %4754 = vmatpush1.bf16.msra.mxu0 %v4299
      %4755 = vmatprep.subr.bf16.mxu0 %v4304
      %4756 = vmatpush1.bf16.msra.mxu0 %v4303
      %4757 = vmatprep.subr.bf16.mxu0 %v4308
      %4758 = vmatpush1.bf16.msra.mxu0 %v4307
      %4759 = vmatprep.subr.bf16.mxu0 %v4312
      %4760 = vmatpush1.bf16.msra.mxu0 %v4311
      %4761 = vmatprep.subr.bf16.mxu0 %v4316
      %4762 = vmatpush1.bf16.msra.mxu0 %v4315
      %4763 = vmatprep.subr.bf16.mxu0 %v4320
      %4764 = vmatpush1.bf16.msra.mxu0 %v4319
      %4765 = vmatprep.subr.bf16.mxu0 %v4324
      %4766 = vmatpush1.bf16.msra.mxu0 %v4323
      %4767 = vmatprep.subr.bf16.mxu0 %v4328
      %4768 = vmatpush1.bf16.msra.mxu0 %v4327
      %4769 = vmatprep.subr.bf16.mxu0 %v4332
      %4770 = vmatpush1.bf16.msra.mxu0 %v4331
      %4771 = vmatprep.subr.bf16.mxu0 %v4336
      %4772 = vmatpush1.bf16.msra.mxu0 %v4335
      %4773 = vmatprep.mubr.bf16.mxu0 %v3098
      %4774 = vmatmul.mubr.bf16.gmra.mrb[0].mxu0 %v3097
      %v4775 = vpop.f32.mrb[0].mxu0
      %v4776 = vadd.f32 %v4735, %v4775
      %v4777 = vpop.f32.mrb[0].mxu0
      %v4778 = vadd.f32 %v4737, %v4777
      %v4779 = vpop.f32.mrb[0].mxu0
      %v4780 = vpop.f32.mrb[0].mxu0
      %4781 = vdwg.mxu0
      %4782 = vmatprep.subr.bf16.mxu0 %v4340
      %4783 = vmatpush1.bf16.msra.mxu0 %v4339
      %4784 = vmatprep.subr.bf16.mxu0 %v4344
      %4785 = vmatpush1.bf16.msra.mxu0 %v4343
      %4786 = vmatprep.subr.bf16.mxu0 %v4348
      %4787 = vmatpush1.bf16.msra.mxu0 %v4347
      %4788 = vmatprep.subr.bf16.mxu0 %v4352
      %4789 = vmatpush1.bf16.msra.mxu0 %v4351
      %4790 = vmatprep.subr.bf16.mxu0 %v4356
      %4791 = vmatpush1.bf16.msra.mxu0 %v4355
      %4792 = vmatprep.subr.bf16.mxu0 %v4360
      %4793 = vmatpush1.bf16.msra.mxu0 %v4359
      %4794 = vmatprep.subr.bf16.mxu0 %v4364
      %4795 = vmatpush1.bf16.msra.mxu0 %v4363
      %4796 = vmatprep.subr.bf16.mxu0 %v4368
      %4797 = vmatpush1.bf16.msra.mxu0 %v4367
      %4798 = vmatprep.subr.bf16.mxu0 %v4372
      %4799 = vmatpush1.bf16.msra.mxu0 %v4371
      %4800 = vmatprep.subr.bf16.mxu0 %v4376
      %4801 = vmatpush1.bf16.msra.mxu0 %v4375
      %4802 = vmatprep.subr.bf16.mxu0 %v4380
      %4803 = vmatpush1.bf16.msra.mxu0 %v4379
      %4804 = vmatprep.subr.bf16.mxu0 %v4384
      %4805 = vmatpush1.bf16.msra.mxu0 %v4383
      %4806 = vmatprep.subr.bf16.mxu0 %v4388
      %4807 = vmatpush1.bf16.msra.mxu0 %v4387
      %4808 = vmatprep.subr.bf16.mxu0 %v4392
      %4809 = vmatpush1.bf16.msra.mxu0 %v4391
      %4810 = vmatprep.subr.bf16.mxu0 %v4396
      %4811 = vmatpush1.bf16.msra.mxu0 %v4395
      %4812 = vmatprep.subr.bf16.mxu0 %v4400
      %4813 = vmatpush1.bf16.msra.mxu0 %v4399
      %4814 = vmatprep.mubr.bf16.mxu0 %v3100
      %4815 = vmatmul.mubr.bf16.gmra.mrb[0].mxu0 %v3099
      %v4816 = vpop.f32.mrb[0].mxu0
      %v4817 = vadd.f32 %v4776, %v4816
      %v4818 = vpop.f32.mrb[0].mxu0
      %v4819 = vadd.f32 %v4778, %v4818
      %v4820 = vpop.f32.mrb[0].mxu0
      %v4821 = vpop.f32.mrb[0].mxu0
      %4822 = vdwg.mxu0
      %4823 = vmatprep.subr.bf16.mxu0 %v4150
      %4824 = vmatpush1.bf16.msra.mxu0 %v4149
      %4825 = vmatprep.subr.bf16.mxu0 %v4154
      %4826 = vmatpush1.bf16.msra.mxu0 %v4153
      %4827 = vmatprep.subr.bf16.mxu0 %v4158
      %4828 = vmatpush1.bf16.msra.mxu0 %v4157
      %4829 = vmatprep.subr.bf16.mxu0 %v4162
      %4830 = vmatpush1.bf16.msra.mxu0 %v4161
      %4831 = vmatprep.subr.bf16.mxu0 %v4166
      %4832 = vmatpush1.bf16.msra.mxu0 %v4165
      %4833 = vmatprep.subr.bf16.mxu0 %v4170
      %4834 = vmatpush1.bf16.msra.mxu0 %v4169
      %4835 = vmatprep.subr.bf16.mxu0 %v4174
      %4836 = vmatpush1.bf16.msra.mxu0 %v4173
      %4837 = vmatprep.subr.bf16.mxu0 %v4178
      %4838 = vmatpush1.bf16.msra.mxu0 %v4177
      %4839 = vmatprep.subr.bf16.mxu0 %v4182
      %4840 = vmatpush1.bf16.msra.mxu0 %v4181
      %4841 = vmatprep.subr.bf16.mxu0 %v4186
      %4842 = vmatpush1.bf16.msra.mxu0 %v4185
      %4843 = vmatprep.subr.bf16.mxu0 %v4190
      %4844 = vmatpush1.bf16.msra.mxu0 %v4189
      %4845 = vmatprep.subr.bf16.mxu0 %v4194
      %4846 = vmatpush1.bf16.msra.mxu0 %v4193
      %4847 = vmatprep.subr.bf16.mxu0 %v4198
      %4848 = vmatpush1.bf16.msra.mxu0 %v4197
      %4849 = vmatprep.subr.bf16.mxu0 %v4202
      %4850 = vmatpush1.bf16.msra.mxu0 %v4201
      %4851 = vmatprep.subr.bf16.mxu0 %v4206
      %4852 = vmatpush1.bf16.msra.mxu0 %v4205
      %4853 = vmatprep.subr.bf16.mxu0 %v4210
      %4854 = vmatpush1.bf16.msra.mxu0 %v4209
      %4855 = vmatprep.mubr.bf16.mxu0 %v3094
      %4856 = vmatmul.mubr.bf16.gmra.mrb[0].mxu0 %v3093
      %v4857 = vpop.f32.mrb[0].mxu0
      %v4858 = vadd.f32 %v3370, %v4857
      %v4859 = vpop.f32.mrb[0].mxu0
      %v4860 = vadd.f32 %v3374, %v4859
      %v4861 = vpop.f32.mrb[0].mxu0
      %v4862 = vpop.f32.mrb[0].mxu0
      %4863 = vdwg.mxu0
      %4864 = vmatprep.subr.bf16.mxu0 %v4214
      %4865 = vmatpush1.bf16.msra.mxu0 %v4213
      %4866 = vmatprep.subr.bf16.mxu0 %v4218
      %4867 = vmatpush1.bf16.msra.mxu0 %v4217
      %4868 = vmatprep.subr.bf16.mxu0 %v4222
      %4869 = vmatpush1.bf16.msra.mxu0 %v4221
      %4870 = vmatprep.subr.bf16.mxu0 %v4226
      %4871 = vmatpush1.bf16.msra.mxu0 %v4225
      %4872 = vmatprep.subr.bf16.mxu0 %v4230
      %4873 = vmatpush1.bf16.msra.mxu0 %v4229
      %4874 = vmatprep.subr.bf16.mxu0 %v4234
      %4875 = vmatpush1.bf16.msra.mxu0 %v4233
      %4876 = vmatprep.subr.bf16.mxu0 %v4238
      %4877 = vmatpush1.bf16.msra.mxu0 %v4237
      %4878 = vmatprep.subr.bf16.mxu0 %v4242
      %4879 = vmatpush1.bf16.msra.mxu0 %v4241
      %4880 = vmatprep.subr.bf16.mxu0 %v4246
      %4881 = vmatpush1.bf16.msra.mxu0 %v4245
      %4882 = vmatprep.subr.bf16.mxu0 %v4250
      %4883 = vmatpush1.bf16.msra.mxu0 %v4249
      %4884 = vmatprep.subr.bf16.mxu0 %v4254
      %4885 = vmatpush1.bf16.msra.mxu0 %v4253
      %4886 = vmatprep.subr.bf16.mxu0 %v4258
      %4887 = vmatpush1.bf16.msra.mxu0 %v4257
      %4888 = vmatprep.subr.bf16.mxu0 %v4262
      %4889 = vmatpush1.bf16.msra.mxu0 %v4261
      %4890 = vmatprep.subr.bf16.mxu0 %v4266
      %4891 = vmatpush1.bf16.msra.mxu0 %v4265
      %4892 = vmatprep.subr.bf16.mxu0 %v4270
      %4893 = vmatpush1.bf16.msra.mxu0 %v4269
      %4894 = vmatprep.subr.bf16.mxu0 %v4274
      %4895 = vmatpush1.bf16.msra.mxu0 %v4273
      %4896 = vmatprep.mubr.bf16.mxu0 %v3096
      %4897 = vmatmul.mubr.bf16.gmra.mrb[0].mxu0 %v3095
      %v4898 = vpop.f32.mrb[0].mxu0
      %v4899 = vadd.f32 %v4858, %v4898
      %v4900 = vpop.f32.mrb[0].mxu0
      %v4901 = vadd.f32 %v4860, %v4900
      %v4902 = vpop.f32.mrb[0].mxu0
      %v4903 = vpop.f32.mrb[0].mxu0
      %4904 = vdwg.mxu0
      %4905 = vmatprep.subr.bf16.mxu0 %v4278
      %4906 = vmatpush1.bf16.msra.mxu0 %v4277
      %4907 = vmatprep.subr.bf16.mxu0 %v4282
      %4908 = vmatpush1.bf16.msra.mxu0 %v4281
      %4909 = vmatprep.subr.bf16.mxu0 %v4286
      %4910 = vmatpush1.bf16.msra.mxu0 %v4285
      %4911 = vmatprep.subr.bf16.mxu0 %v4290
      %4912 = vmatpush1.bf16.msra.mxu0 %v4289
      %4913 = vmatprep.subr.bf16.mxu0 %v4294
      %4914 = vmatpush1.bf16.msra.mxu0 %v4293
      %4915 = vmatprep.subr.bf16.mxu0 %v4298
      %4916 = vmatpush1.bf16.msra.mxu0 %v4297
      %4917 = vmatprep.subr.bf16.mxu0 %v4302
      %4918 = vmatpush1.bf16.msra.mxu0 %v4301
      %4919 = vmatprep.subr.bf16.mxu0 %v4306
      %4920 = vmatpush1.bf16.msra.mxu0 %v4305
      %4921 = vmatprep.subr.bf16.mxu0 %v4310
      %4922 = vmatpush1.bf16.msra.mxu0 %v4309
      %4923 = vmatprep.subr.bf16.mxu0 %v4314
      %4924 = vmatpush1.bf16.msra.mxu0 %v4313
      %4925 = vmatprep.subr.bf16.mxu0 %v4318
      %4926 = vmatpush1.bf16.msra.mxu0 %v4317
      %4927 = vmatprep.subr.bf16.mxu0 %v4322
      %4928 = vmatpush1.bf16.msra.mxu0 %v4321
      %4929 = vmatprep.subr.bf16.mxu0 %v4326
      %4930 = vmatpush1.bf16.msra.mxu0 %v4325
      %4931 = vmatprep.subr.bf16.mxu0 %v4330
      %4932 = vmatpush1.bf16.msra.mxu0 %v4329
      %4933 = vmatprep.subr.bf16.mxu0 %v4334
      %4934 = vmatpush1.bf16.msra.mxu0 %v4333
      %4935 = vmatprep.subr.bf16.mxu0 %v4338
      %4936 = vmatpush1.bf16.msra.mxu0 %v4337
      %4937 = vmatprep.mubr.bf16.mxu0 %v3098
      %4938 = vmatmul.mubr.bf16.gmra.mrb[0].mxu0 %v3097
      %v4939 = vpop.f32.mrb[0].mxu0
      %v4940 = vadd.f32 %v4899, %v4939
      %v4941 = vpop.f32.mrb[0].mxu0
      %v4942 = vadd.f32 %v4901, %v4941
      %v4943 = vpop.f32.mrb[0].mxu0
      %v4944 = vpop.f32.mrb[0].mxu0
      %4945 = vdwg.mxu0
      %4946 = vmatprep.subr.bf16.mxu0 %v4342
      %4947 = vmatpush1.bf16.msra.mxu0 %v4341
      %4948 = vmatprep.subr.bf16.mxu0 %v4346
      %4949 = vmatpush1.bf16.msra.mxu0 %v4345
      %4950 = vmatprep.subr.bf16.mxu0 %v4350
      %4951 = vmatpush1.bf16.msra.mxu0 %v4349
      %4952 = vmatprep.subr.bf16.mxu0 %v4354
      %4953 = vmatpush1.bf16.msra.mxu0 %v4353
      %4954 = vmatprep.subr.bf16.mxu0 %v4358
      %4955 = vmatpush1.bf16.msra.mxu0 %v4357
      %4956 = vmatprep.subr.bf16.mxu0 %v4362
      %4957 = vmatpush1.bf16.msra.mxu0 %v4361
      %4958 = vmatprep.subr.bf16.mxu0 %v4366
      %4959 = vmatpush1.bf16.msra.mxu0 %v4365
      %4960 = vmatprep.subr.bf16.mxu0 %v4370
      %4961 = vmatpush1.bf16.msra.mxu0 %v4369
      %4962 = vmatprep.subr.bf16.mxu0 %v4374
      %4963 = vmatpush1.bf16.msra.mxu0 %v4373
      %4964 = vmatprep.subr.bf16.mxu0 %v4378
      %4965 = vmatpush1.bf16.msra.mxu0 %v4377
      %4966 = vmatprep.subr.bf16.mxu0 %v4382
      %4967 = vmatpush1.bf16.msra.mxu0 %v4381
      %4968 = vmatprep.subr.bf16.mxu0 %v4386
      %4969 = vmatpush1.bf16.msra.mxu0 %v4385
      %4970 = vmatprep.subr.bf16.mxu0 %v4390
      %4971 = vmatpush1.bf16.msra.mxu0 %v4389
      %4972 = vmatprep.subr.bf16.mxu0 %v4394
      %4973 = vmatpush1.bf16.msra.mxu0 %v4393
      %4974 = vmatprep.subr.bf16.mxu0 %v4398
      %4975 = vmatpush1.bf16.msra.mxu0 %v4397
      %4976 = vmatprep.subr.bf16.mxu0 %v4402
      %4977 = vmatpush1.bf16.msra.mxu0 %v4401
      %4978 = vmatprep.mubr.bf16.mxu0 %v3100
      %4979 = vmatmul.mubr.bf16.gmra.mrb[0].mxu0 %v3099
      %v4980 = vpop.f32.mrb[0].mxu0
      %v4981 = vadd.f32 %v4940, %v4980
      %v4982 = vpop.f32.mrb[0].mxu0
      %v4983 = vadd.f32 %v4942, %v4982
      %v4984 = vpop.f32.mrb[0].mxu0
      %v4985 = vpop.f32.mrb[0].mxu0
      %4986 = vdwg.mxu0
      %v4987 = vmax.f32 %v4817, 0.0
      %v4988 = vmax.f32 %v4819, 0.0
      %v4989 = vmax.f32 %v4981, 0.0
      %v4990 = vmax.f32 %v4983, 0.0
      %v4991 = vpack.c.bf16 %v4987, %v4987
      %v4992 = vpack.c.bf16 %v4988, %v4988
      %v4993 = vpack.c.bf16 %v4989, %v4989
      %v4994 = vpack.c.bf16 %v4990, %v4990
      %v4995 = vld [vmem:[%s11] sm:$0xff]
      %v4996 = vld [vmem:[%s11 + $0x8] sm:$0xff]
      %v4997 = vld [vmem:[%s11 + $0x10] sm:$0xff]
      %v4998 = vld [vmem:[%s11 + $0x18] sm:$0xff]
      %v4999 = vld [vmem:[%s11 + $0x20] sm:$0xff]
      %v5000 = vld [vmem:[%s11 + $0x28] sm:$0xff]
      %v5001 = vld [vmem:[%s11 + $0x30] sm:$0xff]
      %v5002 = vld [vmem:[%s11 + $0x38] sm:$0xff]
      %v5003 = vld [vmem:[%s11 + $0x40] sm:$0xff]
      %v5004 = vld [vmem:[%s11 + $0x48] sm:$0xff]
      %v5005 = vld [vmem:[%s11 + $0x50] sm:$0xff]
      %v5006 = vld [vmem:[%s11 + $0x58] sm:$0xff]
      %v5007 = vld [vmem:[%s11 + $0x60] sm:$0xff]
      %v5008 = vld [vmem:[%s11 + $0x68] sm:$0xff]
      %v5009 = vld [vmem:[%s11 + $0x70] sm:$0xff]
      %v5010 = vld [vmem:[%s11 + $0x78] sm:$0xff]
      %v5011 = vld [vmem:[%s11 + $0x80] sm:$0xff]
      %v5012 = vld [vmem:[%s11 + $0x88] sm:$0xff]
      %v5013 = vld [vmem:[%s11 + $0x90] sm:$0xff]
      %v5014 = vld [vmem:[%s11 + $0x98] sm:$0xff]
      %v5015 = vld [vmem:[%s11 + $0xa0] sm:$0xff]
      %v5016 = vld [vmem:[%s11 + $0xa8] sm:$0xff]
      %v5017 = vld [vmem:[%s11 + $0xb0] sm:$0xff]
      %v5018 = vld [vmem:[%s11 + $0xb8] sm:$0xff]
      %v5019 = vld [vmem:[%s11 + $0xc0] sm:$0xff]
      %v5020 = vld [vmem:[%s11 + $0xc8] sm:$0xff]
      %v5021 = vld [vmem:[%s11 + $0xd0] sm:$0xff]
      %v5022 = vld [vmem:[%s11 + $0xd8] sm:$0xff]
      %v5023 = vld [vmem:[%s11 + $0xe0] sm:$0xff]
      %v5024 = vld [vmem:[%s11 + $0xe8] sm:$0xff]
      %v5025 = vld [vmem:[%s11 + $0xf0] sm:$0xff]
      %v5026 = vld [vmem:[%s11 + $0xf8] sm:$0xff]
      %v5027 = vld [vmem:[%s11 + $0x100] sm:$0xff]
      %v5028 = vld [vmem:[%s11 + $0x108] sm:$0xff]
      %v5029 = vld [vmem:[%s11 + $0x110] sm:$0xff]
      %v5030 = vld [vmem:[%s11 + $0x118] sm:$0xff]
      %v5031 = vld [vmem:[%s11 + $0x120] sm:$0xff]
      %v5032 = vld [vmem:[%s11 + $0x128] sm:$0xff]
      %v5033 = vld [vmem:[%s11 + $0x130] sm:$0xff]
      %v5034 = vld [vmem:[%s11 + $0x138] sm:$0xff]
      %v5035 = vld [vmem:[%s11 + $0x140] sm:$0xff]
      %v5036 = vld [vmem:[%s11 + $0x148] sm:$0xff]
      %v5037 = vld [vmem:[%s11 + $0x150] sm:$0xff]
      %v5038 = vld [vmem:[%s11 + $0x158] sm:$0xff]
      %v5039 = vld [vmem:[%s11 + $0x160] sm:$0xff]
      %v5040 = vld [vmem:[%s11 + $0x168] sm:$0xff]
      %v5041 = vld [vmem:[%s11 + $0x170] sm:$0xff]
      %v5042 = vld [vmem:[%s11 + $0x178] sm:$0xff]
      %v5043 = vld [vmem:[%s11 + $0x180] sm:$0xff]
      %v5044 = vld [vmem:[%s11 + $0x188] sm:$0xff]
      %v5045 = vld [vmem:[%s11 + $0x190] sm:$0xff]
      %v5046 = vld [vmem:[%s11 + $0x198] sm:$0xff]
      %v5047 = vld [vmem:[%s11 + $0x1a0] sm:$0xff]
      %v5048 = vld [vmem:[%s11 + $0x1a8] sm:$0xff]
      %v5049 = vld [vmem:[%s11 + $0x1b0] sm:$0xff]
      %v5050 = vld [vmem:[%s11 + $0x1b8] sm:$0xff]
      %v5051 = vld [vmem:[%s11 + $0x1c0] sm:$0xff]
      %v5052 = vld [vmem:[%s11 + $0x1c8] sm:$0xff]
      %v5053 = vld [vmem:[%s11 + $0x1d0] sm:$0xff]
      %v5054 = vld [vmem:[%s11 + $0x1d8] sm:$0xff]
      %v5055 = vld [vmem:[%s11 + $0x1e0] sm:$0xff]
      %v5056 = vld [vmem:[%s11 + $0x1e8] sm:$0xff]
      %v5057 = vld [vmem:[%s11 + $0x1f0] sm:$0xff]
      %v5058 = vld [vmem:[%s11 + $0x1f8] sm:$0xff]
      %v5059 = vld [vmem:[%s12] sm:$0x3]
      %v5061 = vlaneseq
      %v5062 = vshrl.u32 %v5061, 7
      %v5063 = vsub.s32 0, %v5062
      %v5064 = vrot.slane %v5059, %v5063
      %v5065 = vlaneseq
      %v5066 = vshrl.u32 %v5065, 7
      %v5067 = vsub.s32 1, %v5066
      %v5068 = vrot.slane %v5059, %v5067
      %v5135 = vunpack.c.l.b16 %v4995
      %v5136 = vunpack.c.h.b16 %v4995
      %v5137 = vunpack.c.l.b16 %v4996
      %v5138 = vunpack.c.h.b16 %v4996
      %v5139 = vunpack.c.l.b16 %v4997
      %v5140 = vunpack.c.h.b16 %v4997
      %v5141 = vunpack.c.l.b16 %v4998
      %v5142 = vunpack.c.h.b16 %v4998
      %v5143 = vunpack.c.l.b16 %v4999
      %v5144 = vunpack.c.h.b16 %v4999
      %v5145 = vunpack.c.l.b16 %v5000
      %v5146 = vunpack.c.h.b16 %v5000
      %v5147 = vunpack.c.l.b16 %v5001
      %v5148 = vunpack.c.h.b16 %v5001
      %v5149 = vunpack.c.l.b16 %v5002
      %v5150 = vunpack.c.h.b16 %v5002
      %v5151 = vunpack.c.l.b16 %v5003
      %v5152 = vunpack.c.h.b16 %v5003
      %v5153 = vunpack.c.l.b16 %v5004
      %v5154 = vunpack.c.h.b16 %v5004
      %v5155 = vunpack.c.l.b16 %v5005
      %v5156 = vunpack.c.h.b16 %v5005
      %v5157 = vunpack.c.l.b16 %v5006
      %v5158 = vunpack.c.h.b16 %v5006
      %v5159 = vunpack.c.l.b16 %v5007
      %v5160 = vunpack.c.h.b16 %v5007
      %v5161 = vunpack.c.l.b16 %v5008
      %v5162 = vunpack.c.h.b16 %v5008
      %v5163 = vunpack.c.l.b16 %v5009
      %v5164 = vunpack.c.h.b16 %v5009
      %v5165 = vunpack.c.l.b16 %v5010
      %v5166 = vunpack.c.h.b16 %v5010
      %v5167 = vunpack.c.l.b16 %v5011
      %v5168 = vunpack.c.h.b16 %v5011
      %v5169 = vunpack.c.l.b16 %v5012
      %v5170 = vunpack.c.h.b16 %v5012
      %v5171 = vunpack.c.l.b16 %v5013
      %v5172 = vunpack.c.h.b16 %v5013
      %v5173 = vunpack.c.l.b16 %v5014
      %v5174 = vunpack.c.h.b16 %v5014
      %v5175 = vunpack.c.l.b16 %v5015
      %v5176 = vunpack.c.h.b16 %v5015
      %v5177 = vunpack.c.l.b16 %v5016
      %v5178 = vunpack.c.h.b16 %v5016
      %v5179 = vunpack.c.l.b16 %v5017
      %v5180 = vunpack.c.h.b16 %v5017
      %v5181 = vunpack.c.l.b16 %v5018
      %v5182 = vunpack.c.h.b16 %v5018
      %v5183 = vunpack.c.l.b16 %v5019
      %v5184 = vunpack.c.h.b16 %v5019
      %v5185 = vunpack.c.l.b16 %v5020
      %v5186 = vunpack.c.h.b16 %v5020
      %v5187 = vunpack.c.l.b16 %v5021
      %v5188 = vunpack.c.h.b16 %v5021
      %v5189 = vunpack.c.l.b16 %v5022
      %v5190 = vunpack.c.h.b16 %v5022
      %v5191 = vunpack.c.l.b16 %v5023
      %v5192 = vunpack.c.h.b16 %v5023
      %v5193 = vunpack.c.l.b16 %v5024
      %v5194 = vunpack.c.h.b16 %v5024
      %v5195 = vunpack.c.l.b16 %v5025
      %v5196 = vunpack.c.h.b16 %v5025
      %v5197 = vunpack.c.l.b16 %v5026
      %v5198 = vunpack.c.h.b16 %v5026
      %v5199 = vunpack.c.l.b16 %v5027
      %v5200 = vunpack.c.h.b16 %v5027
      %v5201 = vunpack.c.l.b16 %v5028
      %v5202 = vunpack.c.h.b16 %v5028
      %v5203 = vunpack.c.l.b16 %v5029
      %v5204 = vunpack.c.h.b16 %v5029
      %v5205 = vunpack.c.l.b16 %v5030
      %v5206 = vunpack.c.h.b16 %v5030
      %v5207 = vunpack.c.l.b16 %v5031
      %v5208 = vunpack.c.h.b16 %v5031
      %v5209 = vunpack.c.l.b16 %v5032
      %v5210 = vunpack.c.h.b16 %v5032
      %v5211 = vunpack.c.l.b16 %v5033
      %v5212 = vunpack.c.h.b16 %v5033
      %v5213 = vunpack.c.l.b16 %v5034
      %v5214 = vunpack.c.h.b16 %v5034
      %v5215 = vunpack.c.l.b16 %v5035
      %v5216 = vunpack.c.h.b16 %v5035
      %v5217 = vunpack.c.l.b16 %v5036
      %v5218 = vunpack.c.h.b16 %v5036
      %v5219 = vunpack.c.l.b16 %v5037
      %v5220 = vunpack.c.h.b16 %v5037
      %v5221 = vunpack.c.l.b16 %v5038
      %v5222 = vunpack.c.h.b16 %v5038
      %v5223 = vunpack.c.l.b16 %v5039
      %v5224 = vunpack.c.h.b16 %v5039
      %v5225 = vunpack.c.l.b16 %v5040
      %v5226 = vunpack.c.h.b16 %v5040
      %v5227 = vunpack.c.l.b16 %v5041
      %v5228 = vunpack.c.h.b16 %v5041
      %v5229 = vunpack.c.l.b16 %v5042
      %v5230 = vunpack.c.h.b16 %v5042
      %v5231 = vunpack.c.l.b16 %v5043
      %v5232 = vunpack.c.h.b16 %v5043
      %v5233 = vunpack.c.l.b16 %v5044
      %v5234 = vunpack.c.h.b16 %v5044
      %v5235 = vunpack.c.l.b16 %v5045
      %v5236 = vunpack.c.h.b16 %v5045
      %v5237 = vunpack.c.l.b16 %v5046
      %v5238 = vunpack.c.h.b16 %v5046
      %v5239 = vunpack.c.l.b16 %v5047
      %v5240 = vunpack.c.h.b16 %v5047
      %v5241 = vunpack.c.l.b16 %v5048
      %v5242 = vunpack.c.h.b16 %v5048
      %v5243 = vunpack.c.l.b16 %v5049
      %v5244 = vunpack.c.h.b16 %v5049
      %v5245 = vunpack.c.l.b16 %v5050
      %v5246 = vunpack.c.h.b16 %v5050
      %v5247 = vunpack.c.l.b16 %v5051
      %v5248 = vunpack.c.h.b16 %v5051
      %v5249 = vunpack.c.l.b16 %v5052
      %v5250 = vunpack.c.h.b16 %v5052
      %v5251 = vunpack.c.l.b16 %v5053
      %v5252 = vunpack.c.h.b16 %v5053
      %v5253 = vunpack.c.l.b16 %v5054
      %v5254 = vunpack.c.h.b16 %v5054
      %v5255 = vunpack.c.l.b16 %v5055
      %v5256 = vunpack.c.h.b16 %v5055
      %v5257 = vunpack.c.l.b16 %v5056
      %v5258 = vunpack.c.h.b16 %v5056
      %v5259 = vunpack.c.l.b16 %v5057
      %v5260 = vunpack.c.h.b16 %v5057
      %v5261 = vunpack.c.l.b16 %v5058
      %v5262 = vunpack.c.h.b16 %v5058
      %v5263 = vpack.c.b16 %v5137, %v5135
      %v5264 = vpack.c.b16 %v5138, %v5136
      %v5265 = vpack.c.b16 %v5141, %v5139
      %v5266 = vpack.c.b16 %v5142, %v5140
      %v5267 = vpack.c.b16 %v5145, %v5143
      %v5268 = vpack.c.b16 %v5146, %v5144
      %v5269 = vpack.c.b16 %v5149, %v5147
      %v5270 = vpack.c.b16 %v5150, %v5148
      %v5271 = vpack.c.b16 %v5153, %v5151
      %v5272 = vpack.c.b16 %v5154, %v5152
      %v5273 = vpack.c.b16 %v5157, %v5155
      %v5274 = vpack.c.b16 %v5158, %v5156
      %v5275 = vpack.c.b16 %v5161, %v5159
      %v5276 = vpack.c.b16 %v5162, %v5160
      %v5277 = vpack.c.b16 %v5165, %v5163
      %v5278 = vpack.c.b16 %v5166, %v5164
      %v5279 = vpack.c.b16 %v5169, %v5167
      %v5280 = vpack.c.b16 %v5170, %v5168
      %v5281 = vpack.c.b16 %v5173, %v5171
      %v5282 = vpack.c.b16 %v5174, %v5172
      %v5283 = vpack.c.b16 %v5177, %v5175
      %v5284 = vpack.c.b16 %v5178, %v5176
      %v5285 = vpack.c.b16 %v5181, %v5179
      %v5286 = vpack.c.b16 %v5182, %v5180
      %v5287 = vpack.c.b16 %v5185, %v5183
      %v5288 = vpack.c.b16 %v5186, %v5184
      %v5289 = vpack.c.b16 %v5189, %v5187
      %v5290 = vpack.c.b16 %v5190, %v5188
      %v5291 = vpack.c.b16 %v5193, %v5191
      %v5292 = vpack.c.b16 %v5194, %v5192
      %v5293 = vpack.c.b16 %v5197, %v5195
      %v5294 = vpack.c.b16 %v5198, %v5196
      %v5295 = vpack.c.b16 %v5201, %v5199
      %v5296 = vpack.c.b16 %v5202, %v5200
      %v5297 = vpack.c.b16 %v5205, %v5203
      %v5298 = vpack.c.b16 %v5206, %v5204
      %v5299 = vpack.c.b16 %v5209, %v5207
      %v5300 = vpack.c.b16 %v5210, %v5208
      %v5301 = vpack.c.b16 %v5213, %v5211
      %v5302 = vpack.c.b16 %v5214, %v5212
      %v5303 = vpack.c.b16 %v5217, %v5215
      %v5304 = vpack.c.b16 %v5218, %v5216
      %v5305 = vpack.c.b16 %v5221, %v5219
      %v5306 = vpack.c.b16 %v5222, %v5220
      %v5307 = vpack.c.b16 %v5225, %v5223
      %v5308 = vpack.c.b16 %v5226, %v5224
      %v5309 = vpack.c.b16 %v5229, %v5227
      %v5310 = vpack.c.b16 %v5230, %v5228
      %v5311 = vpack.c.b16 %v5233, %v5231
      %v5312 = vpack.c.b16 %v5234, %v5232
      %v5313 = vpack.c.b16 %v5237, %v5235
      %v5314 = vpack.c.b16 %v5238, %v5236
      %v5315 = vpack.c.b16 %v5241, %v5239
      %v5316 = vpack.c.b16 %v5242, %v5240
      %v5317 = vpack.c.b16 %v5245, %v5243
      %v5318 = vpack.c.b16 %v5246, %v5244
      %v5319 = vpack.c.b16 %v5249, %v5247
      %v5320 = vpack.c.b16 %v5250, %v5248
      %v5321 = vpack.c.b16 %v5253, %v5251
      %v5322 = vpack.c.b16 %v5254, %v5252
      %v5323 = vpack.c.b16 %v5257, %v5255
      %v5324 = vpack.c.b16 %v5258, %v5256
      %v5325 = vpack.c.b16 %v5261, %v5259
      %v5326 = vpack.c.b16 %v5262, %v5260
      %5391 = vmatprep.subr.bf16.mxu0 %v5264
      %5392 = vmatpush1.bf16.msra.mxu0 %v5263
      %5393 = vmatprep.subr.bf16.mxu0 %v5266
      %5394 = vmatpush1.bf16.msra.mxu0 %v5265
      %5395 = vmatprep.subr.bf16.mxu0 %v5268
      %5396 = vmatpush1.bf16.msra.mxu0 %v5267
      %5397 = vmatprep.subr.bf16.mxu0 %v5270
      %5398 = vmatpush1.bf16.msra.mxu0 %v5269
      %5399 = vmatprep.subr.bf16.mxu0 %v5272
      %5400 = vmatpush1.bf16.msra.mxu0 %v5271
      %5401 = vmatprep.subr.bf16.mxu0 %v5274
      %5402 = vmatpush1.bf16.msra.mxu0 %v5273
      %5403 = vmatprep.subr.bf16.mxu0 %v5276
      %5404 = vmatpush1.bf16.msra.mxu0 %v5275
      %5405 = vmatprep.subr.bf16.mxu0 %v5278
      %5406 = vmatpush1.bf16.msra.mxu0 %v5277
      %5407 = vmatprep.subr.bf16.mxu0 %v5280
      %5408 = vmatpush1.bf16.msra.mxu0 %v5279
      %5409 = vmatprep.subr.bf16.mxu0 %v5282
      %5410 = vmatpush1.bf16.msra.mxu0 %v5281
      %5411 = vmatprep.subr.bf16.mxu0 %v5284
      %5412 = vmatpush1.bf16.msra.mxu0 %v5283
      %5413 = vmatprep.subr.bf16.mxu0 %v5286
      %5414 = vmatpush1.bf16.msra.mxu0 %v5285
      %5415 = vmatprep.subr.bf16.mxu0 %v5288
      %5416 = vmatpush1.bf16.msra.mxu0 %v5287
      %5417 = vmatprep.subr.bf16.mxu0 %v5290
      %5418 = vmatpush1.bf16.msra.mxu0 %v5289
      %5419 = vmatprep.subr.bf16.mxu0 %v5292
      %5420 = vmatpush1.bf16.msra.mxu0 %v5291
      %5421 = vmatprep.subr.bf16.mxu0 %v5294
      %5422 = vmatpush1.bf16.msra.mxu0 %v5293
      %5423 = vmatprep.mubr.bf16.mxu0 %v4992
      %5424 = vmatmul.mubr.bf16.gmra.mrb[0].mxu0 %v4991
      %v5425 = vpop.f32.mrb[0].mxu0
      %v5426 = vadd.f32 %v5064, %v5425
      %v5427 = vpop.f32.mrb[0].mxu0
      %v5428 = vadd.f32 %v5068, %v5427
      %v5429 = vpop.f32.mrb[0].mxu0
      %v5430 = vpop.f32.mrb[0].mxu0
      %5431 = vdwg.mxu0
      %5432 = vmatprep.subr.bf16.mxu0 %v5296
      %5433 = vmatpush1.bf16.msra.mxu0 %v5295
      %5434 = vmatprep.subr.bf16.mxu0 %v5298
      %5435 = vmatpush1.bf16.msra.mxu0 %v5297
      %5436 = vmatprep.subr.bf16.mxu0 %v5300
      %5437 = vmatpush1.bf16.msra.mxu0 %v5299
      %5438 = vmatprep.subr.bf16.mxu0 %v5302
      %5439 = vmatpush1.bf16.msra.mxu0 %v5301
      %5440 = vmatprep.subr.bf16.mxu0 %v5304
      %5441 = vmatpush1.bf16.msra.mxu0 %v5303
      %5442 = vmatprep.subr.bf16.mxu0 %v5306
      %5443 = vmatpush1.bf16.msra.mxu0 %v5305
      %5444 = vmatprep.subr.bf16.mxu0 %v5308
      %5445 = vmatpush1.bf16.msra.mxu0 %v5307
      %5446 = vmatprep.subr.bf16.mxu0 %v5310
      %5447 = vmatpush1.bf16.msra.mxu0 %v5309
      %5448 = vmatprep.subr.bf16.mxu0 %v5312
      %5449 = vmatpush1.bf16.msra.mxu0 %v5311
      %5450 = vmatprep.subr.bf16.mxu0 %v5314
      %5451 = vmatpush1.bf16.msra.mxu0 %v5313
      %5452 = vmatprep.subr.bf16.mxu0 %v5316
      %5453 = vmatpush1.bf16.msra.mxu0 %v5315
      %5454 = vmatprep.subr.bf16.mxu0 %v5318
      %5455 = vmatpush1.bf16.msra.mxu0 %v5317
      %5456 = vmatprep.subr.bf16.mxu0 %v5320
      %5457 = vmatpush1.bf16.msra.mxu0 %v5319
      %5458 = vmatprep.subr.bf16.mxu0 %v5322
      %5459 = vmatpush1.bf16.msra.mxu0 %v5321
      %5460 = vmatprep.subr.bf16.mxu0 %v5324
      %5461 = vmatpush1.bf16.msra.mxu0 %v5323
      %5462 = vmatprep.subr.bf16.mxu0 %v5326
      %5463 = vmatpush1.bf16.msra.mxu0 %v5325
      %5464 = vmatprep.mubr.bf16.mxu0 %v4994
      %5465 = vmatmul.mubr.bf16.gmra.mrb[0].mxu0 %v4993
      %v5466 = vpop.f32.mrb[0].mxu0
      %v5467 = vadd.f32 %v5426, %v5466
      %v5468 = vpop.f32.mrb[0].mxu0
      %v5469 = vadd.f32 %v5428, %v5468
      %v5470 = vpop.f32.mrb[0].mxu0
      %v5471 = vpop.f32.mrb[0].mxu0
      %5472 = vdwg.mxu0
      %v5473 = vmax.f32 %v5467, 0.0
      %v5474 = vmax.f32 %v5469, 0.0
      %v5475 = vpack.c.bf16 %v5473, %v5473
      %v5476 = vpack.c.bf16 %v5474, %v5474
      %v5477 = vld [vmem:[%s13] sm:$0xf]
      %v5478 = vld [vmem:[%s13 + $0x4] sm:$0xf]
      %v5479 = vld [vmem:[%s13 + $0x8] sm:$0xf]
      %v5480 = vld [vmem:[%s13 + $0xc] sm:$0xf]
      %v5481 = vld [vmem:[%s13 + $0x10] sm:$0xf]
      %v5482 = vld [vmem:[%s13 + $0x14] sm:$0xf]
      %v5483 = vld [vmem:[%s13 + $0x18] sm:$0xf]
      %v5484 = vld [vmem:[%s13 + $0x1c] sm:$0xf]
      %v5485 = vld [vmem:[%s13 + $0x20] sm:$0xf]
      %v5486 = vld [vmem:[%s13 + $0x24] sm:$0xf]
      %v5487 = vld [vmem:[%s13 + $0x28] sm:$0xf]
      %v5488 = vld [vmem:[%s13 + $0x2c] sm:$0xf]
      %v5489 = vld [vmem:[%s13 + $0x30] sm:$0xf]
      %v5490 = vld [vmem:[%s13 + $0x34] sm:$0xf]
      %v5491 = vld [vmem:[%s13 + $0x38] sm:$0xf]
      %v5492 = vld [vmem:[%s13 + $0x3c] sm:$0xf]
      %v5493 = vld [vmem:[%s13 + $0x40] sm:$0xf]
      %v5494 = vld [vmem:[%s13 + $0x44] sm:$0xf]
      %v5495 = vld [vmem:[%s13 + $0x48] sm:$0xf]
      %v5496 = vld [vmem:[%s13 + $0x4c] sm:$0xf]
      %v5497 = vld [vmem:[%s13 + $0x50] sm:$0xf]
      %v5498 = vld [vmem:[%s13 + $0x54] sm:$0xf]
      %v5499 = vld [vmem:[%s13 + $0x58] sm:$0xf]
      %v5500 = vld [vmem:[%s13 + $0x5c] sm:$0xf]
      %v5501 = vld [vmem:[%s13 + $0x60] sm:$0xf]
      %v5502 = vld [vmem:[%s13 + $0x64] sm:$0xf]
      %v5503 = vld [vmem:[%s13 + $0x68] sm:$0xf]
      %v5504 = vld [vmem:[%s13 + $0x6c] sm:$0xf]
      %v5505 = vld [vmem:[%s13 + $0x70] sm:$0xf]
      %v5506 = vld [vmem:[%s13 + $0x74] sm:$0xf]
      %v5507 = vld [vmem:[%s13 + $0x78] sm:$0xf]
      %v5508 = vld [vmem:[%s13 + $0x7c] sm:$0xf]
      %v5509 = vld [vmem:[%s14] sm:$0x1]
      %v5511 = vlaneseq
      %v5512 = vshrl.u32 %v5511, 7
      %v5513 = vsub.s32 0, %v5512
      %v5514 = vrot.slane %v5509, %v5513
      %v5548 = vunpack.c.l.b16 %v5477
      %v5549 = vunpack.c.l.b16 %v5478
      %v5550 = vunpack.c.l.b16 %v5479
      %v5551 = vunpack.c.l.b16 %v5480
      %v5552 = vunpack.c.l.b16 %v5481
      %v5553 = vunpack.c.l.b16 %v5482
      %v5554 = vunpack.c.l.b16 %v5483
      %v5555 = vunpack.c.l.b16 %v5484
      %v5556 = vunpack.c.l.b16 %v5485
      %v5557 = vunpack.c.l.b16 %v5486
      %v5558 = vunpack.c.l.b16 %v5487
      %v5559 = vunpack.c.l.b16 %v5488
      %v5560 = vunpack.c.l.b16 %v5489
      %v5561 = vunpack.c.l.b16 %v5490
      %v5562 = vunpack.c.l.b16 %v5491
      %v5563 = vunpack.c.l.b16 %v5492
      %v5564 = vunpack.c.l.b16 %v5493
      %v5565 = vunpack.c.l.b16 %v5494
      %v5566 = vunpack.c.l.b16 %v5495
      %v5567 = vunpack.c.l.b16 %v5496
      %v5568 = vunpack.c.l.b16 %v5497
      %v5569 = vunpack.c.l.b16 %v5498
      %v5570 = vunpack.c.l.b16 %v5499
      %v5571 = vunpack.c.l.b16 %v5500
      %v5572 = vunpack.c.l.b16 %v5501
      %v5573 = vunpack.c.l.b16 %v5502
      %v5574 = vunpack.c.l.b16 %v5503
      %v5575 = vunpack.c.l.b16 %v5504
      %v5576 = vunpack.c.l.b16 %v5505
      %v5577 = vunpack.c.l.b16 %v5506
      %v5578 = vunpack.c.l.b16 %v5507
      %v5579 = vunpack.c.l.b16 %v5508
      %v5580 = vpack.c.b16 %v5549, %v5548
      %v5581 = vpack.c.b16 %v5551, %v5550
      %v5582 = vpack.c.b16 %v5553, %v5552
      %v5583 = vpack.c.b16 %v5555, %v5554
      %v5584 = vpack.c.b16 %v5557, %v5556
      %v5585 = vpack.c.b16 %v5559, %v5558
      %v5586 = vpack.c.b16 %v5561, %v5560
      %v5587 = vpack.c.b16 %v5563, %v5562
      %v5588 = vpack.c.b16 %v5565, %v5564
      %v5589 = vpack.c.b16 %v5567, %v5566
      %v5590 = vpack.c.b16 %v5569, %v5568
      %v5591 = vpack.c.b16 %v5571, %v5570
      %v5592 = vpack.c.b16 %v5573, %v5572
      %v5593 = vpack.c.b16 %v5575, %v5574
      %v5594 = vpack.c.b16 %v5577, %v5576
      %v5595 = vpack.c.b16 %v5579, %v5578
      %5612 = vmatprep.subr.bf16.mxu0 0
      %5613 = vmatpush1.bf16.msra.mxu0 %v5580
      %5614 = vmatprep.subr.bf16.mxu0 0
      %5615 = vmatpush1.bf16.msra.mxu0 %v5581
      %5616 = vmatprep.subr.bf16.mxu0 0
      %5617 = vmatpush1.bf16.msra.mxu0 %v5582
      %5618 = vmatprep.subr.bf16.mxu0 0
      %5619 = vmatpush1.bf16.msra.mxu0 %v5583
      %5620 = vmatprep.subr.bf16.mxu0 0
      %5621 = vmatpush1.bf16.msra.mxu0 %v5584
      %5622 = vmatprep.subr.bf16.mxu0 0
      %5623 = vmatpush1.bf16.msra.mxu0 %v5585
      %5624 = vmatprep.subr.bf16.mxu0 0
      %5625 = vmatpush1.bf16.msra.mxu0 %v5586
      %5626 = vmatprep.subr.bf16.mxu0 0
      %5627 = vmatpush1.bf16.msra.mxu0 %v5587
      %5628 = vmatprep.subr.bf16.mxu0 0
      %5629 = vmatpush1.bf16.msra.mxu0 %v5588
      %5630 = vmatprep.subr.bf16.mxu0 0
      %5631 = vmatpush1.bf16.msra.mxu0 %v5589
      %5632 = vmatprep.subr.bf16.mxu0 0
      %5633 = vmatpush1.bf16.msra.mxu0 %v5590
      %5634 = vmatprep.subr.bf16.mxu0 0
      %5635 = vmatpush1.bf16.msra.mxu0 %v5591
      %5636 = vmatprep.subr.bf16.mxu0 0
      %5637 = vmatpush1.bf16.msra.mxu0 %v5592
      %5638 = vmatprep.subr.bf16.mxu0 0
      %5639 = vmatpush1.bf16.msra.mxu0 %v5593
      %5640 = vmatprep.subr.bf16.mxu0 0
      %5641 = vmatpush1.bf16.msra.mxu0 %v5594
      %5642 = vmatprep.subr.bf16.mxu0 0
      %5643 = vmatpush1.bf16.msra.mxu0 %v5595
      %5644 = vmatprep.mubr.bf16.mxu0 %v5476
      %5645 = vmatmul.mubr.bf16.gmra.mrb[0].mxu0 %v5475
      %v5646 = vpop.f32.mrb[0].mxu0
      %v5647 = vadd.f32 %v5514, %v5646
      %v5648 = vpop.f32.mrb[0].mxu0
      %v5649 = vpop.f32.mrb[0].mxu0
      %v5650 = vpop.f32.mrb[0].mxu0
      %5651 = vdwg.mxu0
      %5652 = vst [vmem:[#allocation3] sm:$0x3] %v5647
    $region69: #{pointnet2_forward.5} parent=1 // pred_fallthru
      _
    // Predicated region
    $region70: #{pointnet2_forward.5} parent=1 // pred_check
      _
    $region71: #{pointnet2_forward.5} parent=1 // pred_check_branch
      %5654 = sbr.rel (0) target = $region73
    $region72: #{pointnet2_forward.5} parent=1 // pred_region
      %s5656 = ssub.s32 32, 32
      %5657 = vsyncadd [#allocation4], %s5656
      %s5659 = sshll.u32 [#allocation3], 4
      %s5660 = int_to_ptr.vmem [resolvable:$true] %s5659
      %5662 = dma.vmem_to_hbm [thread:$0]  %s5660, 32, %s15, [#allocation4]
    $region73: #{pointnet2_forward.5} parent=1 // pred_fallthru
      _
    // Predicated region
    $region74: #{pointnet2_forward.5} parent=1 // pred_check
      _
    $region75: #{pointnet2_forward.5} parent=1 // pred_check_branch
      %5664 = sbr.rel (0) target = $region77
    $region76: #{pointnet2_forward.5} parent=1 // pred_region
      %5665 = dma.done [#allocation4], 32
    $region77: #{pointnet2_forward.5} parent=1 // pred_fallthru
      _
    %5666 = vsyncpa [#allocation4], 1

</llo_original>
